<compile_context>
chip_gen: v6e
topology: v6e:2x2x1
jax: 0.10.0
libtpu: 0.0.40
codegen_flags: <defaults>
</compile_context>

<pallas_src>
import jax
import jax.numpy as jnp
from jax import lax
from jax.experimental import pallas as pl
from jax.experimental.pallas import tpu as pltpu

# ----------------------------- model config ---------------------------------
BATCH = 2
SEQ = 8
INPUT_SIZE = 16
D_MODEL = 32
D_STATE = 8
EXPANSION = 2
D_INNER = D_MODEL * EXPANSION          # 64
NUM_LAYERS = 2
OUTPUT_SIZE = 16
CONV_K = 3
LN_EPS = 1e-5

# ------------------------ packed-slab row offsets ----------------------------
# per-layer weight slab (NL, _WL_ROWS, 128); all 2-D blocks start on
# multiples of 8 sublanes.
_WL_W_IN = 0                                   # (D_MODEL, 2*D_INNER)
_WL_W_DT = _WL_W_IN + D_MODEL                  # (D_INNER, D_INNER)
_WL_W_OUT = _WL_W_DT + D_INNER                 # (D_INNER, D_MODEL)
_WL_A_LOG = _WL_W_OUT + D_INNER                # (D_STATE, D_INNER)
_WL_W_BCT = _WL_A_LOG + D_STATE                # (2*D_STATE, D_INNER), pre-transposed
_WL_ROWS = _WL_W_BCT + 2 * D_STATE             # 184

# per-layer small slab (NL, 8, 128)
_SL_W_CONV = 0                                 # (CONV_K, D_INNER)
_SL_B_IN = CONV_K                              # (1, 2*D_INNER)
_SL_B_DT = CONV_K + 1                          # (1, D_INNER)
_SL_B_CONV = CONV_K + 2                        # (1, D_INNER)
_SL_D = CONV_K + 3                             # (1, D_INNER)
_SL_B_OUT = CONV_K + 4                         # (1, D_MODEL)
_SL_ROWS = 8

# global slab (_G_ROWS, 128)
_G_W_IN = 0                                    # (INPUT_SIZE, D_MODEL)
_G_W_OUT = INPUT_SIZE                          # (D_MODEL, OUTPUT_SIZE)
_G_B_IN = INPUT_SIZE + D_MODEL                 # (1, D_MODEL)
_G_LN_G = _G_B_IN + 1                          # (1, D_MODEL)
_G_LN_B = _G_B_IN + 2                          # (1, D_MODEL)
_G_B_OUT = _G_B_IN + 3                         # (1, OUTPUT_SIZE)
_G_ROWS = 56


def _silu(x):
    return x * (1.0 / (1.0 + jnp.exp(-x)))


def _softplus(x):
    return jnp.maximum(x, 0.0) + jnp.log1p(jnp.exp(-jnp.abs(x)))


def _hdot(a, b):
    return jnp.dot(a, b, precision=lax.Precision.HIGHEST,
                   preferred_element_type=jnp.float32)


# ----------------------------- fused pallas kernel --------------------------
def _fused_forward_kernel(x_ref, wl_ref, sl_ref, g_ref, o_ref):
    BL = x_ref.shape[0]                      # folded batch*seq rows
    L = SEQ
    B = BL // L

    # ---- input projection (whole folded batch, one matmul) -----------------
    x = x_ref[...]                                              # (BL, IN)
    h = (_hdot(x, g_ref[_G_W_IN:_G_W_IN + INPUT_SIZE, 0:D_MODEL])
         + g_ref[_G_B_IN:_G_B_IN + 1, 0:D_MODEL])               # (BL, D_MODEL)

    # row-within-sequence index: keeps the causal conv from leaking across the
    # batch boundary of the folded (B*L, .) layout
    pos = lax.broadcasted_iota(jnp.int32, (BL, 1), 0) % L

    # ---- NUM_LAYERS selective-SSM blocks (statically unrolled) -------------
    for layer in range(NUM_LAYERS):
        resid = h

        xz = (_hdot(resid, wl_ref[layer, _WL_W_IN:_WL_W_IN + D_MODEL, :])
              + sl_ref[layer, _SL_B_IN:_SL_B_IN + 1, :])        # (BL, 2*D_INNER)
        xb = xz[:, :D_INNER]                                    # conv branch
        z = xz[:, D_INNER:]                                     # gate branch

        # causal depthwise conv1d (torch padding=K-1, truncated to L), folded
        # over the batch; the positional mask zeroes taps that would cross
        # a sequence boundary.
        wc = sl_ref[layer, _SL_W_CONV:_SL_W_CONV + CONV_K, 0:D_INNER]
        xc = xb * wc[CONV_K - 1:CONV_K, :]
        for k in range(CONV_K - 1):
            s = CONV_K - 1 - k
            shifted = jnp.concatenate(
                [jnp.zeros((s, D_INNER), jnp.float32), xb[:-s, :]], axis=0)
            shifted = jnp.where(pos >= s, shifted, 0.0)
            xc = xc + shifted * wc[k:k + 1, :]
        xs = _silu(xc + sl_ref[layer, _SL_B_CONV:_SL_B_CONV + 1, 0:D_INNER])

        # dt projection (lane-dense) + softplus
        dt = _softplus(
            _hdot(xs, wl_ref[layer, _WL_W_DT:_WL_W_DT + D_INNER, 0:D_INNER])
            + sl_ref[layer, _SL_B_DT:_SL_B_DT + 1, 0:D_INNER])  # (BL, D_INNER)

        # B/C projection produced already transposed, (2S, BL), via one
        # q@k^T-style dot (contract the feature dims of both operands); this
        # removes any VMEM staging / in-kernel transpose for the scan.
        bc_t = lax.dot_general(
            wl_ref[layer, _WL_W_BCT:_WL_W_BCT + 2 * D_STATE, 0:D_INNER], xs,
            (((1,), (1,)), ((), ())),
            precision=lax.Precision.HIGHEST,
            preferred_element_type=jnp.float32)                 # (2S, BL)
        bm_t = bc_t[:D_STATE, :]                                # (S, BL)
        cm_t = bc_t[D_STATE:, :]                                # (S, BL)

        a = -jnp.exp(wl_ref[layer, _WL_A_LOG:_WL_A_LOG + D_STATE, 0:D_INNER])
        dtu = dt * xs                                           # (BL, D_INNER)
        d_skip = sl_ref[layer, _SL_D:_SL_D + 1, 0:D_INNER]      # (1, D_INNER)

        # selective scan: per-batch serial chains, fully unrolled.  The
        # discretization exp is one batched EUP pass per sequence; dbu and the
        # readout are in-register broadcasts off the hs dependence chain.
        y_rows = []
        for b in range(B):
            base = b * L
            da_b = jnp.exp(jnp.concatenate(
                [dt[base + l:base + l + 1, :] * a for l in range(L)],
                axis=0))                                        # (L*S, D_INNER)
            hs = jnp.zeros((D_STATE, D_INNER), jnp.float32)
            for l in range(L):
                r = base + l
                dbu = bm_t[:, r:r + 1] * dtu[r:r + 1, :]        # (S, D_INNER)
                hs = da_b[l * D_STATE:(l + 1) * D_STATE, :] * hs + dbu
                # readout: VPU multiply + sublane reduce (no MXU push)
                y_rows.append(
                    jnp.sum(cm_t[:, r:r + 1] * hs, axis=0, keepdims=True))
        y = d_skip * xs + jnp.concatenate(y_rows, axis=0)       # (BL, D_INNER)
        y = y * _silu(z)

        h = (_hdot(y, wl_ref[layer, _WL_W_OUT:_WL_W_OUT + D_INNER, 0:D_MODEL])
             + sl_ref[layer, _SL_B_OUT:_SL_B_OUT + 1, 0:D_MODEL] + resid)

    # ---- LayerNorm + output projection --------------------------------------
    mu = jnp.mean(h, axis=-1, keepdims=True)
    var = jnp.mean(jnp.square(h - mu), axis=-1, keepdims=True)
    hn = ((h - mu) * lax.rsqrt(var + LN_EPS)
          * g_ref[_G_LN_G:_G_LN_G + 1, 0:D_MODEL]
          + g_ref[_G_LN_B:_G_LN_B + 1, 0:D_MODEL])

    o_ref[...] = (_hdot(hn, g_ref[_G_W_OUT:_G_W_OUT + D_MODEL, 0:OUTPUT_SIZE])
                  + g_ref[_G_B_OUT:_G_B_OUT + 1, 0:OUTPUT_SIZE])


# --------------------------- host-side packing --------------------------------
def _pad_rc(a, rows, cols):
    return jnp.pad(a, ((0, rows - a.shape[0]), (0, cols - a.shape[1])))


def _pack_params(params):
    wl, sl = [], []
    for p in params["layers"]:
        w_bc_t = jnp.concatenate([p["w_B"], p["w_C"]], axis=1).T   # (2S, D_INNER)
        wl.append(jnp.concatenate([
            _pad_rc(p["w_in"], D_MODEL, 128),
            _pad_rc(p["w_dt"], D_INNER, 128),
            _pad_rc(p["w_out"], D_INNER, 128),
            _pad_rc(p["A_log"], D_STATE, 128),
            _pad_rc(w_bc_t, 2 * D_STATE, 128),
        ], axis=0))                                                 # (184, 128)
        sl.append(jnp.concatenate([
            _pad_rc(p["w_conv"], CONV_K, 128),
            _pad_rc(p["b_in"], 1, 128),
            _pad_rc(p["b_dt"], 1, 128),
            _pad_rc(p["b_conv"], 1, 128),
            _pad_rc(p["D"], 1, 128),
            _pad_rc(p["b_out"], 1, 128),
        ], axis=0))                                                 # (8, 128)
    g = jnp.concatenate([
        _pad_rc(params["w_in_lin"], INPUT_SIZE, 128),
        _pad_rc(params["w_out_lin"], D_MODEL, 128),
        _pad_rc(params["b_in_lin"], 1, 128),
        _pad_rc(params["ln_g"], 1, 128),
        _pad_rc(params["ln_b"], 1, 128),
        _pad_rc(params["b_out_lin"], 1, 128),
        jnp.zeros((_G_ROWS - (INPUT_SIZE + D_MODEL + 4), 128), jnp.float32),
    ], axis=0)                                                      # (56, 128)
    return jnp.stack(wl, axis=0), jnp.stack(sl, axis=0), g


def model_forward(params, x):
    b, l, _ = x.shape
    assert l == SEQ and x.shape[-1] == INPUT_SIZE
    wl, sl, g = _pack_params(params)
    x2 = x.reshape(b * l, INPUT_SIZE)

    out2 = pl.pallas_call(
        _fused_forward_kernel,
        out_shape=jax.ShapeDtypeStruct((b * l, OUTPUT_SIZE), jnp.float32),
        grid=(1,),
        in_specs=[
            pl.BlockSpec((b * l, INPUT_SIZE), lambda i: (0, 0)),
            pl.BlockSpec((NUM_LAYERS, _WL_ROWS, 128), lambda i: (0, 0, 0)),
            pl.BlockSpec((NUM_LAYERS, _SL_ROWS, 128), lambda i: (0, 0, 0)),
            pl.BlockSpec((_G_ROWS, 128), lambda i: (0, 0)),
        ],
        out_specs=pl.BlockSpec((b * l, OUTPUT_SIZE), lambda i: (0, 0)),
        compiler_params=pltpu.CompilerParams(
            dimension_semantics=("arbitrary",)),
    )(x2, wl, sl, g)
    return out2.reshape(b, l, OUTPUT_SIZE)


# ------------------------- pure-JAX reference --------------------------------
def _rdot(a, b):
    return jnp.matmul(a, b, precision=lax.Precision.HIGHEST)


def _ref_block(lp, x):
    L = x.shape[1]
    xz = _rdot(x, lp["w_in"]) + lp["b_in"]
    xb, z = xz[..., :D_INNER], xz[..., D_INNER:]
    xpad = jnp.pad(xb, ((0, 0), (CONV_K - 1, 0), (0, 0)))
    xc = sum(lp["w_conv"][k] * xpad[:, k:k + L, :] for k in range(CONV_K))
    xc = xc + lp["b_conv"]
    xs = _silu(xc)
    dt = _softplus(_rdot(xs, lp["w_dt"]) + lp["b_dt"])
    bm = _rdot(xs, lp["w_B"])
    cm = _rdot(xs, lp["w_C"])
    a = -jnp.exp(lp["A_log"])
    da = jnp.exp(dt[:, :, None, :] * a[None, None, :, :])
    dbu = (dt * xs)[:, :, None, :] * bm[..., None]

    def scan_fn(h, inp):
        da_l, dbu_l = inp
        h = da_l * h + dbu_l
        return h, h

    def one(da_b, dbu_b, cm_b, xs_b, z_b):
        _, hs = lax.scan(
            scan_fn, jnp.zeros((D_STATE, D_INNER), jnp.float32), (da_b, dbu_b))
        y = jnp.sum(hs * cm_b[:, :, None], axis=1) + lp["D"] * xs_b
        return y * _silu(z_b)

    y = jax.vmap(one)(da, dbu, cm, xs, z)
    return _rdot(y, lp["w_out"]) + lp["b_out"] + x


def ref_forward(params, x):
    h = _rdot(x, params["w_in_lin"]) + params["b_in_lin"]
    for lp in params["layers"]:
        h = _ref_block(lp, h)
    mu = jnp.mean(h, axis=-1, keepdims=True)
    var = jnp.mean(jnp.square(h - mu), axis=-1, keepdims=True)
    h = (h - mu) * lax.rsqrt(var + LN_EPS) * params["ln_g"] + params["ln_b"]
    return _rdot(h, params["w_out_lin"]) + params["b_out_lin"]


# ------------------------------- params --------------------------------------
def init_params(key):
    kit = iter(jax.random.split(key, 8 + 12 * NUM_LAYERS))
    w = lambda shape: (0.1 * jax.random.normal(next(kit), shape)).astype(jnp.float32)
    zeros = lambda shape: jnp.zeros(shape, jnp.float32)
    params = {
        "w_in_lin": w((INPUT_SIZE, D_MODEL)),
        "b_in_lin": zeros((1, D_MODEL)),
        "ln_g": jnp.ones((1, D_MODEL), jnp.float32),
        "ln_b": zeros((1, D_MODEL)),
        "w_out_lin": w((D_MODEL, OUTPUT_SIZE)),
        "b_out_lin": zeros((1, OUTPUT_SIZE)),
        "layers": [],
    }
    for _ in range(NUM_LAYERS):
        params["layers"].append({
            "w_in": w((D_MODEL, 2 * D_INNER)),
            "b_in": zeros((1, 2 * D_INNER)),
            "w_conv": w((CONV_K, D_INNER)),
            "b_conv": zeros((1, D_INNER)),
            "w_B": w((D_INNER, D_STATE)),
            "w_C": w((D_INNER, D_STATE)),
            "w_dt": w((D_INNER, D_INNER)),
            "b_dt": zeros((1, D_INNER)),
            "A_log": w((D_STATE, D_INNER)),
            "D": w((1, D_INNER)),
            "w_out": w((D_INNER, D_MODEL)),
            "b_out": zeros((1, D_MODEL)),
        })
    return params


if __name__ == "__main__":
    key = jax.random.PRNGKey(0)
    pkey, xkey = jax.random.split(key)
    params = init_params(pkey)
    x = jax.random.normal(xkey, (BATCH, SEQ, INPUT_SIZE), dtype=jnp.float32)

    fwd = jax.jit(model_forward)
    out = jax.block_until_ready(fwd(params, x))
    ref = ref_forward(params, x)

    assert out.shape == (BATCH, SEQ, OUTPUT_SIZE)
    if not jnp.allclose(out, ref, rtol=5e-5, atol=5e-5):
        raise AssertionError(
            f"kernel/reference mismatch, max abs err = {jnp.max(jnp.abs(out - ref))}")
    print("KERNEL_OK")
</pallas_src>

<mosaic_0001>
module attributes {stable_mosaic.version = 11 : i64} {
  func.func @_fused_forward_kernel(%arg0: i32, %arg1: memref<16x16xf32, #tpu.memory_space<vmem>>, %arg2: memref<2x184x128xf32, #tpu.memory_space<vmem>>, %arg3: memref<2x8x128xf32, #tpu.memory_space<vmem>>, %arg4: memref<56x128xf32, #tpu.memory_space<vmem>>, %arg5: memref<16x16xf32, #tpu.memory_space<vmem>>) attributes {dimension_semantics = [#tpu.dimension_semantics<arbitrary>], iteration_bounds = array<i64: 1>, scalar_prefetch = 0 : i64, scratch_operands = 0 : i64, tpu.core_type = #tpu.core_type<tc>, window_params = [{pipeline_mode = #tpu.pipeline_mode<synchronous>, transform_indices = @transform_0, window_bounds = array<i64: 16, 16>}, {pipeline_mode = #tpu.pipeline_mode<synchronous>, transform_indices = @transform_1, window_bounds = array<i64: 2, 184, 128>}, {pipeline_mode = #tpu.pipeline_mode<synchronous>, transform_indices = @transform_2, window_bounds = array<i64: 2, 8, 128>}, {pipeline_mode = #tpu.pipeline_mode<synchronous>, transform_indices = @transform_3, window_bounds = array<i64: 56, 128>}, {pipeline_mode = #tpu.pipeline_mode<synchronous>, transform_indices = @transform_4, window_bounds = array<i64: 16, 16>}]} {
    %c0 = arith.constant 0 : index
    %c0_0 = arith.constant 0 : index
    %0 = vector.load %arg1[%c0, %c0_0] : memref<16x16xf32, #tpu.memory_space<vmem>>, vector<16x16xf32>
    %c0_1 = arith.constant 0 : index
    %c0_2 = arith.constant 0 : index
    %1 = vector.load %arg4[%c0_1, %c0_2] : memref<56x128xf32, #tpu.memory_space<vmem>>, vector<16x32xf32>
    %cst = arith.constant dense<0.000000e+00> : vector<16x32xf32>
    %2 = tpu.matmul %0, %1, %cst {dimension_numbers = #tpu.dot_dimension_numbers<[1], [0], [0], [1], [0, 0, 1, 1], [], []>, precision = #tpu.contract_precision<fp32>} : vector<16x16xf32>, vector<16x32xf32>, vector<16x32xf32> -> vector<16x32xf32>
    %c48 = arith.constant 48 : index
    %c0_3 = arith.constant 0 : index
    %3 = vector.load %arg4[%c48, %c0_3] : memref<56x128xf32, #tpu.memory_space<vmem>>, vector<1x32xf32>
    %4 = vector.broadcast %3 : vector<1x32xf32> to vector<16x32xf32>
    %5 = arith.addf %2, %4 : vector<16x32xf32>
    %6 = tpu.iota {dimensions = array<i32: 0>} : vector<16x1xi32>
    %c8_i32 = arith.constant 8 : i32
    %c0_i32 = arith.constant 0 : i32
    %7 = arith.cmpi eq, %c8_i32, %c0_i32 : i32
    %c1_i32 = arith.constant 1 : i32
    %8 = arith.select %7, %c1_i32, %c8_i32 : i32
    %9 = vector.broadcast %8 : i32 to vector<16x1xi32>
    %10 = arith.remsi %6, %9 : vector<16x1xi32>
    %c0_i32_4 = arith.constant 0 : i32
    %11 = vector.broadcast %c0_i32_4 : i32 to vector<16x1xi32>
    %12 = arith.cmpi ne, %10, %11 : vector<16x1xi32>
    %c0_i32_5 = arith.constant 0 : i32
    %13 = vector.broadcast %c0_i32_5 : i32 to vector<16x1xi32>
    %14 = arith.cmpi slt, %10, %13 : vector<16x1xi32>
    %c0_i32_6 = arith.constant 0 : i32
    %15 = arith.cmpi slt, %8, %c0_i32_6 : i32
    %16 = vector.broadcast %15 : i1 to vector<16x1xi1>
    %17 = vector.broadcast %16 : vector<16x1xi1> to vector<16x1xi1>
    %18 = arith.xori %14, %17 : vector<16x1xi1>
    %19 = arith.andi %18, %12 : vector<16x1xi1>
    %20 = vector.broadcast %8 : i32 to vector<16x1xi32>
    %21 = arith.addi %10, %20 : vector<16x1xi32>
    %22 = arith.select %19, %21, %10 : vector<16x1xi1>, vector<16x1xi32>
    %c0_7 = arith.constant 0 : index
    %c0_8 = arith.constant 0 : index
    %c0_9 = arith.constant 0 : index
    %23 = vector.load %arg2[%c0_7, %c0_8, %c0_9] : memref<2x184x128xf32, #tpu.memory_space<vmem>>, vector<1x32x128xf32>
    %24 = vector.shape_cast %23 : vector<1x32x128xf32> to vector<32x128xf32>
    %cst_10 = arith.constant dense<0.000000e+00> : vector<16x128xf32>
    %25 = tpu.matmul %5, %24, %cst_10 {dimension_numbers = #tpu.dot_dimension_numbers<[1], [0], [0], [1], [0, 0, 1, 1], [], []>, precision = #tpu.contract_precision<fp32>} : vector<16x32xf32>, vector<32x128xf32>, vector<16x128xf32> -> vector<16x128xf32>
    %c0_11 = arith.constant 0 : index
    %c3 = arith.constant 3 : index
    %c0_12 = arith.constant 0 : index
    %26 = vector.load %arg3[%c0_11, %c3, %c0_12] : memref<2x8x128xf32, #tpu.memory_space<vmem>>, vector<1x1x128xf32>
    %27 = vector.shape_cast %26 : vector<1x1x128xf32> to vector<1x128xf32>
    %28 = vector.broadcast %27 : vector<1x128xf32> to vector<16x128xf32>
    %29 = arith.addf %25, %28 : vector<16x128xf32>
    %30 = vector.extract_strided_slice %29 {offsets = [0, 0], sizes = [16, 64], strides = [1, 1]} : vector<16x128xf32> to vector<16x64xf32>
    %31 = vector.extract_strided_slice %29 {offsets = [0, 64], sizes = [16, 64], strides = [1, 1]} : vector<16x128xf32> to vector<16x64xf32>
    %c0_13 = arith.constant 0 : index
    %c0_14 = arith.constant 0 : index
    %c0_15 = arith.constant 0 : index
    %32 = vector.load %arg3[%c0_13, %c0_14, %c0_15] : memref<2x8x128xf32, #tpu.memory_space<vmem>>, vector<1x3x64xf32>
    %33 = vector.shape_cast %32 : vector<1x3x64xf32> to vector<3x64xf32>
    %34 = vector.extract_strided_slice %33 {offsets = [2, 0], sizes = [1, 64], strides = [1, 1]} : vector<3x64xf32> to vector<1x64xf32>
    %35 = vector.broadcast %34 : vector<1x64xf32> to vector<16x64xf32>
    %36 = arith.mulf %30, %35 : vector<16x64xf32>
    %cst_16 = arith.constant 0.000000e+00 : f32
    %37 = vector.broadcast %cst_16 : f32 to vector<2x64xf32>
    %38 = vector.extract_strided_slice %30 {offsets = [0, 0], sizes = [14, 64], strides = [1, 1]} : vector<16x64xf32> to vector<14x64xf32>
    %39 = tpu.concatenate %37, %38 in 0 : vector<2x64xf32>, vector<14x64xf32> -> vector<16x64xf32>
    %c2_i32 = arith.constant 2 : i32
    %40 = vector.broadcast %c2_i32 : i32 to vector<16x1xi32>
    %41 = arith.cmpi sge, %22, %40 : vector<16x1xi32>
    %cst_17 = arith.constant 0.000000e+00 : f32
    %42 = vector.shape_cast %41 : vector<16x1xi1> to vector<16x1xi1>
    %43 = vector.broadcast %42 : vector<16x1xi1> to vector<16x64xi1>
    %44 = vector.broadcast %cst_17 : f32 to vector<16x64xf32>
    %45 = arith.select %43, %39, %44 : vector<16x64xi1>, vector<16x64xf32>
    %46 = vector.extract_strided_slice %33 {offsets = [0, 0], sizes = [1, 64], strides = [1, 1]} : vector<3x64xf32> to vector<1x64xf32>
    %47 = vector.broadcast %46 : vector<1x64xf32> to vector<16x64xf32>
    %48 = arith.mulf %45, %47 : vector<16x64xf32>
    %49 = arith.addf %36, %48 : vector<16x64xf32>
    %cst_18 = arith.constant 0.000000e+00 : f32
    %50 = vector.broadcast %cst_18 : f32 to vector<1x64xf32>
    %51 = vector.extract_strided_slice %30 {offsets = [0, 0], sizes = [15, 64], strides = [1, 1]} : vector<16x64xf32> to vector<15x64xf32>
    %52 = tpu.concatenate %50, %51 in 0 : vector<1x64xf32>, vector<15x64xf32> -> vector<16x64xf32>
    %c1_i32_19 = arith.constant 1 : i32
    %53 = vector.broadcast %c1_i32_19 : i32 to vector<16x1xi32>
    %54 = arith.cmpi sge, %22, %53 : vector<16x1xi32>
    %cst_20 = arith.constant 0.000000e+00 : f32
    %55 = vector.shape_cast %54 : vector<16x1xi1> to vector<16x1xi1>
    %56 = vector.broadcast %55 : vector<16x1xi1> to vector<16x64xi1>
    %57 = vector.broadcast %cst_20 : f32 to vector<16x64xf32>
    %58 = arith.select %56, %52, %57 : vector<16x64xi1>, vector<16x64xf32>
    %59 = vector.extract_strided_slice %33 {offsets = [1, 0], sizes = [1, 64], strides = [1, 1]} : vector<3x64xf32> to vector<1x64xf32>
    %60 = vector.broadcast %59 : vector<1x64xf32> to vector<16x64xf32>
    %61 = arith.mulf %58, %60 : vector<16x64xf32>
    %62 = arith.addf %49, %61 : vector<16x64xf32>
    %c0_21 = arith.constant 0 : index
    %c5 = arith.constant 5 : index
    %c0_22 = arith.constant 0 : index
    %63 = vector.load %arg3[%c0_21, %c5, %c0_22] : memref<2x8x128xf32, #tpu.memory_space<vmem>>, vector<1x1x64xf32>
    %64 = vector.shape_cast %63 : vector<1x1x64xf32> to vector<1x64xf32>
    %65 = vector.broadcast %64 : vector<1x64xf32> to vector<16x64xf32>
    %66 = arith.addf %62, %65 : vector<16x64xf32>
    %cst_23 = arith.constant 0.000000e+00 : f32
    %67 = vector.broadcast %cst_23 : f32 to vector<16x64xf32>
    %68 = arith.subf %67, %66 : vector<16x64xf32>
    %69 = math.exp %68 : vector<16x64xf32>
    %cst_24 = arith.constant 1.000000e+00 : f32
    %70 = vector.broadcast %cst_24 : f32 to vector<16x64xf32>
    %71 = arith.addf %70, %69 : vector<16x64xf32>
    %cst_25 = arith.constant 1.000000e+00 : f32
    %72 = vector.broadcast %cst_25 : f32 to vector<16x64xf32>
    %73 = arith.divf %72, %71 : vector<16x64xf32>
    %74 = arith.mulf %66, %73 : vector<16x64xf32>
    %c0_26 = arith.constant 0 : index
    %c32 = arith.constant 32 : index
    %c0_27 = arith.constant 0 : index
    %75 = vector.load %arg2[%c0_26, %c32, %c0_27] : memref<2x184x128xf32, #tpu.memory_space<vmem>>, vector<1x64x64xf32>
    %76 = vector.shape_cast %75 : vector<1x64x64xf32> to vector<64x64xf32>
    %cst_28 = arith.constant dense<0.000000e+00> : vector<16x64xf32>
    %77 = tpu.matmul %74, %76, %cst_28 {dimension_numbers = #tpu.dot_dimension_numbers<[1], [0], [0], [1], [0, 0, 1, 1], [], []>, precision = #tpu.contract_precision<fp32>} : vector<16x64xf32>, vector<64x64xf32>, vector<16x64xf32> -> vector<16x64xf32>
    %c0_29 = arith.constant 0 : index
    %c4 = arith.constant 4 : index
    %c0_30 = arith.constant 0 : index
    %78 = vector.load %arg3[%c0_29, %c4, %c0_30] : memref<2x8x128xf32, #tpu.memory_space<vmem>>, vector<1x1x64xf32>
    %79 = vector.shape_cast %78 : vector<1x1x64xf32> to vector<1x64xf32>
    %80 = vector.broadcast %79 : vector<1x64xf32> to vector<16x64xf32>
    %81 = arith.addf %77, %80 : vector<16x64xf32>
    %cst_31 = arith.constant 0.000000e+00 : f32
    %82 = vector.broadcast %cst_31 : f32 to vector<16x64xf32>
    %83 = arith.maximumf %81, %82 : vector<16x64xf32>
    %84 = math.absf %81 : vector<16x64xf32>
    %cst_32 = arith.constant 0.000000e+00 : f32
    %85 = vector.broadcast %cst_32 : f32 to vector<16x64xf32>
    %86 = arith.subf %85, %84 : vector<16x64xf32>
    %87 = math.exp %86 : vector<16x64xf32>
    %88 = math.log1p %87 : vector<16x64xf32>
    %89 = arith.addf %83, %88 : vector<16x64xf32>
    %c0_33 = arith.constant 0 : index
    %c168 = arith.constant 168 : index
    %c0_34 = arith.constant 0 : index
    %90 = vector.load %arg2[%c0_33, %c168, %c0_34] : memref<2x184x128xf32, #tpu.memory_space<vmem>>, vector<1x16x64xf32>
    %91 = vector.shape_cast %90 : vector<1x16x64xf32> to vector<16x64xf32>
    %cst_35 = arith.constant dense<0.000000e+00> : vector<16x16xf32>
    %92 = tpu.matmul %91, %74, %cst_35 {dimension_numbers = #tpu.dot_dimension_numbers<[1], [1], [0], [0], [0, 0, 1, 0], [], []>, precision = #tpu.contract_precision<fp32>} : vector<16x64xf32>, vector<16x64xf32>, vector<16x16xf32> -> vector<16x16xf32>
    %93 = vector.extract_strided_slice %92 {offsets = [0, 0], sizes = [8, 16], strides = [1, 1]} : vector<16x16xf32> to vector<8x16xf32>
    %94 = vector.extract_strided_slice %92 {offsets = [8, 0], sizes = [8, 16], strides = [1, 1]} : vector<16x16xf32> to vector<8x16xf32>
    %c0_36 = arith.constant 0 : index
    %c160 = arith.constant 160 : index
    %c0_37 = arith.constant 0 : index
    %95 = vector.load %arg2[%c0_36, %c160, %c0_37] : memref<2x184x128xf32, #tpu.memory_space<vmem>>, vector<1x8x64xf32>
    %96 = vector.shape_cast %95 : vector<1x8x64xf32> to vector<8x64xf32>
    %97 = math.exp %96 : vector<8x64xf32>
    %cst_38 = arith.constant 0.000000e+00 : f32
    %98 = vector.broadcast %cst_38 : f32 to vector<8x64xf32>
    %99 = arith.subf %98, %97 : vector<8x64xf32>
    %100 = arith.mulf %89, %74 : vector<16x64xf32>
    %c0_39 = arith.constant 0 : index
    %c6 = arith.constant 6 : index
    %c0_40 = arith.constant 0 : index
    %101 = vector.load %arg3[%c0_39, %c6, %c0_40] : memref<2x8x128xf32, #tpu.memory_space<vmem>>, vector<1x1x64xf32>
    %102 = vector.shape_cast %101 : vector<1x1x64xf32> to vector<1x64xf32>
    %103 = vector.extract_strided_slice %89 {offsets = [0, 0], sizes = [1, 64], strides = [1, 1]} : vector<16x64xf32> to vector<1x64xf32>
    %104 = vector.broadcast %103 : vector<1x64xf32> to vector<8x64xf32>
    %105 = arith.mulf %104, %99 : vector<8x64xf32>
    %106 = vector.extract_strided_slice %89 {offsets = [1, 0], sizes = [1, 64], strides = [1, 1]} : vector<16x64xf32> to vector<1x64xf32>
    %107 = vector.broadcast %106 : vector<1x64xf32> to vector<8x64xf32>
    %108 = arith.mulf %107, %99 : vector<8x64xf32>
    %109 = vector.extract_strided_slice %89 {offsets = [2, 0], sizes = [1, 64], strides = [1, 1]} : vector<16x64xf32> to vector<1x64xf32>
    %110 = vector.broadcast %109 : vector<1x64xf32> to vector<8x64xf32>
    %111 = arith.mulf %110, %99 : vector<8x64xf32>
    %112 = vector.extract_strided_slice %89 {offsets = [3, 0], sizes = [1, 64], strides = [1, 1]} : vector<16x64xf32> to vector<1x64xf32>
    %113 = vector.broadcast %112 : vector<1x64xf32> to vector<8x64xf32>
    %114 = arith.mulf %113, %99 : vector<8x64xf32>
    %115 = vector.extract_strided_slice %89 {offsets = [4, 0], sizes = [1, 64], strides = [1, 1]} : vector<16x64xf32> to vector<1x64xf32>
    %116 = vector.broadcast %115 : vector<1x64xf32> to vector<8x64xf32>
    %117 = arith.mulf %116, %99 : vector<8x64xf32>
    %118 = vector.extract_strided_slice %89 {offsets = [5, 0], sizes = [1, 64], strides = [1, 1]} : vector<16x64xf32> to vector<1x64xf32>
    %119 = vector.broadcast %118 : vector<1x64xf32> to vector<8x64xf32>
    %120 = arith.mulf %119, %99 : vector<8x64xf32>
    %121 = vector.extract_strided_slice %89 {offsets = [6, 0], sizes = [1, 64], strides = [1, 1]} : vector<16x64xf32> to vector<1x64xf32>
    %122 = vector.broadcast %121 : vector<1x64xf32> to vector<8x64xf32>
    %123 = arith.mulf %122, %99 : vector<8x64xf32>
    %124 = vector.extract_strided_slice %89 {offsets = [7, 0], sizes = [1, 64], strides = [1, 1]} : vector<16x64xf32> to vector<1x64xf32>
    %125 = vector.broadcast %124 : vector<1x64xf32> to vector<8x64xf32>
    %126 = arith.mulf %125, %99 : vector<8x64xf32>
    %127 = tpu.concatenate %105, %108, %111, %114, %117, %120, %123, %126 in 0 : vector<8x64xf32>, vector<8x64xf32>, vector<8x64xf32>, vector<8x64xf32>, vector<8x64xf32>, vector<8x64xf32>, vector<8x64xf32>, vector<8x64xf32> -> vector<64x64xf32>
    %128 = math.exp %127 : vector<64x64xf32>
    %cst_41 = arith.constant 0.000000e+00 : f32
    %129 = vector.broadcast %cst_41 : f32 to vector<8x64xf32>
    %130 = vector.extract_strided_slice %93 {offsets = [0, 0], sizes = [8, 1], strides = [1, 1]} : vector<8x16xf32> to vector<8x1xf32>
    %131 = vector.extract_strided_slice %100 {offsets = [0, 0], sizes = [1, 64], strides = [1, 1]} : vector<16x64xf32> to vector<1x64xf32>
    %132 = vector.broadcast %130 : vector<8x1xf32> to vector<8x64xf32>
    %133 = vector.broadcast %131 : vector<1x64xf32> to vector<8x64xf32>
    %134 = arith.mulf %132, %133 : vector<8x64xf32>
    %135 = vector.extract_strided_slice %128 {offsets = [0, 0], sizes = [8, 64], strides = [1, 1]} : vector<64x64xf32> to vector<8x64xf32>
    %136 = arith.mulf %135, %129 : vector<8x64xf32>
    %137 = arith.addf %136, %134 : vector<8x64xf32>
    %138 = vector.extract_strided_slice %94 {offsets = [0, 0], sizes = [8, 1], strides = [1, 1]} : vector<8x16xf32> to vector<8x1xf32>
    %139 = vector.broadcast %138 : vector<8x1xf32> to vector<8x64xf32>
    %140 = arith.mulf %139, %137 : vector<8x64xf32>
    %cst_42 = arith.constant dense<0.000000e+00> : vector<64xf32>
    %141 = vector.multi_reduction <add>, %140, %cst_42 [0] : vector<8x64xf32> to vector<64xf32>
    %142 = vector.shape_cast %141 : vector<64xf32> to vector<1x64xf32>
    %143 = vector.extract_strided_slice %93 {offsets = [0, 1], sizes = [8, 1], strides = [1, 1]} : vector<8x16xf32> to vector<8x1xf32>
    %144 = vector.extract_strided_slice %100 {offsets = [1, 0], sizes = [1, 64], strides = [1, 1]} : vector<16x64xf32> to vector<1x64xf32>
    %145 = vector.broadcast %143 : vector<8x1xf32> to vector<8x64xf32>
    %146 = vector.broadcast %144 : vector<1x64xf32> to vector<8x64xf32>
    %147 = arith.mulf %145, %146 : vector<8x64xf32>
    %148 = vector.extract_strided_slice %128 {offsets = [8, 0], sizes = [8, 64], strides = [1, 1]} : vector<64x64xf32> to vector<8x64xf32>
    %149 = arith.mulf %148, %137 : vector<8x64xf32>
    %150 = arith.addf %149, %147 : vector<8x64xf32>
    %151 = vector.extract_strided_slice %94 {offsets = [0, 1], sizes = [8, 1], strides = [1, 1]} : vector<8x16xf32> to vector<8x1xf32>
    %152 = vector.broadcast %151 : vector<8x1xf32> to vector<8x64xf32>
    %153 = arith.mulf %152, %150 : vector<8x64xf32>
    %cst_43 = arith.constant dense<0.000000e+00> : vector<64xf32>
    %154 = vector.multi_reduction <add>, %153, %cst_43 [0] : vector<8x64xf32> to vector<64xf32>
    %155 = vector.shape_cast %154 : vector<64xf32> to vector<1x64xf32>
    %156 = vector.extract_strided_slice %93 {offsets = [0, 2], sizes = [8, 1], strides = [1, 1]} : vector<8x16xf32> to vector<8x1xf32>
    %157 = vector.extract_strided_slice %100 {offsets = [2, 0], sizes = [1, 64], strides = [1, 1]} : vector<16x64xf32> to vector<1x64xf32>
    %158 = vector.broadcast %156 : vector<8x1xf32> to vector<8x64xf32>
    %159 = vector.broadcast %157 : vector<1x64xf32> to vector<8x64xf32>
    %160 = arith.mulf %158, %159 : vector<8x64xf32>
    %161 = vector.extract_strided_slice %128 {offsets = [16, 0], sizes = [8, 64], strides = [1, 1]} : vector<64x64xf32> to vector<8x64xf32>
    %162 = arith.mulf %161, %150 : vector<8x64xf32>
    %163 = arith.addf %162, %160 : vector<8x64xf32>
    %164 = vector.extract_strided_slice %94 {offsets = [0, 2], sizes = [8, 1], strides = [1, 1]} : vector<8x16xf32> to vector<8x1xf32>
    %165 = vector.broadcast %164 : vector<8x1xf32> to vector<8x64xf32>
    %166 = arith.mulf %165, %163 : vector<8x64xf32>
    %cst_44 = arith.constant dense<0.000000e+00> : vector<64xf32>
    %167 = vector.multi_reduction <add>, %166, %cst_44 [0] : vector<8x64xf32> to vector<64xf32>
    %168 = vector.shape_cast %167 : vector<64xf32> to vector<1x64xf32>
    %169 = vector.extract_strided_slice %93 {offsets = [0, 3], sizes = [8, 1], strides = [1, 1]} : vector<8x16xf32> to vector<8x1xf32>
    %170 = vector.extract_strided_slice %100 {offsets = [3, 0], sizes = [1, 64], strides = [1, 1]} : vector<16x64xf32> to vector<1x64xf32>
    %171 = vector.broadcast %169 : vector<8x1xf32> to vector<8x64xf32>
    %172 = vector.broadcast %170 : vector<1x64xf32> to vector<8x64xf32>
    %173 = arith.mulf %171, %172 : vector<8x64xf32>
    %174 = vector.extract_strided_slice %128 {offsets = [24, 0], sizes = [8, 64], strides = [1, 1]} : vector<64x64xf32> to vector<8x64xf32>
    %175 = arith.mulf %174, %163 : vector<8x64xf32>
    %176 = arith.addf %175, %173 : vector<8x64xf32>
    %177 = vector.extract_strided_slice %94 {offsets = [0, 3], sizes = [8, 1], strides = [1, 1]} : vector<8x16xf32> to vector<8x1xf32>
    %178 = vector.broadcast %177 : vector<8x1xf32> to vector<8x64xf32>
    %179 = arith.mulf %178, %176 : vector<8x64xf32>
    %cst_45 = arith.constant dense<0.000000e+00> : vector<64xf32>
    %180 = vector.multi_reduction <add>, %179, %cst_45 [0] : vector<8x64xf32> to vector<64xf32>
    %181 = vector.shape_cast %180 : vector<64xf32> to vector<1x64xf32>
    %182 = vector.extract_strided_slice %93 {offsets = [0, 4], sizes = [8, 1], strides = [1, 1]} : vector<8x16xf32> to vector<8x1xf32>
    %183 = vector.extract_strided_slice %100 {offsets = [4, 0], sizes = [1, 64], strides = [1, 1]} : vector<16x64xf32> to vector<1x64xf32>
    %184 = vector.broadcast %182 : vector<8x1xf32> to vector<8x64xf32>
    %185 = vector.broadcast %183 : vector<1x64xf32> to vector<8x64xf32>
    %186 = arith.mulf %184, %185 : vector<8x64xf32>
    %187 = vector.extract_strided_slice %128 {offsets = [32, 0], sizes = [8, 64], strides = [1, 1]} : vector<64x64xf32> to vector<8x64xf32>
    %188 = arith.mulf %187, %176 : vector<8x64xf32>
    %189 = arith.addf %188, %186 : vector<8x64xf32>
    %190 = vector.extract_strided_slice %94 {offsets = [0, 4], sizes = [8, 1], strides = [1, 1]} : vector<8x16xf32> to vector<8x1xf32>
    %191 = vector.broadcast %190 : vector<8x1xf32> to vector<8x64xf32>
    %192 = arith.mulf %191, %189 : vector<8x64xf32>
    %cst_46 = arith.constant dense<0.000000e+00> : vector<64xf32>
    %193 = vector.multi_reduction <add>, %192, %cst_46 [0] : vector<8x64xf32> to vector<64xf32>
    %194 = vector.shape_cast %193 : vector<64xf32> to vector<1x64xf32>
    %195 = vector.extract_strided_slice %93 {offsets = [0, 5], sizes = [8, 1], strides = [1, 1]} : vector<8x16xf32> to vector<8x1xf32>
    %196 = vector.extract_strided_slice %100 {offsets = [5, 0], sizes = [1, 64], strides = [1, 1]} : vector<16x64xf32> to vector<1x64xf32>
    %197 = vector.broadcast %195 : vector<8x1xf32> to vector<8x64xf32>
    %198 = vector.broadcast %196 : vector<1x64xf32> to vector<8x64xf32>
    %199 = arith.mulf %197, %198 : vector<8x64xf32>
    %200 = vector.extract_strided_slice %128 {offsets = [40, 0], sizes = [8, 64], strides = [1, 1]} : vector<64x64xf32> to vector<8x64xf32>
    %201 = arith.mulf %200, %189 : vector<8x64xf32>
    %202 = arith.addf %201, %199 : vector<8x64xf32>
    %203 = vector.extract_strided_slice %94 {offsets = [0, 5], sizes = [8, 1], strides = [1, 1]} : vector<8x16xf32> to vector<8x1xf32>
    %204 = vector.broadcast %203 : vector<8x1xf32> to vector<8x64xf32>
    %205 = arith.mulf %204, %202 : vector<8x64xf32>
    %cst_47 = arith.constant dense<0.000000e+00> : vector<64xf32>
    %206 = vector.multi_reduction <add>, %205, %cst_47 [0] : vector<8x64xf32> to vector<64xf32>
    %207 = vector.shape_cast %206 : vector<64xf32> to vector<1x64xf32>
    %208 = vector.extract_strided_slice %93 {offsets = [0, 6], sizes = [8, 1], strides = [1, 1]} : vector<8x16xf32> to vector<8x1xf32>
    %209 = vector.extract_strided_slice %100 {offsets = [6, 0], sizes = [1, 64], strides = [1, 1]} : vector<16x64xf32> to vector<1x64xf32>
    %210 = vector.broadcast %208 : vector<8x1xf32> to vector<8x64xf32>
    %211 = vector.broadcast %209 : vector<1x64xf32> to vector<8x64xf32>
    %212 = arith.mulf %210, %211 : vector<8x64xf32>
    %213 = vector.extract_strided_slice %128 {offsets = [48, 0], sizes = [8, 64], strides = [1, 1]} : vector<64x64xf32> to vector<8x64xf32>
    %214 = arith.mulf %213, %202 : vector<8x64xf32>
    %215 = arith.addf %214, %212 : vector<8x64xf32>
    %216 = vector.extract_strided_slice %94 {offsets = [0, 6], sizes = [8, 1], strides = [1, 1]} : vector<8x16xf32> to vector<8x1xf32>
    %217 = vector.broadcast %216 : vector<8x1xf32> to vector<8x64xf32>
    %218 = arith.mulf %217, %215 : vector<8x64xf32>
    %cst_48 = arith.constant dense<0.000000e+00> : vector<64xf32>
    %219 = vector.multi_reduction <add>, %218, %cst_48 [0] : vector<8x64xf32> to vector<64xf32>
    %220 = vector.shape_cast %219 : vector<64xf32> to vector<1x64xf32>
    %221 = vector.extract_strided_slice %93 {offsets = [0, 7], sizes = [8, 1], strides = [1, 1]} : vector<8x16xf32> to vector<8x1xf32>
    %222 = vector.extract_strided_slice %100 {offsets = [7, 0], sizes = [1, 64], strides = [1, 1]} : vector<16x64xf32> to vector<1x64xf32>
    %223 = vector.broadcast %221 : vector<8x1xf32> to vector<8x64xf32>
    %224 = vector.broadcast %222 : vector<1x64xf32> to vector<8x64xf32>
    %225 = arith.mulf %223, %224 : vector<8x64xf32>
    %226 = vector.extract_strided_slice %128 {offsets = [56, 0], sizes = [8, 64], strides = [1, 1]} : vector<64x64xf32> to vector<8x64xf32>
    %227 = arith.mulf %226, %215 : vector<8x64xf32>
    %228 = arith.addf %227, %225 : vector<8x64xf32>
    %229 = vector.extract_strided_slice %94 {offsets = [0, 7], sizes = [8, 1], strides = [1, 1]} : vector<8x16xf32> to vector<8x1xf32>
    %230 = vector.broadcast %229 : vector<8x1xf32> to vector<8x64xf32>
    %231 = arith.mulf %230, %228 : vector<8x64xf32>
    %cst_49 = arith.constant dense<0.000000e+00> : vector<64xf32>
    %232 = vector.multi_reduction <add>, %231, %cst_49 [0] : vector<8x64xf32> to vector<64xf32>
    %233 = vector.shape_cast %232 : vector<64xf32> to vector<1x64xf32>
    %234 = vector.extract_strided_slice %89 {offsets = [8, 0], sizes = [1, 64], strides = [1, 1]} : vector<16x64xf32> to vector<1x64xf32>
    %235 = vector.broadcast %234 : vector<1x64xf32> to vector<8x64xf32>
    %236 = arith.mulf %235, %99 : vector<8x64xf32>
    %237 = vector.extract_strided_slice %89 {offsets = [9, 0], sizes = [1, 64], strides = [1, 1]} : vector<16x64xf32> to vector<1x64xf32>
    %238 = vector.broadcast %237 : vector<1x64xf32> to vector<8x64xf32>
    %239 = arith.mulf %238, %99 : vector<8x64xf32>
    %240 = vector.extract_strided_slice %89 {offsets = [10, 0], sizes = [1, 64], strides = [1, 1]} : vector<16x64xf32> to vector<1x64xf32>
    %241 = vector.broadcast %240 : vector<1x64xf32> to vector<8x64xf32>
    %242 = arith.mulf %241, %99 : vector<8x64xf32>
    %243 = vector.extract_strided_slice %89 {offsets = [11, 0], sizes = [1, 64], strides = [1, 1]} : vector<16x64xf32> to vector<1x64xf32>
    %244 = vector.broadcast %243 : vector<1x64xf32> to vector<8x64xf32>
    %245 = arith.mulf %244, %99 : vector<8x64xf32>
    %246 = vector.extract_strided_slice %89 {offsets = [12, 0], sizes = [1, 64], strides = [1, 1]} : vector<16x64xf32> to vector<1x64xf32>
    %247 = vector.broadcast %246 : vector<1x64xf32> to vector<8x64xf32>
    %248 = arith.mulf %247, %99 : vector<8x64xf32>
    %249 = vector.extract_strided_slice %89 {offsets = [13, 0], sizes = [1, 64], strides = [1, 1]} : vector<16x64xf32> to vector<1x64xf32>
    %250 = vector.broadcast %249 : vector<1x64xf32> to vector<8x64xf32>
    %251 = arith.mulf %250, %99 : vector<8x64xf32>
    %252 = vector.extract_strided_slice %89 {offsets = [14, 0], sizes = [1, 64], strides = [1, 1]} : vector<16x64xf32> to vector<1x64xf32>
    %253 = vector.broadcast %252 : vector<1x64xf32> to vector<8x64xf32>
    %254 = arith.mulf %253, %99 : vector<8x64xf32>
    %255 = vector.extract_strided_slice %89 {offsets = [15, 0], sizes = [1, 64], strides = [1, 1]} : vector<16x64xf32> to vector<1x64xf32>
    %256 = vector.broadcast %255 : vector<1x64xf32> to vector<8x64xf32>
    %257 = arith.mulf %256, %99 : vector<8x64xf32>
    %258 = tpu.concatenate %236, %239, %242, %245, %248, %251, %254, %257 in 0 : vector<8x64xf32>, vector<8x64xf32>, vector<8x64xf32>, vector<8x64xf32>, vector<8x64xf32>, vector<8x64xf32>, vector<8x64xf32>, vector<8x64xf32> -> vector<64x64xf32>
    %259 = math.exp %258 : vector<64x64xf32>
    %cst_50 = arith.constant 0.000000e+00 : f32
    %260 = vector.broadcast %cst_50 : f32 to vector<8x64xf32>
    %261 = vector.extract_strided_slice %93 {offsets = [0, 8], sizes = [8, 1], strides = [1, 1]} : vector<8x16xf32> to vector<8x1xf32>
    %262 = vector.extract_strided_slice %100 {offsets = [8, 0], sizes = [1, 64], strides = [1, 1]} : vector<16x64xf32> to vector<1x64xf32>
    %263 = vector.broadcast %261 : vector<8x1xf32> to vector<8x64xf32>
    %264 = vector.broadcast %262 : vector<1x64xf32> to vector<8x64xf32>
    %265 = arith.mulf %263, %264 : vector<8x64xf32>
    %266 = vector.extract_strided_slice %259 {offsets = [0, 0], sizes = [8, 64], strides = [1, 1]} : vector<64x64xf32> to vector<8x64xf32>
    %267 = arith.mulf %266, %260 : vector<8x64xf32>
    %268 = arith.addf %267, %265 : vector<8x64xf32>
    %269 = vector.extract_strided_slice %94 {offsets = [0, 8], sizes = [8, 1], strides = [1, 1]} : vector<8x16xf32> to vector<8x1xf32>
    %270 = vector.broadcast %269 : vector<8x1xf32> to vector<8x64xf32>
    %271 = arith.mulf %270, %268 : vector<8x64xf32>
    %cst_51 = arith.constant dense<0.000000e+00> : vector<64xf32>
    %272 = vector.multi_reduction <add>, %271, %cst_51 [0] : vector<8x64xf32> to vector<64xf32>
    %273 = vector.shape_cast %272 : vector<64xf32> to vector<1x64xf32>
    %274 = vector.extract_strided_slice %93 {offsets = [0, 9], sizes = [8, 1], strides = [1, 1]} : vector<8x16xf32> to vector<8x1xf32>
    %275 = vector.extract_strided_slice %100 {offsets = [9, 0], sizes = [1, 64], strides = [1, 1]} : vector<16x64xf32> to vector<1x64xf32>
    %276 = vector.broadcast %274 : vector<8x1xf32> to vector<8x64xf32>
    %277 = vector.broadcast %275 : vector<1x64xf32> to vector<8x64xf32>
    %278 = arith.mulf %276, %277 : vector<8x64xf32>
    %279 = vector.extract_strided_slice %259 {offsets = [8, 0], sizes = [8, 64], strides = [1, 1]} : vector<64x64xf32> to vector<8x64xf32>
    %280 = arith.mulf %279, %268 : vector<8x64xf32>
    %281 = arith.addf %280, %278 : vector<8x64xf32>
    %282 = vector.extract_strided_slice %94 {offsets = [0, 9], sizes = [8, 1], strides = [1, 1]} : vector<8x16xf32> to vector<8x1xf32>
    %283 = vector.broadcast %282 : vector<8x1xf32> to vector<8x64xf32>
    %284 = arith.mulf %283, %281 : vector<8x64xf32>
    %cst_52 = arith.constant dense<0.000000e+00> : vector<64xf32>
    %285 = vector.multi_reduction <add>, %284, %cst_52 [0] : vector<8x64xf32> to vector<64xf32>
    %286 = vector.shape_cast %285 : vector<64xf32> to vector<1x64xf32>
    %287 = vector.extract_strided_slice %93 {offsets = [0, 10], sizes = [8, 1], strides = [1, 1]} : vector<8x16xf32> to vector<8x1xf32>
    %288 = vector.extract_strided_slice %100 {offsets = [10, 0], sizes = [1, 64], strides = [1, 1]} : vector<16x64xf32> to vector<1x64xf32>
    %289 = vector.broadcast %287 : vector<8x1xf32> to vector<8x64xf32>
    %290 = vector.broadcast %288 : vector<1x64xf32> to vector<8x64xf32>
    %291 = arith.mulf %289, %290 : vector<8x64xf32>
    %292 = vector.extract_strided_slice %259 {offsets = [16, 0], sizes = [8, 64], strides = [1, 1]} : vector<64x64xf32> to vector<8x64xf32>
    %293 = arith.mulf %292, %281 : vector<8x64xf32>
    %294 = arith.addf %293, %291 : vector<8x64xf32>
    %295 = vector.extract_strided_slice %94 {offsets = [0, 10], sizes = [8, 1], strides = [1, 1]} : vector<8x16xf32> to vector<8x1xf32>
    %296 = vector.broadcast %295 : vector<8x1xf32> to vector<8x64xf32>
    %297 = arith.mulf %296, %294 : vector<8x64xf32>
    %cst_53 = arith.constant dense<0.000000e+00> : vector<64xf32>
    %298 = vector.multi_reduction <add>, %297, %cst_53 [0] : vector<8x64xf32> to vector<64xf32>
    %299 = vector.shape_cast %298 : vector<64xf32> to vector<1x64xf32>
    %300 = vector.extract_strided_slice %93 {offsets = [0, 11], sizes = [8, 1], strides = [1, 1]} : vector<8x16xf32> to vector<8x1xf32>
    %301 = vector.extract_strided_slice %100 {offsets = [11, 0], sizes = [1, 64], strides = [1, 1]} : vector<16x64xf32> to vector<1x64xf32>
    %302 = vector.broadcast %300 : vector<8x1xf32> to vector<8x64xf32>
    %303 = vector.broadcast %301 : vector<1x64xf32> to vector<8x64xf32>
    %304 = arith.mulf %302, %303 : vector<8x64xf32>
    %305 = vector.extract_strided_slice %259 {offsets = [24, 0], sizes = [8, 64], strides = [1, 1]} : vector<64x64xf32> to vector<8x64xf32>
    %306 = arith.mulf %305, %294 : vector<8x64xf32>
    %307 = arith.addf %306, %304 : vector<8x64xf32>
    %308 = vector.extract_strided_slice %94 {offsets = [0, 11], sizes = [8, 1], strides = [1, 1]} : vector<8x16xf32> to vector<8x1xf32>
    %309 = vector.broadcast %308 : vector<8x1xf32> to vector<8x64xf32>
    %310 = arith.mulf %309, %307 : vector<8x64xf32>
    %cst_54 = arith.constant dense<0.000000e+00> : vector<64xf32>
    %311 = vector.multi_reduction <add>, %310, %cst_54 [0] : vector<8x64xf32> to vector<64xf32>
    %312 = vector.shape_cast %311 : vector<64xf32> to vector<1x64xf32>
    %313 = vector.extract_strided_slice %93 {offsets = [0, 12], sizes = [8, 1], strides = [1, 1]} : vector<8x16xf32> to vector<8x1xf32>
    %314 = vector.extract_strided_slice %100 {offsets = [12, 0], sizes = [1, 64], strides = [1, 1]} : vector<16x64xf32> to vector<1x64xf32>
    %315 = vector.broadcast %313 : vector<8x1xf32> to vector<8x64xf32>
    %316 = vector.broadcast %314 : vector<1x64xf32> to vector<8x64xf32>
    %317 = arith.mulf %315, %316 : vector<8x64xf32>
    %318 = vector.extract_strided_slice %259 {offsets = [32, 0], sizes = [8, 64], strides = [1, 1]} : vector<64x64xf32> to vector<8x64xf32>
    %319 = arith.mulf %318, %307 : vector<8x64xf32>
    %320 = arith.addf %319, %317 : vector<8x64xf32>
    %321 = vector.extract_strided_slice %94 {offsets = [0, 12], sizes = [8, 1], strides = [1, 1]} : vector<8x16xf32> to vector<8x1xf32>
    %322 = vector.broadcast %321 : vector<8x1xf32> to vector<8x64xf32>
    %323 = arith.mulf %322, %320 : vector<8x64xf32>
    %cst_55 = arith.constant dense<0.000000e+00> : vector<64xf32>
    %324 = vector.multi_reduction <add>, %323, %cst_55 [0] : vector<8x64xf32> to vector<64xf32>
    %325 = vector.shape_cast %324 : vector<64xf32> to vector<1x64xf32>
    %326 = vector.extract_strided_slice %93 {offsets = [0, 13], sizes = [8, 1], strides = [1, 1]} : vector<8x16xf32> to vector<8x1xf32>
    %327 = vector.extract_strided_slice %100 {offsets = [13, 0], sizes = [1, 64], strides = [1, 1]} : vector<16x64xf32> to vector<1x64xf32>
    %328 = vector.broadcast %326 : vector<8x1xf32> to vector<8x64xf32>
    %329 = vector.broadcast %327 : vector<1x64xf32> to vector<8x64xf32>
    %330 = arith.mulf %328, %329 : vector<8x64xf32>
    %331 = vector.extract_strided_slice %259 {offsets = [40, 0], sizes = [8, 64], strides = [1, 1]} : vector<64x64xf32> to vector<8x64xf32>
    %332 = arith.mulf %331, %320 : vector<8x64xf32>
    %333 = arith.addf %332, %330 : vector<8x64xf32>
    %334 = vector.extract_strided_slice %94 {offsets = [0, 13], sizes = [8, 1], strides = [1, 1]} : vector<8x16xf32> to vector<8x1xf32>
    %335 = vector.broadcast %334 : vector<8x1xf32> to vector<8x64xf32>
    %336 = arith.mulf %335, %333 : vector<8x64xf32>
    %cst_56 = arith.constant dense<0.000000e+00> : vector<64xf32>
    %337 = vector.multi_reduction <add>, %336, %cst_56 [0] : vector<8x64xf32> to vector<64xf32>
    %338 = vector.shape_cast %337 : vector<64xf32> to vector<1x64xf32>
    %339 = vector.extract_strided_slice %93 {offsets = [0, 14], sizes = [8, 1], strides = [1, 1]} : vector<8x16xf32> to vector<8x1xf32>
    %340 = vector.extract_strided_slice %100 {offsets = [14, 0], sizes = [1, 64], strides = [1, 1]} : vector<16x64xf32> to vector<1x64xf32>
    %341 = vector.broadcast %339 : vector<8x1xf32> to vector<8x64xf32>
    %342 = vector.broadcast %340 : vector<1x64xf32> to vector<8x64xf32>
    %343 = arith.mulf %341, %342 : vector<8x64xf32>
    %344 = vector.extract_strided_slice %259 {offsets = [48, 0], sizes = [8, 64], strides = [1, 1]} : vector<64x64xf32> to vector<8x64xf32>
    %345 = arith.mulf %344, %333 : vector<8x64xf32>
    %346 = arith.addf %345, %343 : vector<8x64xf32>
    %347 = vector.extract_strided_slice %94 {offsets = [0, 14], sizes = [8, 1], strides = [1, 1]} : vector<8x16xf32> to vector<8x1xf32>
    %348 = vector.broadcast %347 : vector<8x1xf32> to vector<8x64xf32>
    %349 = arith.mulf %348, %346 : vector<8x64xf32>
    %cst_57 = arith.constant dense<0.000000e+00> : vector<64xf32>
    %350 = vector.multi_reduction <add>, %349, %cst_57 [0] : vector<8x64xf32> to vector<64xf32>
    %351 = vector.shape_cast %350 : vector<64xf32> to vector<1x64xf32>
    %352 = vector.extract_strided_slice %93 {offsets = [0, 15], sizes = [8, 1], strides = [1, 1]} : vector<8x16xf32> to vector<8x1xf32>
    %353 = vector.extract_strided_slice %100 {offsets = [15, 0], sizes = [1, 64], strides = [1, 1]} : vector<16x64xf32> to vector<1x64xf32>
    %354 = vector.broadcast %352 : vector<8x1xf32> to vector<8x64xf32>
    %355 = vector.broadcast %353 : vector<1x64xf32> to vector<8x64xf32>
    %356 = arith.mulf %354, %355 : vector<8x64xf32>
    %357 = vector.extract_strided_slice %259 {offsets = [56, 0], sizes = [8, 64], strides = [1, 1]} : vector<64x64xf32> to vector<8x64xf32>
    %358 = arith.mulf %357, %346 : vector<8x64xf32>
    %359 = arith.addf %358, %356 : vector<8x64xf32>
    %360 = vector.extract_strided_slice %94 {offsets = [0, 15], sizes = [8, 1], strides = [1, 1]} : vector<8x16xf32> to vector<8x1xf32>
    %361 = vector.broadcast %360 : vector<8x1xf32> to vector<8x64xf32>
    %362 = arith.mulf %361, %359 : vector<8x64xf32>
    %cst_58 = arith.constant dense<0.000000e+00> : vector<64xf32>
    %363 = vector.multi_reduction <add>, %362, %cst_58 [0] : vector<8x64xf32> to vector<64xf32>
    %364 = vector.shape_cast %363 : vector<64xf32> to vector<1x64xf32>
    %365 = vector.broadcast %102 : vector<1x64xf32> to vector<16x64xf32>
    %366 = arith.mulf %365, %74 : vector<16x64xf32>
    %367 = tpu.concatenate %142, %155, %168, %181, %194, %207, %220, %233, %273, %286, %299, %312, %325, %338, %351, %364 in 0 : vector<1x64xf32>, vector<1x64xf32>, vector<1x64xf32>, vector<1x64xf32>, vector<1x64xf32>, vector<1x64xf32>, vector<1x64xf32>, vector<1x64xf32>, vector<1x64xf32>, vector<1x64xf32>, vector<1x64xf32>, vector<1x64xf32>, vector<1x64xf32>, vector<1x64xf32>, vector<1x64xf32>, vector<1x64xf32> -> vector<16x64xf32>
    %368 = arith.addf %366, %367 : vector<16x64xf32>
    %cst_59 = arith.constant 0.000000e+00 : f32
    %369 = vector.broadcast %cst_59 : f32 to vector<16x64xf32>
    %370 = arith.subf %369, %31 : vector<16x64xf32>
    %371 = math.exp %370 : vector<16x64xf32>
    %cst_60 = arith.constant 1.000000e+00 : f32
    %372 = vector.broadcast %cst_60 : f32 to vector<16x64xf32>
    %373 = arith.addf %372, %371 : vector<16x64xf32>
    %cst_61 = arith.constant 1.000000e+00 : f32
    %374 = vector.broadcast %cst_61 : f32 to vector<16x64xf32>
    %375 = arith.divf %374, %373 : vector<16x64xf32>
    %376 = arith.mulf %31, %375 : vector<16x64xf32>
    %377 = arith.mulf %368, %376 : vector<16x64xf32>
    %c0_62 = arith.constant 0 : index
    %c96 = arith.constant 96 : index
    %c0_63 = arith.constant 0 : index
    %378 = vector.load %arg2[%c0_62, %c96, %c0_63] : memref<2x184x128xf32, #tpu.memory_space<vmem>>, vector<1x64x32xf32>
    %379 = vector.shape_cast %378 : vector<1x64x32xf32> to vector<64x32xf32>
    %cst_64 = arith.constant dense<0.000000e+00> : vector<16x32xf32>
    %380 = tpu.matmul %377, %379, %cst_64 {dimension_numbers = #tpu.dot_dimension_numbers<[1], [0], [0], [1], [0, 0, 1, 1], [], []>, precision = #tpu.contract_precision<fp32>} : vector<16x64xf32>, vector<64x32xf32>, vector<16x32xf32> -> vector<16x32xf32>
    %c0_65 = arith.constant 0 : index
    %c7 = arith.constant 7 : index
    %c0_66 = arith.constant 0 : index
    %381 = vector.load %arg3[%c0_65, %c7, %c0_66] : memref<2x8x128xf32, #tpu.memory_space<vmem>>, vector<1x1x32xf32>
    %382 = vector.shape_cast %381 : vector<1x1x32xf32> to vector<1x32xf32>
    %383 = vector.broadcast %382 : vector<1x32xf32> to vector<16x32xf32>
    %384 = arith.addf %380, %383 : vector<16x32xf32>
    %385 = arith.addf %384, %5 : vector<16x32xf32>
    %c1 = arith.constant 1 : index
    %c0_67 = arith.constant 0 : index
    %c0_68 = arith.constant 0 : index
    %386 = vector.load %arg2[%c1, %c0_67, %c0_68] : memref<2x184x128xf32, #tpu.memory_space<vmem>>, vector<1x32x128xf32>
    %387 = vector.shape_cast %386 : vector<1x32x128xf32> to vector<32x128xf32>
    %cst_69 = arith.constant dense<0.000000e+00> : vector<16x128xf32>
    %388 = tpu.matmul %385, %387, %cst_69 {dimension_numbers = #tpu.dot_dimension_numbers<[1], [0], [0], [1], [0, 0, 1, 1], [], []>, precision = #tpu.contract_precision<fp32>} : vector<16x32xf32>, vector<32x128xf32>, vector<16x128xf32> -> vector<16x128xf32>
    %c1_70 = arith.constant 1 : index
    %c3_71 = arith.constant 3 : index
    %c0_72 = arith.constant 0 : index
    %389 = vector.load %arg3[%c1_70, %c3_71, %c0_72] : memref<2x8x128xf32, #tpu.memory_space<vmem>>, vector<1x1x128xf32>
    %390 = vector.shape_cast %389 : vector<1x1x128xf32> to vector<1x128xf32>
    %391 = vector.broadcast %390 : vector<1x128xf32> to vector<16x128xf32>
    %392 = arith.addf %388, %391 : vector<16x128xf32>
    %393 = vector.extract_strided_slice %392 {offsets = [0, 0], sizes = [16, 64], strides = [1, 1]} : vector<16x128xf32> to vector<16x64xf32>
    %394 = vector.extract_strided_slice %392 {offsets = [0, 64], sizes = [16, 64], strides = [1, 1]} : vector<16x128xf32> to vector<16x64xf32>
    %c1_73 = arith.constant 1 : index
    %c0_74 = arith.constant 0 : index
    %c0_75 = arith.constant 0 : index
    %395 = vector.load %arg3[%c1_73, %c0_74, %c0_75] : memref<2x8x128xf32, #tpu.memory_space<vmem>>, vector<1x3x64xf32>
    %396 = vector.shape_cast %395 : vector<1x3x64xf32> to vector<3x64xf32>
    %397 = vector.extract_strided_slice %396 {offsets = [2, 0], sizes = [1, 64], strides = [1, 1]} : vector<3x64xf32> to vector<1x64xf32>
    %398 = vector.broadcast %397 : vector<1x64xf32> to vector<16x64xf32>
    %399 = arith.mulf %393, %398 : vector<16x64xf32>
    %cst_76 = arith.constant 0.000000e+00 : f32
    %400 = vector.broadcast %cst_76 : f32 to vector<2x64xf32>
    %401 = vector.extract_strided_slice %393 {offsets = [0, 0], sizes = [14, 64], strides = [1, 1]} : vector<16x64xf32> to vector<14x64xf32>
    %402 = tpu.concatenate %400, %401 in 0 : vector<2x64xf32>, vector<14x64xf32> -> vector<16x64xf32>
    %c2_i32_77 = arith.constant 2 : i32
    %403 = vector.broadcast %c2_i32_77 : i32 to vector<16x1xi32>
    %404 = arith.cmpi sge, %22, %403 : vector<16x1xi32>
    %cst_78 = arith.constant 0.000000e+00 : f32
    %405 = vector.shape_cast %404 : vector<16x1xi1> to vector<16x1xi1>
    %406 = vector.broadcast %405 : vector<16x1xi1> to vector<16x64xi1>
    %407 = vector.broadcast %cst_78 : f32 to vector<16x64xf32>
    %408 = arith.select %406, %402, %407 : vector<16x64xi1>, vector<16x64xf32>
    %409 = vector.extract_strided_slice %396 {offsets = [0, 0], sizes = [1, 64], strides = [1, 1]} : vector<3x64xf32> to vector<1x64xf32>
    %410 = vector.broadcast %409 : vector<1x64xf32> to vector<16x64xf32>
    %411 = arith.mulf %408, %410 : vector<16x64xf32>
    %412 = arith.addf %399, %411 : vector<16x64xf32>
    %cst_79 = arith.constant 0.000000e+00 : f32
    %413 = vector.broadcast %cst_79 : f32 to vector<1x64xf32>
    %414 = vector.extract_strided_slice %393 {offsets = [0, 0], sizes = [15, 64], strides = [1, 1]} : vector<16x64xf32> to vector<15x64xf32>
    %415 = tpu.concatenate %413, %414 in 0 : vector<1x64xf32>, vector<15x64xf32> -> vector<16x64xf32>
    %c1_i32_80 = arith.constant 1 : i32
    %416 = vector.broadcast %c1_i32_80 : i32 to vector<16x1xi32>
    %417 = arith.cmpi sge, %22, %416 : vector<16x1xi32>
    %cst_81 = arith.constant 0.000000e+00 : f32
    %418 = vector.shape_cast %417 : vector<16x1xi1> to vector<16x1xi1>
    %419 = vector.broadcast %418 : vector<16x1xi1> to vector<16x64xi1>
    %420 = vector.broadcast %cst_81 : f32 to vector<16x64xf32>
    %421 = arith.select %419, %415, %420 : vector<16x64xi1>, vector<16x64xf32>
    %422 = vector.extract_strided_slice %396 {offsets = [1, 0], sizes = [1, 64], strides = [1, 1]} : vector<3x64xf32> to vector<1x64xf32>
    %423 = vector.broadcast %422 : vector<1x64xf32> to vector<16x64xf32>
    %424 = arith.mulf %421, %423 : vector<16x64xf32>
    %425 = arith.addf %412, %424 : vector<16x64xf32>
    %c1_82 = arith.constant 1 : index
    %c5_83 = arith.constant 5 : index
    %c0_84 = arith.constant 0 : index
    %426 = vector.load %arg3[%c1_82, %c5_83, %c0_84] : memref<2x8x128xf32, #tpu.memory_space<vmem>>, vector<1x1x64xf32>
    %427 = vector.shape_cast %426 : vector<1x1x64xf32> to vector<1x64xf32>
    %428 = vector.broadcast %427 : vector<1x64xf32> to vector<16x64xf32>
    %429 = arith.addf %425, %428 : vector<16x64xf32>
    %cst_85 = arith.constant 0.000000e+00 : f32
    %430 = vector.broadcast %cst_85 : f32 to vector<16x64xf32>
    %431 = arith.subf %430, %429 : vector<16x64xf32>
    %432 = math.exp %431 : vector<16x64xf32>
    %cst_86 = arith.constant 1.000000e+00 : f32
    %433 = vector.broadcast %cst_86 : f32 to vector<16x64xf32>
    %434 = arith.addf %433, %432 : vector<16x64xf32>
    %cst_87 = arith.constant 1.000000e+00 : f32
    %435 = vector.broadcast %cst_87 : f32 to vector<16x64xf32>
    %436 = arith.divf %435, %434 : vector<16x64xf32>
    %437 = arith.mulf %429, %436 : vector<16x64xf32>
    %c1_88 = arith.constant 1 : index
    %c32_89 = arith.constant 32 : index
    %c0_90 = arith.constant 0 : index
    %438 = vector.load %arg2[%c1_88, %c32_89, %c0_90] : memref<2x184x128xf32, #tpu.memory_space<vmem>>, vector<1x64x64xf32>
    %439 = vector.shape_cast %438 : vector<1x64x64xf32> to vector<64x64xf32>
    %cst_91 = arith.constant dense<0.000000e+00> : vector<16x64xf32>
    %440 = tpu.matmul %437, %439, %cst_91 {dimension_numbers = #tpu.dot_dimension_numbers<[1], [0], [0], [1], [0, 0, 1, 1], [], []>, precision = #tpu.contract_precision<fp32>} : vector<16x64xf32>, vector<64x64xf32>, vector<16x64xf32> -> vector<16x64xf32>
    %c1_92 = arith.constant 1 : index
    %c4_93 = arith.constant 4 : index
    %c0_94 = arith.constant 0 : index
    %441 = vector.load %arg3[%c1_92, %c4_93, %c0_94] : memref<2x8x128xf32, #tpu.memory_space<vmem>>, vector<1x1x64xf32>
    %442 = vector.shape_cast %441 : vector<1x1x64xf32> to vector<1x64xf32>
    %443 = vector.broadcast %442 : vector<1x64xf32> to vector<16x64xf32>
    %444 = arith.addf %440, %443 : vector<16x64xf32>
    %cst_95 = arith.constant 0.000000e+00 : f32
    %445 = vector.broadcast %cst_95 : f32 to vector<16x64xf32>
    %446 = arith.maximumf %444, %445 : vector<16x64xf32>
    %447 = math.absf %444 : vector<16x64xf32>
    %cst_96 = arith.constant 0.000000e+00 : f32
    %448 = vector.broadcast %cst_96 : f32 to vector<16x64xf32>
    %449 = arith.subf %448, %447 : vector<16x64xf32>
    %450 = math.exp %449 : vector<16x64xf32>
    %451 = math.log1p %450 : vector<16x64xf32>
    %452 = arith.addf %446, %451 : vector<16x64xf32>
    %c1_97 = arith.constant 1 : index
    %c168_98 = arith.constant 168 : index
    %c0_99 = arith.constant 0 : index
    %453 = vector.load %arg2[%c1_97, %c168_98, %c0_99] : memref<2x184x128xf32, #tpu.memory_space<vmem>>, vector<1x16x64xf32>
    %454 = vector.shape_cast %453 : vector<1x16x64xf32> to vector<16x64xf32>
    %cst_100 = arith.constant dense<0.000000e+00> : vector<16x16xf32>
    %455 = tpu.matmul %454, %437, %cst_100 {dimension_numbers = #tpu.dot_dimension_numbers<[1], [1], [0], [0], [0, 0, 1, 0], [], []>, precision = #tpu.contract_precision<fp32>} : vector<16x64xf32>, vector<16x64xf32>, vector<16x16xf32> -> vector<16x16xf32>
    %456 = vector.extract_strided_slice %455 {offsets = [0, 0], sizes = [8, 16], strides = [1, 1]} : vector<16x16xf32> to vector<8x16xf32>
    %457 = vector.extract_strided_slice %455 {offsets = [8, 0], sizes = [8, 16], strides = [1, 1]} : vector<16x16xf32> to vector<8x16xf32>
    %c1_101 = arith.constant 1 : index
    %c160_102 = arith.constant 160 : index
    %c0_103 = arith.constant 0 : index
    %458 = vector.load %arg2[%c1_101, %c160_102, %c0_103] : memref<2x184x128xf32, #tpu.memory_space<vmem>>, vector<1x8x64xf32>
    %459 = vector.shape_cast %458 : vector<1x8x64xf32> to vector<8x64xf32>
    %460 = math.exp %459 : vector<8x64xf32>
    %cst_104 = arith.constant 0.000000e+00 : f32
    %461 = vector.broadcast %cst_104 : f32 to vector<8x64xf32>
    %462 = arith.subf %461, %460 : vector<8x64xf32>
    %463 = arith.mulf %452, %437 : vector<16x64xf32>
    %c1_105 = arith.constant 1 : index
    %c6_106 = arith.constant 6 : index
    %c0_107 = arith.constant 0 : index
    %464 = vector.load %arg3[%c1_105, %c6_106, %c0_107] : memref<2x8x128xf32, #tpu.memory_space<vmem>>, vector<1x1x64xf32>
    %465 = vector.shape_cast %464 : vector<1x1x64xf32> to vector<1x64xf32>
    %466 = vector.extract_strided_slice %452 {offsets = [0, 0], sizes = [1, 64], strides = [1, 1]} : vector<16x64xf32> to vector<1x64xf32>
    %467 = vector.broadcast %466 : vector<1x64xf32> to vector<8x64xf32>
    %468 = arith.mulf %467, %462 : vector<8x64xf32>
    %469 = vector.extract_strided_slice %452 {offsets = [1, 0], sizes = [1, 64], strides = [1, 1]} : vector<16x64xf32> to vector<1x64xf32>
    %470 = vector.broadcast %469 : vector<1x64xf32> to vector<8x64xf32>
    %471 = arith.mulf %470, %462 : vector<8x64xf32>
    %472 = vector.extract_strided_slice %452 {offsets = [2, 0], sizes = [1, 64], strides = [1, 1]} : vector<16x64xf32> to vector<1x64xf32>
    %473 = vector.broadcast %472 : vector<1x64xf32> to vector<8x64xf32>
    %474 = arith.mulf %473, %462 : vector<8x64xf32>
    %475 = vector.extract_strided_slice %452 {offsets = [3, 0], sizes = [1, 64], strides = [1, 1]} : vector<16x64xf32> to vector<1x64xf32>
    %476 = vector.broadcast %475 : vector<1x64xf32> to vector<8x64xf32>
    %477 = arith.mulf %476, %462 : vector<8x64xf32>
    %478 = vector.extract_strided_slice %452 {offsets = [4, 0], sizes = [1, 64], strides = [1, 1]} : vector<16x64xf32> to vector<1x64xf32>
    %479 = vector.broadcast %478 : vector<1x64xf32> to vector<8x64xf32>
    %480 = arith.mulf %479, %462 : vector<8x64xf32>
    %481 = vector.extract_strided_slice %452 {offsets = [5, 0], sizes = [1, 64], strides = [1, 1]} : vector<16x64xf32> to vector<1x64xf32>
    %482 = vector.broadcast %481 : vector<1x64xf32> to vector<8x64xf32>
    %483 = arith.mulf %482, %462 : vector<8x64xf32>
    %484 = vector.extract_strided_slice %452 {offsets = [6, 0], sizes = [1, 64], strides = [1, 1]} : vector<16x64xf32> to vector<1x64xf32>
    %485 = vector.broadcast %484 : vector<1x64xf32> to vector<8x64xf32>
    %486 = arith.mulf %485, %462 : vector<8x64xf32>
    %487 = vector.extract_strided_slice %452 {offsets = [7, 0], sizes = [1, 64], strides = [1, 1]} : vector<16x64xf32> to vector<1x64xf32>
    %488 = vector.broadcast %487 : vector<1x64xf32> to vector<8x64xf32>
    %489 = arith.mulf %488, %462 : vector<8x64xf32>
    %490 = tpu.concatenate %468, %471, %474, %477, %480, %483, %486, %489 in 0 : vector<8x64xf32>, vector<8x64xf32>, vector<8x64xf32>, vector<8x64xf32>, vector<8x64xf32>, vector<8x64xf32>, vector<8x64xf32>, vector<8x64xf32> -> vector<64x64xf32>
    %491 = math.exp %490 : vector<64x64xf32>
    %cst_108 = arith.constant 0.000000e+00 : f32
    %492 = vector.broadcast %cst_108 : f32 to vector<8x64xf32>
    %493 = vector.extract_strided_slice %456 {offsets = [0, 0], sizes = [8, 1], strides = [1, 1]} : vector<8x16xf32> to vector<8x1xf32>
    %494 = vector.extract_strided_slice %463 {offsets = [0, 0], sizes = [1, 64], strides = [1, 1]} : vector<16x64xf32> to vector<1x64xf32>
    %495 = vector.broadcast %493 : vector<8x1xf32> to vector<8x64xf32>
    %496 = vector.broadcast %494 : vector<1x64xf32> to vector<8x64xf32>
    %497 = arith.mulf %495, %496 : vector<8x64xf32>
    %498 = vector.extract_strided_slice %491 {offsets = [0, 0], sizes = [8, 64], strides = [1, 1]} : vector<64x64xf32> to vector<8x64xf32>
    %499 = arith.mulf %498, %492 : vector<8x64xf32>
    %500 = arith.addf %499, %497 : vector<8x64xf32>
    %501 = vector.extract_strided_slice %457 {offsets = [0, 0], sizes = [8, 1], strides = [1, 1]} : vector<8x16xf32> to vector<8x1xf32>
    %502 = vector.broadcast %501 : vector<8x1xf32> to vector<8x64xf32>
    %503 = arith.mulf %502, %500 : vector<8x64xf32>
    %cst_109 = arith.constant dense<0.000000e+00> : vector<64xf32>
    %504 = vector.multi_reduction <add>, %503, %cst_109 [0] : vector<8x64xf32> to vector<64xf32>
    %505 = vector.shape_cast %504 : vector<64xf32> to vector<1x64xf32>
    %506 = vector.extract_strided_slice %456 {offsets = [0, 1], sizes = [8, 1], strides = [1, 1]} : vector<8x16xf32> to vector<8x1xf32>
    %507 = vector.extract_strided_slice %463 {offsets = [1, 0], sizes = [1, 64], strides = [1, 1]} : vector<16x64xf32> to vector<1x64xf32>
    %508 = vector.broadcast %506 : vector<8x1xf32> to vector<8x64xf32>
    %509 = vector.broadcast %507 : vector<1x64xf32> to vector<8x64xf32>
    %510 = arith.mulf %508, %509 : vector<8x64xf32>
    %511 = vector.extract_strided_slice %491 {offsets = [8, 0], sizes = [8, 64], strides = [1, 1]} : vector<64x64xf32> to vector<8x64xf32>
    %512 = arith.mulf %511, %500 : vector<8x64xf32>
    %513 = arith.addf %512, %510 : vector<8x64xf32>
    %514 = vector.extract_strided_slice %457 {offsets = [0, 1], sizes = [8, 1], strides = [1, 1]} : vector<8x16xf32> to vector<8x1xf32>
    %515 = vector.broadcast %514 : vector<8x1xf32> to vector<8x64xf32>
    %516 = arith.mulf %515, %513 : vector<8x64xf32>
    %cst_110 = arith.constant dense<0.000000e+00> : vector<64xf32>
    %517 = vector.multi_reduction <add>, %516, %cst_110 [0] : vector<8x64xf32> to vector<64xf32>
    %518 = vector.shape_cast %517 : vector<64xf32> to vector<1x64xf32>
    %519 = vector.extract_strided_slice %456 {offsets = [0, 2], sizes = [8, 1], strides = [1, 1]} : vector<8x16xf32> to vector<8x1xf32>
    %520 = vector.extract_strided_slice %463 {offsets = [2, 0], sizes = [1, 64], strides = [1, 1]} : vector<16x64xf32> to vector<1x64xf32>
    %521 = vector.broadcast %519 : vector<8x1xf32> to vector<8x64xf32>
    %522 = vector.broadcast %520 : vector<1x64xf32> to vector<8x64xf32>
    %523 = arith.mulf %521, %522 : vector<8x64xf32>
    %524 = vector.extract_strided_slice %491 {offsets = [16, 0], sizes = [8, 64], strides = [1, 1]} : vector<64x64xf32> to vector<8x64xf32>
    %525 = arith.mulf %524, %513 : vector<8x64xf32>
    %526 = arith.addf %525, %523 : vector<8x64xf32>
    %527 = vector.extract_strided_slice %457 {offsets = [0, 2], sizes = [8, 1], strides = [1, 1]} : vector<8x16xf32> to vector<8x1xf32>
    %528 = vector.broadcast %527 : vector<8x1xf32> to vector<8x64xf32>
    %529 = arith.mulf %528, %526 : vector<8x64xf32>
    %cst_111 = arith.constant dense<0.000000e+00> : vector<64xf32>
    %530 = vector.multi_reduction <add>, %529, %cst_111 [0] : vector<8x64xf32> to vector<64xf32>
    %531 = vector.shape_cast %530 : vector<64xf32> to vector<1x64xf32>
    %532 = vector.extract_strided_slice %456 {offsets = [0, 3], sizes = [8, 1], strides = [1, 1]} : vector<8x16xf32> to vector<8x1xf32>
    %533 = vector.extract_strided_slice %463 {offsets = [3, 0], sizes = [1, 64], strides = [1, 1]} : vector<16x64xf32> to vector<1x64xf32>
    %534 = vector.broadcast %532 : vector<8x1xf32> to vector<8x64xf32>
    %535 = vector.broadcast %533 : vector<1x64xf32> to vector<8x64xf32>
    %536 = arith.mulf %534, %535 : vector<8x64xf32>
    %537 = vector.extract_strided_slice %491 {offsets = [24, 0], sizes = [8, 64], strides = [1, 1]} : vector<64x64xf32> to vector<8x64xf32>
    %538 = arith.mulf %537, %526 : vector<8x64xf32>
    %539 = arith.addf %538, %536 : vector<8x64xf32>
    %540 = vector.extract_strided_slice %457 {offsets = [0, 3], sizes = [8, 1], strides = [1, 1]} : vector<8x16xf32> to vector<8x1xf32>
    %541 = vector.broadcast %540 : vector<8x1xf32> to vector<8x64xf32>
    %542 = arith.mulf %541, %539 : vector<8x64xf32>
    %cst_112 = arith.constant dense<0.000000e+00> : vector<64xf32>
    %543 = vector.multi_reduction <add>, %542, %cst_112 [0] : vector<8x64xf32> to vector<64xf32>
    %544 = vector.shape_cast %543 : vector<64xf32> to vector<1x64xf32>
    %545 = vector.extract_strided_slice %456 {offsets = [0, 4], sizes = [8, 1], strides = [1, 1]} : vector<8x16xf32> to vector<8x1xf32>
    %546 = vector.extract_strided_slice %463 {offsets = [4, 0], sizes = [1, 64], strides = [1, 1]} : vector<16x64xf32> to vector<1x64xf32>
    %547 = vector.broadcast %545 : vector<8x1xf32> to vector<8x64xf32>
    %548 = vector.broadcast %546 : vector<1x64xf32> to vector<8x64xf32>
    %549 = arith.mulf %547, %548 : vector<8x64xf32>
    %550 = vector.extract_strided_slice %491 {offsets = [32, 0], sizes = [8, 64], strides = [1, 1]} : vector<64x64xf32> to vector<8x64xf32>
    %551 = arith.mulf %550, %539 : vector<8x64xf32>
    %552 = arith.addf %551, %549 : vector<8x64xf32>
    %553 = vector.extract_strided_slice %457 {offsets = [0, 4], sizes = [8, 1], strides = [1, 1]} : vector<8x16xf32> to vector<8x1xf32>
    %554 = vector.broadcast %553 : vector<8x1xf32> to vector<8x64xf32>
    %555 = arith.mulf %554, %552 : vector<8x64xf32>
    %cst_113 = arith.constant dense<0.000000e+00> : vector<64xf32>
    %556 = vector.multi_reduction <add>, %555, %cst_113 [0] : vector<8x64xf32> to vector<64xf32>
    %557 = vector.shape_cast %556 : vector<64xf32> to vector<1x64xf32>
    %558 = vector.extract_strided_slice %456 {offsets = [0, 5], sizes = [8, 1], strides = [1, 1]} : vector<8x16xf32> to vector<8x1xf32>
    %559 = vector.extract_strided_slice %463 {offsets = [5, 0], sizes = [1, 64], strides = [1, 1]} : vector<16x64xf32> to vector<1x64xf32>
    %560 = vector.broadcast %558 : vector<8x1xf32> to vector<8x64xf32>
    %561 = vector.broadcast %559 : vector<1x64xf32> to vector<8x64xf32>
    %562 = arith.mulf %560, %561 : vector<8x64xf32>
    %563 = vector.extract_strided_slice %491 {offsets = [40, 0], sizes = [8, 64], strides = [1, 1]} : vector<64x64xf32> to vector<8x64xf32>
    %564 = arith.mulf %563, %552 : vector<8x64xf32>
    %565 = arith.addf %564, %562 : vector<8x64xf32>
    %566 = vector.extract_strided_slice %457 {offsets = [0, 5], sizes = [8, 1], strides = [1, 1]} : vector<8x16xf32> to vector<8x1xf32>
    %567 = vector.broadcast %566 : vector<8x1xf32> to vector<8x64xf32>
    %568 = arith.mulf %567, %565 : vector<8x64xf32>
    %cst_114 = arith.constant dense<0.000000e+00> : vector<64xf32>
    %569 = vector.multi_reduction <add>, %568, %cst_114 [0] : vector<8x64xf32> to vector<64xf32>
    %570 = vector.shape_cast %569 : vector<64xf32> to vector<1x64xf32>
    %571 = vector.extract_strided_slice %456 {offsets = [0, 6], sizes = [8, 1], strides = [1, 1]} : vector<8x16xf32> to vector<8x1xf32>
    %572 = vector.extract_strided_slice %463 {offsets = [6, 0], sizes = [1, 64], strides = [1, 1]} : vector<16x64xf32> to vector<1x64xf32>
    %573 = vector.broadcast %571 : vector<8x1xf32> to vector<8x64xf32>
    %574 = vector.broadcast %572 : vector<1x64xf32> to vector<8x64xf32>
    %575 = arith.mulf %573, %574 : vector<8x64xf32>
    %576 = vector.extract_strided_slice %491 {offsets = [48, 0], sizes = [8, 64], strides = [1, 1]} : vector<64x64xf32> to vector<8x64xf32>
    %577 = arith.mulf %576, %565 : vector<8x64xf32>
    %578 = arith.addf %577, %575 : vector<8x64xf32>
    %579 = vector.extract_strided_slice %457 {offsets = [0, 6], sizes = [8, 1], strides = [1, 1]} : vector<8x16xf32> to vector<8x1xf32>
    %580 = vector.broadcast %579 : vector<8x1xf32> to vector<8x64xf32>
    %581 = arith.mulf %580, %578 : vector<8x64xf32>
    %cst_115 = arith.constant dense<0.000000e+00> : vector<64xf32>
    %582 = vector.multi_reduction <add>, %581, %cst_115 [0] : vector<8x64xf32> to vector<64xf32>
    %583 = vector.shape_cast %582 : vector<64xf32> to vector<1x64xf32>
    %584 = vector.extract_strided_slice %456 {offsets = [0, 7], sizes = [8, 1], strides = [1, 1]} : vector<8x16xf32> to vector<8x1xf32>
    %585 = vector.extract_strided_slice %463 {offsets = [7, 0], sizes = [1, 64], strides = [1, 1]} : vector<16x64xf32> to vector<1x64xf32>
    %586 = vector.broadcast %584 : vector<8x1xf32> to vector<8x64xf32>
    %587 = vector.broadcast %585 : vector<1x64xf32> to vector<8x64xf32>
    %588 = arith.mulf %586, %587 : vector<8x64xf32>
    %589 = vector.extract_strided_slice %491 {offsets = [56, 0], sizes = [8, 64], strides = [1, 1]} : vector<64x64xf32> to vector<8x64xf32>
    %590 = arith.mulf %589, %578 : vector<8x64xf32>
    %591 = arith.addf %590, %588 : vector<8x64xf32>
    %592 = vector.extract_strided_slice %457 {offsets = [0, 7], sizes = [8, 1], strides = [1, 1]} : vector<8x16xf32> to vector<8x1xf32>
    %593 = vector.broadcast %592 : vector<8x1xf32> to vector<8x64xf32>
    %594 = arith.mulf %593, %591 : vector<8x64xf32>
    %cst_116 = arith.constant dense<0.000000e+00> : vector<64xf32>
    %595 = vector.multi_reduction <add>, %594, %cst_116 [0] : vector<8x64xf32> to vector<64xf32>
    %596 = vector.shape_cast %595 : vector<64xf32> to vector<1x64xf32>
    %597 = vector.extract_strided_slice %452 {offsets = [8, 0], sizes = [1, 64], strides = [1, 1]} : vector<16x64xf32> to vector<1x64xf32>
    %598 = vector.broadcast %597 : vector<1x64xf32> to vector<8x64xf32>
    %599 = arith.mulf %598, %462 : vector<8x64xf32>
    %600 = vector.extract_strided_slice %452 {offsets = [9, 0], sizes = [1, 64], strides = [1, 1]} : vector<16x64xf32> to vector<1x64xf32>
    %601 = vector.broadcast %600 : vector<1x64xf32> to vector<8x64xf32>
    %602 = arith.mulf %601, %462 : vector<8x64xf32>
    %603 = vector.extract_strided_slice %452 {offsets = [10, 0], sizes = [1, 64], strides = [1, 1]} : vector<16x64xf32> to vector<1x64xf32>
    %604 = vector.broadcast %603 : vector<1x64xf32> to vector<8x64xf32>
    %605 = arith.mulf %604, %462 : vector<8x64xf32>
    %606 = vector.extract_strided_slice %452 {offsets = [11, 0], sizes = [1, 64], strides = [1, 1]} : vector<16x64xf32> to vector<1x64xf32>
    %607 = vector.broadcast %606 : vector<1x64xf32> to vector<8x64xf32>
    %608 = arith.mulf %607, %462 : vector<8x64xf32>
    %609 = vector.extract_strided_slice %452 {offsets = [12, 0], sizes = [1, 64], strides = [1, 1]} : vector<16x64xf32> to vector<1x64xf32>
    %610 = vector.broadcast %609 : vector<1x64xf32> to vector<8x64xf32>
    %611 = arith.mulf %610, %462 : vector<8x64xf32>
    %612 = vector.extract_strided_slice %452 {offsets = [13, 0], sizes = [1, 64], strides = [1, 1]} : vector<16x64xf32> to vector<1x64xf32>
    %613 = vector.broadcast %612 : vector<1x64xf32> to vector<8x64xf32>
    %614 = arith.mulf %613, %462 : vector<8x64xf32>
    %615 = vector.extract_strided_slice %452 {offsets = [14, 0], sizes = [1, 64], strides = [1, 1]} : vector<16x64xf32> to vector<1x64xf32>
    %616 = vector.broadcast %615 : vector<1x64xf32> to vector<8x64xf32>
    %617 = arith.mulf %616, %462 : vector<8x64xf32>
    %618 = vector.extract_strided_slice %452 {offsets = [15, 0], sizes = [1, 64], strides = [1, 1]} : vector<16x64xf32> to vector<1x64xf32>
    %619 = vector.broadcast %618 : vector<1x64xf32> to vector<8x64xf32>
    %620 = arith.mulf %619, %462 : vector<8x64xf32>
    %621 = tpu.concatenate %599, %602, %605, %608, %611, %614, %617, %620 in 0 : vector<8x64xf32>, vector<8x64xf32>, vector<8x64xf32>, vector<8x64xf32>, vector<8x64xf32>, vector<8x64xf32>, vector<8x64xf32>, vector<8x64xf32> -> vector<64x64xf32>
    %622 = math.exp %621 : vector<64x64xf32>
    %cst_117 = arith.constant 0.000000e+00 : f32
    %623 = vector.broadcast %cst_117 : f32 to vector<8x64xf32>
    %624 = vector.extract_strided_slice %456 {offsets = [0, 8], sizes = [8, 1], strides = [1, 1]} : vector<8x16xf32> to vector<8x1xf32>
    %625 = vector.extract_strided_slice %463 {offsets = [8, 0], sizes = [1, 64], strides = [1, 1]} : vector<16x64xf32> to vector<1x64xf32>
    %626 = vector.broadcast %624 : vector<8x1xf32> to vector<8x64xf32>
    %627 = vector.broadcast %625 : vector<1x64xf32> to vector<8x64xf32>
    %628 = arith.mulf %626, %627 : vector<8x64xf32>
    %629 = vector.extract_strided_slice %622 {offsets = [0, 0], sizes = [8, 64], strides = [1, 1]} : vector<64x64xf32> to vector<8x64xf32>
    %630 = arith.mulf %629, %623 : vector<8x64xf32>
    %631 = arith.addf %630, %628 : vector<8x64xf32>
    %632 = vector.extract_strided_slice %457 {offsets = [0, 8], sizes = [8, 1], strides = [1, 1]} : vector<8x16xf32> to vector<8x1xf32>
    %633 = vector.broadcast %632 : vector<8x1xf32> to vector<8x64xf32>
    %634 = arith.mulf %633, %631 : vector<8x64xf32>
    %cst_118 = arith.constant dense<0.000000e+00> : vector<64xf32>
    %635 = vector.multi_reduction <add>, %634, %cst_118 [0] : vector<8x64xf32> to vector<64xf32>
    %636 = vector.shape_cast %635 : vector<64xf32> to vector<1x64xf32>
    %637 = vector.extract_strided_slice %456 {offsets = [0, 9], sizes = [8, 1], strides = [1, 1]} : vector<8x16xf32> to vector<8x1xf32>
    %638 = vector.extract_strided_slice %463 {offsets = [9, 0], sizes = [1, 64], strides = [1, 1]} : vector<16x64xf32> to vector<1x64xf32>
    %639 = vector.broadcast %637 : vector<8x1xf32> to vector<8x64xf32>
    %640 = vector.broadcast %638 : vector<1x64xf32> to vector<8x64xf32>
    %641 = arith.mulf %639, %640 : vector<8x64xf32>
    %642 = vector.extract_strided_slice %622 {offsets = [8, 0], sizes = [8, 64], strides = [1, 1]} : vector<64x64xf32> to vector<8x64xf32>
    %643 = arith.mulf %642, %631 : vector<8x64xf32>
    %644 = arith.addf %643, %641 : vector<8x64xf32>
    %645 = vector.extract_strided_slice %457 {offsets = [0, 9], sizes = [8, 1], strides = [1, 1]} : vector<8x16xf32> to vector<8x1xf32>
    %646 = vector.broadcast %645 : vector<8x1xf32> to vector<8x64xf32>
    %647 = arith.mulf %646, %644 : vector<8x64xf32>
    %cst_119 = arith.constant dense<0.000000e+00> : vector<64xf32>
    %648 = vector.multi_reduction <add>, %647, %cst_119 [0] : vector<8x64xf32> to vector<64xf32>
    %649 = vector.shape_cast %648 : vector<64xf32> to vector<1x64xf32>
    %650 = vector.extract_strided_slice %456 {offsets = [0, 10], sizes = [8, 1], strides = [1, 1]} : vector<8x16xf32> to vector<8x1xf32>
    %651 = vector.extract_strided_slice %463 {offsets = [10, 0], sizes = [1, 64], strides = [1, 1]} : vector<16x64xf32> to vector<1x64xf32>
    %652 = vector.broadcast %650 : vector<8x1xf32> to vector<8x64xf32>
    %653 = vector.broadcast %651 : vector<1x64xf32> to vector<8x64xf32>
    %654 = arith.mulf %652, %653 : vector<8x64xf32>
    %655 = vector.extract_strided_slice %622 {offsets = [16, 0], sizes = [8, 64], strides = [1, 1]} : vector<64x64xf32> to vector<8x64xf32>
    %656 = arith.mulf %655, %644 : vector<8x64xf32>
    %657 = arith.addf %656, %654 : vector<8x64xf32>
    %658 = vector.extract_strided_slice %457 {offsets = [0, 10], sizes = [8, 1], strides = [1, 1]} : vector<8x16xf32> to vector<8x1xf32>
    %659 = vector.broadcast %658 : vector<8x1xf32> to vector<8x64xf32>
    %660 = arith.mulf %659, %657 : vector<8x64xf32>
    %cst_120 = arith.constant dense<0.000000e+00> : vector<64xf32>
    %661 = vector.multi_reduction <add>, %660, %cst_120 [0] : vector<8x64xf32> to vector<64xf32>
    %662 = vector.shape_cast %661 : vector<64xf32> to vector<1x64xf32>
    %663 = vector.extract_strided_slice %456 {offsets = [0, 11], sizes = [8, 1], strides = [1, 1]} : vector<8x16xf32> to vector<8x1xf32>
    %664 = vector.extract_strided_slice %463 {offsets = [11, 0], sizes = [1, 64], strides = [1, 1]} : vector<16x64xf32> to vector<1x64xf32>
    %665 = vector.broadcast %663 : vector<8x1xf32> to vector<8x64xf32>
    %666 = vector.broadcast %664 : vector<1x64xf32> to vector<8x64xf32>
    %667 = arith.mulf %665, %666 : vector<8x64xf32>
    %668 = vector.extract_strided_slice %622 {offsets = [24, 0], sizes = [8, 64], strides = [1, 1]} : vector<64x64xf32> to vector<8x64xf32>
    %669 = arith.mulf %668, %657 : vector<8x64xf32>
    %670 = arith.addf %669, %667 : vector<8x64xf32>
    %671 = vector.extract_strided_slice %457 {offsets = [0, 11], sizes = [8, 1], strides = [1, 1]} : vector<8x16xf32> to vector<8x1xf32>
    %672 = vector.broadcast %671 : vector<8x1xf32> to vector<8x64xf32>
    %673 = arith.mulf %672, %670 : vector<8x64xf32>
    %cst_121 = arith.constant dense<0.000000e+00> : vector<64xf32>
    %674 = vector.multi_reduction <add>, %673, %cst_121 [0] : vector<8x64xf32> to vector<64xf32>
    %675 = vector.shape_cast %674 : vector<64xf32> to vector<1x64xf32>
    %676 = vector.extract_strided_slice %456 {offsets = [0, 12], sizes = [8, 1], strides = [1, 1]} : vector<8x16xf32> to vector<8x1xf32>
    %677 = vector.extract_strided_slice %463 {offsets = [12, 0], sizes = [1, 64], strides = [1, 1]} : vector<16x64xf32> to vector<1x64xf32>
    %678 = vector.broadcast %676 : vector<8x1xf32> to vector<8x64xf32>
    %679 = vector.broadcast %677 : vector<1x64xf32> to vector<8x64xf32>
    %680 = arith.mulf %678, %679 : vector<8x64xf32>
    %681 = vector.extract_strided_slice %622 {offsets = [32, 0], sizes = [8, 64], strides = [1, 1]} : vector<64x64xf32> to vector<8x64xf32>
    %682 = arith.mulf %681, %670 : vector<8x64xf32>
    %683 = arith.addf %682, %680 : vector<8x64xf32>
    %684 = vector.extract_strided_slice %457 {offsets = [0, 12], sizes = [8, 1], strides = [1, 1]} : vector<8x16xf32> to vector<8x1xf32>
    %685 = vector.broadcast %684 : vector<8x1xf32> to vector<8x64xf32>
    %686 = arith.mulf %685, %683 : vector<8x64xf32>
    %cst_122 = arith.constant dense<0.000000e+00> : vector<64xf32>
    %687 = vector.multi_reduction <add>, %686, %cst_122 [0] : vector<8x64xf32> to vector<64xf32>
    %688 = vector.shape_cast %687 : vector<64xf32> to vector<1x64xf32>
    %689 = vector.extract_strided_slice %456 {offsets = [0, 13], sizes = [8, 1], strides = [1, 1]} : vector<8x16xf32> to vector<8x1xf32>
    %690 = vector.extract_strided_slice %463 {offsets = [13, 0], sizes = [1, 64], strides = [1, 1]} : vector<16x64xf32> to vector<1x64xf32>
    %691 = vector.broadcast %689 : vector<8x1xf32> to vector<8x64xf32>
    %692 = vector.broadcast %690 : vector<1x64xf32> to vector<8x64xf32>
    %693 = arith.mulf %691, %692 : vector<8x64xf32>
    %694 = vector.extract_strided_slice %622 {offsets = [40, 0], sizes = [8, 64], strides = [1, 1]} : vector<64x64xf32> to vector<8x64xf32>
    %695 = arith.mulf %694, %683 : vector<8x64xf32>
    %696 = arith.addf %695, %693 : vector<8x64xf32>
    %697 = vector.extract_strided_slice %457 {offsets = [0, 13], sizes = [8, 1], strides = [1, 1]} : vector<8x16xf32> to vector<8x1xf32>
    %698 = vector.broadcast %697 : vector<8x1xf32> to vector<8x64xf32>
    %699 = arith.mulf %698, %696 : vector<8x64xf32>
    %cst_123 = arith.constant dense<0.000000e+00> : vector<64xf32>
    %700 = vector.multi_reduction <add>, %699, %cst_123 [0] : vector<8x64xf32> to vector<64xf32>
    %701 = vector.shape_cast %700 : vector<64xf32> to vector<1x64xf32>
    %702 = vector.extract_strided_slice %456 {offsets = [0, 14], sizes = [8, 1], strides = [1, 1]} : vector<8x16xf32> to vector<8x1xf32>
    %703 = vector.extract_strided_slice %463 {offsets = [14, 0], sizes = [1, 64], strides = [1, 1]} : vector<16x64xf32> to vector<1x64xf32>
    %704 = vector.broadcast %702 : vector<8x1xf32> to vector<8x64xf32>
    %705 = vector.broadcast %703 : vector<1x64xf32> to vector<8x64xf32>
    %706 = arith.mulf %704, %705 : vector<8x64xf32>
    %707 = vector.extract_strided_slice %622 {offsets = [48, 0], sizes = [8, 64], strides = [1, 1]} : vector<64x64xf32> to vector<8x64xf32>
    %708 = arith.mulf %707, %696 : vector<8x64xf32>
    %709 = arith.addf %708, %706 : vector<8x64xf32>
    %710 = vector.extract_strided_slice %457 {offsets = [0, 14], sizes = [8, 1], strides = [1, 1]} : vector<8x16xf32> to vector<8x1xf32>
    %711 = vector.broadcast %710 : vector<8x1xf32> to vector<8x64xf32>
    %712 = arith.mulf %711, %709 : vector<8x64xf32>
    %cst_124 = arith.constant dense<0.000000e+00> : vector<64xf32>
    %713 = vector.multi_reduction <add>, %712, %cst_124 [0] : vector<8x64xf32> to vector<64xf32>
    %714 = vector.shape_cast %713 : vector<64xf32> to vector<1x64xf32>
    %715 = vector.extract_strided_slice %456 {offsets = [0, 15], sizes = [8, 1], strides = [1, 1]} : vector<8x16xf32> to vector<8x1xf32>
    %716 = vector.extract_strided_slice %463 {offsets = [15, 0], sizes = [1, 64], strides = [1, 1]} : vector<16x64xf32> to vector<1x64xf32>
    %717 = vector.broadcast %715 : vector<8x1xf32> to vector<8x64xf32>
    %718 = vector.broadcast %716 : vector<1x64xf32> to vector<8x64xf32>
    %719 = arith.mulf %717, %718 : vector<8x64xf32>
    %720 = vector.extract_strided_slice %622 {offsets = [56, 0], sizes = [8, 64], strides = [1, 1]} : vector<64x64xf32> to vector<8x64xf32>
    %721 = arith.mulf %720, %709 : vector<8x64xf32>
    %722 = arith.addf %721, %719 : vector<8x64xf32>
    %723 = vector.extract_strided_slice %457 {offsets = [0, 15], sizes = [8, 1], strides = [1, 1]} : vector<8x16xf32> to vector<8x1xf32>
    %724 = vector.broadcast %723 : vector<8x1xf32> to vector<8x64xf32>
    %725 = arith.mulf %724, %722 : vector<8x64xf32>
    %cst_125 = arith.constant dense<0.000000e+00> : vector<64xf32>
    %726 = vector.multi_reduction <add>, %725, %cst_125 [0] : vector<8x64xf32> to vector<64xf32>
    %727 = vector.shape_cast %726 : vector<64xf32> to vector<1x64xf32>
    %728 = vector.broadcast %465 : vector<1x64xf32> to vector<16x64xf32>
    %729 = arith.mulf %728, %437 : vector<16x64xf32>
    %730 = tpu.concatenate %505, %518, %531, %544, %557, %570, %583, %596, %636, %649, %662, %675, %688, %701, %714, %727 in 0 : vector<1x64xf32>, vector<1x64xf32>, vector<1x64xf32>, vector<1x64xf32>, vector<1x64xf32>, vector<1x64xf32>, vector<1x64xf32>, vector<1x64xf32>, vector<1x64xf32>, vector<1x64xf32>, vector<1x64xf32>, vector<1x64xf32>, vector<1x64xf32>, vector<1x64xf32>, vector<1x64xf32>, vector<1x64xf32> -> vector<16x64xf32>
    %731 = arith.addf %729, %730 : vector<16x64xf32>
    %cst_126 = arith.constant 0.000000e+00 : f32
    %732 = vector.broadcast %cst_126 : f32 to vector<16x64xf32>
    %733 = arith.subf %732, %394 : vector<16x64xf32>
    %734 = math.exp %733 : vector<16x64xf32>
    %cst_127 = arith.constant 1.000000e+00 : f32
    %735 = vector.broadcast %cst_127 : f32 to vector<16x64xf32>
    %736 = arith.addf %735, %734 : vector<16x64xf32>
    %cst_128 = arith.constant 1.000000e+00 : f32
    %737 = vector.broadcast %cst_128 : f32 to vector<16x64xf32>
    %738 = arith.divf %737, %736 : vector<16x64xf32>
    %739 = arith.mulf %394, %738 : vector<16x64xf32>
    %740 = arith.mulf %731, %739 : vector<16x64xf32>
    %c1_129 = arith.constant 1 : index
    %c96_130 = arith.constant 96 : index
    %c0_131 = arith.constant 0 : index
    %741 = vector.load %arg2[%c1_129, %c96_130, %c0_131] : memref<2x184x128xf32, #tpu.memory_space<vmem>>, vector<1x64x32xf32>
    %742 = vector.shape_cast %741 : vector<1x64x32xf32> to vector<64x32xf32>
    %cst_132 = arith.constant dense<0.000000e+00> : vector<16x32xf32>
    %743 = tpu.matmul %740, %742, %cst_132 {dimension_numbers = #tpu.dot_dimension_numbers<[1], [0], [0], [1], [0, 0, 1, 1], [], []>, precision = #tpu.contract_precision<fp32>} : vector<16x64xf32>, vector<64x32xf32>, vector<16x32xf32> -> vector<16x32xf32>
    %c1_133 = arith.constant 1 : index
    %c7_134 = arith.constant 7 : index
    %c0_135 = arith.constant 0 : index
    %744 = vector.load %arg3[%c1_133, %c7_134, %c0_135] : memref<2x8x128xf32, #tpu.memory_space<vmem>>, vector<1x1x32xf32>
    %745 = vector.shape_cast %744 : vector<1x1x32xf32> to vector<1x32xf32>
    %746 = vector.broadcast %745 : vector<1x32xf32> to vector<16x32xf32>
    %747 = arith.addf %743, %746 : vector<16x32xf32>
    %748 = arith.addf %747, %385 : vector<16x32xf32>
    %cst_136 = arith.constant dense<0.000000e+00> : vector<16xf32>
    %749 = vector.multi_reduction <add>, %748, %cst_136 [1] : vector<16x32xf32> to vector<16xf32>
    %750 = vector.shape_cast %749 : vector<16xf32> to vector<16x1xf32>
    %cst_137 = arith.constant 3.200000e+01 : f32
    %751 = vector.broadcast %cst_137 : f32 to vector<16x1xf32>
    %752 = arith.divf %750, %751 : vector<16x1xf32>
    %753 = vector.broadcast %752 : vector<16x1xf32> to vector<16x32xf32>
    %754 = arith.subf %748, %753 : vector<16x32xf32>
    %755 = arith.mulf %754, %754 : vector<16x32xf32>
    %cst_138 = arith.constant dense<0.000000e+00> : vector<16xf32>
    %756 = vector.multi_reduction <add>, %755, %cst_138 [1] : vector<16x32xf32> to vector<16xf32>
    %757 = vector.shape_cast %756 : vector<16xf32> to vector<16x1xf32>
    %cst_139 = arith.constant 3.200000e+01 : f32
    %758 = vector.broadcast %cst_139 : f32 to vector<16x1xf32>
    %759 = arith.divf %757, %758 : vector<16x1xf32>
    %760 = vector.broadcast %752 : vector<16x1xf32> to vector<16x32xf32>
    %761 = arith.subf %748, %760 : vector<16x32xf32>
    %cst_140 = arith.constant 9.99999974E-6 : f32
    %762 = vector.broadcast %cst_140 : f32 to vector<16x1xf32>
    %763 = arith.addf %759, %762 : vector<16x1xf32>
    %764 = math.rsqrt %763 : vector<16x1xf32>
    %765 = vector.broadcast %764 : vector<16x1xf32> to vector<16x32xf32>
    %766 = arith.mulf %761, %765 : vector<16x32xf32>
    %c49 = arith.constant 49 : index
    %c0_141 = arith.constant 0 : index
    %767 = vector.load %arg4[%c49, %c0_141] : memref<56x128xf32, #tpu.memory_space<vmem>>, vector<1x32xf32>
    %768 = vector.broadcast %767 : vector<1x32xf32> to vector<16x32xf32>
    %769 = arith.mulf %766, %768 : vector<16x32xf32>
    %c50 = arith.constant 50 : index
    %c0_142 = arith.constant 0 : index
    %770 = vector.load %arg4[%c50, %c0_142] : memref<56x128xf32, #tpu.memory_space<vmem>>, vector<1x32xf32>
    %771 = vector.broadcast %770 : vector<1x32xf32> to vector<16x32xf32>
    %772 = arith.addf %769, %771 : vector<16x32xf32>
    %c16 = arith.constant 16 : index
    %c0_143 = arith.constant 0 : index
    %773 = vector.load %arg4[%c16, %c0_143] : memref<56x128xf32, #tpu.memory_space<vmem>>, vector<32x16xf32>
    %cst_144 = arith.constant dense<0.000000e+00> : vector<16x16xf32>
    %774 = tpu.matmul %772, %773, %cst_144 {dimension_numbers = #tpu.dot_dimension_numbers<[1], [0], [0], [1], [0, 0, 1, 1], [], []>, precision = #tpu.contract_precision<fp32>} : vector<16x32xf32>, vector<32x16xf32>, vector<16x16xf32> -> vector<16x16xf32>
    %c51 = arith.constant 51 : index
    %c0_145 = arith.constant 0 : index
    %775 = vector.load %arg4[%c51, %c0_145] : memref<56x128xf32, #tpu.memory_space<vmem>>, vector<1x16xf32>
    %776 = vector.broadcast %775 : vector<1x16xf32> to vector<16x16xf32>
    %777 = arith.addf %774, %776 : vector<16x16xf32>
    %c0_146 = arith.constant 0 : index
    %c0_147 = arith.constant 0 : index
    %778 = vector.load %arg5[%c0_146, %c0_147] : memref<16x16xf32, #tpu.memory_space<vmem>>, vector<16x16xf32>
    tpu.vector_store %arg5[%c0_146, %c0_147], %777 {strides = array<i32>} : memref<16x16xf32, #tpu.memory_space<vmem>>, vector<16x16xf32>,
    return
  }
  func.func @transform_0(%arg0: i32) -> (i32, i32) {
    %c0_i32 = arith.constant 0 : i32
    %c0_i32_0 = arith.constant 0 : i32
    %c0_i32_1 = arith.constant 0 : i32
    return %c0_i32, %c0_i32_0 : i32, i32
  }
  func.func @transform_1(%arg0: i32) -> (i32, i32, i32) {
    %c0_i32 = arith.constant 0 : i32
    %c0_i32_0 = arith.constant 0 : i32
    %c0_i32_1 = arith.constant 0 : i32
    %c0_i32_2 = arith.constant 0 : i32
    return %c0_i32, %c0_i32_0, %c0_i32_1 : i32, i32, i32
  }
  func.func @transform_2(%arg0: i32) -> (i32, i32, i32) {
    %c0_i32 = arith.constant 0 : i32
    %c0_i32_0 = arith.constant 0 : i32
    %c0_i32_1 = arith.constant 0 : i32
    %c0_i32_2 = arith.constant 0 : i32
    return %c0_i32, %c0_i32_0, %c0_i32_1 : i32, i32, i32
  }
  func.func @transform_3(%arg0: i32) -> (i32, i32) {
    %c0_i32 = arith.constant 0 : i32
    %c0_i32_0 = arith.constant 0 : i32
    %c0_i32_1 = arith.constant 0 : i32
    return %c0_i32, %c0_i32_0 : i32, i32
  }
  func.func @transform_4(%arg0: i32) -> (i32, i32) {
    %c0_i32 = arith.constant 0 : i32
    %c0_i32_0 = arith.constant 0 : i32
    %c0_i32_1 = arith.constant 0 : i32
    return %c0_i32, %c0_i32_0 : i32, i32
  }
}

</mosaic_0001>

<llo_original>
// kernel: model_forward.1
$region0: #{model_forward.1}
  #allocation0 [shape = 'u32[]', space=smem, size = 0x4, offset = 0x4, fixed_abs, tag = 'smem constant byte address 0x4 - core index']
  #allocation1 [shape = 'u32[144,128]{1,0:T(1,128)}', space=vmem, size = 0x12000, scoped, tag = 'internal scratch']
  %s0 = inlined_call_operand.vmem [shape: f32[16,16], index: 0, kind: input, shape index: {}]
  %s1 = inlined_call_operand.vmem [shape: f32[2,184,128], index: 1, kind: input, shape index: {}]
  %s2 = inlined_call_operand.vmem [shape: f32[2,8,128], index: 2, kind: input, shape index: {}]
  %s3 = inlined_call_operand.vmem [shape: f32[56,128], index: 3, kind: input, shape index: {}]
  %s4 = inlined_call_operand.hbm [shape: f32[16,16], index: 4, kind: output, shape index: {}]
  %s5 = sld [smem:[#allocation0]]
  $region26: #{model_forward.1} parent=0
    _
  %s7 = ssub.s32 1, %s5
  %s8 = scalar_select 0, %s7, %s5
  $region1: #{model_forward.1} parent=0
    #allocation2 [shape = 'u8[8192]{0}', space=vmem, size = 0x2000, scoped, tag = 'output window, operand 0, single buffered']
    #allocation3 [shape = 's32[1]{0}', space=sflag, size = 0x4, scoped, tag = 'scoped memory for model_forward.1']
    %9 = vsyncpa [#allocation3], 0
    // Predicated region
    $region2: #{model_forward.1} parent=1 // pred_check
      _
    $region3: #{model_forward.1} parent=1 // pred_check_branch
      %11 = sbr.rel (0) target = $region5
    $region4: #{model_forward.1} parent=1 // pred_region
      _
    $region5: #{model_forward.1} parent=1 // pred_fallthru
      _
    // Predicated region
    $region6: #{model_forward.1} parent=1 // pred_check
      _
    $region7: #{model_forward.1} parent=1 // pred_check_branch
      %13 = sbr.rel (0) target = $region9
    $region8: #{model_forward.1} parent=1 // pred_region
      _
    $region9: #{model_forward.1} parent=1 // pred_fallthru
      _
    // Predicated region
    $region10: #{model_forward.1} parent=1 // pred_check
      _
    $region11: #{model_forward.1} parent=1 // pred_check_branch
      %15 = sbr.rel (0) target = $region13
    $region12: #{model_forward.1} parent=1 // pred_region
      _
    $region13: #{model_forward.1} parent=1 // pred_fallthru
      _
    // Predicated region
    $region14: #{model_forward.1} parent=1 // pred_check
      _
    $region15: #{model_forward.1} parent=1 // pred_check_branch
      %17 = sbr.rel (0) target = $region17
    $region16: #{model_forward.1} parent=1 // pred_region
      _
    $region17: #{model_forward.1} parent=1 // pred_fallthru
      _
    %v18 = vld [vmem:[%s0] sm:$0xff]
    %v19 = vld [vmem:[%s0 + $0x8] sm:$0xff]
    %v20 = vld [vmem:[%s3] sm:$0xff]
    %v21 = vld [vmem:[%s3 + $0x8] sm:$0xff]
    %v22 = vld [vmem:[%s3 + $0x30] sm:$0x1]
    %v23 = vlaneseq
    %v24 = vshrl.u32 %v23, 7
    %v25 = vsub.s32 0, %v24
    %v26 = vrot.slane %v22, %v25
    %vm27 = vcmask 130048
    %v29 = vsel %vm27, %v18, 0
    %v32 = vsel %vm27, %v19, 0
    %34 = vmatprep.subr.mxu0 0.0
    %35 = vmatpush1.msra.mxu0 0.0
    %36 = vmatprep.subr.mxu0 0.0
    %37 = vmatpush1.msra.mxu0 0.0
    %38 = vmatprep.subr.mxu0 0.0
    %39 = vmatpush1.msra.mxu0 0.0
    %40 = vmatprep.subr.mxu0 0.0
    %41 = vmatpush1.msra.mxu0 0.0
    %42 = vmatprep.subr.mxu0 0.0
    %43 = vmatpush1.msra.mxu0 0.0
    %44 = vmatprep.subr.mxu0 0.0
    %45 = vmatpush1.msra.mxu0 0.0
    %46 = vmatprep.subr.mxu0 0.0
    %47 = vmatpush1.msra.mxu0 0.0
    %48 = vmatprep.subr.mxu0 0.0
    %49 = vmatpush1.msra.mxu0 0.0
    %50 = vmatprep.subr.mxu0 0.0
    %51 = vmatpush1.msra.mxu0 0.0
    %52 = vmatprep.subr.mxu0 0.0
    %53 = vmatpush1.msra.mxu0 0.0
    %54 = vmatprep.subr.mxu0 0.0
    %55 = vmatpush1.msra.mxu0 0.0
    %56 = vmatprep.subr.mxu0 0.0
    %57 = vmatpush1.msra.mxu0 0.0
    %58 = vmatprep.subr.mxu0 0.0
    %59 = vmatpush1.msra.mxu0 0.0
    %60 = vmatprep.subr.mxu0 0.0
    %61 = vmatpush1.msra.mxu0 0.0
    %62 = vmatprep.subr.mxu0 0.0
    %v63 = vand.u32 %v21, 4294901760
    %64 = vmatpush1.msra.mxu0 %v63
    %65 = vmatprep.subr.mxu0 0.0
    %v66 = vand.u32 %v20, 4294901760
    %67 = vmatpush1.msra.mxu0 %v66
    %68 = vmatprep.subr.mxu0 0.0
    %69 = vmatpush2.msra.mxu0 0.0
    %70 = vmatprep.subr.mxu0 0.0
    %71 = vmatpush2.msra.mxu0 0.0
    %72 = vmatprep.subr.mxu0 0.0
    %73 = vmatpush2.msra.mxu0 0.0
    %74 = vmatprep.subr.mxu0 0.0
    %75 = vmatpush2.msra.mxu0 0.0
    %76 = vmatprep.subr.mxu0 0.0
    %77 = vmatpush2.msra.mxu0 0.0
    %78 = vmatprep.subr.mxu0 0.0
    %79 = vmatpush2.msra.mxu0 0.0
    %80 = vmatprep.subr.mxu0 0.0
    %81 = vmatpush2.msra.mxu0 0.0
    %82 = vmatprep.subr.mxu0 0.0
    %83 = vmatpush2.msra.mxu0 0.0
    %84 = vmatprep.subr.mxu0 0.0
    %85 = vmatpush2.msra.mxu0 0.0
    %86 = vmatprep.subr.mxu0 0.0
    %87 = vmatpush2.msra.mxu0 0.0
    %88 = vmatprep.subr.mxu0 0.0
    %89 = vmatpush2.msra.mxu0 0.0
    %90 = vmatprep.subr.mxu0 0.0
    %91 = vmatpush2.msra.mxu0 0.0
    %92 = vmatprep.subr.mxu0 0.0
    %93 = vmatpush2.msra.mxu0 0.0
    %94 = vmatprep.subr.mxu0 0.0
    %95 = vmatpush2.msra.mxu0 0.0
    %96 = vmatprep.subr.mxu0 0.0
    %97 = vmatpush2.msra.mxu0 0.0
    %98 = vmatprep.subr.mxu0 0.0
    %99 = vmatpush2.msra.mxu0 0.0
    %100 = vmatprep.mubr.f32.mxu0 0.0
    %v101 = vand.u32 %v29, 4294901760
    %v102 = vsub.f32 %v29, %v101
    %v103 = vand.u32 %v102, 4294901760
    %v104 = vsub.f32 %v102, %v103
    %v105 = vand.u32 %v104, 4294901760
    %106 = vmatmul.mubr.f32.gmra.mxu0 %v105
    %v107 = vpop.f32.mrf.mxu0
    %v108 = vadd.f32 %v26, %v107
    %v109 = vpop.f32.mrf.mxu0
    %110 = vmatprep.mubr.f32.mxu0 0.0
    %v111 = vand.u32 %v32, 4294901760
    %v112 = vsub.f32 %v32, %v111
    %v113 = vand.u32 %v112, 4294901760
    %v114 = vsub.f32 %v112, %v113
    %v115 = vand.u32 %v114, 4294901760
    %116 = vmatmul.mubr.f32.gmra.mxu0 %v115
    %v117 = vpop.f32.mrf.mxu0
    %v118 = vadd.f32 %v26, %v117
    %v119 = vpop.f32.mrf.mxu0
    %120 = vdwg.mxu0
    %121 = vmatprep.subr.mxu0 0.0
    %122 = vmatpush1.msra.mxu0 0.0
    %123 = vmatprep.subr.mxu0 0.0
    %124 = vmatpush1.msra.mxu0 0.0
    %125 = vmatprep.subr.mxu0 0.0
    %126 = vmatpush1.msra.mxu0 0.0
    %127 = vmatprep.subr.mxu0 0.0
    %128 = vmatpush1.msra.mxu0 0.0
    %129 = vmatprep.subr.mxu0 0.0
    %130 = vmatpush1.msra.mxu0 0.0
    %131 = vmatprep.subr.mxu0 0.0
    %132 = vmatpush1.msra.mxu0 0.0
    %133 = vmatprep.subr.mxu0 0.0
    %134 = vmatpush1.msra.mxu0 0.0
    %135 = vmatprep.subr.mxu0 0.0
    %136 = vmatpush1.msra.mxu0 0.0
    %137 = vmatprep.subr.mxu0 0.0
    %138 = vmatpush1.msra.mxu0 0.0
    %139 = vmatprep.subr.mxu0 0.0
    %140 = vmatpush1.msra.mxu0 0.0
    %141 = vmatprep.subr.mxu0 0.0
    %142 = vmatpush1.msra.mxu0 0.0
    %143 = vmatprep.subr.mxu0 0.0
    %144 = vmatpush1.msra.mxu0 0.0
    %145 = vmatprep.subr.mxu0 0.0
    %146 = vmatpush1.msra.mxu0 0.0
    %147 = vmatprep.subr.mxu0 0.0
    %148 = vmatpush1.msra.mxu0 0.0
    %149 = vmatprep.subr.mxu0 0.0
    %v150 = vand.u32 %v21, 4294901760
    %v151 = vsub.f32 %v21, %v150
    %v152 = vand.u32 %v151, 4294901760
    %v153 = vsub.f32 %v151, %v152
    %v154 = vand.u32 %v153, 4294901760
    %155 = vmatpush1.msra.mxu0 %v154
    %156 = vmatprep.subr.mxu0 0.0
    %v157 = vand.u32 %v20, 4294901760
    %v158 = vsub.f32 %v20, %v157
    %v159 = vand.u32 %v158, 4294901760
    %v160 = vsub.f32 %v158, %v159
    %v161 = vand.u32 %v160, 4294901760
    %162 = vmatpush1.msra.mxu0 %v161
    %163 = vmatprep.subr.mxu0 0.0
    %164 = vmatpush2.msra.mxu0 0.0
    %165 = vmatprep.subr.mxu0 0.0
    %166 = vmatpush2.msra.mxu0 0.0
    %167 = vmatprep.subr.mxu0 0.0
    %168 = vmatpush2.msra.mxu0 0.0
    %169 = vmatprep.subr.mxu0 0.0
    %170 = vmatpush2.msra.mxu0 0.0
    %171 = vmatprep.subr.mxu0 0.0
    %172 = vmatpush2.msra.mxu0 0.0
    %173 = vmatprep.subr.mxu0 0.0
    %174 = vmatpush2.msra.mxu0 0.0
    %175 = vmatprep.subr.mxu0 0.0
    %176 = vmatpush2.msra.mxu0 0.0
    %177 = vmatprep.subr.mxu0 0.0
    %178 = vmatpush2.msra.mxu0 0.0
    %179 = vmatprep.subr.mxu0 0.0
    %180 = vmatpush2.msra.mxu0 0.0
    %181 = vmatprep.subr.mxu0 0.0
    %182 = vmatpush2.msra.mxu0 0.0
    %183 = vmatprep.subr.mxu0 0.0
    %184 = vmatpush2.msra.mxu0 0.0
    %185 = vmatprep.subr.mxu0 0.0
    %186 = vmatpush2.msra.mxu0 0.0
    %187 = vmatprep.subr.mxu0 0.0
    %188 = vmatpush2.msra.mxu0 0.0
    %189 = vmatprep.subr.mxu0 0.0
    %190 = vmatpush2.msra.mxu0 0.0
    %191 = vmatprep.subr.mxu0 0.0
    %192 = vmatpush2.msra.mxu0 0.0
    %193 = vmatprep.subr.mxu0 0.0
    %194 = vmatpush2.msra.mxu0 0.0
    %195 = vmatprep.mubr.f32.mxu0 0.0
    %v196 = vand.u32 %v29, 4294901760
    %197 = vmatmul.mubr.f32.gmra.mxu0 %v196
    %v198 = vpop.f32.mrf.mxu0
    %v199 = vadd.f32 %v108, %v198
    %v200 = vpop.f32.mrf.mxu0
    %201 = vmatprep.mubr.f32.mxu0 0.0
    %v202 = vand.u32 %v32, 4294901760
    %203 = vmatmul.mubr.f32.gmra.mxu0 %v202
    %v204 = vpop.f32.mrf.mxu0
    %v205 = vadd.f32 %v118, %v204
    %v206 = vpop.f32.mrf.mxu0
    %207 = vdwg.mxu0
    %208 = vmatprep.subr.mxu0 0.0
    %209 = vmatpush1.msra.mxu0 0.0
    %210 = vmatprep.subr.mxu0 0.0
    %211 = vmatpush1.msra.mxu0 0.0
    %212 = vmatprep.subr.mxu0 0.0
    %213 = vmatpush1.msra.mxu0 0.0
    %214 = vmatprep.subr.mxu0 0.0
    %215 = vmatpush1.msra.mxu0 0.0
    %216 = vmatprep.subr.mxu0 0.0
    %217 = vmatpush1.msra.mxu0 0.0
    %218 = vmatprep.subr.mxu0 0.0
    %219 = vmatpush1.msra.mxu0 0.0
    %220 = vmatprep.subr.mxu0 0.0
    %221 = vmatpush1.msra.mxu0 0.0
    %222 = vmatprep.subr.mxu0 0.0
    %223 = vmatpush1.msra.mxu0 0.0
    %224 = vmatprep.subr.mxu0 0.0
    %225 = vmatpush1.msra.mxu0 0.0
    %226 = vmatprep.subr.mxu0 0.0
    %227 = vmatpush1.msra.mxu0 0.0
    %228 = vmatprep.subr.mxu0 0.0
    %229 = vmatpush1.msra.mxu0 0.0
    %230 = vmatprep.subr.mxu0 0.0
    %231 = vmatpush1.msra.mxu0 0.0
    %232 = vmatprep.subr.mxu0 0.0
    %233 = vmatpush1.msra.mxu0 0.0
    %234 = vmatprep.subr.mxu0 0.0
    %235 = vmatpush1.msra.mxu0 0.0
    %236 = vmatprep.subr.mxu0 0.0
    %v237 = vand.u32 %v21, 4294901760
    %v238 = vsub.f32 %v21, %v237
    %239 = vmatpush1.msra.mxu0 %v238
    %240 = vmatprep.subr.mxu0 0.0
    %v241 = vand.u32 %v20, 4294901760
    %v242 = vsub.f32 %v20, %v241
    %243 = vmatpush1.msra.mxu0 %v242
    %244 = vmatprep.subr.mxu0 0.0
    %245 = vmatpush2.msra.mxu0 0.0
    %246 = vmatprep.subr.mxu0 0.0
    %247 = vmatpush2.msra.mxu0 0.0
    %248 = vmatprep.subr.mxu0 0.0
    %249 = vmatpush2.msra.mxu0 0.0
    %250 = vmatprep.subr.mxu0 0.0
    %251 = vmatpush2.msra.mxu0 0.0
    %252 = vmatprep.subr.mxu0 0.0
    %253 = vmatpush2.msra.mxu0 0.0
    %254 = vmatprep.subr.mxu0 0.0
    %255 = vmatpush2.msra.mxu0 0.0
    %256 = vmatprep.subr.mxu0 0.0
    %257 = vmatpush2.msra.mxu0 0.0
    %258 = vmatprep.subr.mxu0 0.0
    %259 = vmatpush2.msra.mxu0 0.0
    %260 = vmatprep.subr.mxu0 0.0
    %261 = vmatpush2.msra.mxu0 0.0
    %262 = vmatprep.subr.mxu0 0.0
    %263 = vmatpush2.msra.mxu0 0.0
    %264 = vmatprep.subr.mxu0 0.0
    %265 = vmatpush2.msra.mxu0 0.0
    %266 = vmatprep.subr.mxu0 0.0
    %267 = vmatpush2.msra.mxu0 0.0
    %268 = vmatprep.subr.mxu0 0.0
    %269 = vmatpush2.msra.mxu0 0.0
    %270 = vmatprep.subr.mxu0 0.0
    %271 = vmatpush2.msra.mxu0 0.0
    %272 = vmatprep.subr.mxu0 0.0
    %273 = vmatpush2.msra.mxu0 0.0
    %274 = vmatprep.subr.mxu0 0.0
    %275 = vmatpush2.msra.mxu0 0.0
    %276 = vmatprep.mubr.f32.mxu0 0.0
    %v277 = vand.u32 %v29, 4294901760
    %v278 = vsub.f32 %v29, %v277
    %279 = vmatmul.mubr.f32.gmra.mxu0 %v278
    %v280 = vpop.f32.mrf.mxu0
    %v281 = vadd.f32 %v199, %v280
    %v282 = vpop.f32.mrf.mxu0
    %283 = vmatprep.mubr.f32.mxu0 0.0
    %v284 = vand.u32 %v32, 4294901760
    %v285 = vsub.f32 %v32, %v284
    %286 = vmatmul.mubr.f32.gmra.mxu0 %v285
    %v287 = vpop.f32.mrf.mxu0
    %v288 = vadd.f32 %v205, %v287
    %v289 = vpop.f32.mrf.mxu0
    %290 = vdwg.mxu0
    %291 = vmatprep.subr.mxu0 0.0
    %292 = vmatpush1.msra.mxu0 0.0
    %293 = vmatprep.subr.mxu0 0.0
    %294 = vmatpush1.msra.mxu0 0.0
    %295 = vmatprep.subr.mxu0 0.0
    %296 = vmatpush1.msra.mxu0 0.0
    %297 = vmatprep.subr.mxu0 0.0
    %298 = vmatpush1.msra.mxu0 0.0
    %299 = vmatprep.subr.mxu0 0.0
    %300 = vmatpush1.msra.mxu0 0.0
    %301 = vmatprep.subr.mxu0 0.0
    %302 = vmatpush1.msra.mxu0 0.0
    %303 = vmatprep.subr.mxu0 0.0
    %304 = vmatpush1.msra.mxu0 0.0
    %305 = vmatprep.subr.mxu0 0.0
    %306 = vmatpush1.msra.mxu0 0.0
    %307 = vmatprep.subr.mxu0 0.0
    %308 = vmatpush1.msra.mxu0 0.0
    %309 = vmatprep.subr.mxu0 0.0
    %310 = vmatpush1.msra.mxu0 0.0
    %311 = vmatprep.subr.mxu0 0.0
    %312 = vmatpush1.msra.mxu0 0.0
    %313 = vmatprep.subr.mxu0 0.0
    %314 = vmatpush1.msra.mxu0 0.0
    %315 = vmatprep.subr.mxu0 0.0
    %316 = vmatpush1.msra.mxu0 0.0
    %317 = vmatprep.subr.mxu0 0.0
    %318 = vmatpush1.msra.mxu0 0.0
    %319 = vmatprep.subr.mxu0 0.0
    %v320 = vand.u32 %v21, 4294901760
    %321 = vmatpush1.msra.mxu0 %v320
    %322 = vmatprep.subr.mxu0 0.0
    %v323 = vand.u32 %v20, 4294901760
    %324 = vmatpush1.msra.mxu0 %v323
    %325 = vmatprep.subr.mxu0 0.0
    %326 = vmatpush2.msra.mxu0 0.0
    %327 = vmatprep.subr.mxu0 0.0
    %328 = vmatpush2.msra.mxu0 0.0
    %329 = vmatprep.subr.mxu0 0.0
    %330 = vmatpush2.msra.mxu0 0.0
    %331 = vmatprep.subr.mxu0 0.0
    %332 = vmatpush2.msra.mxu0 0.0
    %333 = vmatprep.subr.mxu0 0.0
    %334 = vmatpush2.msra.mxu0 0.0
    %335 = vmatprep.subr.mxu0 0.0
    %336 = vmatpush2.msra.mxu0 0.0
    %337 = vmatprep.subr.mxu0 0.0
    %338 = vmatpush2.msra.mxu0 0.0
    %339 = vmatprep.subr.mxu0 0.0
    %340 = vmatpush2.msra.mxu0 0.0
    %341 = vmatprep.subr.mxu0 0.0
    %342 = vmatpush2.msra.mxu0 0.0
    %343 = vmatprep.subr.mxu0 0.0
    %344 = vmatpush2.msra.mxu0 0.0
    %345 = vmatprep.subr.mxu0 0.0
    %346 = vmatpush2.msra.mxu0 0.0
    %347 = vmatprep.subr.mxu0 0.0
    %348 = vmatpush2.msra.mxu0 0.0
    %349 = vmatprep.subr.mxu0 0.0
    %350 = vmatpush2.msra.mxu0 0.0
    %351 = vmatprep.subr.mxu0 0.0
    %352 = vmatpush2.msra.mxu0 0.0
    %353 = vmatprep.subr.mxu0 0.0
    %354 = vmatpush2.msra.mxu0 0.0
    %355 = vmatprep.subr.mxu0 0.0
    %356 = vmatpush2.msra.mxu0 0.0
    %357 = vmatprep.mubr.f32.mxu0 0.0
    %v358 = vand.u32 %v29, 4294901760
    %v359 = vsub.f32 %v29, %v358
    %v360 = vand.u32 %v359, 4294901760
    %361 = vmatmul.mubr.f32.gmra.mxu0 %v360
    %v362 = vpop.f32.mrf.mxu0
    %v363 = vadd.f32 %v281, %v362
    %v364 = vpop.f32.mrf.mxu0
    %365 = vmatprep.mubr.f32.mxu0 0.0
    %v366 = vand.u32 %v32, 4294901760
    %v367 = vsub.f32 %v32, %v366
    %v368 = vand.u32 %v367, 4294901760
    %369 = vmatmul.mubr.f32.gmra.mxu0 %v368
    %v370 = vpop.f32.mrf.mxu0
    %v371 = vadd.f32 %v288, %v370
    %v372 = vpop.f32.mrf.mxu0
    %373 = vdwg.mxu0
    %374 = vmatprep.subr.mxu0 0.0
    %375 = vmatpush1.msra.mxu0 0.0
    %376 = vmatprep.subr.mxu0 0.0
    %377 = vmatpush1.msra.mxu0 0.0
    %378 = vmatprep.subr.mxu0 0.0
    %379 = vmatpush1.msra.mxu0 0.0
    %380 = vmatprep.subr.mxu0 0.0
    %381 = vmatpush1.msra.mxu0 0.0
    %382 = vmatprep.subr.mxu0 0.0
    %383 = vmatpush1.msra.mxu0 0.0
    %384 = vmatprep.subr.mxu0 0.0
    %385 = vmatpush1.msra.mxu0 0.0
    %386 = vmatprep.subr.mxu0 0.0
    %387 = vmatpush1.msra.mxu0 0.0
    %388 = vmatprep.subr.mxu0 0.0
    %389 = vmatpush1.msra.mxu0 0.0
    %390 = vmatprep.subr.mxu0 0.0
    %391 = vmatpush1.msra.mxu0 0.0
    %392 = vmatprep.subr.mxu0 0.0
    %393 = vmatpush1.msra.mxu0 0.0
    %394 = vmatprep.subr.mxu0 0.0
    %395 = vmatpush1.msra.mxu0 0.0
    %396 = vmatprep.subr.mxu0 0.0
    %397 = vmatpush1.msra.mxu0 0.0
    %398 = vmatprep.subr.mxu0 0.0
    %399 = vmatpush1.msra.mxu0 0.0
    %400 = vmatprep.subr.mxu0 0.0
    %401 = vmatpush1.msra.mxu0 0.0
    %402 = vmatprep.subr.mxu0 0.0
    %v403 = vand.u32 %v21, 4294901760
    %v404 = vsub.f32 %v21, %v403
    %v405 = vand.u32 %v404, 4294901760
    %406 = vmatpush1.msra.mxu0 %v405
    %407 = vmatprep.subr.mxu0 0.0
    %v408 = vand.u32 %v20, 4294901760
    %v409 = vsub.f32 %v20, %v408
    %v410 = vand.u32 %v409, 4294901760
    %411 = vmatpush1.msra.mxu0 %v410
    %412 = vmatprep.subr.mxu0 0.0
    %413 = vmatpush2.msra.mxu0 0.0
    %414 = vmatprep.subr.mxu0 0.0
    %415 = vmatpush2.msra.mxu0 0.0
    %416 = vmatprep.subr.mxu0 0.0
    %417 = vmatpush2.msra.mxu0 0.0
    %418 = vmatprep.subr.mxu0 0.0
    %419 = vmatpush2.msra.mxu0 0.0
    %420 = vmatprep.subr.mxu0 0.0
    %421 = vmatpush2.msra.mxu0 0.0
    %422 = vmatprep.subr.mxu0 0.0
    %423 = vmatpush2.msra.mxu0 0.0
    %424 = vmatprep.subr.mxu0 0.0
    %425 = vmatpush2.msra.mxu0 0.0
    %426 = vmatprep.subr.mxu0 0.0
    %427 = vmatpush2.msra.mxu0 0.0
    %428 = vmatprep.subr.mxu0 0.0
    %429 = vmatpush2.msra.mxu0 0.0
    %430 = vmatprep.subr.mxu0 0.0
    %431 = vmatpush2.msra.mxu0 0.0
    %432 = vmatprep.subr.mxu0 0.0
    %433 = vmatpush2.msra.mxu0 0.0
    %434 = vmatprep.subr.mxu0 0.0
    %435 = vmatpush2.msra.mxu0 0.0
    %436 = vmatprep.subr.mxu0 0.0
    %437 = vmatpush2.msra.mxu0 0.0
    %438 = vmatprep.subr.mxu0 0.0
    %439 = vmatpush2.msra.mxu0 0.0
    %440 = vmatprep.subr.mxu0 0.0
    %441 = vmatpush2.msra.mxu0 0.0
    %442 = vmatprep.subr.mxu0 0.0
    %443 = vmatpush2.msra.mxu0 0.0
    %444 = vmatprep.mubr.f32.mxu0 0.0
    %v445 = vand.u32 %v29, 4294901760
    %446 = vmatmul.mubr.f32.gmra.mxu0 %v445
    %v447 = vpop.f32.mrf.mxu0
    %v448 = vadd.f32 %v363, %v447
    %v449 = vpop.f32.mrf.mxu0
    %450 = vmatprep.mubr.f32.mxu0 0.0
    %v451 = vand.u32 %v32, 4294901760
    %452 = vmatmul.mubr.f32.gmra.mxu0 %v451
    %v453 = vpop.f32.mrf.mxu0
    %v454 = vadd.f32 %v371, %v453
    %v455 = vpop.f32.mrf.mxu0
    %456 = vdwg.mxu0
    %457 = vmatprep.subr.mxu0 0.0
    %458 = vmatpush1.msra.mxu0 0.0
    %459 = vmatprep.subr.mxu0 0.0
    %460 = vmatpush1.msra.mxu0 0.0
    %461 = vmatprep.subr.mxu0 0.0
    %462 = vmatpush1.msra.mxu0 0.0
    %463 = vmatprep.subr.mxu0 0.0
    %464 = vmatpush1.msra.mxu0 0.0
    %465 = vmatprep.subr.mxu0 0.0
    %466 = vmatpush1.msra.mxu0 0.0
    %467 = vmatprep.subr.mxu0 0.0
    %468 = vmatpush1.msra.mxu0 0.0
    %469 = vmatprep.subr.mxu0 0.0
    %470 = vmatpush1.msra.mxu0 0.0
    %471 = vmatprep.subr.mxu0 0.0
    %472 = vmatpush1.msra.mxu0 0.0
    %473 = vmatprep.subr.mxu0 0.0
    %474 = vmatpush1.msra.mxu0 0.0
    %475 = vmatprep.subr.mxu0 0.0
    %476 = vmatpush1.msra.mxu0 0.0
    %477 = vmatprep.subr.mxu0 0.0
    %478 = vmatpush1.msra.mxu0 0.0
    %479 = vmatprep.subr.mxu0 0.0
    %480 = vmatpush1.msra.mxu0 0.0
    %481 = vmatprep.subr.mxu0 0.0
    %482 = vmatpush1.msra.mxu0 0.0
    %483 = vmatprep.subr.mxu0 0.0
    %484 = vmatpush1.msra.mxu0 0.0
    %485 = vmatprep.subr.mxu0 0.0
    %v486 = vand.u32 %v21, 4294901760
    %487 = vmatpush1.msra.mxu0 %v486
    %488 = vmatprep.subr.mxu0 0.0
    %v489 = vand.u32 %v20, 4294901760
    %490 = vmatpush1.msra.mxu0 %v489
    %491 = vmatprep.subr.mxu0 0.0
    %492 = vmatpush2.msra.mxu0 0.0
    %493 = vmatprep.subr.mxu0 0.0
    %494 = vmatpush2.msra.mxu0 0.0
    %495 = vmatprep.subr.mxu0 0.0
    %496 = vmatpush2.msra.mxu0 0.0
    %497 = vmatprep.subr.mxu0 0.0
    %498 = vmatpush2.msra.mxu0 0.0
    %499 = vmatprep.subr.mxu0 0.0
    %500 = vmatpush2.msra.mxu0 0.0
    %501 = vmatprep.subr.mxu0 0.0
    %502 = vmatpush2.msra.mxu0 0.0
    %503 = vmatprep.subr.mxu0 0.0
    %504 = vmatpush2.msra.mxu0 0.0
    %505 = vmatprep.subr.mxu0 0.0
    %506 = vmatpush2.msra.mxu0 0.0
    %507 = vmatprep.subr.mxu0 0.0
    %508 = vmatpush2.msra.mxu0 0.0
    %509 = vmatprep.subr.mxu0 0.0
    %510 = vmatpush2.msra.mxu0 0.0
    %511 = vmatprep.subr.mxu0 0.0
    %512 = vmatpush2.msra.mxu0 0.0
    %513 = vmatprep.subr.mxu0 0.0
    %514 = vmatpush2.msra.mxu0 0.0
    %515 = vmatprep.subr.mxu0 0.0
    %516 = vmatpush2.msra.mxu0 0.0
    %517 = vmatprep.subr.mxu0 0.0
    %518 = vmatpush2.msra.mxu0 0.0
    %519 = vmatprep.subr.mxu0 0.0
    %520 = vmatpush2.msra.mxu0 0.0
    %521 = vmatprep.subr.mxu0 0.0
    %522 = vmatpush2.msra.mxu0 0.0
    %523 = vmatprep.mubr.f32.mxu0 0.0
    %v524 = vand.u32 %v29, 4294901760
    %525 = vmatmul.mubr.f32.gmra.mxu0 %v524
    %v526 = vpop.f32.mrf.mxu0
    %v527 = vadd.f32 %v448, %v526
    %v528 = vpop.f32.mrf.mxu0
    %529 = vmatprep.mubr.f32.mxu0 0.0
    %v530 = vand.u32 %v32, 4294901760
    %531 = vmatmul.mubr.f32.gmra.mxu0 %v530
    %v532 = vpop.f32.mrf.mxu0
    %v533 = vadd.f32 %v454, %v532
    %v534 = vpop.f32.mrf.mxu0
    %535 = vdwg.mxu0
    %v536 = vlaneseq
    %v537 = vshrl.u32 %v536, 7
    %v538 = vadd.s32 %v537, 8
    %vm539 = vcmp.lt.s32.totalorder %v537, 0
    %v540 = vsub.s32 0, %v537
    %v541 = vsel %vm539, %v540, %v537
    %v542 = vshrl.u32 %v541, 3
    %v543 = vand.u32 %v541, 7
    %v544 = vsub.s32 0, %v543
    %v545 = vsel %vm539, %v544, %v543
    %vm546 = vcmp.lt.s32.totalorder %v538, 0
    %v547 = vsub.s32 0, %v538
    %v548 = vsel %vm546, %v547, %v538
    %v549 = vshrl.u32 %v548, 3
    %v550 = vand.u32 %v548, 7
    %v551 = vsub.s32 0, %v550
    %v552 = vsel %vm546, %v551, %v550
    %vm553 = vcmp.ne.s32.totalorder %v545, 0
    %vm554 = vcmp.ne.s32.totalorder %v552, 0
    %vm555 = vcmp.lt.s32.totalorder %v545, 0
    %vm556 = vcmp.lt.s32.totalorder %v552, 0
    %vm557 = vmand %vm555, %vm553
    %vm558 = vmand %vm556, %vm554
    %v559 = vadd.s32 %v545, 8
    %v560 = vadd.s32 %v552, 8
    %v561 = vsel %vm557, %v559, %v545
    %v562 = vsel %vm558, %v560, %v552
    %v563 = vld [vmem:[%s1] sm:$0xff]
    %v564 = vld [vmem:[%s1 + $0x8] sm:$0xff]
    %v565 = vld [vmem:[%s1 + $0x10] sm:$0xff]
    %v566 = vld [vmem:[%s1 + $0x18] sm:$0xff]
    %v567 = vld [vmem:[%s2 + $0x3] sm:$0x1]
    %v568 = vlaneseq
    %v569 = vshrl.u32 %v568, 7
    %v570 = vsub.s32 0, %v569
    %v571 = vrot.slane %v567, %v570
    %vm572 = vcmask 261120
    %v574 = vsel %vm572, %v527, 0
    %v577 = vsel %vm572, %v533, 0
    %579 = vmatprep.subr.mxu0 0.0
    %580 = vmatpush1.msra.mxu0 0.0
    %581 = vmatprep.subr.mxu0 0.0
    %582 = vmatpush1.msra.mxu0 0.0
    %583 = vmatprep.subr.mxu0 0.0
    %584 = vmatpush1.msra.mxu0 0.0
    %585 = vmatprep.subr.mxu0 0.0
    %586 = vmatpush1.msra.mxu0 0.0
    %587 = vmatprep.subr.mxu0 0.0
    %588 = vmatpush1.msra.mxu0 0.0
    %589 = vmatprep.subr.mxu0 0.0
    %590 = vmatpush1.msra.mxu0 0.0
    %591 = vmatprep.subr.mxu0 0.0
    %592 = vmatpush1.msra.mxu0 0.0
    %593 = vmatprep.subr.mxu0 0.0
    %594 = vmatpush1.msra.mxu0 0.0
    %595 = vmatprep.subr.mxu0 0.0
    %596 = vmatpush1.msra.mxu0 0.0
    %597 = vmatprep.subr.mxu0 0.0
    %598 = vmatpush1.msra.mxu0 0.0
    %599 = vmatprep.subr.mxu0 0.0
    %600 = vmatpush1.msra.mxu0 0.0
    %601 = vmatprep.subr.mxu0 0.0
    %602 = vmatpush1.msra.mxu0 0.0
    %603 = vmatprep.subr.mxu0 0.0
    %v604 = vand.u32 %v566, 4294901760
    %605 = vmatpush1.msra.mxu0 %v604
    %606 = vmatprep.subr.mxu0 0.0
    %v607 = vand.u32 %v565, 4294901760
    %608 = vmatpush1.msra.mxu0 %v607
    %609 = vmatprep.subr.mxu0 0.0
    %v610 = vand.u32 %v564, 4294901760
    %611 = vmatpush1.msra.mxu0 %v610
    %612 = vmatprep.subr.mxu0 0.0
    %v613 = vand.u32 %v563, 4294901760
    %614 = vmatpush1.msra.mxu0 %v613
    %615 = vmatprep.subr.mxu0 0.0
    %616 = vmatpush2.msra.mxu0 0.0
    %617 = vmatprep.subr.mxu0 0.0
    %618 = vmatpush2.msra.mxu0 0.0
    %619 = vmatprep.subr.mxu0 0.0
    %620 = vmatpush2.msra.mxu0 0.0
    %621 = vmatprep.subr.mxu0 0.0
    %622 = vmatpush2.msra.mxu0 0.0
    %623 = vmatprep.subr.mxu0 0.0
    %624 = vmatpush2.msra.mxu0 0.0
    %625 = vmatprep.subr.mxu0 0.0
    %626 = vmatpush2.msra.mxu0 0.0
    %627 = vmatprep.subr.mxu0 0.0
    %628 = vmatpush2.msra.mxu0 0.0
    %629 = vmatprep.subr.mxu0 0.0
    %630 = vmatpush2.msra.mxu0 0.0
    %631 = vmatprep.subr.mxu0 0.0
    %632 = vmatpush2.msra.mxu0 0.0
    %633 = vmatprep.subr.mxu0 0.0
    %634 = vmatpush2.msra.mxu0 0.0
    %635 = vmatprep.subr.mxu0 0.0
    %636 = vmatpush2.msra.mxu0 0.0
    %637 = vmatprep.subr.mxu0 0.0
    %638 = vmatpush2.msra.mxu0 0.0
    %639 = vmatprep.subr.mxu0 0.0
    %640 = vmatpush2.msra.mxu0 0.0
    %641 = vmatprep.subr.mxu0 0.0
    %642 = vmatpush2.msra.mxu0 0.0
    %643 = vmatprep.subr.mxu0 0.0
    %644 = vmatpush2.msra.mxu0 0.0
    %645 = vmatprep.subr.mxu0 0.0
    %646 = vmatpush2.msra.mxu0 0.0
    %647 = vmatprep.mubr.f32.mxu0 0.0
    %v648 = vand.u32 %v574, 4294901760
    %v649 = vsub.f32 %v574, %v648
    %v650 = vand.u32 %v649, 4294901760
    %v651 = vsub.f32 %v649, %v650
    %v652 = vand.u32 %v651, 4294901760
    %653 = vmatmul.mubr.f32.gmra.mxu0 %v652
    %v654 = vpop.f32.mrf.mxu0
    %v655 = vadd.f32 %v571, %v654
    %v656 = vpop.f32.mrf.mxu0
    %657 = vmatprep.mubr.f32.mxu0 0.0
    %v658 = vand.u32 %v577, 4294901760
    %v659 = vsub.f32 %v577, %v658
    %v660 = vand.u32 %v659, 4294901760
    %v661 = vsub.f32 %v659, %v660
    %v662 = vand.u32 %v661, 4294901760
    %663 = vmatmul.mubr.f32.gmra.mxu0 %v662
    %v664 = vpop.f32.mrf.mxu0
    %v665 = vadd.f32 %v571, %v664
    %v666 = vpop.f32.mrf.mxu0
    %667 = vdwg.mxu0
    %668 = vmatprep.subr.mxu0 0.0
    %669 = vmatpush1.msra.mxu0 0.0
    %670 = vmatprep.subr.mxu0 0.0
    %671 = vmatpush1.msra.mxu0 0.0
    %672 = vmatprep.subr.mxu0 0.0
    %673 = vmatpush1.msra.mxu0 0.0
    %674 = vmatprep.subr.mxu0 0.0
    %675 = vmatpush1.msra.mxu0 0.0
    %676 = vmatprep.subr.mxu0 0.0
    %677 = vmatpush1.msra.mxu0 0.0
    %678 = vmatprep.subr.mxu0 0.0
    %679 = vmatpush1.msra.mxu0 0.0
    %680 = vmatprep.subr.mxu0 0.0
    %681 = vmatpush1.msra.mxu0 0.0
    %682 = vmatprep.subr.mxu0 0.0
    %683 = vmatpush1.msra.mxu0 0.0
    %684 = vmatprep.subr.mxu0 0.0
    %685 = vmatpush1.msra.mxu0 0.0
    %686 = vmatprep.subr.mxu0 0.0
    %687 = vmatpush1.msra.mxu0 0.0
    %688 = vmatprep.subr.mxu0 0.0
    %689 = vmatpush1.msra.mxu0 0.0
    %690 = vmatprep.subr.mxu0 0.0
    %691 = vmatpush1.msra.mxu0 0.0
    %692 = vmatprep.subr.mxu0 0.0
    %v693 = vand.u32 %v566, 4294901760
    %v694 = vsub.f32 %v566, %v693
    %v695 = vand.u32 %v694, 4294901760
    %v696 = vsub.f32 %v694, %v695
    %v697 = vand.u32 %v696, 4294901760
    %698 = vmatpush1.msra.mxu0 %v697
    %699 = vmatprep.subr.mxu0 0.0
    %v700 = vand.u32 %v565, 4294901760
    %v701 = vsub.f32 %v565, %v700
    %v702 = vand.u32 %v701, 4294901760
    %v703 = vsub.f32 %v701, %v702
    %v704 = vand.u32 %v703, 4294901760
    %705 = vmatpush1.msra.mxu0 %v704
    %706 = vmatprep.subr.mxu0 0.0
    %v707 = vand.u32 %v564, 4294901760
    %v708 = vsub.f32 %v564, %v707
    %v709 = vand.u32 %v708, 4294901760
    %v710 = vsub.f32 %v708, %v709
    %v711 = vand.u32 %v710, 4294901760
    %712 = vmatpush1.msra.mxu0 %v711
    %713 = vmatprep.subr.mxu0 0.0
    %v714 = vand.u32 %v563, 4294901760
    %v715 = vsub.f32 %v563, %v714
    %v716 = vand.u32 %v715, 4294901760
    %v717 = vsub.f32 %v715, %v716
    %v718 = vand.u32 %v717, 4294901760
    %719 = vmatpush1.msra.mxu0 %v718
    %720 = vmatprep.subr.mxu0 0.0
    %721 = vmatpush2.msra.mxu0 0.0
    %722 = vmatprep.subr.mxu0 0.0
    %723 = vmatpush2.msra.mxu0 0.0
    %724 = vmatprep.subr.mxu0 0.0
    %725 = vmatpush2.msra.mxu0 0.0
    %726 = vmatprep.subr.mxu0 0.0
    %727 = vmatpush2.msra.mxu0 0.0
    %728 = vmatprep.subr.mxu0 0.0
    %729 = vmatpush2.msra.mxu0 0.0
    %730 = vmatprep.subr.mxu0 0.0
    %731 = vmatpush2.msra.mxu0 0.0
    %732 = vmatprep.subr.mxu0 0.0
    %733 = vmatpush2.msra.mxu0 0.0
    %734 = vmatprep.subr.mxu0 0.0
    %735 = vmatpush2.msra.mxu0 0.0
    %736 = vmatprep.subr.mxu0 0.0
    %737 = vmatpush2.msra.mxu0 0.0
    %738 = vmatprep.subr.mxu0 0.0
    %739 = vmatpush2.msra.mxu0 0.0
    %740 = vmatprep.subr.mxu0 0.0
    %741 = vmatpush2.msra.mxu0 0.0
    %742 = vmatprep.subr.mxu0 0.0
    %743 = vmatpush2.msra.mxu0 0.0
    %744 = vmatprep.subr.mxu0 0.0
    %745 = vmatpush2.msra.mxu0 0.0
    %746 = vmatprep.subr.mxu0 0.0
    %747 = vmatpush2.msra.mxu0 0.0
    %748 = vmatprep.subr.mxu0 0.0
    %749 = vmatpush2.msra.mxu0 0.0
    %750 = vmatprep.subr.mxu0 0.0
    %751 = vmatpush2.msra.mxu0 0.0
    %752 = vmatprep.mubr.f32.mxu0 0.0
    %v753 = vand.u32 %v574, 4294901760
    %754 = vmatmul.mubr.f32.gmra.mxu0 %v753
    %v755 = vpop.f32.mrf.mxu0
    %v756 = vadd.f32 %v655, %v755
    %v757 = vpop.f32.mrf.mxu0
    %758 = vmatprep.mubr.f32.mxu0 0.0
    %v759 = vand.u32 %v577, 4294901760
    %760 = vmatmul.mubr.f32.gmra.mxu0 %v759
    %v761 = vpop.f32.mrf.mxu0
    %v762 = vadd.f32 %v665, %v761
    %v763 = vpop.f32.mrf.mxu0
    %764 = vdwg.mxu0
    %765 = vmatprep.subr.mxu0 0.0
    %766 = vmatpush1.msra.mxu0 0.0
    %767 = vmatprep.subr.mxu0 0.0
    %768 = vmatpush1.msra.mxu0 0.0
    %769 = vmatprep.subr.mxu0 0.0
    %770 = vmatpush1.msra.mxu0 0.0
    %771 = vmatprep.subr.mxu0 0.0
    %772 = vmatpush1.msra.mxu0 0.0
    %773 = vmatprep.subr.mxu0 0.0
    %774 = vmatpush1.msra.mxu0 0.0
    %775 = vmatprep.subr.mxu0 0.0
    %776 = vmatpush1.msra.mxu0 0.0
    %777 = vmatprep.subr.mxu0 0.0
    %778 = vmatpush1.msra.mxu0 0.0
    %779 = vmatprep.subr.mxu0 0.0
    %780 = vmatpush1.msra.mxu0 0.0
    %781 = vmatprep.subr.mxu0 0.0
    %782 = vmatpush1.msra.mxu0 0.0
    %783 = vmatprep.subr.mxu0 0.0
    %784 = vmatpush1.msra.mxu0 0.0
    %785 = vmatprep.subr.mxu0 0.0
    %786 = vmatpush1.msra.mxu0 0.0
    %787 = vmatprep.subr.mxu0 0.0
    %788 = vmatpush1.msra.mxu0 0.0
    %789 = vmatprep.subr.mxu0 0.0
    %v790 = vand.u32 %v566, 4294901760
    %v791 = vsub.f32 %v566, %v790
    %792 = vmatpush1.msra.mxu0 %v791
    %793 = vmatprep.subr.mxu0 0.0
    %v794 = vand.u32 %v565, 4294901760
    %v795 = vsub.f32 %v565, %v794
    %796 = vmatpush1.msra.mxu0 %v795
    %797 = vmatprep.subr.mxu0 0.0
    %v798 = vand.u32 %v564, 4294901760
    %v799 = vsub.f32 %v564, %v798
    %800 = vmatpush1.msra.mxu0 %v799
    %801 = vmatprep.subr.mxu0 0.0
    %v802 = vand.u32 %v563, 4294901760
    %v803 = vsub.f32 %v563, %v802
    %804 = vmatpush1.msra.mxu0 %v803
    %805 = vmatprep.subr.mxu0 0.0
    %806 = vmatpush2.msra.mxu0 0.0
    %807 = vmatprep.subr.mxu0 0.0
    %808 = vmatpush2.msra.mxu0 0.0
    %809 = vmatprep.subr.mxu0 0.0
    %810 = vmatpush2.msra.mxu0 0.0
    %811 = vmatprep.subr.mxu0 0.0
    %812 = vmatpush2.msra.mxu0 0.0
    %813 = vmatprep.subr.mxu0 0.0
    %814 = vmatpush2.msra.mxu0 0.0
    %815 = vmatprep.subr.mxu0 0.0
    %816 = vmatpush2.msra.mxu0 0.0
    %817 = vmatprep.subr.mxu0 0.0
    %818 = vmatpush2.msra.mxu0 0.0
    %819 = vmatprep.subr.mxu0 0.0
    %820 = vmatpush2.msra.mxu0 0.0
    %821 = vmatprep.subr.mxu0 0.0
    %822 = vmatpush2.msra.mxu0 0.0
    %823 = vmatprep.subr.mxu0 0.0
    %824 = vmatpush2.msra.mxu0 0.0
    %825 = vmatprep.subr.mxu0 0.0
    %826 = vmatpush2.msra.mxu0 0.0
    %827 = vmatprep.subr.mxu0 0.0
    %828 = vmatpush2.msra.mxu0 0.0
    %829 = vmatprep.subr.mxu0 0.0
    %830 = vmatpush2.msra.mxu0 0.0
    %831 = vmatprep.subr.mxu0 0.0
    %832 = vmatpush2.msra.mxu0 0.0
    %833 = vmatprep.subr.mxu0 0.0
    %834 = vmatpush2.msra.mxu0 0.0
    %835 = vmatprep.subr.mxu0 0.0
    %836 = vmatpush2.msra.mxu0 0.0
    %837 = vmatprep.mubr.f32.mxu0 0.0
    %v838 = vand.u32 %v574, 4294901760
    %v839 = vsub.f32 %v574, %v838
    %840 = vmatmul.mubr.f32.gmra.mxu0 %v839
    %v841 = vpop.f32.mrf.mxu0
    %v842 = vadd.f32 %v756, %v841
    %v843 = vpop.f32.mrf.mxu0
    %844 = vmatprep.mubr.f32.mxu0 0.0
    %v845 = vand.u32 %v577, 4294901760
    %v846 = vsub.f32 %v577, %v845
    %847 = vmatmul.mubr.f32.gmra.mxu0 %v846
    %v848 = vpop.f32.mrf.mxu0
    %v849 = vadd.f32 %v762, %v848
    %v850 = vpop.f32.mrf.mxu0
    %851 = vdwg.mxu0
    %852 = vmatprep.subr.mxu0 0.0
    %853 = vmatpush1.msra.mxu0 0.0
    %854 = vmatprep.subr.mxu0 0.0
    %855 = vmatpush1.msra.mxu0 0.0
    %856 = vmatprep.subr.mxu0 0.0
    %857 = vmatpush1.msra.mxu0 0.0
    %858 = vmatprep.subr.mxu0 0.0
    %859 = vmatpush1.msra.mxu0 0.0
    %860 = vmatprep.subr.mxu0 0.0
    %861 = vmatpush1.msra.mxu0 0.0
    %862 = vmatprep.subr.mxu0 0.0
    %863 = vmatpush1.msra.mxu0 0.0
    %864 = vmatprep.subr.mxu0 0.0
    %865 = vmatpush1.msra.mxu0 0.0
    %866 = vmatprep.subr.mxu0 0.0
    %867 = vmatpush1.msra.mxu0 0.0
    %868 = vmatprep.subr.mxu0 0.0
    %869 = vmatpush1.msra.mxu0 0.0
    %870 = vmatprep.subr.mxu0 0.0
    %871 = vmatpush1.msra.mxu0 0.0
    %872 = vmatprep.subr.mxu0 0.0
    %873 = vmatpush1.msra.mxu0 0.0
    %874 = vmatprep.subr.mxu0 0.0
    %875 = vmatpush1.msra.mxu0 0.0
    %876 = vmatprep.subr.mxu0 0.0
    %v877 = vand.u32 %v566, 4294901760
    %878 = vmatpush1.msra.mxu0 %v877
    %879 = vmatprep.subr.mxu0 0.0
    %v880 = vand.u32 %v565, 4294901760
    %881 = vmatpush1.msra.mxu0 %v880
    %882 = vmatprep.subr.mxu0 0.0
    %v883 = vand.u32 %v564, 4294901760
    %884 = vmatpush1.msra.mxu0 %v883
    %885 = vmatprep.subr.mxu0 0.0
    %v886 = vand.u32 %v563, 4294901760
    %887 = vmatpush1.msra.mxu0 %v886
    %888 = vmatprep.subr.mxu0 0.0
    %889 = vmatpush2.msra.mxu0 0.0
    %890 = vmatprep.subr.mxu0 0.0
    %891 = vmatpush2.msra.mxu0 0.0
    %892 = vmatprep.subr.mxu0 0.0
    %893 = vmatpush2.msra.mxu0 0.0
    %894 = vmatprep.subr.mxu0 0.0
    %895 = vmatpush2.msra.mxu0 0.0
    %896 = vmatprep.subr.mxu0 0.0
    %897 = vmatpush2.msra.mxu0 0.0
    %898 = vmatprep.subr.mxu0 0.0
    %899 = vmatpush2.msra.mxu0 0.0
    %900 = vmatprep.subr.mxu0 0.0
    %901 = vmatpush2.msra.mxu0 0.0
    %902 = vmatprep.subr.mxu0 0.0
    %903 = vmatpush2.msra.mxu0 0.0
    %904 = vmatprep.subr.mxu0 0.0
    %905 = vmatpush2.msra.mxu0 0.0
    %906 = vmatprep.subr.mxu0 0.0
    %907 = vmatpush2.msra.mxu0 0.0
    %908 = vmatprep.subr.mxu0 0.0
    %909 = vmatpush2.msra.mxu0 0.0
    %910 = vmatprep.subr.mxu0 0.0
    %911 = vmatpush2.msra.mxu0 0.0
    %912 = vmatprep.subr.mxu0 0.0
    %913 = vmatpush2.msra.mxu0 0.0
    %914 = vmatprep.subr.mxu0 0.0
    %915 = vmatpush2.msra.mxu0 0.0
    %916 = vmatprep.subr.mxu0 0.0
    %917 = vmatpush2.msra.mxu0 0.0
    %918 = vmatprep.subr.mxu0 0.0
    %919 = vmatpush2.msra.mxu0 0.0
    %920 = vmatprep.mubr.f32.mxu0 0.0
    %v921 = vand.u32 %v574, 4294901760
    %v922 = vsub.f32 %v574, %v921
    %v923 = vand.u32 %v922, 4294901760
    %924 = vmatmul.mubr.f32.gmra.mxu0 %v923
    %v925 = vpop.f32.mrf.mxu0
    %v926 = vadd.f32 %v842, %v925
    %v927 = vpop.f32.mrf.mxu0
    %928 = vmatprep.mubr.f32.mxu0 0.0
    %v929 = vand.u32 %v577, 4294901760
    %v930 = vsub.f32 %v577, %v929
    %v931 = vand.u32 %v930, 4294901760
    %932 = vmatmul.mubr.f32.gmra.mxu0 %v931
    %v933 = vpop.f32.mrf.mxu0
    %v934 = vadd.f32 %v849, %v933
    %v935 = vpop.f32.mrf.mxu0
    %936 = vdwg.mxu0
    %937 = vmatprep.subr.mxu0 0.0
    %938 = vmatpush1.msra.mxu0 0.0
    %939 = vmatprep.subr.mxu0 0.0
    %940 = vmatpush1.msra.mxu0 0.0
    %941 = vmatprep.subr.mxu0 0.0
    %942 = vmatpush1.msra.mxu0 0.0
    %943 = vmatprep.subr.mxu0 0.0
    %944 = vmatpush1.msra.mxu0 0.0
    %945 = vmatprep.subr.mxu0 0.0
    %946 = vmatpush1.msra.mxu0 0.0
    %947 = vmatprep.subr.mxu0 0.0
    %948 = vmatpush1.msra.mxu0 0.0
    %949 = vmatprep.subr.mxu0 0.0
    %950 = vmatpush1.msra.mxu0 0.0
    %951 = vmatprep.subr.mxu0 0.0
    %952 = vmatpush1.msra.mxu0 0.0
    %953 = vmatprep.subr.mxu0 0.0
    %954 = vmatpush1.msra.mxu0 0.0
    %955 = vmatprep.subr.mxu0 0.0
    %956 = vmatpush1.msra.mxu0 0.0
    %957 = vmatprep.subr.mxu0 0.0
    %958 = vmatpush1.msra.mxu0 0.0
    %959 = vmatprep.subr.mxu0 0.0
    %960 = vmatpush1.msra.mxu0 0.0
    %961 = vmatprep.subr.mxu0 0.0
    %v962 = vand.u32 %v566, 4294901760
    %v963 = vsub.f32 %v566, %v962
    %v964 = vand.u32 %v963, 4294901760
    %965 = vmatpush1.msra.mxu0 %v964
    %966 = vmatprep.subr.mxu0 0.0
    %v967 = vand.u32 %v565, 4294901760
    %v968 = vsub.f32 %v565, %v967
    %v969 = vand.u32 %v968, 4294901760
    %970 = vmatpush1.msra.mxu0 %v969
    %971 = vmatprep.subr.mxu0 0.0
    %v972 = vand.u32 %v564, 4294901760
    %v973 = vsub.f32 %v564, %v972
    %v974 = vand.u32 %v973, 4294901760
    %975 = vmatpush1.msra.mxu0 %v974
    %976 = vmatprep.subr.mxu0 0.0
    %v977 = vand.u32 %v563, 4294901760
    %v978 = vsub.f32 %v563, %v977
    %v979 = vand.u32 %v978, 4294901760
    %980 = vmatpush1.msra.mxu0 %v979
    %981 = vmatprep.subr.mxu0 0.0
    %982 = vmatpush2.msra.mxu0 0.0
    %983 = vmatprep.subr.mxu0 0.0
    %984 = vmatpush2.msra.mxu0 0.0
    %985 = vmatprep.subr.mxu0 0.0
    %986 = vmatpush2.msra.mxu0 0.0
    %987 = vmatprep.subr.mxu0 0.0
    %988 = vmatpush2.msra.mxu0 0.0
    %989 = vmatprep.subr.mxu0 0.0
    %990 = vmatpush2.msra.mxu0 0.0
    %991 = vmatprep.subr.mxu0 0.0
    %992 = vmatpush2.msra.mxu0 0.0
    %993 = vmatprep.subr.mxu0 0.0
    %994 = vmatpush2.msra.mxu0 0.0
    %995 = vmatprep.subr.mxu0 0.0
    %996 = vmatpush2.msra.mxu0 0.0
    %997 = vmatprep.subr.mxu0 0.0
    %998 = vmatpush2.msra.mxu0 0.0
    %999 = vmatprep.subr.mxu0 0.0
    %1000 = vmatpush2.msra.mxu0 0.0
    %1001 = vmatprep.subr.mxu0 0.0
    %1002 = vmatpush2.msra.mxu0 0.0
    %1003 = vmatprep.subr.mxu0 0.0
    %1004 = vmatpush2.msra.mxu0 0.0
    %1005 = vmatprep.subr.mxu0 0.0
    %1006 = vmatpush2.msra.mxu0 0.0
    %1007 = vmatprep.subr.mxu0 0.0
    %1008 = vmatpush2.msra.mxu0 0.0
    %1009 = vmatprep.subr.mxu0 0.0
    %1010 = vmatpush2.msra.mxu0 0.0
    %1011 = vmatprep.subr.mxu0 0.0
    %1012 = vmatpush2.msra.mxu0 0.0
    %1013 = vmatprep.mubr.f32.mxu0 0.0
    %v1014 = vand.u32 %v574, 4294901760
    %1015 = vmatmul.mubr.f32.gmra.mxu0 %v1014
    %v1016 = vpop.f32.mrf.mxu0
    %v1017 = vadd.f32 %v926, %v1016
    %v1018 = vpop.f32.mrf.mxu0
    %1019 = vmatprep.mubr.f32.mxu0 0.0
    %v1020 = vand.u32 %v577, 4294901760
    %1021 = vmatmul.mubr.f32.gmra.mxu0 %v1020
    %v1022 = vpop.f32.mrf.mxu0
    %v1023 = vadd.f32 %v934, %v1022
    %v1024 = vpop.f32.mrf.mxu0
    %1025 = vdwg.mxu0
    %1026 = vmatprep.subr.mxu0 0.0
    %1027 = vmatpush1.msra.mxu0 0.0
    %1028 = vmatprep.subr.mxu0 0.0
    %1029 = vmatpush1.msra.mxu0 0.0
    %1030 = vmatprep.subr.mxu0 0.0
    %1031 = vmatpush1.msra.mxu0 0.0
    %1032 = vmatprep.subr.mxu0 0.0
    %1033 = vmatpush1.msra.mxu0 0.0
    %1034 = vmatprep.subr.mxu0 0.0
    %1035 = vmatpush1.msra.mxu0 0.0
    %1036 = vmatprep.subr.mxu0 0.0
    %1037 = vmatpush1.msra.mxu0 0.0
    %1038 = vmatprep.subr.mxu0 0.0
    %1039 = vmatpush1.msra.mxu0 0.0
    %1040 = vmatprep.subr.mxu0 0.0
    %1041 = vmatpush1.msra.mxu0 0.0
    %1042 = vmatprep.subr.mxu0 0.0
    %1043 = vmatpush1.msra.mxu0 0.0
    %1044 = vmatprep.subr.mxu0 0.0
    %1045 = vmatpush1.msra.mxu0 0.0
    %1046 = vmatprep.subr.mxu0 0.0
    %1047 = vmatpush1.msra.mxu0 0.0
    %1048 = vmatprep.subr.mxu0 0.0
    %1049 = vmatpush1.msra.mxu0 0.0
    %1050 = vmatprep.subr.mxu0 0.0
    %v1051 = vand.u32 %v566, 4294901760
    %1052 = vmatpush1.msra.mxu0 %v1051
    %1053 = vmatprep.subr.mxu0 0.0
    %v1054 = vand.u32 %v565, 4294901760
    %1055 = vmatpush1.msra.mxu0 %v1054
    %1056 = vmatprep.subr.mxu0 0.0
    %v1057 = vand.u32 %v564, 4294901760
    %1058 = vmatpush1.msra.mxu0 %v1057
    %1059 = vmatprep.subr.mxu0 0.0
    %v1060 = vand.u32 %v563, 4294901760
    %1061 = vmatpush1.msra.mxu0 %v1060
    %1062 = vmatprep.subr.mxu0 0.0
    %1063 = vmatpush2.msra.mxu0 0.0
    %1064 = vmatprep.subr.mxu0 0.0
    %1065 = vmatpush2.msra.mxu0 0.0
    %1066 = vmatprep.subr.mxu0 0.0
    %1067 = vmatpush2.msra.mxu0 0.0
    %1068 = vmatprep.subr.mxu0 0.0
    %1069 = vmatpush2.msra.mxu0 0.0
    %1070 = vmatprep.subr.mxu0 0.0
    %1071 = vmatpush2.msra.mxu0 0.0
    %1072 = vmatprep.subr.mxu0 0.0
    %1073 = vmatpush2.msra.mxu0 0.0
    %1074 = vmatprep.subr.mxu0 0.0
    %1075 = vmatpush2.msra.mxu0 0.0
    %1076 = vmatprep.subr.mxu0 0.0
    %1077 = vmatpush2.msra.mxu0 0.0
    %1078 = vmatprep.subr.mxu0 0.0
    %1079 = vmatpush2.msra.mxu0 0.0
    %1080 = vmatprep.subr.mxu0 0.0
    %1081 = vmatpush2.msra.mxu0 0.0
    %1082 = vmatprep.subr.mxu0 0.0
    %1083 = vmatpush2.msra.mxu0 0.0
    %1084 = vmatprep.subr.mxu0 0.0
    %1085 = vmatpush2.msra.mxu0 0.0
    %1086 = vmatprep.subr.mxu0 0.0
    %1087 = vmatpush2.msra.mxu0 0.0
    %1088 = vmatprep.subr.mxu0 0.0
    %1089 = vmatpush2.msra.mxu0 0.0
    %1090 = vmatprep.subr.mxu0 0.0
    %1091 = vmatpush2.msra.mxu0 0.0
    %1092 = vmatprep.subr.mxu0 0.0
    %1093 = vmatpush2.msra.mxu0 0.0
    %1094 = vmatprep.mubr.f32.mxu0 0.0
    %v1095 = vand.u32 %v574, 4294901760
    %1096 = vmatmul.mubr.f32.gmra.mxu0 %v1095
    %v1097 = vpop.f32.mrf.mxu0
    %v1098 = vadd.f32 %v1017, %v1097
    %v1099 = vpop.f32.mrf.mxu0
    %1100 = vmatprep.mubr.f32.mxu0 0.0
    %v1101 = vand.u32 %v577, 4294901760
    %1102 = vmatmul.mubr.f32.gmra.mxu0 %v1101
    %v1103 = vpop.f32.mrf.mxu0
    %v1104 = vadd.f32 %v1023, %v1103
    %v1105 = vpop.f32.mrf.mxu0
    %1106 = vdwg.mxu0
    %v1107 = vld [vmem:[%s2] sm:$0x7]
    %v1108 = vlaneseq
    %v1109 = vshrl.u32 %v1108, 7
    %v1110 = vsub.s32 2, %v1109
    %v1111 = vrot.slane %v1107, %v1110
    %v1112 = vmul.f32 %v1098, %v1111
    %v1113 = vmul.f32 %v1104, %v1111
    %vm1116 = vcmask 1041408
    %v1117 = vrot.slane %v1098, 6
    %v1118 = vrot.slane %v1104, 6
    %v1119 = vsel %vm1116, %v1117, %v1118
    %v1122 = vsel %vm1116, 0.0, %v1117
    %vm1123 = vcmp.ge.s32.totalorder %v561, 2
    %vm1124 = vcmp.ge.s32.totalorder %v562, 2
    %v1125 = vsel %vm1123, 1, 0
    %v1126 = vsel %vm1124, 1, 0
    %vm1127 = vcmp.eq.s32.totalorder %v1125, 1
    %vm1128 = vcmp.eq.s32.totalorder %v1126, 1
    %v1129 = vsel %vm1127, %v1122, 0.0
    %v1130 = vsel %vm1128, %v1119, 0.0
    %v1131 = vlaneseq
    %v1132 = vshrl.u32 %v1131, 7
    %v1133 = vsub.s32 0, %v1132
    %v1134 = vrot.slane %v1107, %v1133
    %v1135 = vmul.f32 %v1129, %v1134
    %v1136 = vmul.f32 %v1130, %v1134
    %v1137 = vadd.f32 %v1112, %v1135
    %v1138 = vadd.f32 %v1113, %v1136
    %vm1139 = vcmask 1040384
    %v1140 = vrot.slane %v1098, 7
    %v1141 = vrot.slane %v1104, 7
    %v1142 = vsel %vm1139, %v1140, %v1141
    %v1145 = vsel %vm1139, 0.0, %v1140
    %vm1146 = vcmp.ge.s32.totalorder %v561, 1
    %vm1147 = vcmp.ge.s32.totalorder %v562, 1
    %v1148 = vsel %vm1146, 1, 0
    %v1149 = vsel %vm1147, 1, 0
    %vm1150 = vcmp.eq.s32.totalorder %v1148, 1
    %vm1151 = vcmp.eq.s32.totalorder %v1149, 1
    %v1152 = vsel %vm1150, %v1145, 0.0
    %v1153 = vsel %vm1151, %v1142, 0.0
    %v1154 = vlaneseq
    %v1155 = vshrl.u32 %v1154, 7
    %v1156 = vsub.s32 1, %v1155
    %v1157 = vrot.slane %v1107, %v1156
    %v1158 = vmul.f32 %v1152, %v1157
    %v1159 = vmul.f32 %v1153, %v1157
    %v1160 = vadd.f32 %v1137, %v1158
    %v1161 = vadd.f32 %v1138, %v1159
    %v1162 = vld [vmem:[%s2 + $0x5] sm:$0x1]
    %v1163 = vlaneseq
    %v1164 = vshrl.u32 %v1163, 7
    %v1165 = vsub.s32 0, %v1164
    %v1166 = vrot.slane %v1162, %v1165
    %v1167 = vadd.f32 %v1160, %v1166
    %v1168 = vadd.f32 %v1161, %v1166
    %v1169 = vsub.f32 0.0, %v1167
    %v1170 = vsub.f32 0.0, %v1168
    %v1171 = vmul.f32 %v1169, 1.442695
    %v1172 = vpow.pop %v1171
    %v1173 = vmul.f32 %v1170, 1.442695
    %v1174 = vpow.pop %v1173
    %v1175 = vadd.f32 %v1172, 1.0
    %v1176 = vadd.f32 %v1174, 1.0
    %v1177 = vrcp.pop %v1175
    %v1178 = vmul.f32 1.0, %v1177
    %v1179 = vrcp.pop %v1176
    %v1180 = vmul.f32 1.0, %v1179
    %v1181 = vmul.f32 %v1167, %v1178
    %v1182 = vmul.f32 %v1168, %v1180
    %v1183 = vld [vmem:[%s1 + $0x20] sm:$0xff]
    %v1184 = vld [vmem:[%s1 + $0x28] sm:$0xff]
    %v1185 = vld [vmem:[%s1 + $0x30] sm:$0xff]
    %v1186 = vld [vmem:[%s1 + $0x38] sm:$0xff]
    %v1187 = vld [vmem:[%s1 + $0x40] sm:$0xff]
    %v1188 = vld [vmem:[%s1 + $0x48] sm:$0xff]
    %v1189 = vld [vmem:[%s1 + $0x50] sm:$0xff]
    %v1190 = vld [vmem:[%s1 + $0x58] sm:$0xff]
    %v1191 = vld [vmem:[%s2 + $0x4] sm:$0x1]
    %v1192 = vlaneseq
    %v1193 = vshrl.u32 %v1192, 7
    %v1194 = vsub.s32 0, %v1193
    %v1195 = vrot.slane %v1191, %v1194
    %vm1196 = vcmask 523264
    %v1198 = vsel %vm1196, %v1181, 0
    %v1201 = vsel %vm1196, %v1182, 0
    %1203 = vmatprep.subr.mxu0 0.0
    %1204 = vmatpush1.msra.mxu0 0.0
    %1205 = vmatprep.subr.mxu0 0.0
    %1206 = vmatpush1.msra.mxu0 0.0
    %1207 = vmatprep.subr.mxu0 0.0
    %1208 = vmatpush1.msra.mxu0 0.0
    %1209 = vmatprep.subr.mxu0 0.0
    %1210 = vmatpush1.msra.mxu0 0.0
    %1211 = vmatprep.subr.mxu0 0.0
    %1212 = vmatpush1.msra.mxu0 0.0
    %1213 = vmatprep.subr.mxu0 0.0
    %1214 = vmatpush1.msra.mxu0 0.0
    %1215 = vmatprep.subr.mxu0 0.0
    %1216 = vmatpush1.msra.mxu0 0.0
    %1217 = vmatprep.subr.mxu0 0.0
    %1218 = vmatpush1.msra.mxu0 0.0
    %1219 = vmatprep.subr.mxu0 0.0
    %v1220 = vand.u32 %v1190, 4294901760
    %1221 = vmatpush1.msra.mxu0 %v1220
    %1222 = vmatprep.subr.mxu0 0.0
    %v1223 = vand.u32 %v1189, 4294901760
    %1224 = vmatpush1.msra.mxu0 %v1223
    %1225 = vmatprep.subr.mxu0 0.0
    %v1226 = vand.u32 %v1188, 4294901760
    %1227 = vmatpush1.msra.mxu0 %v1226
    %1228 = vmatprep.subr.mxu0 0.0
    %v1229 = vand.u32 %v1187, 4294901760
    %1230 = vmatpush1.msra.mxu0 %v1229
    %1231 = vmatprep.subr.mxu0 0.0
    %v1232 = vand.u32 %v1186, 4294901760
    %1233 = vmatpush1.msra.mxu0 %v1232
    %1234 = vmatprep.subr.mxu0 0.0
    %v1235 = vand.u32 %v1185, 4294901760
    %1236 = vmatpush1.msra.mxu0 %v1235
    %1237 = vmatprep.subr.mxu0 0.0
    %v1238 = vand.u32 %v1184, 4294901760
    %1239 = vmatpush1.msra.mxu0 %v1238
    %1240 = vmatprep.subr.mxu0 0.0
    %v1241 = vand.u32 %v1183, 4294901760
    %1242 = vmatpush1.msra.mxu0 %v1241
    %1243 = vmatprep.subr.mxu0 0.0
    %1244 = vmatpush2.msra.mxu0 0.0
    %1245 = vmatprep.subr.mxu0 0.0
    %1246 = vmatpush2.msra.mxu0 0.0
    %1247 = vmatprep.subr.mxu0 0.0
    %1248 = vmatpush2.msra.mxu0 0.0
    %1249 = vmatprep.subr.mxu0 0.0
    %1250 = vmatpush2.msra.mxu0 0.0
    %1251 = vmatprep.subr.mxu0 0.0
    %1252 = vmatpush2.msra.mxu0 0.0
    %1253 = vmatprep.subr.mxu0 0.0
    %1254 = vmatpush2.msra.mxu0 0.0
    %1255 = vmatprep.subr.mxu0 0.0
    %1256 = vmatpush2.msra.mxu0 0.0
    %1257 = vmatprep.subr.mxu0 0.0
    %1258 = vmatpush2.msra.mxu0 0.0
    %1259 = vmatprep.subr.mxu0 0.0
    %1260 = vmatpush2.msra.mxu0 0.0
    %1261 = vmatprep.subr.mxu0 0.0
    %1262 = vmatpush2.msra.mxu0 0.0
    %1263 = vmatprep.subr.mxu0 0.0
    %1264 = vmatpush2.msra.mxu0 0.0
    %1265 = vmatprep.subr.mxu0 0.0
    %1266 = vmatpush2.msra.mxu0 0.0
    %1267 = vmatprep.subr.mxu0 0.0
    %1268 = vmatpush2.msra.mxu0 0.0
    %1269 = vmatprep.subr.mxu0 0.0
    %1270 = vmatpush2.msra.mxu0 0.0
    %1271 = vmatprep.subr.mxu0 0.0
    %1272 = vmatpush2.msra.mxu0 0.0
    %1273 = vmatprep.subr.mxu0 0.0
    %1274 = vmatpush2.msra.mxu0 0.0
    %1275 = vmatprep.mubr.f32.mxu0 0.0
    %v1276 = vand.u32 %v1198, 4294901760
    %v1277 = vsub.f32 %v1198, %v1276
    %v1278 = vand.u32 %v1277, 4294901760
    %v1279 = vsub.f32 %v1277, %v1278
    %v1280 = vand.u32 %v1279, 4294901760
    %1281 = vmatmul.mubr.f32.gmra.mxu0 %v1280
    %v1282 = vpop.f32.mrf.mxu0
    %v1283 = vadd.f32 %v1195, %v1282
    %v1284 = vpop.f32.mrf.mxu0
    %1285 = vmatprep.mubr.f32.mxu0 0.0
    %v1286 = vand.u32 %v1201, 4294901760
    %v1287 = vsub.f32 %v1201, %v1286
    %v1288 = vand.u32 %v1287, 4294901760
    %v1289 = vsub.f32 %v1287, %v1288
    %v1290 = vand.u32 %v1289, 4294901760
    %1291 = vmatmul.mubr.f32.gmra.mxu0 %v1290
    %v1292 = vpop.f32.mrf.mxu0
    %v1293 = vadd.f32 %v1195, %v1292
    %v1294 = vpop.f32.mrf.mxu0
    %1295 = vdwg.mxu0
    %1296 = vmatprep.subr.mxu0 0.0
    %1297 = vmatpush1.msra.mxu0 0.0
    %1298 = vmatprep.subr.mxu0 0.0
    %1299 = vmatpush1.msra.mxu0 0.0
    %1300 = vmatprep.subr.mxu0 0.0
    %1301 = vmatpush1.msra.mxu0 0.0
    %1302 = vmatprep.subr.mxu0 0.0
    %1303 = vmatpush1.msra.mxu0 0.0
    %1304 = vmatprep.subr.mxu0 0.0
    %1305 = vmatpush1.msra.mxu0 0.0
    %1306 = vmatprep.subr.mxu0 0.0
    %1307 = vmatpush1.msra.mxu0 0.0
    %1308 = vmatprep.subr.mxu0 0.0
    %1309 = vmatpush1.msra.mxu0 0.0
    %1310 = vmatprep.subr.mxu0 0.0
    %1311 = vmatpush1.msra.mxu0 0.0
    %1312 = vmatprep.subr.mxu0 0.0
    %v1313 = vand.u32 %v1190, 4294901760
    %v1314 = vsub.f32 %v1190, %v1313
    %v1315 = vand.u32 %v1314, 4294901760
    %v1316 = vsub.f32 %v1314, %v1315
    %v1317 = vand.u32 %v1316, 4294901760
    %1318 = vmatpush1.msra.mxu0 %v1317
    %1319 = vmatprep.subr.mxu0 0.0
    %v1320 = vand.u32 %v1189, 4294901760
    %v1321 = vsub.f32 %v1189, %v1320
    %v1322 = vand.u32 %v1321, 4294901760
    %v1323 = vsub.f32 %v1321, %v1322
    %v1324 = vand.u32 %v1323, 4294901760
    %1325 = vmatpush1.msra.mxu0 %v1324
    %1326 = vmatprep.subr.mxu0 0.0
    %v1327 = vand.u32 %v1188, 4294901760
    %v1328 = vsub.f32 %v1188, %v1327
    %v1329 = vand.u32 %v1328, 4294901760
    %v1330 = vsub.f32 %v1328, %v1329
    %v1331 = vand.u32 %v1330, 4294901760
    %1332 = vmatpush1.msra.mxu0 %v1331
    %1333 = vmatprep.subr.mxu0 0.0
    %v1334 = vand.u32 %v1187, 4294901760
    %v1335 = vsub.f32 %v1187, %v1334
    %v1336 = vand.u32 %v1335, 4294901760
    %v1337 = vsub.f32 %v1335, %v1336
    %v1338 = vand.u32 %v1337, 4294901760
    %1339 = vmatpush1.msra.mxu0 %v1338
    %1340 = vmatprep.subr.mxu0 0.0
    %v1341 = vand.u32 %v1186, 4294901760
    %v1342 = vsub.f32 %v1186, %v1341
    %v1343 = vand.u32 %v1342, 4294901760
    %v1344 = vsub.f32 %v1342, %v1343
    %v1345 = vand.u32 %v1344, 4294901760
    %1346 = vmatpush1.msra.mxu0 %v1345
    %1347 = vmatprep.subr.mxu0 0.0
    %v1348 = vand.u32 %v1185, 4294901760
    %v1349 = vsub.f32 %v1185, %v1348
    %v1350 = vand.u32 %v1349, 4294901760
    %v1351 = vsub.f32 %v1349, %v1350
    %v1352 = vand.u32 %v1351, 4294901760
    %1353 = vmatpush1.msra.mxu0 %v1352
    %1354 = vmatprep.subr.mxu0 0.0
    %v1355 = vand.u32 %v1184, 4294901760
    %v1356 = vsub.f32 %v1184, %v1355
    %v1357 = vand.u32 %v1356, 4294901760
    %v1358 = vsub.f32 %v1356, %v1357
    %v1359 = vand.u32 %v1358, 4294901760
    %1360 = vmatpush1.msra.mxu0 %v1359
    %1361 = vmatprep.subr.mxu0 0.0
    %v1362 = vand.u32 %v1183, 4294901760
    %v1363 = vsub.f32 %v1183, %v1362
    %v1364 = vand.u32 %v1363, 4294901760
    %v1365 = vsub.f32 %v1363, %v1364
    %v1366 = vand.u32 %v1365, 4294901760
    %1367 = vmatpush1.msra.mxu0 %v1366
    %1368 = vmatprep.subr.mxu0 0.0
    %1369 = vmatpush2.msra.mxu0 0.0
    %1370 = vmatprep.subr.mxu0 0.0
    %1371 = vmatpush2.msra.mxu0 0.0
    %1372 = vmatprep.subr.mxu0 0.0
    %1373 = vmatpush2.msra.mxu0 0.0
    %1374 = vmatprep.subr.mxu0 0.0
    %1375 = vmatpush2.msra.mxu0 0.0
    %1376 = vmatprep.subr.mxu0 0.0
    %1377 = vmatpush2.msra.mxu0 0.0
    %1378 = vmatprep.subr.mxu0 0.0
    %1379 = vmatpush2.msra.mxu0 0.0
    %1380 = vmatprep.subr.mxu0 0.0
    %1381 = vmatpush2.msra.mxu0 0.0
    %1382 = vmatprep.subr.mxu0 0.0
    %1383 = vmatpush2.msra.mxu0 0.0
    %1384 = vmatprep.subr.mxu0 0.0
    %1385 = vmatpush2.msra.mxu0 0.0
    %1386 = vmatprep.subr.mxu0 0.0
    %1387 = vmatpush2.msra.mxu0 0.0
    %1388 = vmatprep.subr.mxu0 0.0
    %1389 = vmatpush2.msra.mxu0 0.0
    %1390 = vmatprep.subr.mxu0 0.0
    %1391 = vmatpush2.msra.mxu0 0.0
    %1392 = vmatprep.subr.mxu0 0.0
    %1393 = vmatpush2.msra.mxu0 0.0
    %1394 = vmatprep.subr.mxu0 0.0
    %1395 = vmatpush2.msra.mxu0 0.0
    %1396 = vmatprep.subr.mxu0 0.0
    %1397 = vmatpush2.msra.mxu0 0.0
    %1398 = vmatprep.subr.mxu0 0.0
    %1399 = vmatpush2.msra.mxu0 0.0
    %1400 = vmatprep.mubr.f32.mxu0 0.0
    %v1401 = vand.u32 %v1198, 4294901760
    %1402 = vmatmul.mubr.f32.gmra.mxu0 %v1401
    %v1403 = vpop.f32.mrf.mxu0
    %v1404 = vadd.f32 %v1283, %v1403
    %v1405 = vpop.f32.mrf.mxu0
    %1406 = vmatprep.mubr.f32.mxu0 0.0
    %v1407 = vand.u32 %v1201, 4294901760
    %1408 = vmatmul.mubr.f32.gmra.mxu0 %v1407
    %v1409 = vpop.f32.mrf.mxu0
    %v1410 = vadd.f32 %v1293, %v1409
    %v1411 = vpop.f32.mrf.mxu0
    %1412 = vdwg.mxu0
    %1413 = vmatprep.subr.mxu0 0.0
    %1414 = vmatpush1.msra.mxu0 0.0
    %1415 = vmatprep.subr.mxu0 0.0
    %1416 = vmatpush1.msra.mxu0 0.0
    %1417 = vmatprep.subr.mxu0 0.0
    %1418 = vmatpush1.msra.mxu0 0.0
    %1419 = vmatprep.subr.mxu0 0.0
    %1420 = vmatpush1.msra.mxu0 0.0
    %1421 = vmatprep.subr.mxu0 0.0
    %1422 = vmatpush1.msra.mxu0 0.0
    %1423 = vmatprep.subr.mxu0 0.0
    %1424 = vmatpush1.msra.mxu0 0.0
    %1425 = vmatprep.subr.mxu0 0.0
    %1426 = vmatpush1.msra.mxu0 0.0
    %1427 = vmatprep.subr.mxu0 0.0
    %1428 = vmatpush1.msra.mxu0 0.0
    %1429 = vmatprep.subr.mxu0 0.0
    %v1430 = vand.u32 %v1190, 4294901760
    %v1431 = vsub.f32 %v1190, %v1430
    %1432 = vmatpush1.msra.mxu0 %v1431
    %1433 = vmatprep.subr.mxu0 0.0
    %v1434 = vand.u32 %v1189, 4294901760
    %v1435 = vsub.f32 %v1189, %v1434
    %1436 = vmatpush1.msra.mxu0 %v1435
    %1437 = vmatprep.subr.mxu0 0.0
    %v1438 = vand.u32 %v1188, 4294901760
    %v1439 = vsub.f32 %v1188, %v1438
    %1440 = vmatpush1.msra.mxu0 %v1439
    %1441 = vmatprep.subr.mxu0 0.0
    %v1442 = vand.u32 %v1187, 4294901760
    %v1443 = vsub.f32 %v1187, %v1442
    %1444 = vmatpush1.msra.mxu0 %v1443
    %1445 = vmatprep.subr.mxu0 0.0
    %v1446 = vand.u32 %v1186, 4294901760
    %v1447 = vsub.f32 %v1186, %v1446
    %1448 = vmatpush1.msra.mxu0 %v1447
    %1449 = vmatprep.subr.mxu0 0.0
    %v1450 = vand.u32 %v1185, 4294901760
    %v1451 = vsub.f32 %v1185, %v1450
    %1452 = vmatpush1.msra.mxu0 %v1451
    %1453 = vmatprep.subr.mxu0 0.0
    %v1454 = vand.u32 %v1184, 4294901760
    %v1455 = vsub.f32 %v1184, %v1454
    %1456 = vmatpush1.msra.mxu0 %v1455
    %1457 = vmatprep.subr.mxu0 0.0
    %v1458 = vand.u32 %v1183, 4294901760
    %v1459 = vsub.f32 %v1183, %v1458
    %1460 = vmatpush1.msra.mxu0 %v1459
    %1461 = vmatprep.subr.mxu0 0.0
    %1462 = vmatpush2.msra.mxu0 0.0
    %1463 = vmatprep.subr.mxu0 0.0
    %1464 = vmatpush2.msra.mxu0 0.0
    %1465 = vmatprep.subr.mxu0 0.0
    %1466 = vmatpush2.msra.mxu0 0.0
    %1467 = vmatprep.subr.mxu0 0.0
    %1468 = vmatpush2.msra.mxu0 0.0
    %1469 = vmatprep.subr.mxu0 0.0
    %1470 = vmatpush2.msra.mxu0 0.0
    %1471 = vmatprep.subr.mxu0 0.0
    %1472 = vmatpush2.msra.mxu0 0.0
    %1473 = vmatprep.subr.mxu0 0.0
    %1474 = vmatpush2.msra.mxu0 0.0
    %1475 = vmatprep.subr.mxu0 0.0
    %1476 = vmatpush2.msra.mxu0 0.0
    %1477 = vmatprep.subr.mxu0 0.0
    %1478 = vmatpush2.msra.mxu0 0.0
    %1479 = vmatprep.subr.mxu0 0.0
    %1480 = vmatpush2.msra.mxu0 0.0
    %1481 = vmatprep.subr.mxu0 0.0
    %1482 = vmatpush2.msra.mxu0 0.0
    %1483 = vmatprep.subr.mxu0 0.0
    %1484 = vmatpush2.msra.mxu0 0.0
    %1485 = vmatprep.subr.mxu0 0.0
    %1486 = vmatpush2.msra.mxu0 0.0
    %1487 = vmatprep.subr.mxu0 0.0
    %1488 = vmatpush2.msra.mxu0 0.0
    %1489 = vmatprep.subr.mxu0 0.0
    %1490 = vmatpush2.msra.mxu0 0.0
    %1491 = vmatprep.subr.mxu0 0.0
    %1492 = vmatpush2.msra.mxu0 0.0
    %1493 = vmatprep.mubr.f32.mxu0 0.0
    %v1494 = vand.u32 %v1198, 4294901760
    %v1495 = vsub.f32 %v1198, %v1494
    %1496 = vmatmul.mubr.f32.gmra.mxu0 %v1495
    %v1497 = vpop.f32.mrf.mxu0
    %v1498 = vadd.f32 %v1404, %v1497
    %v1499 = vpop.f32.mrf.mxu0
    %1500 = vmatprep.mubr.f32.mxu0 0.0
    %v1501 = vand.u32 %v1201, 4294901760
    %v1502 = vsub.f32 %v1201, %v1501
    %1503 = vmatmul.mubr.f32.gmra.mxu0 %v1502
    %v1504 = vpop.f32.mrf.mxu0
    %v1505 = vadd.f32 %v1410, %v1504
    %v1506 = vpop.f32.mrf.mxu0
    %1507 = vdwg.mxu0
    %1508 = vmatprep.subr.mxu0 0.0
    %1509 = vmatpush1.msra.mxu0 0.0
    %1510 = vmatprep.subr.mxu0 0.0
    %1511 = vmatpush1.msra.mxu0 0.0
    %1512 = vmatprep.subr.mxu0 0.0
    %1513 = vmatpush1.msra.mxu0 0.0
    %1514 = vmatprep.subr.mxu0 0.0
    %1515 = vmatpush1.msra.mxu0 0.0
    %1516 = vmatprep.subr.mxu0 0.0
    %1517 = vmatpush1.msra.mxu0 0.0
    %1518 = vmatprep.subr.mxu0 0.0
    %1519 = vmatpush1.msra.mxu0 0.0
    %1520 = vmatprep.subr.mxu0 0.0
    %1521 = vmatpush1.msra.mxu0 0.0
    %1522 = vmatprep.subr.mxu0 0.0
    %1523 = vmatpush1.msra.mxu0 0.0
    %1524 = vmatprep.subr.mxu0 0.0
    %v1525 = vand.u32 %v1190, 4294901760
    %1526 = vmatpush1.msra.mxu0 %v1525
    %1527 = vmatprep.subr.mxu0 0.0
    %v1528 = vand.u32 %v1189, 4294901760
    %1529 = vmatpush1.msra.mxu0 %v1528
    %1530 = vmatprep.subr.mxu0 0.0
    %v1531 = vand.u32 %v1188, 4294901760
    %1532 = vmatpush1.msra.mxu0 %v1531
    %1533 = vmatprep.subr.mxu0 0.0
    %v1534 = vand.u32 %v1187, 4294901760
    %1535 = vmatpush1.msra.mxu0 %v1534
    %1536 = vmatprep.subr.mxu0 0.0
    %v1537 = vand.u32 %v1186, 4294901760
    %1538 = vmatpush1.msra.mxu0 %v1537
    %1539 = vmatprep.subr.mxu0 0.0
    %v1540 = vand.u32 %v1185, 4294901760
    %1541 = vmatpush1.msra.mxu0 %v1540
    %1542 = vmatprep.subr.mxu0 0.0
    %v1543 = vand.u32 %v1184, 4294901760
    %1544 = vmatpush1.msra.mxu0 %v1543
    %1545 = vmatprep.subr.mxu0 0.0
    %v1546 = vand.u32 %v1183, 4294901760
    %1547 = vmatpush1.msra.mxu0 %v1546
    %1548 = vmatprep.subr.mxu0 0.0
    %1549 = vmatpush2.msra.mxu0 0.0
    %1550 = vmatprep.subr.mxu0 0.0
    %1551 = vmatpush2.msra.mxu0 0.0
    %1552 = vmatprep.subr.mxu0 0.0
    %1553 = vmatpush2.msra.mxu0 0.0
    %1554 = vmatprep.subr.mxu0 0.0
    %1555 = vmatpush2.msra.mxu0 0.0
    %1556 = vmatprep.subr.mxu0 0.0
    %1557 = vmatpush2.msra.mxu0 0.0
    %1558 = vmatprep.subr.mxu0 0.0
    %1559 = vmatpush2.msra.mxu0 0.0
    %1560 = vmatprep.subr.mxu0 0.0
    %1561 = vmatpush2.msra.mxu0 0.0
    %1562 = vmatprep.subr.mxu0 0.0
    %1563 = vmatpush2.msra.mxu0 0.0
    %1564 = vmatprep.subr.mxu0 0.0
    %1565 = vmatpush2.msra.mxu0 0.0
    %1566 = vmatprep.subr.mxu0 0.0
    %1567 = vmatpush2.msra.mxu0 0.0
    %1568 = vmatprep.subr.mxu0 0.0
    %1569 = vmatpush2.msra.mxu0 0.0
    %1570 = vmatprep.subr.mxu0 0.0
    %1571 = vmatpush2.msra.mxu0 0.0
    %1572 = vmatprep.subr.mxu0 0.0
    %1573 = vmatpush2.msra.mxu0 0.0
    %1574 = vmatprep.subr.mxu0 0.0
    %1575 = vmatpush2.msra.mxu0 0.0
    %1576 = vmatprep.subr.mxu0 0.0
    %1577 = vmatpush2.msra.mxu0 0.0
    %1578 = vmatprep.subr.mxu0 0.0
    %1579 = vmatpush2.msra.mxu0 0.0
    %1580 = vmatprep.mubr.f32.mxu0 0.0
    %v1581 = vand.u32 %v1198, 4294901760
    %v1582 = vsub.f32 %v1198, %v1581
    %v1583 = vand.u32 %v1582, 4294901760
    %1584 = vmatmul.mubr.f32.gmra.mxu0 %v1583
    %v1585 = vpop.f32.mrf.mxu0
    %v1586 = vadd.f32 %v1498, %v1585
    %v1587 = vpop.f32.mrf.mxu0
    %1588 = vmatprep.mubr.f32.mxu0 0.0
    %v1589 = vand.u32 %v1201, 4294901760
    %v1590 = vsub.f32 %v1201, %v1589
    %v1591 = vand.u32 %v1590, 4294901760
    %1592 = vmatmul.mubr.f32.gmra.mxu0 %v1591
    %v1593 = vpop.f32.mrf.mxu0
    %v1594 = vadd.f32 %v1505, %v1593
    %v1595 = vpop.f32.mrf.mxu0
    %1596 = vdwg.mxu0
    %1597 = vmatprep.subr.mxu0 0.0
    %1598 = vmatpush1.msra.mxu0 0.0
    %1599 = vmatprep.subr.mxu0 0.0
    %1600 = vmatpush1.msra.mxu0 0.0
    %1601 = vmatprep.subr.mxu0 0.0
    %1602 = vmatpush1.msra.mxu0 0.0
    %1603 = vmatprep.subr.mxu0 0.0
    %1604 = vmatpush1.msra.mxu0 0.0
    %1605 = vmatprep.subr.mxu0 0.0
    %1606 = vmatpush1.msra.mxu0 0.0
    %1607 = vmatprep.subr.mxu0 0.0
    %1608 = vmatpush1.msra.mxu0 0.0
    %1609 = vmatprep.subr.mxu0 0.0
    %1610 = vmatpush1.msra.mxu0 0.0
    %1611 = vmatprep.subr.mxu0 0.0
    %1612 = vmatpush1.msra.mxu0 0.0
    %1613 = vmatprep.subr.mxu0 0.0
    %v1614 = vand.u32 %v1190, 4294901760
    %v1615 = vsub.f32 %v1190, %v1614
    %v1616 = vand.u32 %v1615, 4294901760
    %1617 = vmatpush1.msra.mxu0 %v1616
    %1618 = vmatprep.subr.mxu0 0.0
    %v1619 = vand.u32 %v1189, 4294901760
    %v1620 = vsub.f32 %v1189, %v1619
    %v1621 = vand.u32 %v1620, 4294901760
    %1622 = vmatpush1.msra.mxu0 %v1621
    %1623 = vmatprep.subr.mxu0 0.0
    %v1624 = vand.u32 %v1188, 4294901760
    %v1625 = vsub.f32 %v1188, %v1624
    %v1626 = vand.u32 %v1625, 4294901760
    %1627 = vmatpush1.msra.mxu0 %v1626
    %1628 = vmatprep.subr.mxu0 0.0
    %v1629 = vand.u32 %v1187, 4294901760
    %v1630 = vsub.f32 %v1187, %v1629
    %v1631 = vand.u32 %v1630, 4294901760
    %1632 = vmatpush1.msra.mxu0 %v1631
    %1633 = vmatprep.subr.mxu0 0.0
    %v1634 = vand.u32 %v1186, 4294901760
    %v1635 = vsub.f32 %v1186, %v1634
    %v1636 = vand.u32 %v1635, 4294901760
    %1637 = vmatpush1.msra.mxu0 %v1636
    %1638 = vmatprep.subr.mxu0 0.0
    %v1639 = vand.u32 %v1185, 4294901760
    %v1640 = vsub.f32 %v1185, %v1639
    %v1641 = vand.u32 %v1640, 4294901760
    %1642 = vmatpush1.msra.mxu0 %v1641
    %1643 = vmatprep.subr.mxu0 0.0
    %v1644 = vand.u32 %v1184, 4294901760
    %v1645 = vsub.f32 %v1184, %v1644
    %v1646 = vand.u32 %v1645, 4294901760
    %1647 = vmatpush1.msra.mxu0 %v1646
    %1648 = vmatprep.subr.mxu0 0.0
    %v1649 = vand.u32 %v1183, 4294901760
    %v1650 = vsub.f32 %v1183, %v1649
    %v1651 = vand.u32 %v1650, 4294901760
    %1652 = vmatpush1.msra.mxu0 %v1651
    %1653 = vmatprep.subr.mxu0 0.0
    %1654 = vmatpush2.msra.mxu0 0.0
    %1655 = vmatprep.subr.mxu0 0.0
    %1656 = vmatpush2.msra.mxu0 0.0
    %1657 = vmatprep.subr.mxu0 0.0
    %1658 = vmatpush2.msra.mxu0 0.0
    %1659 = vmatprep.subr.mxu0 0.0
    %1660 = vmatpush2.msra.mxu0 0.0
    %1661 = vmatprep.subr.mxu0 0.0
    %1662 = vmatpush2.msra.mxu0 0.0
    %1663 = vmatprep.subr.mxu0 0.0
    %1664 = vmatpush2.msra.mxu0 0.0
    %1665 = vmatprep.subr.mxu0 0.0
    %1666 = vmatpush2.msra.mxu0 0.0
    %1667 = vmatprep.subr.mxu0 0.0
    %1668 = vmatpush2.msra.mxu0 0.0
    %1669 = vmatprep.subr.mxu0 0.0
    %1670 = vmatpush2.msra.mxu0 0.0
    %1671 = vmatprep.subr.mxu0 0.0
    %1672 = vmatpush2.msra.mxu0 0.0
    %1673 = vmatprep.subr.mxu0 0.0
    %1674 = vmatpush2.msra.mxu0 0.0
    %1675 = vmatprep.subr.mxu0 0.0
    %1676 = vmatpush2.msra.mxu0 0.0
    %1677 = vmatprep.subr.mxu0 0.0
    %1678 = vmatpush2.msra.mxu0 0.0
    %1679 = vmatprep.subr.mxu0 0.0
    %1680 = vmatpush2.msra.mxu0 0.0
    %1681 = vmatprep.subr.mxu0 0.0
    %1682 = vmatpush2.msra.mxu0 0.0
    %1683 = vmatprep.subr.mxu0 0.0
    %1684 = vmatpush2.msra.mxu0 0.0
    %1685 = vmatprep.mubr.f32.mxu0 0.0
    %v1686 = vand.u32 %v1198, 4294901760
    %1687 = vmatmul.mubr.f32.gmra.mxu0 %v1686
    %v1688 = vpop.f32.mrf.mxu0
    %v1689 = vadd.f32 %v1586, %v1688
    %v1690 = vpop.f32.mrf.mxu0
    %1691 = vmatprep.mubr.f32.mxu0 0.0
    %v1692 = vand.u32 %v1201, 4294901760
    %1693 = vmatmul.mubr.f32.gmra.mxu0 %v1692
    %v1694 = vpop.f32.mrf.mxu0
    %v1695 = vadd.f32 %v1594, %v1694
    %v1696 = vpop.f32.mrf.mxu0
    %1697 = vdwg.mxu0
    %1698 = vmatprep.subr.mxu0 0.0
    %1699 = vmatpush1.msra.mxu0 0.0
    %1700 = vmatprep.subr.mxu0 0.0
    %1701 = vmatpush1.msra.mxu0 0.0
    %1702 = vmatprep.subr.mxu0 0.0
    %1703 = vmatpush1.msra.mxu0 0.0
    %1704 = vmatprep.subr.mxu0 0.0
    %1705 = vmatpush1.msra.mxu0 0.0
    %1706 = vmatprep.subr.mxu0 0.0
    %1707 = vmatpush1.msra.mxu0 0.0
    %1708 = vmatprep.subr.mxu0 0.0
    %1709 = vmatpush1.msra.mxu0 0.0
    %1710 = vmatprep.subr.mxu0 0.0
    %1711 = vmatpush1.msra.mxu0 0.0
    %1712 = vmatprep.subr.mxu0 0.0
    %1713 = vmatpush1.msra.mxu0 0.0
    %1714 = vmatprep.subr.mxu0 0.0
    %v1715 = vand.u32 %v1190, 4294901760
    %1716 = vmatpush1.msra.mxu0 %v1715
    %1717 = vmatprep.subr.mxu0 0.0
    %v1718 = vand.u32 %v1189, 4294901760
    %1719 = vmatpush1.msra.mxu0 %v1718
    %1720 = vmatprep.subr.mxu0 0.0
    %v1721 = vand.u32 %v1188, 4294901760
    %1722 = vmatpush1.msra.mxu0 %v1721
    %1723 = vmatprep.subr.mxu0 0.0
    %v1724 = vand.u32 %v1187, 4294901760
    %1725 = vmatpush1.msra.mxu0 %v1724
    %1726 = vmatprep.subr.mxu0 0.0
    %v1727 = vand.u32 %v1186, 4294901760
    %1728 = vmatpush1.msra.mxu0 %v1727
    %1729 = vmatprep.subr.mxu0 0.0
    %v1730 = vand.u32 %v1185, 4294901760
    %1731 = vmatpush1.msra.mxu0 %v1730
    %1732 = vmatprep.subr.mxu0 0.0
    %v1733 = vand.u32 %v1184, 4294901760
    %1734 = vmatpush1.msra.mxu0 %v1733
    %1735 = vmatprep.subr.mxu0 0.0
    %v1736 = vand.u32 %v1183, 4294901760
    %1737 = vmatpush1.msra.mxu0 %v1736
    %1738 = vmatprep.subr.mxu0 0.0
    %1739 = vmatpush2.msra.mxu0 0.0
    %1740 = vmatprep.subr.mxu0 0.0
    %1741 = vmatpush2.msra.mxu0 0.0
    %1742 = vmatprep.subr.mxu0 0.0
    %1743 = vmatpush2.msra.mxu0 0.0
    %1744 = vmatprep.subr.mxu0 0.0
    %1745 = vmatpush2.msra.mxu0 0.0
    %1746 = vmatprep.subr.mxu0 0.0
    %1747 = vmatpush2.msra.mxu0 0.0
    %1748 = vmatprep.subr.mxu0 0.0
    %1749 = vmatpush2.msra.mxu0 0.0
    %1750 = vmatprep.subr.mxu0 0.0
    %1751 = vmatpush2.msra.mxu0 0.0
    %1752 = vmatprep.subr.mxu0 0.0
    %1753 = vmatpush2.msra.mxu0 0.0
    %1754 = vmatprep.subr.mxu0 0.0
    %1755 = vmatpush2.msra.mxu0 0.0
    %1756 = vmatprep.subr.mxu0 0.0
    %1757 = vmatpush2.msra.mxu0 0.0
    %1758 = vmatprep.subr.mxu0 0.0
    %1759 = vmatpush2.msra.mxu0 0.0
    %1760 = vmatprep.subr.mxu0 0.0
    %1761 = vmatpush2.msra.mxu0 0.0
    %1762 = vmatprep.subr.mxu0 0.0
    %1763 = vmatpush2.msra.mxu0 0.0
    %1764 = vmatprep.subr.mxu0 0.0
    %1765 = vmatpush2.msra.mxu0 0.0
    %1766 = vmatprep.subr.mxu0 0.0
    %1767 = vmatpush2.msra.mxu0 0.0
    %1768 = vmatprep.subr.mxu0 0.0
    %1769 = vmatpush2.msra.mxu0 0.0
    %1770 = vmatprep.mubr.f32.mxu0 0.0
    %v1771 = vand.u32 %v1198, 4294901760
    %1772 = vmatmul.mubr.f32.gmra.mxu0 %v1771
    %v1773 = vpop.f32.mrf.mxu0
    %v1774 = vadd.f32 %v1689, %v1773
    %v1775 = vpop.f32.mrf.mxu0
    %1776 = vmatprep.mubr.f32.mxu0 0.0
    %v1777 = vand.u32 %v1201, 4294901760
    %1778 = vmatmul.mubr.f32.gmra.mxu0 %v1777
    %v1779 = vpop.f32.mrf.mxu0
    %v1780 = vadd.f32 %v1695, %v1779
    %v1781 = vpop.f32.mrf.mxu0
    %1782 = vdwg.mxu0
    %v1783 = vmax.f32 %v1774, 0.0
    %v1784 = vmax.f32 %v1780, 0.0
    %v1785 = vand.u32 2147483647, %v1774
    %v1786 = vand.u32 2147483647, %v1780
    %v1787 = vsub.f32 0.0, %v1785
    %v1788 = vsub.f32 0.0, %v1786
    %v1789 = vmul.f32 %v1787, 1.442695
    %v1790 = vpow.pop %v1789
    %v1791 = vmul.f32 %v1788, 1.442695
    %v1792 = vpow.pop %v1791
    %v1793 = vadd.f32 %v1790, 1.0
    %v1794 = vlog2.pop %v1793
    %v1795 = vmul.f32 %v1794, 0.6931472
    %v1796 = vmul.f32 -0.5, %v1790
    %v1797 = vadd.f32 %v1796, 1.0
    %v1798 = vmul.f32 %v1797, %v1790
    %v1799 = vand.u32 2147483647, %v1790
    %vm1800 = vcmp.lt.f32.partialorder %v1799, 0.0004427343
    %v1801 = vsel %vm1800, %v1798, %v1795
    %v1802 = vadd.f32 %v1792, 1.0
    %v1803 = vlog2.pop %v1802
    %v1804 = vmul.f32 %v1803, 0.6931472
    %v1805 = vmul.f32 -0.5, %v1792
    %v1806 = vadd.f32 %v1805, 1.0
    %v1807 = vmul.f32 %v1806, %v1792
    %v1808 = vand.u32 2147483647, %v1792
    %vm1809 = vcmp.lt.f32.partialorder %v1808, 0.0004427343
    %v1810 = vsel %vm1809, %v1807, %v1804
    %v1811 = vadd.f32 %v1783, %v1801
    %v1812 = vadd.f32 %v1784, %v1810
    %v1813 = vld [vmem:[%s1 + $0xa8] sm:$0xff]
    %v1814 = vld [vmem:[%s1 + $0xb0] sm:$0xff]
    %v1816 = vsel %vm1196, %v1813, 0
    %v1819 = vsel %vm1196, %v1814, 0
    %1821 = vmatprep.subr.mxu0 0.0
    %1822 = vmatpush1.xpose.msra.mxu0 0.0
    %1823 = vmatprep.subr.mxu0 0.0
    %1824 = vmatpush1.xpose.msra.mxu0 0.0
    %1825 = vmatprep.subr.mxu0 0.0
    %1826 = vmatpush1.xpose.msra.mxu0 0.0
    %1827 = vmatprep.subr.mxu0 0.0
    %1828 = vmatpush1.xpose.msra.mxu0 0.0
    %1829 = vmatprep.subr.mxu0 0.0
    %1830 = vmatpush1.xpose.msra.mxu0 0.0
    %1831 = vmatprep.subr.mxu0 0.0
    %1832 = vmatpush1.xpose.msra.mxu0 0.0
    %1833 = vmatprep.subr.mxu0 0.0
    %1834 = vmatpush1.xpose.msra.mxu0 0.0
    %1835 = vmatprep.subr.mxu0 0.0
    %1836 = vmatpush1.xpose.msra.mxu0 0.0
    %1837 = vmatprep.subr.mxu0 0.0
    %1838 = vmatpush1.xpose.msra.mxu0 0.0
    %1839 = vmatprep.subr.mxu0 0.0
    %1840 = vmatpush1.xpose.msra.mxu0 0.0
    %1841 = vmatprep.subr.mxu0 0.0
    %1842 = vmatpush1.xpose.msra.mxu0 0.0
    %1843 = vmatprep.subr.mxu0 0.0
    %1844 = vmatpush1.xpose.msra.mxu0 0.0
    %1845 = vmatprep.subr.mxu0 0.0
    %1846 = vmatpush1.xpose.msra.mxu0 0.0
    %1847 = vmatprep.subr.mxu0 0.0
    %1848 = vmatpush1.xpose.msra.mxu0 0.0
    %1849 = vmatprep.subr.mxu0 0.0
    %v1850 = vand.u32 %v1201, 4294901760
    %1851 = vmatpush1.xpose.msra.mxu0 %v1850
    %1852 = vmatprep.subr.mxu0 0.0
    %v1853 = vand.u32 %v1198, 4294901760
    %1854 = vmatpush1.xpose.msra.mxu0 %v1853
    %1855 = vmatprep.subr.mxu0 0.0
    %1856 = vmatpush2.xpose.msra.mxu0 0.0
    %1857 = vmatprep.subr.mxu0 0.0
    %1858 = vmatpush2.xpose.msra.mxu0 0.0
    %1859 = vmatprep.subr.mxu0 0.0
    %1860 = vmatpush2.xpose.msra.mxu0 0.0
    %1861 = vmatprep.subr.mxu0 0.0
    %1862 = vmatpush2.xpose.msra.mxu0 0.0
    %1863 = vmatprep.subr.mxu0 0.0
    %1864 = vmatpush2.xpose.msra.mxu0 0.0
    %1865 = vmatprep.subr.mxu0 0.0
    %1866 = vmatpush2.xpose.msra.mxu0 0.0
    %1867 = vmatprep.subr.mxu0 0.0
    %1868 = vmatpush2.xpose.msra.mxu0 0.0
    %1869 = vmatprep.subr.mxu0 0.0
    %1870 = vmatpush2.xpose.msra.mxu0 0.0
    %1871 = vmatprep.subr.mxu0 0.0
    %1872 = vmatpush2.xpose.msra.mxu0 0.0
    %1873 = vmatprep.subr.mxu0 0.0
    %1874 = vmatpush2.xpose.msra.mxu0 0.0
    %1875 = vmatprep.subr.mxu0 0.0
    %1876 = vmatpush2.xpose.msra.mxu0 0.0
    %1877 = vmatprep.subr.mxu0 0.0
    %1878 = vmatpush2.xpose.msra.mxu0 0.0
    %1879 = vmatprep.subr.mxu0 0.0
    %1880 = vmatpush2.xpose.msra.mxu0 0.0
    %1881 = vmatprep.subr.mxu0 0.0
    %1882 = vmatpush2.xpose.msra.mxu0 0.0
    %1883 = vmatprep.subr.mxu0 0.0
    %1884 = vmatpush2.xpose.msra.mxu0 0.0
    %1885 = vmatprep.subr.mxu0 0.0
    %1886 = vmatpush2.xpose.msra.mxu0 0.0
    %1887 = vmatprep.mubr.f32.mxu0 0.0
    %v1888 = vand.u32 %v1816, 4294901760
    %v1889 = vsub.f32 %v1816, %v1888
    %v1890 = vand.u32 %v1889, 4294901760
    %v1891 = vsub.f32 %v1889, %v1890
    %v1892 = vand.u32 %v1891, 4294901760
    %1893 = vmatmul.mubr.f32.gmra.mxu0 %v1892
    %v1894 = vpop.f32.mrf.mxu0
    %v1895 = vadd.f32 0.0, %v1894
    %v1896 = vpop.f32.mrf.mxu0
    %1897 = vmatprep.mubr.f32.mxu0 0.0
    %v1898 = vand.u32 %v1819, 4294901760
    %v1899 = vsub.f32 %v1819, %v1898
    %v1900 = vand.u32 %v1899, 4294901760
    %v1901 = vsub.f32 %v1899, %v1900
    %v1902 = vand.u32 %v1901, 4294901760
    %1903 = vmatmul.mubr.f32.gmra.mxu0 %v1902
    %v1904 = vpop.f32.mrf.mxu0
    %v1905 = vadd.f32 0.0, %v1904
    %v1906 = vpop.f32.mrf.mxu0
    %1907 = vdwg.mxu0
    %1908 = vmatprep.subr.mxu0 0.0
    %1909 = vmatpush1.xpose.msra.mxu0 0.0
    %1910 = vmatprep.subr.mxu0 0.0
    %1911 = vmatpush1.xpose.msra.mxu0 0.0
    %1912 = vmatprep.subr.mxu0 0.0
    %1913 = vmatpush1.xpose.msra.mxu0 0.0
    %1914 = vmatprep.subr.mxu0 0.0
    %1915 = vmatpush1.xpose.msra.mxu0 0.0
    %1916 = vmatprep.subr.mxu0 0.0
    %1917 = vmatpush1.xpose.msra.mxu0 0.0
    %1918 = vmatprep.subr.mxu0 0.0
    %1919 = vmatpush1.xpose.msra.mxu0 0.0
    %1920 = vmatprep.subr.mxu0 0.0
    %1921 = vmatpush1.xpose.msra.mxu0 0.0
    %1922 = vmatprep.subr.mxu0 0.0
    %1923 = vmatpush1.xpose.msra.mxu0 0.0
    %1924 = vmatprep.subr.mxu0 0.0
    %1925 = vmatpush1.xpose.msra.mxu0 0.0
    %1926 = vmatprep.subr.mxu0 0.0
    %1927 = vmatpush1.xpose.msra.mxu0 0.0
    %1928 = vmatprep.subr.mxu0 0.0
    %1929 = vmatpush1.xpose.msra.mxu0 0.0
    %1930 = vmatprep.subr.mxu0 0.0
    %1931 = vmatpush1.xpose.msra.mxu0 0.0
    %1932 = vmatprep.subr.mxu0 0.0
    %1933 = vmatpush1.xpose.msra.mxu0 0.0
    %1934 = vmatprep.subr.mxu0 0.0
    %1935 = vmatpush1.xpose.msra.mxu0 0.0
    %1936 = vmatprep.subr.mxu0 0.0
    %v1937 = vand.u32 %v1201, 4294901760
    %v1938 = vsub.f32 %v1201, %v1937
    %v1939 = vand.u32 %v1938, 4294901760
    %v1940 = vsub.f32 %v1938, %v1939
    %v1941 = vand.u32 %v1940, 4294901760
    %1942 = vmatpush1.xpose.msra.mxu0 %v1941
    %1943 = vmatprep.subr.mxu0 0.0
    %v1944 = vand.u32 %v1198, 4294901760
    %v1945 = vsub.f32 %v1198, %v1944
    %v1946 = vand.u32 %v1945, 4294901760
    %v1947 = vsub.f32 %v1945, %v1946
    %v1948 = vand.u32 %v1947, 4294901760
    %1949 = vmatpush1.xpose.msra.mxu0 %v1948
    %1950 = vmatprep.subr.mxu0 0.0
    %1951 = vmatpush2.xpose.msra.mxu0 0.0
    %1952 = vmatprep.subr.mxu0 0.0
    %1953 = vmatpush2.xpose.msra.mxu0 0.0
    %1954 = vmatprep.subr.mxu0 0.0
    %1955 = vmatpush2.xpose.msra.mxu0 0.0
    %1956 = vmatprep.subr.mxu0 0.0
    %1957 = vmatpush2.xpose.msra.mxu0 0.0
    %1958 = vmatprep.subr.mxu0 0.0
    %1959 = vmatpush2.xpose.msra.mxu0 0.0
    %1960 = vmatprep.subr.mxu0 0.0
    %1961 = vmatpush2.xpose.msra.mxu0 0.0
    %1962 = vmatprep.subr.mxu0 0.0
    %1963 = vmatpush2.xpose.msra.mxu0 0.0
    %1964 = vmatprep.subr.mxu0 0.0
    %1965 = vmatpush2.xpose.msra.mxu0 0.0
    %1966 = vmatprep.subr.mxu0 0.0
    %1967 = vmatpush2.xpose.msra.mxu0 0.0
    %1968 = vmatprep.subr.mxu0 0.0
    %1969 = vmatpush2.xpose.msra.mxu0 0.0
    %1970 = vmatprep.subr.mxu0 0.0
    %1971 = vmatpush2.xpose.msra.mxu0 0.0
    %1972 = vmatprep.subr.mxu0 0.0
    %1973 = vmatpush2.xpose.msra.mxu0 0.0
    %1974 = vmatprep.subr.mxu0 0.0
    %1975 = vmatpush2.xpose.msra.mxu0 0.0
    %1976 = vmatprep.subr.mxu0 0.0
    %1977 = vmatpush2.xpose.msra.mxu0 0.0
    %1978 = vmatprep.subr.mxu0 0.0
    %1979 = vmatpush2.xpose.msra.mxu0 0.0
    %1980 = vmatprep.subr.mxu0 0.0
    %1981 = vmatpush2.xpose.msra.mxu0 0.0
    %1982 = vmatprep.mubr.f32.mxu0 0.0
    %v1983 = vand.u32 %v1816, 4294901760
    %1984 = vmatmul.mubr.f32.gmra.mxu0 %v1983
    %v1985 = vpop.f32.mrf.mxu0
    %v1986 = vadd.f32 %v1895, %v1985
    %v1987 = vpop.f32.mrf.mxu0
    %1988 = vmatprep.mubr.f32.mxu0 0.0
    %v1989 = vand.u32 %v1819, 4294901760
    %1990 = vmatmul.mubr.f32.gmra.mxu0 %v1989
    %v1991 = vpop.f32.mrf.mxu0
    %v1992 = vadd.f32 %v1905, %v1991
    %v1993 = vpop.f32.mrf.mxu0
    %1994 = vdwg.mxu0
    %1995 = vmatprep.subr.mxu0 0.0
    %1996 = vmatpush1.xpose.msra.mxu0 0.0
    %1997 = vmatprep.subr.mxu0 0.0
    %1998 = vmatpush1.xpose.msra.mxu0 0.0
    %1999 = vmatprep.subr.mxu0 0.0
    %2000 = vmatpush1.xpose.msra.mxu0 0.0
    %2001 = vmatprep.subr.mxu0 0.0
    %2002 = vmatpush1.xpose.msra.mxu0 0.0
    %2003 = vmatprep.subr.mxu0 0.0
    %2004 = vmatpush1.xpose.msra.mxu0 0.0
    %2005 = vmatprep.subr.mxu0 0.0
    %2006 = vmatpush1.xpose.msra.mxu0 0.0
    %2007 = vmatprep.subr.mxu0 0.0
    %2008 = vmatpush1.xpose.msra.mxu0 0.0
    %2009 = vmatprep.subr.mxu0 0.0
    %2010 = vmatpush1.xpose.msra.mxu0 0.0
    %2011 = vmatprep.subr.mxu0 0.0
    %2012 = vmatpush1.xpose.msra.mxu0 0.0
    %2013 = vmatprep.subr.mxu0 0.0
    %2014 = vmatpush1.xpose.msra.mxu0 0.0
    %2015 = vmatprep.subr.mxu0 0.0
    %2016 = vmatpush1.xpose.msra.mxu0 0.0
    %2017 = vmatprep.subr.mxu0 0.0
    %2018 = vmatpush1.xpose.msra.mxu0 0.0
    %2019 = vmatprep.subr.mxu0 0.0
    %2020 = vmatpush1.xpose.msra.mxu0 0.0
    %2021 = vmatprep.subr.mxu0 0.0
    %2022 = vmatpush1.xpose.msra.mxu0 0.0
    %2023 = vmatprep.subr.mxu0 0.0
    %v2024 = vand.u32 %v1201, 4294901760
    %v2025 = vsub.f32 %v1201, %v2024
    %2026 = vmatpush1.xpose.msra.mxu0 %v2025
    %2027 = vmatprep.subr.mxu0 0.0
    %v2028 = vand.u32 %v1198, 4294901760
    %v2029 = vsub.f32 %v1198, %v2028
    %2030 = vmatpush1.xpose.msra.mxu0 %v2029
    %2031 = vmatprep.subr.mxu0 0.0
    %2032 = vmatpush2.xpose.msra.mxu0 0.0
    %2033 = vmatprep.subr.mxu0 0.0
    %2034 = vmatpush2.xpose.msra.mxu0 0.0
    %2035 = vmatprep.subr.mxu0 0.0
    %2036 = vmatpush2.xpose.msra.mxu0 0.0
    %2037 = vmatprep.subr.mxu0 0.0
    %2038 = vmatpush2.xpose.msra.mxu0 0.0
    %2039 = vmatprep.subr.mxu0 0.0
    %2040 = vmatpush2.xpose.msra.mxu0 0.0
    %2041 = vmatprep.subr.mxu0 0.0
    %2042 = vmatpush2.xpose.msra.mxu0 0.0
    %2043 = vmatprep.subr.mxu0 0.0
    %2044 = vmatpush2.xpose.msra.mxu0 0.0
    %2045 = vmatprep.subr.mxu0 0.0
    %2046 = vmatpush2.xpose.msra.mxu0 0.0
    %2047 = vmatprep.subr.mxu0 0.0
    %2048 = vmatpush2.xpose.msra.mxu0 0.0
    %2049 = vmatprep.subr.mxu0 0.0
    %2050 = vmatpush2.xpose.msra.mxu0 0.0
    %2051 = vmatprep.subr.mxu0 0.0
    %2052 = vmatpush2.xpose.msra.mxu0 0.0
    %2053 = vmatprep.subr.mxu0 0.0
    %2054 = vmatpush2.xpose.msra.mxu0 0.0
    %2055 = vmatprep.subr.mxu0 0.0
    %2056 = vmatpush2.xpose.msra.mxu0 0.0
    %2057 = vmatprep.subr.mxu0 0.0
    %2058 = vmatpush2.xpose.msra.mxu0 0.0
    %2059 = vmatprep.subr.mxu0 0.0
    %2060 = vmatpush2.xpose.msra.mxu0 0.0
    %2061 = vmatprep.subr.mxu0 0.0
    %2062 = vmatpush2.xpose.msra.mxu0 0.0
    %2063 = vmatprep.mubr.f32.mxu0 0.0
    %v2064 = vand.u32 %v1816, 4294901760
    %v2065 = vsub.f32 %v1816, %v2064
    %2066 = vmatmul.mubr.f32.gmra.mxu0 %v2065
    %v2067 = vpop.f32.mrf.mxu0
    %v2068 = vadd.f32 %v1986, %v2067
    %v2069 = vpop.f32.mrf.mxu0
    %2070 = vmatprep.mubr.f32.mxu0 0.0
    %v2071 = vand.u32 %v1819, 4294901760
    %v2072 = vsub.f32 %v1819, %v2071
    %2073 = vmatmul.mubr.f32.gmra.mxu0 %v2072
    %v2074 = vpop.f32.mrf.mxu0
    %v2075 = vadd.f32 %v1992, %v2074
    %v2076 = vpop.f32.mrf.mxu0
    %2077 = vdwg.mxu0
    %2078 = vmatprep.subr.mxu0 0.0
    %2079 = vmatpush1.xpose.msra.mxu0 0.0
    %2080 = vmatprep.subr.mxu0 0.0
    %2081 = vmatpush1.xpose.msra.mxu0 0.0
    %2082 = vmatprep.subr.mxu0 0.0
    %2083 = vmatpush1.xpose.msra.mxu0 0.0
    %2084 = vmatprep.subr.mxu0 0.0
    %2085 = vmatpush1.xpose.msra.mxu0 0.0
    %2086 = vmatprep.subr.mxu0 0.0
    %2087 = vmatpush1.xpose.msra.mxu0 0.0
    %2088 = vmatprep.subr.mxu0 0.0
    %2089 = vmatpush1.xpose.msra.mxu0 0.0
    %2090 = vmatprep.subr.mxu0 0.0
    %2091 = vmatpush1.xpose.msra.mxu0 0.0
    %2092 = vmatprep.subr.mxu0 0.0
    %2093 = vmatpush1.xpose.msra.mxu0 0.0
    %2094 = vmatprep.subr.mxu0 0.0
    %2095 = vmatpush1.xpose.msra.mxu0 0.0
    %2096 = vmatprep.subr.mxu0 0.0
    %2097 = vmatpush1.xpose.msra.mxu0 0.0
    %2098 = vmatprep.subr.mxu0 0.0
    %2099 = vmatpush1.xpose.msra.mxu0 0.0
    %2100 = vmatprep.subr.mxu0 0.0
    %2101 = vmatpush1.xpose.msra.mxu0 0.0
    %2102 = vmatprep.subr.mxu0 0.0
    %2103 = vmatpush1.xpose.msra.mxu0 0.0
    %2104 = vmatprep.subr.mxu0 0.0
    %2105 = vmatpush1.xpose.msra.mxu0 0.0
    %2106 = vmatprep.subr.mxu0 0.0
    %v2107 = vand.u32 %v1201, 4294901760
    %2108 = vmatpush1.xpose.msra.mxu0 %v2107
    %2109 = vmatprep.subr.mxu0 0.0
    %v2110 = vand.u32 %v1198, 4294901760
    %2111 = vmatpush1.xpose.msra.mxu0 %v2110
    %2112 = vmatprep.subr.mxu0 0.0
    %2113 = vmatpush2.xpose.msra.mxu0 0.0
    %2114 = vmatprep.subr.mxu0 0.0
    %2115 = vmatpush2.xpose.msra.mxu0 0.0
    %2116 = vmatprep.subr.mxu0 0.0
    %2117 = vmatpush2.xpose.msra.mxu0 0.0
    %2118 = vmatprep.subr.mxu0 0.0
    %2119 = vmatpush2.xpose.msra.mxu0 0.0
    %2120 = vmatprep.subr.mxu0 0.0
    %2121 = vmatpush2.xpose.msra.mxu0 0.0
    %2122 = vmatprep.subr.mxu0 0.0
    %2123 = vmatpush2.xpose.msra.mxu0 0.0
    %2124 = vmatprep.subr.mxu0 0.0
    %2125 = vmatpush2.xpose.msra.mxu0 0.0
    %2126 = vmatprep.subr.mxu0 0.0
    %2127 = vmatpush2.xpose.msra.mxu0 0.0
    %2128 = vmatprep.subr.mxu0 0.0
    %2129 = vmatpush2.xpose.msra.mxu0 0.0
    %2130 = vmatprep.subr.mxu0 0.0
    %2131 = vmatpush2.xpose.msra.mxu0 0.0
    %2132 = vmatprep.subr.mxu0 0.0
    %2133 = vmatpush2.xpose.msra.mxu0 0.0
    %2134 = vmatprep.subr.mxu0 0.0
    %2135 = vmatpush2.xpose.msra.mxu0 0.0
    %2136 = vmatprep.subr.mxu0 0.0
    %2137 = vmatpush2.xpose.msra.mxu0 0.0
    %2138 = vmatprep.subr.mxu0 0.0
    %2139 = vmatpush2.xpose.msra.mxu0 0.0
    %2140 = vmatprep.subr.mxu0 0.0
    %2141 = vmatpush2.xpose.msra.mxu0 0.0
    %2142 = vmatprep.subr.mxu0 0.0
    %2143 = vmatpush2.xpose.msra.mxu0 0.0
    %2144 = vmatprep.mubr.f32.mxu0 0.0
    %v2145 = vand.u32 %v1816, 4294901760
    %v2146 = vsub.f32 %v1816, %v2145
    %v2147 = vand.u32 %v2146, 4294901760
    %2148 = vmatmul.mubr.f32.gmra.mxu0 %v2147
    %v2149 = vpop.f32.mrf.mxu0
    %v2150 = vadd.f32 %v2068, %v2149
    %v2151 = vpop.f32.mrf.mxu0
    %2152 = vmatprep.mubr.f32.mxu0 0.0
    %v2153 = vand.u32 %v1819, 4294901760
    %v2154 = vsub.f32 %v1819, %v2153
    %v2155 = vand.u32 %v2154, 4294901760
    %2156 = vmatmul.mubr.f32.gmra.mxu0 %v2155
    %v2157 = vpop.f32.mrf.mxu0
    %v2158 = vadd.f32 %v2075, %v2157
    %v2159 = vpop.f32.mrf.mxu0
    %2160 = vdwg.mxu0
    %2161 = vmatprep.subr.mxu0 0.0
    %2162 = vmatpush1.xpose.msra.mxu0 0.0
    %2163 = vmatprep.subr.mxu0 0.0
    %2164 = vmatpush1.xpose.msra.mxu0 0.0
    %2165 = vmatprep.subr.mxu0 0.0
    %2166 = vmatpush1.xpose.msra.mxu0 0.0
    %2167 = vmatprep.subr.mxu0 0.0
    %2168 = vmatpush1.xpose.msra.mxu0 0.0
    %2169 = vmatprep.subr.mxu0 0.0
    %2170 = vmatpush1.xpose.msra.mxu0 0.0
    %2171 = vmatprep.subr.mxu0 0.0
    %2172 = vmatpush1.xpose.msra.mxu0 0.0
    %2173 = vmatprep.subr.mxu0 0.0
    %2174 = vmatpush1.xpose.msra.mxu0 0.0
    %2175 = vmatprep.subr.mxu0 0.0
    %2176 = vmatpush1.xpose.msra.mxu0 0.0
    %2177 = vmatprep.subr.mxu0 0.0
    %2178 = vmatpush1.xpose.msra.mxu0 0.0
    %2179 = vmatprep.subr.mxu0 0.0
    %2180 = vmatpush1.xpose.msra.mxu0 0.0
    %2181 = vmatprep.subr.mxu0 0.0
    %2182 = vmatpush1.xpose.msra.mxu0 0.0
    %2183 = vmatprep.subr.mxu0 0.0
    %2184 = vmatpush1.xpose.msra.mxu0 0.0
    %2185 = vmatprep.subr.mxu0 0.0
    %2186 = vmatpush1.xpose.msra.mxu0 0.0
    %2187 = vmatprep.subr.mxu0 0.0
    %2188 = vmatpush1.xpose.msra.mxu0 0.0
    %2189 = vmatprep.subr.mxu0 0.0
    %v2190 = vand.u32 %v1201, 4294901760
    %v2191 = vsub.f32 %v1201, %v2190
    %v2192 = vand.u32 %v2191, 4294901760
    %2193 = vmatpush1.xpose.msra.mxu0 %v2192
    %2194 = vmatprep.subr.mxu0 0.0
    %v2195 = vand.u32 %v1198, 4294901760
    %v2196 = vsub.f32 %v1198, %v2195
    %v2197 = vand.u32 %v2196, 4294901760
    %2198 = vmatpush1.xpose.msra.mxu0 %v2197
    %2199 = vmatprep.subr.mxu0 0.0
    %2200 = vmatpush2.xpose.msra.mxu0 0.0
    %2201 = vmatprep.subr.mxu0 0.0
    %2202 = vmatpush2.xpose.msra.mxu0 0.0
    %2203 = vmatprep.subr.mxu0 0.0
    %2204 = vmatpush2.xpose.msra.mxu0 0.0
    %2205 = vmatprep.subr.mxu0 0.0
    %2206 = vmatpush2.xpose.msra.mxu0 0.0
    %2207 = vmatprep.subr.mxu0 0.0
    %2208 = vmatpush2.xpose.msra.mxu0 0.0
    %2209 = vmatprep.subr.mxu0 0.0
    %2210 = vmatpush2.xpose.msra.mxu0 0.0
    %2211 = vmatprep.subr.mxu0 0.0
    %2212 = vmatpush2.xpose.msra.mxu0 0.0
    %2213 = vmatprep.subr.mxu0 0.0
    %2214 = vmatpush2.xpose.msra.mxu0 0.0
    %2215 = vmatprep.subr.mxu0 0.0
    %2216 = vmatpush2.xpose.msra.mxu0 0.0
    %2217 = vmatprep.subr.mxu0 0.0
    %2218 = vmatpush2.xpose.msra.mxu0 0.0
    %2219 = vmatprep.subr.mxu0 0.0
    %2220 = vmatpush2.xpose.msra.mxu0 0.0
    %2221 = vmatprep.subr.mxu0 0.0
    %2222 = vmatpush2.xpose.msra.mxu0 0.0
    %2223 = vmatprep.subr.mxu0 0.0
    %2224 = vmatpush2.xpose.msra.mxu0 0.0
    %2225 = vmatprep.subr.mxu0 0.0
    %2226 = vmatpush2.xpose.msra.mxu0 0.0
    %2227 = vmatprep.subr.mxu0 0.0
    %2228 = vmatpush2.xpose.msra.mxu0 0.0
    %2229 = vmatprep.subr.mxu0 0.0
    %2230 = vmatpush2.xpose.msra.mxu0 0.0
    %2231 = vmatprep.mubr.f32.mxu0 0.0
    %v2232 = vand.u32 %v1816, 4294901760
    %2233 = vmatmul.mubr.f32.gmra.mxu0 %v2232
    %v2234 = vpop.f32.mrf.mxu0
    %v2235 = vadd.f32 %v2150, %v2234
    %v2236 = vpop.f32.mrf.mxu0
    %2237 = vmatprep.mubr.f32.mxu0 0.0
    %v2238 = vand.u32 %v1819, 4294901760
    %2239 = vmatmul.mubr.f32.gmra.mxu0 %v2238
    %v2240 = vpop.f32.mrf.mxu0
    %v2241 = vadd.f32 %v2158, %v2240
    %v2242 = vpop.f32.mrf.mxu0
    %2243 = vdwg.mxu0
    %2244 = vmatprep.subr.mxu0 0.0
    %2245 = vmatpush1.xpose.msra.mxu0 0.0
    %2246 = vmatprep.subr.mxu0 0.0
    %2247 = vmatpush1.xpose.msra.mxu0 0.0
    %2248 = vmatprep.subr.mxu0 0.0
    %2249 = vmatpush1.xpose.msra.mxu0 0.0
    %2250 = vmatprep.subr.mxu0 0.0
    %2251 = vmatpush1.xpose.msra.mxu0 0.0
    %2252 = vmatprep.subr.mxu0 0.0
    %2253 = vmatpush1.xpose.msra.mxu0 0.0
    %2254 = vmatprep.subr.mxu0 0.0
    %2255 = vmatpush1.xpose.msra.mxu0 0.0
    %2256 = vmatprep.subr.mxu0 0.0
    %2257 = vmatpush1.xpose.msra.mxu0 0.0
    %2258 = vmatprep.subr.mxu0 0.0
    %2259 = vmatpush1.xpose.msra.mxu0 0.0
    %2260 = vmatprep.subr.mxu0 0.0
    %2261 = vmatpush1.xpose.msra.mxu0 0.0
    %2262 = vmatprep.subr.mxu0 0.0
    %2263 = vmatpush1.xpose.msra.mxu0 0.0
    %2264 = vmatprep.subr.mxu0 0.0
    %2265 = vmatpush1.xpose.msra.mxu0 0.0
    %2266 = vmatprep.subr.mxu0 0.0
    %2267 = vmatpush1.xpose.msra.mxu0 0.0
    %2268 = vmatprep.subr.mxu0 0.0
    %2269 = vmatpush1.xpose.msra.mxu0 0.0
    %2270 = vmatprep.subr.mxu0 0.0
    %2271 = vmatpush1.xpose.msra.mxu0 0.0
    %2272 = vmatprep.subr.mxu0 0.0
    %v2273 = vand.u32 %v1201, 4294901760
    %2274 = vmatpush1.xpose.msra.mxu0 %v2273
    %2275 = vmatprep.subr.mxu0 0.0
    %v2276 = vand.u32 %v1198, 4294901760
    %2277 = vmatpush1.xpose.msra.mxu0 %v2276
    %2278 = vmatprep.subr.mxu0 0.0
    %2279 = vmatpush2.xpose.msra.mxu0 0.0
    %2280 = vmatprep.subr.mxu0 0.0
    %2281 = vmatpush2.xpose.msra.mxu0 0.0
    %2282 = vmatprep.subr.mxu0 0.0
    %2283 = vmatpush2.xpose.msra.mxu0 0.0
    %2284 = vmatprep.subr.mxu0 0.0
    %2285 = vmatpush2.xpose.msra.mxu0 0.0
    %2286 = vmatprep.subr.mxu0 0.0
    %2287 = vmatpush2.xpose.msra.mxu0 0.0
    %2288 = vmatprep.subr.mxu0 0.0
    %2289 = vmatpush2.xpose.msra.mxu0 0.0
    %2290 = vmatprep.subr.mxu0 0.0
    %2291 = vmatpush2.xpose.msra.mxu0 0.0
    %2292 = vmatprep.subr.mxu0 0.0
    %2293 = vmatpush2.xpose.msra.mxu0 0.0
    %2294 = vmatprep.subr.mxu0 0.0
    %2295 = vmatpush2.xpose.msra.mxu0 0.0
    %2296 = vmatprep.subr.mxu0 0.0
    %2297 = vmatpush2.xpose.msra.mxu0 0.0
    %2298 = vmatprep.subr.mxu0 0.0
    %2299 = vmatpush2.xpose.msra.mxu0 0.0
    %2300 = vmatprep.subr.mxu0 0.0
    %2301 = vmatpush2.xpose.msra.mxu0 0.0
    %2302 = vmatprep.subr.mxu0 0.0
    %2303 = vmatpush2.xpose.msra.mxu0 0.0
    %2304 = vmatprep.subr.mxu0 0.0
    %2305 = vmatpush2.xpose.msra.mxu0 0.0
    %2306 = vmatprep.subr.mxu0 0.0
    %2307 = vmatpush2.xpose.msra.mxu0 0.0
    %2308 = vmatprep.subr.mxu0 0.0
    %2309 = vmatpush2.xpose.msra.mxu0 0.0
    %2310 = vmatprep.mubr.f32.mxu0 0.0
    %v2311 = vand.u32 %v1816, 4294901760
    %2312 = vmatmul.mubr.f32.gmra.mxu0 %v2311
    %v2313 = vpop.f32.mrf.mxu0
    %v2314 = vadd.f32 %v2235, %v2313
    %v2315 = vpop.f32.mrf.mxu0
    %2316 = vmatprep.mubr.f32.mxu0 0.0
    %v2317 = vand.u32 %v1819, 4294901760
    %2318 = vmatmul.mubr.f32.gmra.mxu0 %v2317
    %v2319 = vpop.f32.mrf.mxu0
    %v2320 = vadd.f32 %v2241, %v2319
    %v2321 = vpop.f32.mrf.mxu0
    %2322 = vdwg.mxu0
    %v2323 = vld [vmem:[%s1 + $0xa0] sm:$0xff]
    %v2324 = vmul.f32 %v2323, 1.442695
    %v2325 = vpow.pop %v2324
    %v2326 = vsub.f32 0.0, %v2325
    %v2327 = vmul.f32 %v1811, %v1181
    %v2328 = vmul.f32 %v1812, %v1182
    %v2329 = vld [vmem:[%s2 + $0x6] sm:$0x1]
    %v2330 = vlaneseq
    %v2331 = vshrl.u32 %v2330, 7
    %v2332 = vsub.s32 0, %v2331
    %v2333 = vrot.slane %v1811, %v2332
    %v2334 = vmul.f32 %v2333, %v2326
    %v2335 = vlaneseq
    %v2336 = vshrl.u32 %v2335, 7
    %v2337 = vsub.s32 1, %v2336
    %v2338 = vrot.slane %v1811, %v2337
    %v2339 = vmul.f32 %v2338, %v2326
    %v2340 = vlaneseq
    %v2341 = vshrl.u32 %v2340, 7
    %v2342 = vsub.s32 2, %v2341
    %v2343 = vrot.slane %v1811, %v2342
    %v2344 = vmul.f32 %v2343, %v2326
    %v2345 = vlaneseq
    %v2346 = vshrl.u32 %v2345, 7
    %v2347 = vsub.s32 3, %v2346
    %v2348 = vrot.slane %v1811, %v2347
    %v2349 = vmul.f32 %v2348, %v2326
    %v2350 = vlaneseq
    %v2351 = vshrl.u32 %v2350, 7
    %v2352 = vsub.s32 4, %v2351
    %v2353 = vrot.slane %v1811, %v2352
    %v2354 = vmul.f32 %v2353, %v2326
    %v2355 = vlaneseq
    %v2356 = vshrl.u32 %v2355, 7
    %v2357 = vsub.s32 5, %v2356
    %v2358 = vrot.slane %v1811, %v2357
    %v2359 = vmul.f32 %v2358, %v2326
    %v2360 = vlaneseq
    %v2361 = vshrl.u32 %v2360, 7
    %v2362 = vsub.s32 6, %v2361
    %v2363 = vrot.slane %v1811, %v2362
    %v2364 = vmul.f32 %v2363, %v2326
    %v2365 = vlaneseq
    %v2366 = vshrl.u32 %v2365, 7
    %v2367 = vsub.s32 7, %v2366
    %v2368 = vrot.slane %v1811, %v2367
    %v2369 = vmul.f32 %v2368, %v2326
    %v2370 = vmul.f32 %v2334, 1.442695
    %v2371 = vpow.pop %v2370
    %v2372 = vmul.f32 %v2339, 1.442695
    %v2373 = vpow.pop %v2372
    %v2374 = vmul.f32 %v2344, 1.442695
    %v2375 = vpow.pop %v2374
    %v2376 = vmul.f32 %v2349, 1.442695
    %v2377 = vpow.pop %v2376
    %v2378 = vmul.f32 %v2354, 1.442695
    %v2379 = vpow.pop %v2378
    %v2380 = vmul.f32 %v2359, 1.442695
    %v2381 = vpow.pop %v2380
    %v2382 = vmul.f32 %v2364, 1.442695
    %v2383 = vpow.pop %v2382
    %v2384 = vmul.f32 %v2369, 1.442695
    %v2385 = vpow.pop %v2384
    %2387 = vset.pattern.permute.xlu0 0
    %2388 = vperm.xlu0 %2387, %v2314
    %v2389 = vpop.permute.xlu0 %2388
    %v2391 = vlaneseq
    %v2392 = vshrl.u32 %v2391, 7
    %v2393 = vsub.s32 0, %v2392
    %v2394 = vrot.slane %v2327, %v2393
    %v2395 = vmul.f32 %v2389, %v2394
    %v2396 = vmul.f32 %v2371, 0.0
    %v2397 = vadd.f32 %v2396, %v2395
    %2399 = vset.pattern.permute.xlu0 0
    %2400 = vperm.xlu0 %2399, %v2320
    %v2401 = vpop.permute.xlu0 %2400
    %v2403 = vmul.f32 %v2401, %v2397
    %v2404 = vsel %vm1196, %v2403, 0.0
    %v2405 = vrot.slane %v2404, 4
    %v2406 = vadd.f32 %v2404, %v2405
    %v2407 = vrot.slane %v2406, 2
    %v2408 = vadd.f32 %v2406, %v2407
    %v2409 = vrot.slane %v2408, 1
    %v2410 = vadd.f32 %v2408, %v2409
    %2411 = vset.pattern.permute.xlu0 1
    %2412 = vperm.xlu0 %2411, %v2314
    %v2413 = vpop.permute.xlu0 %2412
    %v2415 = vlaneseq
    %v2416 = vshrl.u32 %v2415, 7
    %v2417 = vsub.s32 1, %v2416
    %v2418 = vrot.slane %v2327, %v2417
    %v2419 = vmul.f32 %v2413, %v2418
    %v2420 = vmul.f32 %v2373, %v2397
    %v2421 = vadd.f32 %v2420, %v2419
    %2422 = vset.pattern.permute.xlu0 1
    %2423 = vperm.xlu0 %2422, %v2320
    %v2424 = vpop.permute.xlu0 %2423
    %v2426 = vmul.f32 %v2424, %v2421
    %v2427 = vsel %vm1196, %v2426, 0.0
    %v2428 = vrot.slane %v2427, 4
    %v2429 = vadd.f32 %v2427, %v2428
    %v2430 = vrot.slane %v2429, 2
    %v2431 = vadd.f32 %v2429, %v2430
    %v2432 = vrot.slane %v2431, 1
    %v2433 = vadd.f32 %v2431, %v2432
    %2434 = vset.pattern.permute.xlu0 2
    %2435 = vperm.xlu0 %2434, %v2314
    %v2436 = vpop.permute.xlu0 %2435
    %v2438 = vlaneseq
    %v2439 = vshrl.u32 %v2438, 7
    %v2440 = vsub.s32 2, %v2439
    %v2441 = vrot.slane %v2327, %v2440
    %v2442 = vmul.f32 %v2436, %v2441
    %v2443 = vmul.f32 %v2375, %v2421
    %v2444 = vadd.f32 %v2443, %v2442
    %2445 = vset.pattern.permute.xlu0 2
    %2446 = vperm.xlu0 %2445, %v2320
    %v2447 = vpop.permute.xlu0 %2446
    %v2449 = vmul.f32 %v2447, %v2444
    %v2450 = vsel %vm1196, %v2449, 0.0
    %v2451 = vrot.slane %v2450, 4
    %v2452 = vadd.f32 %v2450, %v2451
    %v2453 = vrot.slane %v2452, 2
    %v2454 = vadd.f32 %v2452, %v2453
    %v2455 = vrot.slane %v2454, 1
    %v2456 = vadd.f32 %v2454, %v2455
    %2457 = vset.pattern.permute.xlu0 3
    %2458 = vperm.xlu0 %2457, %v2314
    %v2459 = vpop.permute.xlu0 %2458
    %v2461 = vlaneseq
    %v2462 = vshrl.u32 %v2461, 7
    %v2463 = vsub.s32 3, %v2462
    %v2464 = vrot.slane %v2327, %v2463
    %v2465 = vmul.f32 %v2459, %v2464
    %v2466 = vmul.f32 %v2377, %v2444
    %v2467 = vadd.f32 %v2466, %v2465
    %2468 = vset.pattern.permute.xlu0 3
    %2469 = vperm.xlu0 %2468, %v2320
    %v2470 = vpop.permute.xlu0 %2469
    %v2472 = vmul.f32 %v2470, %v2467
    %v2473 = vsel %vm1196, %v2472, 0.0
    %v2474 = vrot.slane %v2473, 4
    %v2475 = vadd.f32 %v2473, %v2474
    %v2476 = vrot.slane %v2475, 2
    %v2477 = vadd.f32 %v2475, %v2476
    %v2478 = vrot.slane %v2477, 1
    %v2479 = vadd.f32 %v2477, %v2478
    %2480 = vset.pattern.permute.xlu0 4
    %2481 = vperm.xlu0 %2480, %v2314
    %v2482 = vpop.permute.xlu0 %2481
    %v2484 = vlaneseq
    %v2485 = vshrl.u32 %v2484, 7
    %v2486 = vsub.s32 4, %v2485
    %v2487 = vrot.slane %v2327, %v2486
    %v2488 = vmul.f32 %v2482, %v2487
    %v2489 = vmul.f32 %v2379, %v2467
    %v2490 = vadd.f32 %v2489, %v2488
    %2491 = vset.pattern.permute.xlu0 4
    %2492 = vperm.xlu0 %2491, %v2320
    %v2493 = vpop.permute.xlu0 %2492
    %v2495 = vmul.f32 %v2493, %v2490
    %v2496 = vsel %vm1196, %v2495, 0.0
    %v2497 = vrot.slane %v2496, 4
    %v2498 = vadd.f32 %v2496, %v2497
    %v2499 = vrot.slane %v2498, 2
    %v2500 = vadd.f32 %v2498, %v2499
    %v2501 = vrot.slane %v2500, 1
    %v2502 = vadd.f32 %v2500, %v2501
    %2503 = vset.pattern.permute.xlu0 5
    %2504 = vperm.xlu0 %2503, %v2314
    %v2505 = vpop.permute.xlu0 %2504
    %v2507 = vlaneseq
    %v2508 = vshrl.u32 %v2507, 7
    %v2509 = vsub.s32 5, %v2508
    %v2510 = vrot.slane %v2327, %v2509
    %v2511 = vmul.f32 %v2505, %v2510
    %v2512 = vmul.f32 %v2381, %v2490
    %v2513 = vadd.f32 %v2512, %v2511
    %2514 = vset.pattern.permute.xlu0 5
    %2515 = vperm.xlu0 %2514, %v2320
    %v2516 = vpop.permute.xlu0 %2515
    %v2518 = vmul.f32 %v2516, %v2513
    %v2519 = vsel %vm1196, %v2518, 0.0
    %v2520 = vrot.slane %v2519, 4
    %v2521 = vadd.f32 %v2519, %v2520
    %v2522 = vrot.slane %v2521, 2
    %v2523 = vadd.f32 %v2521, %v2522
    %v2524 = vrot.slane %v2523, 1
    %v2525 = vadd.f32 %v2523, %v2524
    %2526 = vset.pattern.permute.xlu0 6
    %2527 = vperm.xlu0 %2526, %v2314
    %v2528 = vpop.permute.xlu0 %2527
    %v2530 = vlaneseq
    %v2531 = vshrl.u32 %v2530, 7
    %v2532 = vsub.s32 6, %v2531
    %v2533 = vrot.slane %v2327, %v2532
    %v2534 = vmul.f32 %v2528, %v2533
    %v2535 = vmul.f32 %v2383, %v2513
    %v2536 = vadd.f32 %v2535, %v2534
    %2537 = vset.pattern.permute.xlu0 6
    %2538 = vperm.xlu0 %2537, %v2320
    %v2539 = vpop.permute.xlu0 %2538
    %v2541 = vmul.f32 %v2539, %v2536
    %v2542 = vsel %vm1196, %v2541, 0.0
    %v2543 = vrot.slane %v2542, 4
    %v2544 = vadd.f32 %v2542, %v2543
    %v2545 = vrot.slane %v2544, 2
    %v2546 = vadd.f32 %v2544, %v2545
    %v2547 = vrot.slane %v2546, 1
    %v2548 = vadd.f32 %v2546, %v2547
    %2549 = vset.pattern.permute.xlu0 7
    %2550 = vperm.xlu0 %2549, %v2314
    %v2551 = vpop.permute.xlu0 %2550
    %v2553 = vlaneseq
    %v2554 = vshrl.u32 %v2553, 7
    %v2555 = vsub.s32 7, %v2554
    %v2556 = vrot.slane %v2327, %v2555
    %v2557 = vmul.f32 %v2551, %v2556
    %v2558 = vmul.f32 %v2385, %v2536
    %v2559 = vadd.f32 %v2558, %v2557
    %2560 = vset.pattern.permute.xlu0 7
    %2561 = vperm.xlu0 %2560, %v2320
    %v2562 = vpop.permute.xlu0 %2561
    %v2564 = vmul.f32 %v2562, %v2559
    %v2565 = vsel %vm1196, %v2564, 0.0
    %v2566 = vrot.slane %v2565, 4
    %v2567 = vadd.f32 %v2565, %v2566
    %v2568 = vrot.slane %v2567, 2
    %v2569 = vadd.f32 %v2567, %v2568
    %v2570 = vrot.slane %v2569, 1
    %v2571 = vadd.f32 %v2569, %v2570
    %v2572 = vlaneseq
    %v2573 = vshrl.u32 %v2572, 7
    %v2574 = vsub.s32 0, %v2573
    %v2575 = vrot.slane %v1812, %v2574
    %v2576 = vmul.f32 %v2575, %v2326
    %v2577 = vlaneseq
    %v2578 = vshrl.u32 %v2577, 7
    %v2579 = vsub.s32 1, %v2578
    %v2580 = vrot.slane %v1812, %v2579
    %v2581 = vmul.f32 %v2580, %v2326
    %v2582 = vlaneseq
    %v2583 = vshrl.u32 %v2582, 7
    %v2584 = vsub.s32 2, %v2583
    %v2585 = vrot.slane %v1812, %v2584
    %v2586 = vmul.f32 %v2585, %v2326
    %v2587 = vlaneseq
    %v2588 = vshrl.u32 %v2587, 7
    %v2589 = vsub.s32 3, %v2588
    %v2590 = vrot.slane %v1812, %v2589
    %v2591 = vmul.f32 %v2590, %v2326
    %v2592 = vlaneseq
    %v2593 = vshrl.u32 %v2592, 7
    %v2594 = vsub.s32 4, %v2593
    %v2595 = vrot.slane %v1812, %v2594
    %v2596 = vmul.f32 %v2595, %v2326
    %v2597 = vlaneseq
    %v2598 = vshrl.u32 %v2597, 7
    %v2599 = vsub.s32 5, %v2598
    %v2600 = vrot.slane %v1812, %v2599
    %v2601 = vmul.f32 %v2600, %v2326
    %v2602 = vlaneseq
    %v2603 = vshrl.u32 %v2602, 7
    %v2604 = vsub.s32 6, %v2603
    %v2605 = vrot.slane %v1812, %v2604
    %v2606 = vmul.f32 %v2605, %v2326
    %v2607 = vlaneseq
    %v2608 = vshrl.u32 %v2607, 7
    %v2609 = vsub.s32 7, %v2608
    %v2610 = vrot.slane %v1812, %v2609
    %v2611 = vmul.f32 %v2610, %v2326
    %v2612 = vmul.f32 %v2576, 1.442695
    %v2613 = vpow.pop %v2612
    %v2614 = vmul.f32 %v2581, 1.442695
    %v2615 = vpow.pop %v2614
    %v2616 = vmul.f32 %v2586, 1.442695
    %v2617 = vpow.pop %v2616
    %v2618 = vmul.f32 %v2591, 1.442695
    %v2619 = vpow.pop %v2618
    %v2620 = vmul.f32 %v2596, 1.442695
    %v2621 = vpow.pop %v2620
    %v2622 = vmul.f32 %v2601, 1.442695
    %v2623 = vpow.pop %v2622
    %v2624 = vmul.f32 %v2606, 1.442695
    %v2625 = vpow.pop %v2624
    %v2626 = vmul.f32 %v2611, 1.442695
    %v2627 = vpow.pop %v2626
    %2628 = vset.pattern.permute.xlu0 8
    %2629 = vperm.xlu0 %2628, %v2314
    %v2630 = vpop.permute.xlu0 %2629
    %v2632 = vlaneseq
    %v2633 = vshrl.u32 %v2632, 7
    %v2634 = vsub.s32 0, %v2633
    %v2635 = vrot.slane %v2328, %v2634
    %v2636 = vmul.f32 %v2630, %v2635
    %v2637 = vmul.f32 %v2613, 0.0
    %v2638 = vadd.f32 %v2637, %v2636
    %2639 = vset.pattern.permute.xlu0 8
    %2640 = vperm.xlu0 %2639, %v2320
    %v2641 = vpop.permute.xlu0 %2640
    %v2643 = vmul.f32 %v2641, %v2638
    %v2644 = vsel %vm1196, %v2643, 0.0
    %v2645 = vrot.slane %v2644, 4
    %v2646 = vadd.f32 %v2644, %v2645
    %v2647 = vrot.slane %v2646, 2
    %v2648 = vadd.f32 %v2646, %v2647
    %v2649 = vrot.slane %v2648, 1
    %v2650 = vadd.f32 %v2648, %v2649
    %2651 = vset.pattern.permute.xlu0 9
    %2652 = vperm.xlu0 %2651, %v2314
    %v2653 = vpop.permute.xlu0 %2652
    %v2655 = vlaneseq
    %v2656 = vshrl.u32 %v2655, 7
    %v2657 = vsub.s32 1, %v2656
    %v2658 = vrot.slane %v2328, %v2657
    %v2659 = vmul.f32 %v2653, %v2658
    %v2660 = vmul.f32 %v2615, %v2638
    %v2661 = vadd.f32 %v2660, %v2659
    %2662 = vset.pattern.permute.xlu0 9
    %2663 = vperm.xlu0 %2662, %v2320
    %v2664 = vpop.permute.xlu0 %2663
    %v2666 = vmul.f32 %v2664, %v2661
    %v2667 = vsel %vm1196, %v2666, 0.0
    %v2668 = vrot.slane %v2667, 4
    %v2669 = vadd.f32 %v2667, %v2668
    %v2670 = vrot.slane %v2669, 2
    %v2671 = vadd.f32 %v2669, %v2670
    %v2672 = vrot.slane %v2671, 1
    %v2673 = vadd.f32 %v2671, %v2672
    %2674 = vset.pattern.permute.xlu0 10
    %2675 = vperm.xlu0 %2674, %v2314
    %v2676 = vpop.permute.xlu0 %2675
    %v2678 = vlaneseq
    %v2679 = vshrl.u32 %v2678, 7
    %v2680 = vsub.s32 2, %v2679
    %v2681 = vrot.slane %v2328, %v2680
    %v2682 = vmul.f32 %v2676, %v2681
    %v2683 = vmul.f32 %v2617, %v2661
    %v2684 = vadd.f32 %v2683, %v2682
    %2685 = vset.pattern.permute.xlu0 10
    %2686 = vperm.xlu0 %2685, %v2320
    %v2687 = vpop.permute.xlu0 %2686
    %v2689 = vmul.f32 %v2687, %v2684
    %v2690 = vsel %vm1196, %v2689, 0.0
    %v2691 = vrot.slane %v2690, 4
    %v2692 = vadd.f32 %v2690, %v2691
    %v2693 = vrot.slane %v2692, 2
    %v2694 = vadd.f32 %v2692, %v2693
    %v2695 = vrot.slane %v2694, 1
    %v2696 = vadd.f32 %v2694, %v2695
    %2697 = vset.pattern.permute.xlu0 11
    %2698 = vperm.xlu0 %2697, %v2314
    %v2699 = vpop.permute.xlu0 %2698
    %v2701 = vlaneseq
    %v2702 = vshrl.u32 %v2701, 7
    %v2703 = vsub.s32 3, %v2702
    %v2704 = vrot.slane %v2328, %v2703
    %v2705 = vmul.f32 %v2699, %v2704
    %v2706 = vmul.f32 %v2619, %v2684
    %v2707 = vadd.f32 %v2706, %v2705
    %2708 = vset.pattern.permute.xlu0 11
    %2709 = vperm.xlu0 %2708, %v2320
    %v2710 = vpop.permute.xlu0 %2709
    %v2712 = vmul.f32 %v2710, %v2707
    %v2713 = vsel %vm1196, %v2712, 0.0
    %v2714 = vrot.slane %v2713, 4
    %v2715 = vadd.f32 %v2713, %v2714
    %v2716 = vrot.slane %v2715, 2
    %v2717 = vadd.f32 %v2715, %v2716
    %v2718 = vrot.slane %v2717, 1
    %v2719 = vadd.f32 %v2717, %v2718
    %2720 = vset.pattern.permute.xlu0 12
    %2721 = vperm.xlu0 %2720, %v2314
    %v2722 = vpop.permute.xlu0 %2721
    %v2724 = vlaneseq
    %v2725 = vshrl.u32 %v2724, 7
    %v2726 = vsub.s32 4, %v2725
    %v2727 = vrot.slane %v2328, %v2726
    %v2728 = vmul.f32 %v2722, %v2727
    %v2729 = vmul.f32 %v2621, %v2707
    %v2730 = vadd.f32 %v2729, %v2728
    %2731 = vset.pattern.permute.xlu0 12
    %2732 = vperm.xlu0 %2731, %v2320
    %v2733 = vpop.permute.xlu0 %2732
    %v2735 = vmul.f32 %v2733, %v2730
    %v2736 = vsel %vm1196, %v2735, 0.0
    %v2737 = vrot.slane %v2736, 4
    %v2738 = vadd.f32 %v2736, %v2737
    %v2739 = vrot.slane %v2738, 2
    %v2740 = vadd.f32 %v2738, %v2739
    %v2741 = vrot.slane %v2740, 1
    %v2742 = vadd.f32 %v2740, %v2741
    %2743 = vset.pattern.permute.xlu0 13
    %2744 = vperm.xlu0 %2743, %v2314
    %v2745 = vpop.permute.xlu0 %2744
    %v2747 = vlaneseq
    %v2748 = vshrl.u32 %v2747, 7
    %v2749 = vsub.s32 5, %v2748
    %v2750 = vrot.slane %v2328, %v2749
    %v2751 = vmul.f32 %v2745, %v2750
    %v2752 = vmul.f32 %v2623, %v2730
    %v2753 = vadd.f32 %v2752, %v2751
    %2754 = vset.pattern.permute.xlu0 13
    %2755 = vperm.xlu0 %2754, %v2320
    %v2756 = vpop.permute.xlu0 %2755
    %v2758 = vmul.f32 %v2756, %v2753
    %v2759 = vsel %vm1196, %v2758, 0.0
    %v2760 = vrot.slane %v2759, 4
    %v2761 = vadd.f32 %v2759, %v2760
    %v2762 = vrot.slane %v2761, 2
    %v2763 = vadd.f32 %v2761, %v2762
    %v2764 = vrot.slane %v2763, 1
    %v2765 = vadd.f32 %v2763, %v2764
    %2766 = vset.pattern.permute.xlu0 14
    %2767 = vperm.xlu0 %2766, %v2314
    %v2768 = vpop.permute.xlu0 %2767
    %v2770 = vlaneseq
    %v2771 = vshrl.u32 %v2770, 7
    %v2772 = vsub.s32 6, %v2771
    %v2773 = vrot.slane %v2328, %v2772
    %v2774 = vmul.f32 %v2768, %v2773
    %v2775 = vmul.f32 %v2625, %v2753
    %v2776 = vadd.f32 %v2775, %v2774
    %2777 = vset.pattern.permute.xlu0 14
    %2778 = vperm.xlu0 %2777, %v2320
    %v2779 = vpop.permute.xlu0 %2778
    %v2781 = vmul.f32 %v2779, %v2776
    %v2782 = vsel %vm1196, %v2781, 0.0
    %v2783 = vrot.slane %v2782, 4
    %v2784 = vadd.f32 %v2782, %v2783
    %v2785 = vrot.slane %v2784, 2
    %v2786 = vadd.f32 %v2784, %v2785
    %v2787 = vrot.slane %v2786, 1
    %v2788 = vadd.f32 %v2786, %v2787
    %2789 = vset.pattern.permute.xlu0 15
    %2790 = vperm.xlu0 %2789, %v2314
    %v2791 = vpop.permute.xlu0 %2790
    %v2793 = vlaneseq
    %v2794 = vshrl.u32 %v2793, 7
    %v2795 = vsub.s32 7, %v2794
    %v2796 = vrot.slane %v2328, %v2795
    %v2797 = vmul.f32 %v2791, %v2796
    %v2798 = vmul.f32 %v2627, %v2776
    %v2799 = vadd.f32 %v2798, %v2797
    %2800 = vset.pattern.permute.xlu0 15
    %2801 = vperm.xlu0 %2800, %v2320
    %v2802 = vpop.permute.xlu0 %2801
    %v2804 = vmul.f32 %v2802, %v2799
    %v2805 = vsel %vm1196, %v2804, 0.0
    %v2806 = vrot.slane %v2805, 4
    %v2807 = vadd.f32 %v2805, %v2806
    %v2808 = vrot.slane %v2807, 2
    %v2809 = vadd.f32 %v2807, %v2808
    %v2810 = vrot.slane %v2809, 1
    %v2811 = vadd.f32 %v2809, %v2810
    %v2812 = vlaneseq
    %v2813 = vshrl.u32 %v2812, 7
    %v2814 = vsub.s32 0, %v2813
    %v2815 = vrot.slane %v2329, %v2814
    %v2816 = vmul.f32 %v2815, %v1181
    %v2817 = vmul.f32 %v2815, %v1182
    %v2818 = vsel %vm1139, %v2410, %v2433
    %v2819 = vsel %vm1116, %v2818, %v2456
    %vm2820 = vcmask 1042432
    %v2821 = vsel %vm2820, %v2819, %v2479
    %vm2822 = vcmask 1043456
    %v2823 = vsel %vm2822, %v2821, %v2502
    %vm2824 = vcmask 1044480
    %v2825 = vsel %vm2824, %v2823, %v2525
    %vm2826 = vcmask 1045504
    %v2827 = vsel %vm2826, %v2825, %v2548
    %vm2828 = vcmask 1046528
    %v2829 = vsel %vm2828, %v2827, %v2571
    %v2830 = vsel %vm1139, %v2650, %v2673
    %v2831 = vsel %vm1116, %v2830, %v2696
    %v2832 = vsel %vm2820, %v2831, %v2719
    %v2833 = vsel %vm2822, %v2832, %v2742
    %v2834 = vsel %vm2824, %v2833, %v2765
    %v2835 = vsel %vm2826, %v2834, %v2788
    %v2836 = vsel %vm2828, %v2835, %v2811
    %v2837 = vadd.f32 %v2816, %v2829
    %v2838 = vadd.f32 %v2817, %v2836
    %v2839 = vsub.f32 0.0, %v1098
    %v2840 = vsub.f32 0.0, %v1104
    %v2841 = vmul.f32 %v2839, 1.442695
    %v2842 = vpow.pop %v2841
    %v2843 = vmul.f32 %v2840, 1.442695
    %v2844 = vpow.pop %v2843
    %v2845 = vadd.f32 %v2842, 1.0
    %v2846 = vadd.f32 %v2844, 1.0
    %v2847 = vrcp.pop %v2845
    %v2848 = vmul.f32 1.0, %v2847
    %v2849 = vrcp.pop %v2846
    %v2850 = vmul.f32 1.0, %v2849
    %v2851 = vmul.f32 %v1098, %v2848
    %v2852 = vmul.f32 %v1104, %v2850
    %2855 = vrot.lane.b32.xlu0 %v2851, 64
    %v2856 = vpop.permute.xlu0 %2855
    %2857 = vrot.lane.b32.xlu0 %v2852, 64
    %v2858 = vpop.permute.xlu0 %2857
    %v2861 = vmul.f32 %v2837, %v2856
    %v2862 = vmul.f32 %v2838, %v2858
    %v2863 = vld [vmem:[%s1 + $0x60] sm:$0xff]
    %v2864 = vld [vmem:[%s1 + $0x68] sm:$0xff]
    %v2865 = vld [vmem:[%s1 + $0x70] sm:$0xff]
    %v2866 = vld [vmem:[%s1 + $0x78] sm:$0xff]
    %v2867 = vld [vmem:[%s1 + $0x80] sm:$0xff]
    %v2868 = vld [vmem:[%s1 + $0x88] sm:$0xff]
    %v2869 = vld [vmem:[%s1 + $0x90] sm:$0xff]
    %v2870 = vld [vmem:[%s1 + $0x98] sm:$0xff]
    %v2871 = vld [vmem:[%s2 + $0x7] sm:$0x1]
    %v2872 = vlaneseq
    %v2873 = vshrl.u32 %v2872, 7
    %v2874 = vsub.s32 0, %v2873
    %v2875 = vrot.slane %v2871, %v2874
    %v2877 = vsel %vm1196, %v2861, 0
    %v2880 = vsel %vm1196, %v2862, 0
    %2882 = vmatprep.subr.mxu0 0.0
    %2883 = vmatpush1.msra.mxu0 0.0
    %2884 = vmatprep.subr.mxu0 0.0
    %2885 = vmatpush1.msra.mxu0 0.0
    %2886 = vmatprep.subr.mxu0 0.0
    %2887 = vmatpush1.msra.mxu0 0.0
    %2888 = vmatprep.subr.mxu0 0.0
    %2889 = vmatpush1.msra.mxu0 0.0
    %2890 = vmatprep.subr.mxu0 0.0
    %2891 = vmatpush1.msra.mxu0 0.0
    %2892 = vmatprep.subr.mxu0 0.0
    %2893 = vmatpush1.msra.mxu0 0.0
    %2894 = vmatprep.subr.mxu0 0.0
    %2895 = vmatpush1.msra.mxu0 0.0
    %2896 = vmatprep.subr.mxu0 0.0
    %2897 = vmatpush1.msra.mxu0 0.0
    %2898 = vmatprep.subr.mxu0 0.0
    %v2899 = vand.u32 %v2870, 4294901760
    %2900 = vmatpush1.msra.mxu0 %v2899
    %2901 = vmatprep.subr.mxu0 0.0
    %v2902 = vand.u32 %v2869, 4294901760
    %2903 = vmatpush1.msra.mxu0 %v2902
    %2904 = vmatprep.subr.mxu0 0.0
    %v2905 = vand.u32 %v2868, 4294901760
    %2906 = vmatpush1.msra.mxu0 %v2905
    %2907 = vmatprep.subr.mxu0 0.0
    %v2908 = vand.u32 %v2867, 4294901760
    %2909 = vmatpush1.msra.mxu0 %v2908
    %2910 = vmatprep.subr.mxu0 0.0
    %v2911 = vand.u32 %v2866, 4294901760
    %2912 = vmatpush1.msra.mxu0 %v2911
    %2913 = vmatprep.subr.mxu0 0.0
    %v2914 = vand.u32 %v2865, 4294901760
    %2915 = vmatpush1.msra.mxu0 %v2914
    %2916 = vmatprep.subr.mxu0 0.0
    %v2917 = vand.u32 %v2864, 4294901760
    %2918 = vmatpush1.msra.mxu0 %v2917
    %2919 = vmatprep.subr.mxu0 0.0
    %v2920 = vand.u32 %v2863, 4294901760
    %2921 = vmatpush1.msra.mxu0 %v2920
    %2922 = vmatprep.subr.mxu0 0.0
    %2923 = vmatpush2.msra.mxu0 0.0
    %2924 = vmatprep.subr.mxu0 0.0
    %2925 = vmatpush2.msra.mxu0 0.0
    %2926 = vmatprep.subr.mxu0 0.0
    %2927 = vmatpush2.msra.mxu0 0.0
    %2928 = vmatprep.subr.mxu0 0.0
    %2929 = vmatpush2.msra.mxu0 0.0
    %2930 = vmatprep.subr.mxu0 0.0
    %2931 = vmatpush2.msra.mxu0 0.0
    %2932 = vmatprep.subr.mxu0 0.0
    %2933 = vmatpush2.msra.mxu0 0.0
    %2934 = vmatprep.subr.mxu0 0.0
    %2935 = vmatpush2.msra.mxu0 0.0
    %2936 = vmatprep.subr.mxu0 0.0
    %2937 = vmatpush2.msra.mxu0 0.0
    %2938 = vmatprep.subr.mxu0 0.0
    %2939 = vmatpush2.msra.mxu0 0.0
    %2940 = vmatprep.subr.mxu0 0.0
    %2941 = vmatpush2.msra.mxu0 0.0
    %2942 = vmatprep.subr.mxu0 0.0
    %2943 = vmatpush2.msra.mxu0 0.0
    %2944 = vmatprep.subr.mxu0 0.0
    %2945 = vmatpush2.msra.mxu0 0.0
    %2946 = vmatprep.subr.mxu0 0.0
    %2947 = vmatpush2.msra.mxu0 0.0
    %2948 = vmatprep.subr.mxu0 0.0
    %2949 = vmatpush2.msra.mxu0 0.0
    %2950 = vmatprep.subr.mxu0 0.0
    %2951 = vmatpush2.msra.mxu0 0.0
    %2952 = vmatprep.subr.mxu0 0.0
    %2953 = vmatpush2.msra.mxu0 0.0
    %2954 = vmatprep.mubr.f32.mxu0 0.0
    %v2955 = vand.u32 %v2877, 4294901760
    %v2956 = vsub.f32 %v2877, %v2955
    %v2957 = vand.u32 %v2956, 4294901760
    %v2958 = vsub.f32 %v2956, %v2957
    %v2959 = vand.u32 %v2958, 4294901760
    %2960 = vmatmul.mubr.f32.gmra.mxu0 %v2959
    %v2961 = vpop.f32.mrf.mxu0
    %v2962 = vadd.f32 %v2875, %v2961
    %v2963 = vpop.f32.mrf.mxu0
    %2964 = vmatprep.mubr.f32.mxu0 0.0
    %v2965 = vand.u32 %v2880, 4294901760
    %v2966 = vsub.f32 %v2880, %v2965
    %v2967 = vand.u32 %v2966, 4294901760
    %v2968 = vsub.f32 %v2966, %v2967
    %v2969 = vand.u32 %v2968, 4294901760
    %2970 = vmatmul.mubr.f32.gmra.mxu0 %v2969
    %v2971 = vpop.f32.mrf.mxu0
    %v2972 = vadd.f32 %v2875, %v2971
    %v2973 = vpop.f32.mrf.mxu0
    %2974 = vdwg.mxu0
    %2975 = vmatprep.subr.mxu0 0.0
    %2976 = vmatpush1.msra.mxu0 0.0
    %2977 = vmatprep.subr.mxu0 0.0
    %2978 = vmatpush1.msra.mxu0 0.0
    %2979 = vmatprep.subr.mxu0 0.0
    %2980 = vmatpush1.msra.mxu0 0.0
    %2981 = vmatprep.subr.mxu0 0.0
    %2982 = vmatpush1.msra.mxu0 0.0
    %2983 = vmatprep.subr.mxu0 0.0
    %2984 = vmatpush1.msra.mxu0 0.0
    %2985 = vmatprep.subr.mxu0 0.0
    %2986 = vmatpush1.msra.mxu0 0.0
    %2987 = vmatprep.subr.mxu0 0.0
    %2988 = vmatpush1.msra.mxu0 0.0
    %2989 = vmatprep.subr.mxu0 0.0
    %2990 = vmatpush1.msra.mxu0 0.0
    %2991 = vmatprep.subr.mxu0 0.0
    %v2992 = vand.u32 %v2870, 4294901760
    %v2993 = vsub.f32 %v2870, %v2992
    %v2994 = vand.u32 %v2993, 4294901760
    %v2995 = vsub.f32 %v2993, %v2994
    %v2996 = vand.u32 %v2995, 4294901760
    %2997 = vmatpush1.msra.mxu0 %v2996
    %2998 = vmatprep.subr.mxu0 0.0
    %v2999 = vand.u32 %v2869, 4294901760
    %v3000 = vsub.f32 %v2869, %v2999
    %v3001 = vand.u32 %v3000, 4294901760
    %v3002 = vsub.f32 %v3000, %v3001
    %v3003 = vand.u32 %v3002, 4294901760
    %3004 = vmatpush1.msra.mxu0 %v3003
    %3005 = vmatprep.subr.mxu0 0.0
    %v3006 = vand.u32 %v2868, 4294901760
    %v3007 = vsub.f32 %v2868, %v3006
    %v3008 = vand.u32 %v3007, 4294901760
    %v3009 = vsub.f32 %v3007, %v3008
    %v3010 = vand.u32 %v3009, 4294901760
    %3011 = vmatpush1.msra.mxu0 %v3010
    %3012 = vmatprep.subr.mxu0 0.0
    %v3013 = vand.u32 %v2867, 4294901760
    %v3014 = vsub.f32 %v2867, %v3013
    %v3015 = vand.u32 %v3014, 4294901760
    %v3016 = vsub.f32 %v3014, %v3015
    %v3017 = vand.u32 %v3016, 4294901760
    %3018 = vmatpush1.msra.mxu0 %v3017
    %3019 = vmatprep.subr.mxu0 0.0
    %v3020 = vand.u32 %v2866, 4294901760
    %v3021 = vsub.f32 %v2866, %v3020
    %v3022 = vand.u32 %v3021, 4294901760
    %v3023 = vsub.f32 %v3021, %v3022
    %v3024 = vand.u32 %v3023, 4294901760
    %3025 = vmatpush1.msra.mxu0 %v3024
    %3026 = vmatprep.subr.mxu0 0.0
    %v3027 = vand.u32 %v2865, 4294901760
    %v3028 = vsub.f32 %v2865, %v3027
    %v3029 = vand.u32 %v3028, 4294901760
    %v3030 = vsub.f32 %v3028, %v3029
    %v3031 = vand.u32 %v3030, 4294901760
    %3032 = vmatpush1.msra.mxu0 %v3031
    %3033 = vmatprep.subr.mxu0 0.0
    %v3034 = vand.u32 %v2864, 4294901760
    %v3035 = vsub.f32 %v2864, %v3034
    %v3036 = vand.u32 %v3035, 4294901760
    %v3037 = vsub.f32 %v3035, %v3036
    %v3038 = vand.u32 %v3037, 4294901760
    %3039 = vmatpush1.msra.mxu0 %v3038
    %3040 = vmatprep.subr.mxu0 0.0
    %v3041 = vand.u32 %v2863, 4294901760
    %v3042 = vsub.f32 %v2863, %v3041
    %v3043 = vand.u32 %v3042, 4294901760
    %v3044 = vsub.f32 %v3042, %v3043
    %v3045 = vand.u32 %v3044, 4294901760
    %3046 = vmatpush1.msra.mxu0 %v3045
    %3047 = vmatprep.subr.mxu0 0.0
    %3048 = vmatpush2.msra.mxu0 0.0
    %3049 = vmatprep.subr.mxu0 0.0
    %3050 = vmatpush2.msra.mxu0 0.0
    %3051 = vmatprep.subr.mxu0 0.0
    %3052 = vmatpush2.msra.mxu0 0.0
    %3053 = vmatprep.subr.mxu0 0.0
    %3054 = vmatpush2.msra.mxu0 0.0
    %3055 = vmatprep.subr.mxu0 0.0
    %3056 = vmatpush2.msra.mxu0 0.0
    %3057 = vmatprep.subr.mxu0 0.0
    %3058 = vmatpush2.msra.mxu0 0.0
    %3059 = vmatprep.subr.mxu0 0.0
    %3060 = vmatpush2.msra.mxu0 0.0
    %3061 = vmatprep.subr.mxu0 0.0
    %3062 = vmatpush2.msra.mxu0 0.0
    %3063 = vmatprep.subr.mxu0 0.0
    %3064 = vmatpush2.msra.mxu0 0.0
    %3065 = vmatprep.subr.mxu0 0.0
    %3066 = vmatpush2.msra.mxu0 0.0
    %3067 = vmatprep.subr.mxu0 0.0
    %3068 = vmatpush2.msra.mxu0 0.0
    %3069 = vmatprep.subr.mxu0 0.0
    %3070 = vmatpush2.msra.mxu0 0.0
    %3071 = vmatprep.subr.mxu0 0.0
    %3072 = vmatpush2.msra.mxu0 0.0
    %3073 = vmatprep.subr.mxu0 0.0
    %3074 = vmatpush2.msra.mxu0 0.0
    %3075 = vmatprep.subr.mxu0 0.0
    %3076 = vmatpush2.msra.mxu0 0.0
    %3077 = vmatprep.subr.mxu0 0.0
    %3078 = vmatpush2.msra.mxu0 0.0
    %3079 = vmatprep.mubr.f32.mxu0 0.0
    %v3080 = vand.u32 %v2877, 4294901760
    %3081 = vmatmul.mubr.f32.gmra.mxu0 %v3080
    %v3082 = vpop.f32.mrf.mxu0
    %v3083 = vadd.f32 %v2962, %v3082
    %v3084 = vpop.f32.mrf.mxu0
    %3085 = vmatprep.mubr.f32.mxu0 0.0
    %v3086 = vand.u32 %v2880, 4294901760
    %3087 = vmatmul.mubr.f32.gmra.mxu0 %v3086
    %v3088 = vpop.f32.mrf.mxu0
    %v3089 = vadd.f32 %v2972, %v3088
    %v3090 = vpop.f32.mrf.mxu0
    %3091 = vdwg.mxu0
    %3092 = vmatprep.subr.mxu0 0.0
    %3093 = vmatpush1.msra.mxu0 0.0
    %3094 = vmatprep.subr.mxu0 0.0
    %3095 = vmatpush1.msra.mxu0 0.0
    %3096 = vmatprep.subr.mxu0 0.0
    %3097 = vmatpush1.msra.mxu0 0.0
    %3098 = vmatprep.subr.mxu0 0.0
    %3099 = vmatpush1.msra.mxu0 0.0
    %3100 = vmatprep.subr.mxu0 0.0
    %3101 = vmatpush1.msra.mxu0 0.0
    %3102 = vmatprep.subr.mxu0 0.0
    %3103 = vmatpush1.msra.mxu0 0.0
    %3104 = vmatprep.subr.mxu0 0.0
    %3105 = vmatpush1.msra.mxu0 0.0
    %3106 = vmatprep.subr.mxu0 0.0
    %3107 = vmatpush1.msra.mxu0 0.0
    %3108 = vmatprep.subr.mxu0 0.0
    %v3109 = vand.u32 %v2870, 4294901760
    %v3110 = vsub.f32 %v2870, %v3109
    %3111 = vmatpush1.msra.mxu0 %v3110
    %3112 = vmatprep.subr.mxu0 0.0
    %v3113 = vand.u32 %v2869, 4294901760
    %v3114 = vsub.f32 %v2869, %v3113
    %3115 = vmatpush1.msra.mxu0 %v3114
    %3116 = vmatprep.subr.mxu0 0.0
    %v3117 = vand.u32 %v2868, 4294901760
    %v3118 = vsub.f32 %v2868, %v3117
    %3119 = vmatpush1.msra.mxu0 %v3118
    %3120 = vmatprep.subr.mxu0 0.0
    %v3121 = vand.u32 %v2867, 4294901760
    %v3122 = vsub.f32 %v2867, %v3121
    %3123 = vmatpush1.msra.mxu0 %v3122
    %3124 = vmatprep.subr.mxu0 0.0
    %v3125 = vand.u32 %v2866, 4294901760
    %v3126 = vsub.f32 %v2866, %v3125
    %3127 = vmatpush1.msra.mxu0 %v3126
    %3128 = vmatprep.subr.mxu0 0.0
    %v3129 = vand.u32 %v2865, 4294901760
    %v3130 = vsub.f32 %v2865, %v3129
    %3131 = vmatpush1.msra.mxu0 %v3130
    %3132 = vmatprep.subr.mxu0 0.0
    %v3133 = vand.u32 %v2864, 4294901760
    %v3134 = vsub.f32 %v2864, %v3133
    %3135 = vmatpush1.msra.mxu0 %v3134
    %3136 = vmatprep.subr.mxu0 0.0
    %v3137 = vand.u32 %v2863, 4294901760
    %v3138 = vsub.f32 %v2863, %v3137
    %3139 = vmatpush1.msra.mxu0 %v3138
    %3140 = vmatprep.subr.mxu0 0.0
    %3141 = vmatpush2.msra.mxu0 0.0
    %3142 = vmatprep.subr.mxu0 0.0
    %3143 = vmatpush2.msra.mxu0 0.0
    %3144 = vmatprep.subr.mxu0 0.0
    %3145 = vmatpush2.msra.mxu0 0.0
    %3146 = vmatprep.subr.mxu0 0.0
    %3147 = vmatpush2.msra.mxu0 0.0
    %3148 = vmatprep.subr.mxu0 0.0
    %3149 = vmatpush2.msra.mxu0 0.0
    %3150 = vmatprep.subr.mxu0 0.0
    %3151 = vmatpush2.msra.mxu0 0.0
    %3152 = vmatprep.subr.mxu0 0.0
    %3153 = vmatpush2.msra.mxu0 0.0
    %3154 = vmatprep.subr.mxu0 0.0
    %3155 = vmatpush2.msra.mxu0 0.0
    %3156 = vmatprep.subr.mxu0 0.0
    %3157 = vmatpush2.msra.mxu0 0.0
    %3158 = vmatprep.subr.mxu0 0.0
    %3159 = vmatpush2.msra.mxu0 0.0
    %3160 = vmatprep.subr.mxu0 0.0
    %3161 = vmatpush2.msra.mxu0 0.0
    %3162 = vmatprep.subr.mxu0 0.0
    %3163 = vmatpush2.msra.mxu0 0.0
    %3164 = vmatprep.subr.mxu0 0.0
    %3165 = vmatpush2.msra.mxu0 0.0
    %3166 = vmatprep.subr.mxu0 0.0
    %3167 = vmatpush2.msra.mxu0 0.0
    %3168 = vmatprep.subr.mxu0 0.0
    %3169 = vmatpush2.msra.mxu0 0.0
    %3170 = vmatprep.subr.mxu0 0.0
    %3171 = vmatpush2.msra.mxu0 0.0
    %3172 = vmatprep.mubr.f32.mxu0 0.0
    %v3173 = vand.u32 %v2877, 4294901760
    %v3174 = vsub.f32 %v2877, %v3173
    %3175 = vmatmul.mubr.f32.gmra.mxu0 %v3174
    %v3176 = vpop.f32.mrf.mxu0
    %v3177 = vadd.f32 %v3083, %v3176
    %v3178 = vpop.f32.mrf.mxu0
    %3179 = vmatprep.mubr.f32.mxu0 0.0
    %v3180 = vand.u32 %v2880, 4294901760
    %v3181 = vsub.f32 %v2880, %v3180
    %3182 = vmatmul.mubr.f32.gmra.mxu0 %v3181
    %v3183 = vpop.f32.mrf.mxu0
    %v3184 = vadd.f32 %v3089, %v3183
    %v3185 = vpop.f32.mrf.mxu0
    %3186 = vdwg.mxu0
    %3187 = vmatprep.subr.mxu0 0.0
    %3188 = vmatpush1.msra.mxu0 0.0
    %3189 = vmatprep.subr.mxu0 0.0
    %3190 = vmatpush1.msra.mxu0 0.0
    %3191 = vmatprep.subr.mxu0 0.0
    %3192 = vmatpush1.msra.mxu0 0.0
    %3193 = vmatprep.subr.mxu0 0.0
    %3194 = vmatpush1.msra.mxu0 0.0
    %3195 = vmatprep.subr.mxu0 0.0
    %3196 = vmatpush1.msra.mxu0 0.0
    %3197 = vmatprep.subr.mxu0 0.0
    %3198 = vmatpush1.msra.mxu0 0.0
    %3199 = vmatprep.subr.mxu0 0.0
    %3200 = vmatpush1.msra.mxu0 0.0
    %3201 = vmatprep.subr.mxu0 0.0
    %3202 = vmatpush1.msra.mxu0 0.0
    %3203 = vmatprep.subr.mxu0 0.0
    %v3204 = vand.u32 %v2870, 4294901760
    %3205 = vmatpush1.msra.mxu0 %v3204
    %3206 = vmatprep.subr.mxu0 0.0
    %v3207 = vand.u32 %v2869, 4294901760
    %3208 = vmatpush1.msra.mxu0 %v3207
    %3209 = vmatprep.subr.mxu0 0.0
    %v3210 = vand.u32 %v2868, 4294901760
    %3211 = vmatpush1.msra.mxu0 %v3210
    %3212 = vmatprep.subr.mxu0 0.0
    %v3213 = vand.u32 %v2867, 4294901760
    %3214 = vmatpush1.msra.mxu0 %v3213
    %3215 = vmatprep.subr.mxu0 0.0
    %v3216 = vand.u32 %v2866, 4294901760
    %3217 = vmatpush1.msra.mxu0 %v3216
    %3218 = vmatprep.subr.mxu0 0.0
    %v3219 = vand.u32 %v2865, 4294901760
    %3220 = vmatpush1.msra.mxu0 %v3219
    %3221 = vmatprep.subr.mxu0 0.0
    %v3222 = vand.u32 %v2864, 4294901760
    %3223 = vmatpush1.msra.mxu0 %v3222
    %3224 = vmatprep.subr.mxu0 0.0
    %v3225 = vand.u32 %v2863, 4294901760
    %3226 = vmatpush1.msra.mxu0 %v3225
    %3227 = vmatprep.subr.mxu0 0.0
    %3228 = vmatpush2.msra.mxu0 0.0
    %3229 = vmatprep.subr.mxu0 0.0
    %3230 = vmatpush2.msra.mxu0 0.0
    %3231 = vmatprep.subr.mxu0 0.0
    %3232 = vmatpush2.msra.mxu0 0.0
    %3233 = vmatprep.subr.mxu0 0.0
    %3234 = vmatpush2.msra.mxu0 0.0
    %3235 = vmatprep.subr.mxu0 0.0
    %3236 = vmatpush2.msra.mxu0 0.0
    %3237 = vmatprep.subr.mxu0 0.0
    %3238 = vmatpush2.msra.mxu0 0.0
    %3239 = vmatprep.subr.mxu0 0.0
    %3240 = vmatpush2.msra.mxu0 0.0
    %3241 = vmatprep.subr.mxu0 0.0
    %3242 = vmatpush2.msra.mxu0 0.0
    %3243 = vmatprep.subr.mxu0 0.0
    %3244 = vmatpush2.msra.mxu0 0.0
    %3245 = vmatprep.subr.mxu0 0.0
    %3246 = vmatpush2.msra.mxu0 0.0
    %3247 = vmatprep.subr.mxu0 0.0
    %3248 = vmatpush2.msra.mxu0 0.0
    %3249 = vmatprep.subr.mxu0 0.0
    %3250 = vmatpush2.msra.mxu0 0.0
    %3251 = vmatprep.subr.mxu0 0.0
    %3252 = vmatpush2.msra.mxu0 0.0
    %3253 = vmatprep.subr.mxu0 0.0
    %3254 = vmatpush2.msra.mxu0 0.0
    %3255 = vmatprep.subr.mxu0 0.0
    %3256 = vmatpush2.msra.mxu0 0.0
    %3257 = vmatprep.subr.mxu0 0.0
    %3258 = vmatpush2.msra.mxu0 0.0
    %3259 = vmatprep.mubr.f32.mxu0 0.0
    %v3260 = vand.u32 %v2877, 4294901760
    %v3261 = vsub.f32 %v2877, %v3260
    %v3262 = vand.u32 %v3261, 4294901760
    %3263 = vmatmul.mubr.f32.gmra.mxu0 %v3262
    %v3264 = vpop.f32.mrf.mxu0
    %v3265 = vadd.f32 %v3177, %v3264
    %v3266 = vpop.f32.mrf.mxu0
    %3267 = vmatprep.mubr.f32.mxu0 0.0
    %v3268 = vand.u32 %v2880, 4294901760
    %v3269 = vsub.f32 %v2880, %v3268
    %v3270 = vand.u32 %v3269, 4294901760
    %3271 = vmatmul.mubr.f32.gmra.mxu0 %v3270
    %v3272 = vpop.f32.mrf.mxu0
    %v3273 = vadd.f32 %v3184, %v3272
    %v3274 = vpop.f32.mrf.mxu0
    %3275 = vdwg.mxu0
    %3276 = vmatprep.subr.mxu0 0.0
    %3277 = vmatpush1.msra.mxu0 0.0
    %3278 = vmatprep.subr.mxu0 0.0
    %3279 = vmatpush1.msra.mxu0 0.0
    %3280 = vmatprep.subr.mxu0 0.0
    %3281 = vmatpush1.msra.mxu0 0.0
    %3282 = vmatprep.subr.mxu0 0.0
    %3283 = vmatpush1.msra.mxu0 0.0
    %3284 = vmatprep.subr.mxu0 0.0
    %3285 = vmatpush1.msra.mxu0 0.0
    %3286 = vmatprep.subr.mxu0 0.0
    %3287 = vmatpush1.msra.mxu0 0.0
    %3288 = vmatprep.subr.mxu0 0.0
    %3289 = vmatpush1.msra.mxu0 0.0
    %3290 = vmatprep.subr.mxu0 0.0
    %3291 = vmatpush1.msra.mxu0 0.0
    %3292 = vmatprep.subr.mxu0 0.0
    %v3293 = vand.u32 %v2870, 4294901760
    %v3294 = vsub.f32 %v2870, %v3293
    %v3295 = vand.u32 %v3294, 4294901760
    %3296 = vmatpush1.msra.mxu0 %v3295
    %3297 = vmatprep.subr.mxu0 0.0
    %v3298 = vand.u32 %v2869, 4294901760
    %v3299 = vsub.f32 %v2869, %v3298
    %v3300 = vand.u32 %v3299, 4294901760
    %3301 = vmatpush1.msra.mxu0 %v3300
    %3302 = vmatprep.subr.mxu0 0.0
    %v3303 = vand.u32 %v2868, 4294901760
    %v3304 = vsub.f32 %v2868, %v3303
    %v3305 = vand.u32 %v3304, 4294901760
    %3306 = vmatpush1.msra.mxu0 %v3305
    %3307 = vmatprep.subr.mxu0 0.0
    %v3308 = vand.u32 %v2867, 4294901760
    %v3309 = vsub.f32 %v2867, %v3308
    %v3310 = vand.u32 %v3309, 4294901760
    %3311 = vmatpush1.msra.mxu0 %v3310
    %3312 = vmatprep.subr.mxu0 0.0
    %v3313 = vand.u32 %v2866, 4294901760
    %v3314 = vsub.f32 %v2866, %v3313
    %v3315 = vand.u32 %v3314, 4294901760
    %3316 = vmatpush1.msra.mxu0 %v3315
    %3317 = vmatprep.subr.mxu0 0.0
    %v3318 = vand.u32 %v2865, 4294901760
    %v3319 = vsub.f32 %v2865, %v3318
    %v3320 = vand.u32 %v3319, 4294901760
    %3321 = vmatpush1.msra.mxu0 %v3320
    %3322 = vmatprep.subr.mxu0 0.0
    %v3323 = vand.u32 %v2864, 4294901760
    %v3324 = vsub.f32 %v2864, %v3323
    %v3325 = vand.u32 %v3324, 4294901760
    %3326 = vmatpush1.msra.mxu0 %v3325
    %3327 = vmatprep.subr.mxu0 0.0
    %v3328 = vand.u32 %v2863, 4294901760
    %v3329 = vsub.f32 %v2863, %v3328
    %v3330 = vand.u32 %v3329, 4294901760
    %3331 = vmatpush1.msra.mxu0 %v3330
    %3332 = vmatprep.subr.mxu0 0.0
    %3333 = vmatpush2.msra.mxu0 0.0
    %3334 = vmatprep.subr.mxu0 0.0
    %3335 = vmatpush2.msra.mxu0 0.0
    %3336 = vmatprep.subr.mxu0 0.0
    %3337 = vmatpush2.msra.mxu0 0.0
    %3338 = vmatprep.subr.mxu0 0.0
    %3339 = vmatpush2.msra.mxu0 0.0
    %3340 = vmatprep.subr.mxu0 0.0
    %3341 = vmatpush2.msra.mxu0 0.0
    %3342 = vmatprep.subr.mxu0 0.0
    %3343 = vmatpush2.msra.mxu0 0.0
    %3344 = vmatprep.subr.mxu0 0.0
    %3345 = vmatpush2.msra.mxu0 0.0
    %3346 = vmatprep.subr.mxu0 0.0
    %3347 = vmatpush2.msra.mxu0 0.0
    %3348 = vmatprep.subr.mxu0 0.0
    %3349 = vmatpush2.msra.mxu0 0.0
    %3350 = vmatprep.subr.mxu0 0.0
    %3351 = vmatpush2.msra.mxu0 0.0
    %3352 = vmatprep.subr.mxu0 0.0
    %3353 = vmatpush2.msra.mxu0 0.0
    %3354 = vmatprep.subr.mxu0 0.0
    %3355 = vmatpush2.msra.mxu0 0.0
    %3356 = vmatprep.subr.mxu0 0.0
    %3357 = vmatpush2.msra.mxu0 0.0
    %3358 = vmatprep.subr.mxu0 0.0
    %3359 = vmatpush2.msra.mxu0 0.0
    %3360 = vmatprep.subr.mxu0 0.0
    %3361 = vmatpush2.msra.mxu0 0.0
    %3362 = vmatprep.subr.mxu0 0.0
    %3363 = vmatpush2.msra.mxu0 0.0
    %3364 = vmatprep.mubr.f32.mxu0 0.0
    %v3365 = vand.u32 %v2877, 4294901760
    %3366 = vmatmul.mubr.f32.gmra.mxu0 %v3365
    %v3367 = vpop.f32.mrf.mxu0
    %v3368 = vadd.f32 %v3265, %v3367
    %v3369 = vpop.f32.mrf.mxu0
    %3370 = vmatprep.mubr.f32.mxu0 0.0
    %v3371 = vand.u32 %v2880, 4294901760
    %3372 = vmatmul.mubr.f32.gmra.mxu0 %v3371
    %v3373 = vpop.f32.mrf.mxu0
    %v3374 = vadd.f32 %v3273, %v3373
    %v3375 = vpop.f32.mrf.mxu0
    %3376 = vdwg.mxu0
    %3377 = vmatprep.subr.mxu0 0.0
    %3378 = vmatpush1.msra.mxu0 0.0
    %3379 = vmatprep.subr.mxu0 0.0
    %3380 = vmatpush1.msra.mxu0 0.0
    %3381 = vmatprep.subr.mxu0 0.0
    %3382 = vmatpush1.msra.mxu0 0.0
    %3383 = vmatprep.subr.mxu0 0.0
    %3384 = vmatpush1.msra.mxu0 0.0
    %3385 = vmatprep.subr.mxu0 0.0
    %3386 = vmatpush1.msra.mxu0 0.0
    %3387 = vmatprep.subr.mxu0 0.0
    %3388 = vmatpush1.msra.mxu0 0.0
    %3389 = vmatprep.subr.mxu0 0.0
    %3390 = vmatpush1.msra.mxu0 0.0
    %3391 = vmatprep.subr.mxu0 0.0
    %3392 = vmatpush1.msra.mxu0 0.0
    %3393 = vmatprep.subr.mxu0 0.0
    %v3394 = vand.u32 %v2870, 4294901760
    %3395 = vmatpush1.msra.mxu0 %v3394
    %3396 = vmatprep.subr.mxu0 0.0
    %v3397 = vand.u32 %v2869, 4294901760
    %3398 = vmatpush1.msra.mxu0 %v3397
    %3399 = vmatprep.subr.mxu0 0.0
    %v3400 = vand.u32 %v2868, 4294901760
    %3401 = vmatpush1.msra.mxu0 %v3400
    %3402 = vmatprep.subr.mxu0 0.0
    %v3403 = vand.u32 %v2867, 4294901760
    %3404 = vmatpush1.msra.mxu0 %v3403
    %3405 = vmatprep.subr.mxu0 0.0
    %v3406 = vand.u32 %v2866, 4294901760
    %3407 = vmatpush1.msra.mxu0 %v3406
    %3408 = vmatprep.subr.mxu0 0.0
    %v3409 = vand.u32 %v2865, 4294901760
    %3410 = vmatpush1.msra.mxu0 %v3409
    %3411 = vmatprep.subr.mxu0 0.0
    %v3412 = vand.u32 %v2864, 4294901760
    %3413 = vmatpush1.msra.mxu0 %v3412
    %3414 = vmatprep.subr.mxu0 0.0
    %v3415 = vand.u32 %v2863, 4294901760
    %3416 = vmatpush1.msra.mxu0 %v3415
    %3417 = vmatprep.subr.mxu0 0.0
    %3418 = vmatpush2.msra.mxu0 0.0
    %3419 = vmatprep.subr.mxu0 0.0
    %3420 = vmatpush2.msra.mxu0 0.0
    %3421 = vmatprep.subr.mxu0 0.0
    %3422 = vmatpush2.msra.mxu0 0.0
    %3423 = vmatprep.subr.mxu0 0.0
    %3424 = vmatpush2.msra.mxu0 0.0
    %3425 = vmatprep.subr.mxu0 0.0
    %3426 = vmatpush2.msra.mxu0 0.0
    %3427 = vmatprep.subr.mxu0 0.0
    %3428 = vmatpush2.msra.mxu0 0.0
    %3429 = vmatprep.subr.mxu0 0.0
    %3430 = vmatpush2.msra.mxu0 0.0
    %3431 = vmatprep.subr.mxu0 0.0
    %3432 = vmatpush2.msra.mxu0 0.0
    %3433 = vmatprep.subr.mxu0 0.0
    %3434 = vmatpush2.msra.mxu0 0.0
    %3435 = vmatprep.subr.mxu0 0.0
    %3436 = vmatpush2.msra.mxu0 0.0
    %3437 = vmatprep.subr.mxu0 0.0
    %3438 = vmatpush2.msra.mxu0 0.0
    %3439 = vmatprep.subr.mxu0 0.0
    %3440 = vmatpush2.msra.mxu0 0.0
    %3441 = vmatprep.subr.mxu0 0.0
    %3442 = vmatpush2.msra.mxu0 0.0
    %3443 = vmatprep.subr.mxu0 0.0
    %3444 = vmatpush2.msra.mxu0 0.0
    %3445 = vmatprep.subr.mxu0 0.0
    %3446 = vmatpush2.msra.mxu0 0.0
    %3447 = vmatprep.subr.mxu0 0.0
    %3448 = vmatpush2.msra.mxu0 0.0
    %3449 = vmatprep.mubr.f32.mxu0 0.0
    %v3450 = vand.u32 %v2877, 4294901760
    %3451 = vmatmul.mubr.f32.gmra.mxu0 %v3450
    %v3452 = vpop.f32.mrf.mxu0
    %v3453 = vadd.f32 %v3368, %v3452
    %v3454 = vpop.f32.mrf.mxu0
    %3455 = vmatprep.mubr.f32.mxu0 0.0
    %v3456 = vand.u32 %v2880, 4294901760
    %3457 = vmatmul.mubr.f32.gmra.mxu0 %v3456
    %v3458 = vpop.f32.mrf.mxu0
    %v3459 = vadd.f32 %v3374, %v3458
    %v3460 = vpop.f32.mrf.mxu0
    %3461 = vdwg.mxu0
    %v3462 = vadd.f32 %v3453, %v527
    %v3463 = vadd.f32 %v3459, %v533
    %s3464 = scalar_lea.vmem %s1, 184
    %v3465 = vld [vmem:[%s3464] sm:$0xff]
    %v3466 = vld [vmem:[%s3464 + $0x8] sm:$0xff]
    %v3467 = vld [vmem:[%s3464 + $0x10] sm:$0xff]
    %v3468 = vld [vmem:[%s3464 + $0x18] sm:$0xff]
    %s3469 = scalar_lea.vmem %s2, 8
    %v3470 = vld [vmem:[%s3469 + $0x3] sm:$0x1]
    %v3471 = vlaneseq
    %v3472 = vshrl.u32 %v3471, 7
    %v3473 = vsub.s32 0, %v3472
    %v3474 = vrot.slane %v3470, %v3473
    %v3476 = vsel %vm572, %v3462, 0
    %v3479 = vsel %vm572, %v3463, 0
    %3481 = vmatprep.subr.mxu0 0.0
    %3482 = vmatpush1.msra.mxu0 0.0
    %3483 = vmatprep.subr.mxu0 0.0
    %3484 = vmatpush1.msra.mxu0 0.0
    %3485 = vmatprep.subr.mxu0 0.0
    %3486 = vmatpush1.msra.mxu0 0.0
    %3487 = vmatprep.subr.mxu0 0.0
    %3488 = vmatpush1.msra.mxu0 0.0
    %3489 = vmatprep.subr.mxu0 0.0
    %3490 = vmatpush1.msra.mxu0 0.0
    %3491 = vmatprep.subr.mxu0 0.0
    %3492 = vmatpush1.msra.mxu0 0.0
    %3493 = vmatprep.subr.mxu0 0.0
    %3494 = vmatpush1.msra.mxu0 0.0
    %3495 = vmatprep.subr.mxu0 0.0
    %3496 = vmatpush1.msra.mxu0 0.0
    %3497 = vmatprep.subr.mxu0 0.0
    %3498 = vmatpush1.msra.mxu0 0.0
    %3499 = vmatprep.subr.mxu0 0.0
    %3500 = vmatpush1.msra.mxu0 0.0
    %3501 = vmatprep.subr.mxu0 0.0
    %3502 = vmatpush1.msra.mxu0 0.0
    %3503 = vmatprep.subr.mxu0 0.0
    %3504 = vmatpush1.msra.mxu0 0.0
    %3505 = vmatprep.subr.mxu0 0.0
    %v3506 = vand.u32 %v3468, 4294901760
    %3507 = vmatpush1.msra.mxu0 %v3506
    %3508 = vmatprep.subr.mxu0 0.0
    %v3509 = vand.u32 %v3467, 4294901760
    %3510 = vmatpush1.msra.mxu0 %v3509
    %3511 = vmatprep.subr.mxu0 0.0
    %v3512 = vand.u32 %v3466, 4294901760
    %3513 = vmatpush1.msra.mxu0 %v3512
    %3514 = vmatprep.subr.mxu0 0.0
    %v3515 = vand.u32 %v3465, 4294901760
    %3516 = vmatpush1.msra.mxu0 %v3515
    %3517 = vmatprep.subr.mxu0 0.0
    %3518 = vmatpush2.msra.mxu0 0.0
    %3519 = vmatprep.subr.mxu0 0.0
    %3520 = vmatpush2.msra.mxu0 0.0
    %3521 = vmatprep.subr.mxu0 0.0
    %3522 = vmatpush2.msra.mxu0 0.0
    %3523 = vmatprep.subr.mxu0 0.0
    %3524 = vmatpush2.msra.mxu0 0.0
    %3525 = vmatprep.subr.mxu0 0.0
    %3526 = vmatpush2.msra.mxu0 0.0
    %3527 = vmatprep.subr.mxu0 0.0
    %3528 = vmatpush2.msra.mxu0 0.0
    %3529 = vmatprep.subr.mxu0 0.0
    %3530 = vmatpush2.msra.mxu0 0.0
    %3531 = vmatprep.subr.mxu0 0.0
    %3532 = vmatpush2.msra.mxu0 0.0
    %3533 = vmatprep.subr.mxu0 0.0
    %3534 = vmatpush2.msra.mxu0 0.0
    %3535 = vmatprep.subr.mxu0 0.0
    %3536 = vmatpush2.msra.mxu0 0.0
    %3537 = vmatprep.subr.mxu0 0.0
    %3538 = vmatpush2.msra.mxu0 0.0
    %3539 = vmatprep.subr.mxu0 0.0
    %3540 = vmatpush2.msra.mxu0 0.0
    %3541 = vmatprep.subr.mxu0 0.0
    %3542 = vmatpush2.msra.mxu0 0.0
    %3543 = vmatprep.subr.mxu0 0.0
    %3544 = vmatpush2.msra.mxu0 0.0
    %3545 = vmatprep.subr.mxu0 0.0
    %3546 = vmatpush2.msra.mxu0 0.0
    %3547 = vmatprep.subr.mxu0 0.0
    %3548 = vmatpush2.msra.mxu0 0.0
    %3549 = vmatprep.mubr.f32.mxu0 0.0
    %v3550 = vand.u32 %v3476, 4294901760
    %v3551 = vsub.f32 %v3476, %v3550
    %v3552 = vand.u32 %v3551, 4294901760
    %v3553 = vsub.f32 %v3551, %v3552
    %v3554 = vand.u32 %v3553, 4294901760
    %3555 = vmatmul.mubr.f32.gmra.mxu0 %v3554
    %v3556 = vpop.f32.mrf.mxu0
    %v3557 = vadd.f32 %v3474, %v3556
    %v3558 = vpop.f32.mrf.mxu0
    %3559 = vmatprep.mubr.f32.mxu0 0.0
    %v3560 = vand.u32 %v3479, 4294901760
    %v3561 = vsub.f32 %v3479, %v3560
    %v3562 = vand.u32 %v3561, 4294901760
    %v3563 = vsub.f32 %v3561, %v3562
    %v3564 = vand.u32 %v3563, 4294901760
    %3565 = vmatmul.mubr.f32.gmra.mxu0 %v3564
    %v3566 = vpop.f32.mrf.mxu0
    %v3567 = vadd.f32 %v3474, %v3566
    %v3568 = vpop.f32.mrf.mxu0
    %3569 = vdwg.mxu0
    %3570 = vmatprep.subr.mxu0 0.0
    %3571 = vmatpush1.msra.mxu0 0.0
    %3572 = vmatprep.subr.mxu0 0.0
    %3573 = vmatpush1.msra.mxu0 0.0
    %3574 = vmatprep.subr.mxu0 0.0
    %3575 = vmatpush1.msra.mxu0 0.0
    %3576 = vmatprep.subr.mxu0 0.0
    %3577 = vmatpush1.msra.mxu0 0.0
    %3578 = vmatprep.subr.mxu0 0.0
    %3579 = vmatpush1.msra.mxu0 0.0
    %3580 = vmatprep.subr.mxu0 0.0
    %3581 = vmatpush1.msra.mxu0 0.0
    %3582 = vmatprep.subr.mxu0 0.0
    %3583 = vmatpush1.msra.mxu0 0.0
    %3584 = vmatprep.subr.mxu0 0.0
    %3585 = vmatpush1.msra.mxu0 0.0
    %3586 = vmatprep.subr.mxu0 0.0
    %3587 = vmatpush1.msra.mxu0 0.0
    %3588 = vmatprep.subr.mxu0 0.0
    %3589 = vmatpush1.msra.mxu0 0.0
    %3590 = vmatprep.subr.mxu0 0.0
    %3591 = vmatpush1.msra.mxu0 0.0
    %3592 = vmatprep.subr.mxu0 0.0
    %3593 = vmatpush1.msra.mxu0 0.0
    %3594 = vmatprep.subr.mxu0 0.0
    %v3595 = vand.u32 %v3468, 4294901760
    %v3596 = vsub.f32 %v3468, %v3595
    %v3597 = vand.u32 %v3596, 4294901760
    %v3598 = vsub.f32 %v3596, %v3597
    %v3599 = vand.u32 %v3598, 4294901760
    %3600 = vmatpush1.msra.mxu0 %v3599
    %3601 = vmatprep.subr.mxu0 0.0
    %v3602 = vand.u32 %v3467, 4294901760
    %v3603 = vsub.f32 %v3467, %v3602
    %v3604 = vand.u32 %v3603, 4294901760
    %v3605 = vsub.f32 %v3603, %v3604
    %v3606 = vand.u32 %v3605, 4294901760
    %3607 = vmatpush1.msra.mxu0 %v3606
    %3608 = vmatprep.subr.mxu0 0.0
    %v3609 = vand.u32 %v3466, 4294901760
    %v3610 = vsub.f32 %v3466, %v3609
    %v3611 = vand.u32 %v3610, 4294901760
    %v3612 = vsub.f32 %v3610, %v3611
    %v3613 = vand.u32 %v3612, 4294901760
    %3614 = vmatpush1.msra.mxu0 %v3613
    %3615 = vmatprep.subr.mxu0 0.0
    %v3616 = vand.u32 %v3465, 4294901760
    %v3617 = vsub.f32 %v3465, %v3616
    %v3618 = vand.u32 %v3617, 4294901760
    %v3619 = vsub.f32 %v3617, %v3618
    %v3620 = vand.u32 %v3619, 4294901760
    %3621 = vmatpush1.msra.mxu0 %v3620
    %3622 = vmatprep.subr.mxu0 0.0
    %3623 = vmatpush2.msra.mxu0 0.0
    %3624 = vmatprep.subr.mxu0 0.0
    %3625 = vmatpush2.msra.mxu0 0.0
    %3626 = vmatprep.subr.mxu0 0.0
    %3627 = vmatpush2.msra.mxu0 0.0
    %3628 = vmatprep.subr.mxu0 0.0
    %3629 = vmatpush2.msra.mxu0 0.0
    %3630 = vmatprep.subr.mxu0 0.0
    %3631 = vmatpush2.msra.mxu0 0.0
    %3632 = vmatprep.subr.mxu0 0.0
    %3633 = vmatpush2.msra.mxu0 0.0
    %3634 = vmatprep.subr.mxu0 0.0
    %3635 = vmatpush2.msra.mxu0 0.0
    %3636 = vmatprep.subr.mxu0 0.0
    %3637 = vmatpush2.msra.mxu0 0.0
    %3638 = vmatprep.subr.mxu0 0.0
    %3639 = vmatpush2.msra.mxu0 0.0
    %3640 = vmatprep.subr.mxu0 0.0
    %3641 = vmatpush2.msra.mxu0 0.0
    %3642 = vmatprep.subr.mxu0 0.0
    %3643 = vmatpush2.msra.mxu0 0.0
    %3644 = vmatprep.subr.mxu0 0.0
    %3645 = vmatpush2.msra.mxu0 0.0
    %3646 = vmatprep.subr.mxu0 0.0
    %3647 = vmatpush2.msra.mxu0 0.0
    %3648 = vmatprep.subr.mxu0 0.0
    %3649 = vmatpush2.msra.mxu0 0.0
    %3650 = vmatprep.subr.mxu0 0.0
    %3651 = vmatpush2.msra.mxu0 0.0
    %3652 = vmatprep.subr.mxu0 0.0
    %3653 = vmatpush2.msra.mxu0 0.0
    %3654 = vmatprep.mubr.f32.mxu0 0.0
    %v3655 = vand.u32 %v3476, 4294901760
    %3656 = vmatmul.mubr.f32.gmra.mxu0 %v3655
    %v3657 = vpop.f32.mrf.mxu0
    %v3658 = vadd.f32 %v3557, %v3657
    %v3659 = vpop.f32.mrf.mxu0
    %3660 = vmatprep.mubr.f32.mxu0 0.0
    %v3661 = vand.u32 %v3479, 4294901760
    %3662 = vmatmul.mubr.f32.gmra.mxu0 %v3661
    %v3663 = vpop.f32.mrf.mxu0
    %v3664 = vadd.f32 %v3567, %v3663
    %v3665 = vpop.f32.mrf.mxu0
    %3666 = vdwg.mxu0
    %3667 = vmatprep.subr.mxu0 0.0
    %3668 = vmatpush1.msra.mxu0 0.0
    %3669 = vmatprep.subr.mxu0 0.0
    %3670 = vmatpush1.msra.mxu0 0.0
    %3671 = vmatprep.subr.mxu0 0.0
    %3672 = vmatpush1.msra.mxu0 0.0
    %3673 = vmatprep.subr.mxu0 0.0
    %3674 = vmatpush1.msra.mxu0 0.0
    %3675 = vmatprep.subr.mxu0 0.0
    %3676 = vmatpush1.msra.mxu0 0.0
    %3677 = vmatprep.subr.mxu0 0.0
    %3678 = vmatpush1.msra.mxu0 0.0
    %3679 = vmatprep.subr.mxu0 0.0
    %3680 = vmatpush1.msra.mxu0 0.0
    %3681 = vmatprep.subr.mxu0 0.0
    %3682 = vmatpush1.msra.mxu0 0.0
    %3683 = vmatprep.subr.mxu0 0.0
    %3684 = vmatpush1.msra.mxu0 0.0
    %3685 = vmatprep.subr.mxu0 0.0
    %3686 = vmatpush1.msra.mxu0 0.0
    %3687 = vmatprep.subr.mxu0 0.0
    %3688 = vmatpush1.msra.mxu0 0.0
    %3689 = vmatprep.subr.mxu0 0.0
    %3690 = vmatpush1.msra.mxu0 0.0
    %3691 = vmatprep.subr.mxu0 0.0
    %v3692 = vand.u32 %v3468, 4294901760
    %v3693 = vsub.f32 %v3468, %v3692
    %3694 = vmatpush1.msra.mxu0 %v3693
    %3695 = vmatprep.subr.mxu0 0.0
    %v3696 = vand.u32 %v3467, 4294901760
    %v3697 = vsub.f32 %v3467, %v3696
    %3698 = vmatpush1.msra.mxu0 %v3697
    %3699 = vmatprep.subr.mxu0 0.0
    %v3700 = vand.u32 %v3466, 4294901760
    %v3701 = vsub.f32 %v3466, %v3700
    %3702 = vmatpush1.msra.mxu0 %v3701
    %3703 = vmatprep.subr.mxu0 0.0
    %v3704 = vand.u32 %v3465, 4294901760
    %v3705 = vsub.f32 %v3465, %v3704
    %3706 = vmatpush1.msra.mxu0 %v3705
    %3707 = vmatprep.subr.mxu0 0.0
    %3708 = vmatpush2.msra.mxu0 0.0
    %3709 = vmatprep.subr.mxu0 0.0
    %3710 = vmatpush2.msra.mxu0 0.0
    %3711 = vmatprep.subr.mxu0 0.0
    %3712 = vmatpush2.msra.mxu0 0.0
    %3713 = vmatprep.subr.mxu0 0.0
    %3714 = vmatpush2.msra.mxu0 0.0
    %3715 = vmatprep.subr.mxu0 0.0
    %3716 = vmatpush2.msra.mxu0 0.0
    %3717 = vmatprep.subr.mxu0 0.0
    %3718 = vmatpush2.msra.mxu0 0.0
    %3719 = vmatprep.subr.mxu0 0.0
    %3720 = vmatpush2.msra.mxu0 0.0
    %3721 = vmatprep.subr.mxu0 0.0
    %3722 = vmatpush2.msra.mxu0 0.0
    %3723 = vmatprep.subr.mxu0 0.0
    %3724 = vmatpush2.msra.mxu0 0.0
    %3725 = vmatprep.subr.mxu0 0.0
    %3726 = vmatpush2.msra.mxu0 0.0
    %3727 = vmatprep.subr.mxu0 0.0
    %3728 = vmatpush2.msra.mxu0 0.0
    %3729 = vmatprep.subr.mxu0 0.0
    %3730 = vmatpush2.msra.mxu0 0.0
    %3731 = vmatprep.subr.mxu0 0.0
    %3732 = vmatpush2.msra.mxu0 0.0
    %3733 = vmatprep.subr.mxu0 0.0
    %3734 = vmatpush2.msra.mxu0 0.0
    %3735 = vmatprep.subr.mxu0 0.0
    %3736 = vmatpush2.msra.mxu0 0.0
    %3737 = vmatprep.subr.mxu0 0.0
    %3738 = vmatpush2.msra.mxu0 0.0
    %3739 = vmatprep.mubr.f32.mxu0 0.0
    %v3740 = vand.u32 %v3476, 4294901760
    %v3741 = vsub.f32 %v3476, %v3740
    %3742 = vmatmul.mubr.f32.gmra.mxu0 %v3741
    %v3743 = vpop.f32.mrf.mxu0
    %v3744 = vadd.f32 %v3658, %v3743
    %v3745 = vpop.f32.mrf.mxu0
    %3746 = vmatprep.mubr.f32.mxu0 0.0
    %v3747 = vand.u32 %v3479, 4294901760
    %v3748 = vsub.f32 %v3479, %v3747
    %3749 = vmatmul.mubr.f32.gmra.mxu0 %v3748
    %v3750 = vpop.f32.mrf.mxu0
    %v3751 = vadd.f32 %v3664, %v3750
    %v3752 = vpop.f32.mrf.mxu0
    %3753 = vdwg.mxu0
    %3754 = vmatprep.subr.mxu0 0.0
    %3755 = vmatpush1.msra.mxu0 0.0
    %3756 = vmatprep.subr.mxu0 0.0
    %3757 = vmatpush1.msra.mxu0 0.0
    %3758 = vmatprep.subr.mxu0 0.0
    %3759 = vmatpush1.msra.mxu0 0.0
    %3760 = vmatprep.subr.mxu0 0.0
    %3761 = vmatpush1.msra.mxu0 0.0
    %3762 = vmatprep.subr.mxu0 0.0
    %3763 = vmatpush1.msra.mxu0 0.0
    %3764 = vmatprep.subr.mxu0 0.0
    %3765 = vmatpush1.msra.mxu0 0.0
    %3766 = vmatprep.subr.mxu0 0.0
    %3767 = vmatpush1.msra.mxu0 0.0
    %3768 = vmatprep.subr.mxu0 0.0
    %3769 = vmatpush1.msra.mxu0 0.0
    %3770 = vmatprep.subr.mxu0 0.0
    %3771 = vmatpush1.msra.mxu0 0.0
    %3772 = vmatprep.subr.mxu0 0.0
    %3773 = vmatpush1.msra.mxu0 0.0
    %3774 = vmatprep.subr.mxu0 0.0
    %3775 = vmatpush1.msra.mxu0 0.0
    %3776 = vmatprep.subr.mxu0 0.0
    %3777 = vmatpush1.msra.mxu0 0.0
    %3778 = vmatprep.subr.mxu0 0.0
    %v3779 = vand.u32 %v3468, 4294901760
    %3780 = vmatpush1.msra.mxu0 %v3779
    %3781 = vmatprep.subr.mxu0 0.0
    %v3782 = vand.u32 %v3467, 4294901760
    %3783 = vmatpush1.msra.mxu0 %v3782
    %3784 = vmatprep.subr.mxu0 0.0
    %v3785 = vand.u32 %v3466, 4294901760
    %3786 = vmatpush1.msra.mxu0 %v3785
    %3787 = vmatprep.subr.mxu0 0.0
    %v3788 = vand.u32 %v3465, 4294901760
    %3789 = vmatpush1.msra.mxu0 %v3788
    %3790 = vmatprep.subr.mxu0 0.0
    %3791 = vmatpush2.msra.mxu0 0.0
    %3792 = vmatprep.subr.mxu0 0.0
    %3793 = vmatpush2.msra.mxu0 0.0
    %3794 = vmatprep.subr.mxu0 0.0
    %3795 = vmatpush2.msra.mxu0 0.0
    %3796 = vmatprep.subr.mxu0 0.0
    %3797 = vmatpush2.msra.mxu0 0.0
    %3798 = vmatprep.subr.mxu0 0.0
    %3799 = vmatpush2.msra.mxu0 0.0
    %3800 = vmatprep.subr.mxu0 0.0
    %3801 = vmatpush2.msra.mxu0 0.0
    %3802 = vmatprep.subr.mxu0 0.0
    %3803 = vmatpush2.msra.mxu0 0.0
    %3804 = vmatprep.subr.mxu0 0.0
    %3805 = vmatpush2.msra.mxu0 0.0
    %3806 = vmatprep.subr.mxu0 0.0
    %3807 = vmatpush2.msra.mxu0 0.0
    %3808 = vmatprep.subr.mxu0 0.0
    %3809 = vmatpush2.msra.mxu0 0.0
    %3810 = vmatprep.subr.mxu0 0.0
    %3811 = vmatpush2.msra.mxu0 0.0
    %3812 = vmatprep.subr.mxu0 0.0
    %3813 = vmatpush2.msra.mxu0 0.0
    %3814 = vmatprep.subr.mxu0 0.0
    %3815 = vmatpush2.msra.mxu0 0.0
    %3816 = vmatprep.subr.mxu0 0.0
    %3817 = vmatpush2.msra.mxu0 0.0
    %3818 = vmatprep.subr.mxu0 0.0
    %3819 = vmatpush2.msra.mxu0 0.0
    %3820 = vmatprep.subr.mxu0 0.0
    %3821 = vmatpush2.msra.mxu0 0.0
    %3822 = vmatprep.mubr.f32.mxu0 0.0
    %v3823 = vand.u32 %v3476, 4294901760
    %v3824 = vsub.f32 %v3476, %v3823
    %v3825 = vand.u32 %v3824, 4294901760
    %3826 = vmatmul.mubr.f32.gmra.mxu0 %v3825
    %v3827 = vpop.f32.mrf.mxu0
    %v3828 = vadd.f32 %v3744, %v3827
    %v3829 = vpop.f32.mrf.mxu0
    %3830 = vmatprep.mubr.f32.mxu0 0.0
    %v3831 = vand.u32 %v3479, 4294901760
    %v3832 = vsub.f32 %v3479, %v3831
    %v3833 = vand.u32 %v3832, 4294901760
    %3834 = vmatmul.mubr.f32.gmra.mxu0 %v3833
    %v3835 = vpop.f32.mrf.mxu0
    %v3836 = vadd.f32 %v3751, %v3835
    %v3837 = vpop.f32.mrf.mxu0
    %3838 = vdwg.mxu0
    %3839 = vmatprep.subr.mxu0 0.0
    %3840 = vmatpush1.msra.mxu0 0.0
    %3841 = vmatprep.subr.mxu0 0.0
    %3842 = vmatpush1.msra.mxu0 0.0
    %3843 = vmatprep.subr.mxu0 0.0
    %3844 = vmatpush1.msra.mxu0 0.0
    %3845 = vmatprep.subr.mxu0 0.0
    %3846 = vmatpush1.msra.mxu0 0.0
    %3847 = vmatprep.subr.mxu0 0.0
    %3848 = vmatpush1.msra.mxu0 0.0
    %3849 = vmatprep.subr.mxu0 0.0
    %3850 = vmatpush1.msra.mxu0 0.0
    %3851 = vmatprep.subr.mxu0 0.0
    %3852 = vmatpush1.msra.mxu0 0.0
    %3853 = vmatprep.subr.mxu0 0.0
    %3854 = vmatpush1.msra.mxu0 0.0
    %3855 = vmatprep.subr.mxu0 0.0
    %3856 = vmatpush1.msra.mxu0 0.0
    %3857 = vmatprep.subr.mxu0 0.0
    %3858 = vmatpush1.msra.mxu0 0.0
    %3859 = vmatprep.subr.mxu0 0.0
    %3860 = vmatpush1.msra.mxu0 0.0
    %3861 = vmatprep.subr.mxu0 0.0
    %3862 = vmatpush1.msra.mxu0 0.0
    %3863 = vmatprep.subr.mxu0 0.0
    %v3864 = vand.u32 %v3468, 4294901760
    %v3865 = vsub.f32 %v3468, %v3864
    %v3866 = vand.u32 %v3865, 4294901760
    %3867 = vmatpush1.msra.mxu0 %v3866
    %3868 = vmatprep.subr.mxu0 0.0
    %v3869 = vand.u32 %v3467, 4294901760
    %v3870 = vsub.f32 %v3467, %v3869
    %v3871 = vand.u32 %v3870, 4294901760
    %3872 = vmatpush1.msra.mxu0 %v3871
    %3873 = vmatprep.subr.mxu0 0.0
    %v3874 = vand.u32 %v3466, 4294901760
    %v3875 = vsub.f32 %v3466, %v3874
    %v3876 = vand.u32 %v3875, 4294901760
    %3877 = vmatpush1.msra.mxu0 %v3876
    %3878 = vmatprep.subr.mxu0 0.0
    %v3879 = vand.u32 %v3465, 4294901760
    %v3880 = vsub.f32 %v3465, %v3879
    %v3881 = vand.u32 %v3880, 4294901760
    %3882 = vmatpush1.msra.mxu0 %v3881
    %3883 = vmatprep.subr.mxu0 0.0
    %3884 = vmatpush2.msra.mxu0 0.0
    %3885 = vmatprep.subr.mxu0 0.0
    %3886 = vmatpush2.msra.mxu0 0.0
    %3887 = vmatprep.subr.mxu0 0.0
    %3888 = vmatpush2.msra.mxu0 0.0
    %3889 = vmatprep.subr.mxu0 0.0
    %3890 = vmatpush2.msra.mxu0 0.0
    %3891 = vmatprep.subr.mxu0 0.0
    %3892 = vmatpush2.msra.mxu0 0.0
    %3893 = vmatprep.subr.mxu0 0.0
    %3894 = vmatpush2.msra.mxu0 0.0
    %3895 = vmatprep.subr.mxu0 0.0
    %3896 = vmatpush2.msra.mxu0 0.0
    %3897 = vmatprep.subr.mxu0 0.0
    %3898 = vmatpush2.msra.mxu0 0.0
    %3899 = vmatprep.subr.mxu0 0.0
    %3900 = vmatpush2.msra.mxu0 0.0
    %3901 = vmatprep.subr.mxu0 0.0
    %3902 = vmatpush2.msra.mxu0 0.0
    %3903 = vmatprep.subr.mxu0 0.0
    %3904 = vmatpush2.msra.mxu0 0.0
    %3905 = vmatprep.subr.mxu0 0.0
    %3906 = vmatpush2.msra.mxu0 0.0
    %3907 = vmatprep.subr.mxu0 0.0
    %3908 = vmatpush2.msra.mxu0 0.0
    %3909 = vmatprep.subr.mxu0 0.0
    %3910 = vmatpush2.msra.mxu0 0.0
    %3911 = vmatprep.subr.mxu0 0.0
    %3912 = vmatpush2.msra.mxu0 0.0
    %3913 = vmatprep.subr.mxu0 0.0
    %3914 = vmatpush2.msra.mxu0 0.0
    %3915 = vmatprep.mubr.f32.mxu0 0.0
    %v3916 = vand.u32 %v3476, 4294901760
    %3917 = vmatmul.mubr.f32.gmra.mxu0 %v3916
    %v3918 = vpop.f32.mrf.mxu0
    %v3919 = vadd.f32 %v3828, %v3918
    %v3920 = vpop.f32.mrf.mxu0
    %3921 = vmatprep.mubr.f32.mxu0 0.0
    %v3922 = vand.u32 %v3479, 4294901760
    %3923 = vmatmul.mubr.f32.gmra.mxu0 %v3922
    %v3924 = vpop.f32.mrf.mxu0
    %v3925 = vadd.f32 %v3836, %v3924
    %v3926 = vpop.f32.mrf.mxu0
    %3927 = vdwg.mxu0
    %3928 = vmatprep.subr.mxu0 0.0
    %3929 = vmatpush1.msra.mxu0 0.0
    %3930 = vmatprep.subr.mxu0 0.0
    %3931 = vmatpush1.msra.mxu0 0.0
    %3932 = vmatprep.subr.mxu0 0.0
    %3933 = vmatpush1.msra.mxu0 0.0
    %3934 = vmatprep.subr.mxu0 0.0
    %3935 = vmatpush1.msra.mxu0 0.0
    %3936 = vmatprep.subr.mxu0 0.0
    %3937 = vmatpush1.msra.mxu0 0.0
    %3938 = vmatprep.subr.mxu0 0.0
    %3939 = vmatpush1.msra.mxu0 0.0
    %3940 = vmatprep.subr.mxu0 0.0
    %3941 = vmatpush1.msra.mxu0 0.0
    %3942 = vmatprep.subr.mxu0 0.0
    %3943 = vmatpush1.msra.mxu0 0.0
    %3944 = vmatprep.subr.mxu0 0.0
    %3945 = vmatpush1.msra.mxu0 0.0
    %3946 = vmatprep.subr.mxu0 0.0
    %3947 = vmatpush1.msra.mxu0 0.0
    %3948 = vmatprep.subr.mxu0 0.0
    %3949 = vmatpush1.msra.mxu0 0.0
    %3950 = vmatprep.subr.mxu0 0.0
    %3951 = vmatpush1.msra.mxu0 0.0
    %3952 = vmatprep.subr.mxu0 0.0
    %v3953 = vand.u32 %v3468, 4294901760
    %3954 = vmatpush1.msra.mxu0 %v3953
    %3955 = vmatprep.subr.mxu0 0.0
    %v3956 = vand.u32 %v3467, 4294901760
    %3957 = vmatpush1.msra.mxu0 %v3956
    %3958 = vmatprep.subr.mxu0 0.0
    %v3959 = vand.u32 %v3466, 4294901760
    %3960 = vmatpush1.msra.mxu0 %v3959
    %3961 = vmatprep.subr.mxu0 0.0
    %v3962 = vand.u32 %v3465, 4294901760
    %3963 = vmatpush1.msra.mxu0 %v3962
    %3964 = vmatprep.subr.mxu0 0.0
    %3965 = vmatpush2.msra.mxu0 0.0
    %3966 = vmatprep.subr.mxu0 0.0
    %3967 = vmatpush2.msra.mxu0 0.0
    %3968 = vmatprep.subr.mxu0 0.0
    %3969 = vmatpush2.msra.mxu0 0.0
    %3970 = vmatprep.subr.mxu0 0.0
    %3971 = vmatpush2.msra.mxu0 0.0
    %3972 = vmatprep.subr.mxu0 0.0
    %3973 = vmatpush2.msra.mxu0 0.0
    %3974 = vmatprep.subr.mxu0 0.0
    %3975 = vmatpush2.msra.mxu0 0.0
    %3976 = vmatprep.subr.mxu0 0.0
    %3977 = vmatpush2.msra.mxu0 0.0
    %3978 = vmatprep.subr.mxu0 0.0
    %3979 = vmatpush2.msra.mxu0 0.0
    %3980 = vmatprep.subr.mxu0 0.0
    %3981 = vmatpush2.msra.mxu0 0.0
    %3982 = vmatprep.subr.mxu0 0.0
    %3983 = vmatpush2.msra.mxu0 0.0
    %3984 = vmatprep.subr.mxu0 0.0
    %3985 = vmatpush2.msra.mxu0 0.0
    %3986 = vmatprep.subr.mxu0 0.0
    %3987 = vmatpush2.msra.mxu0 0.0
    %3988 = vmatprep.subr.mxu0 0.0
    %3989 = vmatpush2.msra.mxu0 0.0
    %3990 = vmatprep.subr.mxu0 0.0
    %3991 = vmatpush2.msra.mxu0 0.0
    %3992 = vmatprep.subr.mxu0 0.0
    %3993 = vmatpush2.msra.mxu0 0.0
    %3994 = vmatprep.subr.mxu0 0.0
    %3995 = vmatpush2.msra.mxu0 0.0
    %3996 = vmatprep.mubr.f32.mxu0 0.0
    %v3997 = vand.u32 %v3476, 4294901760
    %3998 = vmatmul.mubr.f32.gmra.mxu0 %v3997
    %v3999 = vpop.f32.mrf.mxu0
    %v4000 = vadd.f32 %v3919, %v3999
    %v4001 = vpop.f32.mrf.mxu0
    %4002 = vmatprep.mubr.f32.mxu0 0.0
    %v4003 = vand.u32 %v3479, 4294901760
    %4004 = vmatmul.mubr.f32.gmra.mxu0 %v4003
    %v4005 = vpop.f32.mrf.mxu0
    %v4006 = vadd.f32 %v3925, %v4005
    %v4007 = vpop.f32.mrf.mxu0
    %4008 = vdwg.mxu0
    %v4009 = vld [vmem:[%s3469] sm:$0x7]
    %v4010 = vlaneseq
    %v4011 = vshrl.u32 %v4010, 7
    %v4012 = vsub.s32 2, %v4011
    %v4013 = vrot.slane %v4009, %v4012
    %v4014 = vmul.f32 %v4000, %v4013
    %v4015 = vmul.f32 %v4006, %v4013
    %v4018 = vrot.slane %v4000, 6
    %v4019 = vrot.slane %v4006, 6
    %v4020 = vsel %vm1116, %v4018, %v4019
    %v4023 = vsel %vm1116, 0.0, %v4018
    %v4024 = vsel %vm1127, %v4023, 0.0
    %v4025 = vsel %vm1128, %v4020, 0.0
    %v4026 = vlaneseq
    %v4027 = vshrl.u32 %v4026, 7
    %v4028 = vsub.s32 0, %v4027
    %v4029 = vrot.slane %v4009, %v4028
    %v4030 = vmul.f32 %v4024, %v4029
    %v4031 = vmul.f32 %v4025, %v4029
    %v4032 = vadd.f32 %v4014, %v4030
    %v4033 = vadd.f32 %v4015, %v4031
    %v4034 = vrot.slane %v4000, 7
    %v4035 = vrot.slane %v4006, 7
    %v4036 = vsel %vm1139, %v4034, %v4035
    %v4039 = vsel %vm1139, 0.0, %v4034
    %v4040 = vsel %vm1150, %v4039, 0.0
    %v4041 = vsel %vm1151, %v4036, 0.0
    %v4042 = vlaneseq
    %v4043 = vshrl.u32 %v4042, 7
    %v4044 = vsub.s32 1, %v4043
    %v4045 = vrot.slane %v4009, %v4044
    %v4046 = vmul.f32 %v4040, %v4045
    %v4047 = vmul.f32 %v4041, %v4045
    %v4048 = vadd.f32 %v4032, %v4046
    %v4049 = vadd.f32 %v4033, %v4047
    %v4050 = vld [vmem:[%s3469 + $0x5] sm:$0x1]
    %v4051 = vlaneseq
    %v4052 = vshrl.u32 %v4051, 7
    %v4053 = vsub.s32 0, %v4052
    %v4054 = vrot.slane %v4050, %v4053
    %v4055 = vadd.f32 %v4048, %v4054
    %v4056 = vadd.f32 %v4049, %v4054
    %v4057 = vsub.f32 0.0, %v4055
    %v4058 = vsub.f32 0.0, %v4056
    %v4059 = vmul.f32 %v4057, 1.442695
    %v4060 = vpow.pop %v4059
    %v4061 = vmul.f32 %v4058, 1.442695
    %v4062 = vpow.pop %v4061
    %v4063 = vadd.f32 %v4060, 1.0
    %v4064 = vadd.f32 %v4062, 1.0
    %v4065 = vrcp.pop %v4063
    %v4066 = vmul.f32 1.0, %v4065
    %v4067 = vrcp.pop %v4064
    %v4068 = vmul.f32 1.0, %v4067
    %v4069 = vmul.f32 %v4055, %v4066
    %v4070 = vmul.f32 %v4056, %v4068
    %v4071 = vld [vmem:[%s3464 + $0x20] sm:$0xff]
    %v4072 = vld [vmem:[%s3464 + $0x28] sm:$0xff]
    %v4073 = vld [vmem:[%s3464 + $0x30] sm:$0xff]
    %v4074 = vld [vmem:[%s3464 + $0x38] sm:$0xff]
    %v4075 = vld [vmem:[%s3464 + $0x40] sm:$0xff]
    %v4076 = vld [vmem:[%s3464 + $0x48] sm:$0xff]
    %v4077 = vld [vmem:[%s3464 + $0x50] sm:$0xff]
    %v4078 = vld [vmem:[%s3464 + $0x58] sm:$0xff]
    %v4079 = vld [vmem:[%s3469 + $0x4] sm:$0x1]
    %v4080 = vlaneseq
    %v4081 = vshrl.u32 %v4080, 7
    %v4082 = vsub.s32 0, %v4081
    %v4083 = vrot.slane %v4079, %v4082
    %v4085 = vsel %vm1196, %v4069, 0
    %v4088 = vsel %vm1196, %v4070, 0
    %4090 = vmatprep.subr.mxu0 0.0
    %4091 = vmatpush1.msra.mxu0 0.0
    %4092 = vmatprep.subr.mxu0 0.0
    %4093 = vmatpush1.msra.mxu0 0.0
    %4094 = vmatprep.subr.mxu0 0.0
    %4095 = vmatpush1.msra.mxu0 0.0
    %4096 = vmatprep.subr.mxu0 0.0
    %4097 = vmatpush1.msra.mxu0 0.0
    %4098 = vmatprep.subr.mxu0 0.0
    %4099 = vmatpush1.msra.mxu0 0.0
    %4100 = vmatprep.subr.mxu0 0.0
    %4101 = vmatpush1.msra.mxu0 0.0
    %4102 = vmatprep.subr.mxu0 0.0
    %4103 = vmatpush1.msra.mxu0 0.0
    %4104 = vmatprep.subr.mxu0 0.0
    %4105 = vmatpush1.msra.mxu0 0.0
    %4106 = vmatprep.subr.mxu0 0.0
    %v4107 = vand.u32 %v4078, 4294901760
    %4108 = vmatpush1.msra.mxu0 %v4107
    %4109 = vmatprep.subr.mxu0 0.0
    %v4110 = vand.u32 %v4077, 4294901760
    %4111 = vmatpush1.msra.mxu0 %v4110
    %4112 = vmatprep.subr.mxu0 0.0
    %v4113 = vand.u32 %v4076, 4294901760
    %4114 = vmatpush1.msra.mxu0 %v4113
    %4115 = vmatprep.subr.mxu0 0.0
    %v4116 = vand.u32 %v4075, 4294901760
    %4117 = vmatpush1.msra.mxu0 %v4116
    %4118 = vmatprep.subr.mxu0 0.0
    %v4119 = vand.u32 %v4074, 4294901760
    %4120 = vmatpush1.msra.mxu0 %v4119
    %4121 = vmatprep.subr.mxu0 0.0
    %v4122 = vand.u32 %v4073, 4294901760
    %4123 = vmatpush1.msra.mxu0 %v4122
    %4124 = vmatprep.subr.mxu0 0.0
    %v4125 = vand.u32 %v4072, 4294901760
    %4126 = vmatpush1.msra.mxu0 %v4125
    %4127 = vmatprep.subr.mxu0 0.0
    %v4128 = vand.u32 %v4071, 4294901760
    %4129 = vmatpush1.msra.mxu0 %v4128
    %4130 = vmatprep.subr.mxu0 0.0
    %4131 = vmatpush2.msra.mxu0 0.0
    %4132 = vmatprep.subr.mxu0 0.0
    %4133 = vmatpush2.msra.mxu0 0.0
    %4134 = vmatprep.subr.mxu0 0.0
    %4135 = vmatpush2.msra.mxu0 0.0
    %4136 = vmatprep.subr.mxu0 0.0
    %4137 = vmatpush2.msra.mxu0 0.0
    %4138 = vmatprep.subr.mxu0 0.0
    %4139 = vmatpush2.msra.mxu0 0.0
    %4140 = vmatprep.subr.mxu0 0.0
    %4141 = vmatpush2.msra.mxu0 0.0
    %4142 = vmatprep.subr.mxu0 0.0
    %4143 = vmatpush2.msra.mxu0 0.0
    %4144 = vmatprep.subr.mxu0 0.0
    %4145 = vmatpush2.msra.mxu0 0.0
    %4146 = vmatprep.subr.mxu0 0.0
    %4147 = vmatpush2.msra.mxu0 0.0
    %4148 = vmatprep.subr.mxu0 0.0
    %4149 = vmatpush2.msra.mxu0 0.0
    %4150 = vmatprep.subr.mxu0 0.0
    %4151 = vmatpush2.msra.mxu0 0.0
    %4152 = vmatprep.subr.mxu0 0.0
    %4153 = vmatpush2.msra.mxu0 0.0
    %4154 = vmatprep.subr.mxu0 0.0
    %4155 = vmatpush2.msra.mxu0 0.0
    %4156 = vmatprep.subr.mxu0 0.0
    %4157 = vmatpush2.msra.mxu0 0.0
    %4158 = vmatprep.subr.mxu0 0.0
    %4159 = vmatpush2.msra.mxu0 0.0
    %4160 = vmatprep.subr.mxu0 0.0
    %4161 = vmatpush2.msra.mxu0 0.0
    %4162 = vmatprep.mubr.f32.mxu0 0.0
    %v4163 = vand.u32 %v4085, 4294901760
    %v4164 = vsub.f32 %v4085, %v4163
    %v4165 = vand.u32 %v4164, 4294901760
    %v4166 = vsub.f32 %v4164, %v4165
    %v4167 = vand.u32 %v4166, 4294901760
    %4168 = vmatmul.mubr.f32.gmra.mxu0 %v4167
    %v4169 = vpop.f32.mrf.mxu0
    %v4170 = vadd.f32 %v4083, %v4169
    %v4171 = vpop.f32.mrf.mxu0
    %4172 = vmatprep.mubr.f32.mxu0 0.0
    %v4173 = vand.u32 %v4088, 4294901760
    %v4174 = vsub.f32 %v4088, %v4173
    %v4175 = vand.u32 %v4174, 4294901760
    %v4176 = vsub.f32 %v4174, %v4175
    %v4177 = vand.u32 %v4176, 4294901760
    %4178 = vmatmul.mubr.f32.gmra.mxu0 %v4177
    %v4179 = vpop.f32.mrf.mxu0
    %v4180 = vadd.f32 %v4083, %v4179
    %v4181 = vpop.f32.mrf.mxu0
    %4182 = vdwg.mxu0
    %4183 = vmatprep.subr.mxu0 0.0
    %4184 = vmatpush1.msra.mxu0 0.0
    %4185 = vmatprep.subr.mxu0 0.0
    %4186 = vmatpush1.msra.mxu0 0.0
    %4187 = vmatprep.subr.mxu0 0.0
    %4188 = vmatpush1.msra.mxu0 0.0
    %4189 = vmatprep.subr.mxu0 0.0
    %4190 = vmatpush1.msra.mxu0 0.0
    %4191 = vmatprep.subr.mxu0 0.0
    %4192 = vmatpush1.msra.mxu0 0.0
    %4193 = vmatprep.subr.mxu0 0.0
    %4194 = vmatpush1.msra.mxu0 0.0
    %4195 = vmatprep.subr.mxu0 0.0
    %4196 = vmatpush1.msra.mxu0 0.0
    %4197 = vmatprep.subr.mxu0 0.0
    %4198 = vmatpush1.msra.mxu0 0.0
    %4199 = vmatprep.subr.mxu0 0.0
    %v4200 = vand.u32 %v4078, 4294901760
    %v4201 = vsub.f32 %v4078, %v4200
    %v4202 = vand.u32 %v4201, 4294901760
    %v4203 = vsub.f32 %v4201, %v4202
    %v4204 = vand.u32 %v4203, 4294901760
    %4205 = vmatpush1.msra.mxu0 %v4204
    %4206 = vmatprep.subr.mxu0 0.0
    %v4207 = vand.u32 %v4077, 4294901760
    %v4208 = vsub.f32 %v4077, %v4207
    %v4209 = vand.u32 %v4208, 4294901760
    %v4210 = vsub.f32 %v4208, %v4209
    %v4211 = vand.u32 %v4210, 4294901760
    %4212 = vmatpush1.msra.mxu0 %v4211
    %4213 = vmatprep.subr.mxu0 0.0
    %v4214 = vand.u32 %v4076, 4294901760
    %v4215 = vsub.f32 %v4076, %v4214
    %v4216 = vand.u32 %v4215, 4294901760
    %v4217 = vsub.f32 %v4215, %v4216
    %v4218 = vand.u32 %v4217, 4294901760
    %4219 = vmatpush1.msra.mxu0 %v4218
    %4220 = vmatprep.subr.mxu0 0.0
    %v4221 = vand.u32 %v4075, 4294901760
    %v4222 = vsub.f32 %v4075, %v4221
    %v4223 = vand.u32 %v4222, 4294901760
    %v4224 = vsub.f32 %v4222, %v4223
    %v4225 = vand.u32 %v4224, 4294901760
    %4226 = vmatpush1.msra.mxu0 %v4225
    %4227 = vmatprep.subr.mxu0 0.0
    %v4228 = vand.u32 %v4074, 4294901760
    %v4229 = vsub.f32 %v4074, %v4228
    %v4230 = vand.u32 %v4229, 4294901760
    %v4231 = vsub.f32 %v4229, %v4230
    %v4232 = vand.u32 %v4231, 4294901760
    %4233 = vmatpush1.msra.mxu0 %v4232
    %4234 = vmatprep.subr.mxu0 0.0
    %v4235 = vand.u32 %v4073, 4294901760
    %v4236 = vsub.f32 %v4073, %v4235
    %v4237 = vand.u32 %v4236, 4294901760
    %v4238 = vsub.f32 %v4236, %v4237
    %v4239 = vand.u32 %v4238, 4294901760
    %4240 = vmatpush1.msra.mxu0 %v4239
    %4241 = vmatprep.subr.mxu0 0.0
    %v4242 = vand.u32 %v4072, 4294901760
    %v4243 = vsub.f32 %v4072, %v4242
    %v4244 = vand.u32 %v4243, 4294901760
    %v4245 = vsub.f32 %v4243, %v4244
    %v4246 = vand.u32 %v4245, 4294901760
    %4247 = vmatpush1.msra.mxu0 %v4246
    %4248 = vmatprep.subr.mxu0 0.0
    %v4249 = vand.u32 %v4071, 4294901760
    %v4250 = vsub.f32 %v4071, %v4249
    %v4251 = vand.u32 %v4250, 4294901760
    %v4252 = vsub.f32 %v4250, %v4251
    %v4253 = vand.u32 %v4252, 4294901760
    %4254 = vmatpush1.msra.mxu0 %v4253
    %4255 = vmatprep.subr.mxu0 0.0
    %4256 = vmatpush2.msra.mxu0 0.0
    %4257 = vmatprep.subr.mxu0 0.0
    %4258 = vmatpush2.msra.mxu0 0.0
    %4259 = vmatprep.subr.mxu0 0.0
    %4260 = vmatpush2.msra.mxu0 0.0
    %4261 = vmatprep.subr.mxu0 0.0
    %4262 = vmatpush2.msra.mxu0 0.0
    %4263 = vmatprep.subr.mxu0 0.0
    %4264 = vmatpush2.msra.mxu0 0.0
    %4265 = vmatprep.subr.mxu0 0.0
    %4266 = vmatpush2.msra.mxu0 0.0
    %4267 = vmatprep.subr.mxu0 0.0
    %4268 = vmatpush2.msra.mxu0 0.0
    %4269 = vmatprep.subr.mxu0 0.0
    %4270 = vmatpush2.msra.mxu0 0.0
    %4271 = vmatprep.subr.mxu0 0.0
    %4272 = vmatpush2.msra.mxu0 0.0
    %4273 = vmatprep.subr.mxu0 0.0
    %4274 = vmatpush2.msra.mxu0 0.0
    %4275 = vmatprep.subr.mxu0 0.0
    %4276 = vmatpush2.msra.mxu0 0.0
    %4277 = vmatprep.subr.mxu0 0.0
    %4278 = vmatpush2.msra.mxu0 0.0
    %4279 = vmatprep.subr.mxu0 0.0
    %4280 = vmatpush2.msra.mxu0 0.0
    %4281 = vmatprep.subr.mxu0 0.0
    %4282 = vmatpush2.msra.mxu0 0.0
    %4283 = vmatprep.subr.mxu0 0.0
    %4284 = vmatpush2.msra.mxu0 0.0
    %4285 = vmatprep.subr.mxu0 0.0
    %4286 = vmatpush2.msra.mxu0 0.0
    %4287 = vmatprep.mubr.f32.mxu0 0.0
    %v4288 = vand.u32 %v4085, 4294901760
    %4289 = vmatmul.mubr.f32.gmra.mxu0 %v4288
    %v4290 = vpop.f32.mrf.mxu0
    %v4291 = vadd.f32 %v4170, %v4290
    %v4292 = vpop.f32.mrf.mxu0
    %4293 = vmatprep.mubr.f32.mxu0 0.0
    %v4294 = vand.u32 %v4088, 4294901760
    %4295 = vmatmul.mubr.f32.gmra.mxu0 %v4294
    %v4296 = vpop.f32.mrf.mxu0
    %v4297 = vadd.f32 %v4180, %v4296
    %v4298 = vpop.f32.mrf.mxu0
    %4299 = vdwg.mxu0
    %4300 = vmatprep.subr.mxu0 0.0
    %4301 = vmatpush1.msra.mxu0 0.0
    %4302 = vmatprep.subr.mxu0 0.0
    %4303 = vmatpush1.msra.mxu0 0.0
    %4304 = vmatprep.subr.mxu0 0.0
    %4305 = vmatpush1.msra.mxu0 0.0
    %4306 = vmatprep.subr.mxu0 0.0
    %4307 = vmatpush1.msra.mxu0 0.0
    %4308 = vmatprep.subr.mxu0 0.0
    %4309 = vmatpush1.msra.mxu0 0.0
    %4310 = vmatprep.subr.mxu0 0.0
    %4311 = vmatpush1.msra.mxu0 0.0
    %4312 = vmatprep.subr.mxu0 0.0
    %4313 = vmatpush1.msra.mxu0 0.0
    %4314 = vmatprep.subr.mxu0 0.0
    %4315 = vmatpush1.msra.mxu0 0.0
    %4316 = vmatprep.subr.mxu0 0.0
    %v4317 = vand.u32 %v4078, 4294901760
    %v4318 = vsub.f32 %v4078, %v4317
    %4319 = vmatpush1.msra.mxu0 %v4318
    %4320 = vmatprep.subr.mxu0 0.0
    %v4321 = vand.u32 %v4077, 4294901760
    %v4322 = vsub.f32 %v4077, %v4321
    %4323 = vmatpush1.msra.mxu0 %v4322
    %4324 = vmatprep.subr.mxu0 0.0
    %v4325 = vand.u32 %v4076, 4294901760
    %v4326 = vsub.f32 %v4076, %v4325
    %4327 = vmatpush1.msra.mxu0 %v4326
    %4328 = vmatprep.subr.mxu0 0.0
    %v4329 = vand.u32 %v4075, 4294901760
    %v4330 = vsub.f32 %v4075, %v4329
    %4331 = vmatpush1.msra.mxu0 %v4330
    %4332 = vmatprep.subr.mxu0 0.0
    %v4333 = vand.u32 %v4074, 4294901760
    %v4334 = vsub.f32 %v4074, %v4333
    %4335 = vmatpush1.msra.mxu0 %v4334
    %4336 = vmatprep.subr.mxu0 0.0
    %v4337 = vand.u32 %v4073, 4294901760
    %v4338 = vsub.f32 %v4073, %v4337
    %4339 = vmatpush1.msra.mxu0 %v4338
    %4340 = vmatprep.subr.mxu0 0.0
    %v4341 = vand.u32 %v4072, 4294901760
    %v4342 = vsub.f32 %v4072, %v4341
    %4343 = vmatpush1.msra.mxu0 %v4342
    %4344 = vmatprep.subr.mxu0 0.0
    %v4345 = vand.u32 %v4071, 4294901760
    %v4346 = vsub.f32 %v4071, %v4345
    %4347 = vmatpush1.msra.mxu0 %v4346
    %4348 = vmatprep.subr.mxu0 0.0
    %4349 = vmatpush2.msra.mxu0 0.0
    %4350 = vmatprep.subr.mxu0 0.0
    %4351 = vmatpush2.msra.mxu0 0.0
    %4352 = vmatprep.subr.mxu0 0.0
    %4353 = vmatpush2.msra.mxu0 0.0
    %4354 = vmatprep.subr.mxu0 0.0
    %4355 = vmatpush2.msra.mxu0 0.0
    %4356 = vmatprep.subr.mxu0 0.0
    %4357 = vmatpush2.msra.mxu0 0.0
    %4358 = vmatprep.subr.mxu0 0.0
    %4359 = vmatpush2.msra.mxu0 0.0
    %4360 = vmatprep.subr.mxu0 0.0
    %4361 = vmatpush2.msra.mxu0 0.0
    %4362 = vmatprep.subr.mxu0 0.0
    %4363 = vmatpush2.msra.mxu0 0.0
    %4364 = vmatprep.subr.mxu0 0.0
    %4365 = vmatpush2.msra.mxu0 0.0
    %4366 = vmatprep.subr.mxu0 0.0
    %4367 = vmatpush2.msra.mxu0 0.0
    %4368 = vmatprep.subr.mxu0 0.0
    %4369 = vmatpush2.msra.mxu0 0.0
    %4370 = vmatprep.subr.mxu0 0.0
    %4371 = vmatpush2.msra.mxu0 0.0
    %4372 = vmatprep.subr.mxu0 0.0
    %4373 = vmatpush2.msra.mxu0 0.0
    %4374 = vmatprep.subr.mxu0 0.0
    %4375 = vmatpush2.msra.mxu0 0.0
    %4376 = vmatprep.subr.mxu0 0.0
    %4377 = vmatpush2.msra.mxu0 0.0
    %4378 = vmatprep.subr.mxu0 0.0
    %4379 = vmatpush2.msra.mxu0 0.0
    %4380 = vmatprep.mubr.f32.mxu0 0.0
    %v4381 = vand.u32 %v4085, 4294901760
    %v4382 = vsub.f32 %v4085, %v4381
    %4383 = vmatmul.mubr.f32.gmra.mxu0 %v4382
    %v4384 = vpop.f32.mrf.mxu0
    %v4385 = vadd.f32 %v4291, %v4384
    %v4386 = vpop.f32.mrf.mxu0
    %4387 = vmatprep.mubr.f32.mxu0 0.0
    %v4388 = vand.u32 %v4088, 4294901760
    %v4389 = vsub.f32 %v4088, %v4388
    %4390 = vmatmul.mubr.f32.gmra.mxu0 %v4389
    %v4391 = vpop.f32.mrf.mxu0
    %v4392 = vadd.f32 %v4297, %v4391
    %v4393 = vpop.f32.mrf.mxu0
    %4394 = vdwg.mxu0
    %4395 = vmatprep.subr.mxu0 0.0
    %4396 = vmatpush1.msra.mxu0 0.0
    %4397 = vmatprep.subr.mxu0 0.0
    %4398 = vmatpush1.msra.mxu0 0.0
    %4399 = vmatprep.subr.mxu0 0.0
    %4400 = vmatpush1.msra.mxu0 0.0
    %4401 = vmatprep.subr.mxu0 0.0
    %4402 = vmatpush1.msra.mxu0 0.0
    %4403 = vmatprep.subr.mxu0 0.0
    %4404 = vmatpush1.msra.mxu0 0.0
    %4405 = vmatprep.subr.mxu0 0.0
    %4406 = vmatpush1.msra.mxu0 0.0
    %4407 = vmatprep.subr.mxu0 0.0
    %4408 = vmatpush1.msra.mxu0 0.0
    %4409 = vmatprep.subr.mxu0 0.0
    %4410 = vmatpush1.msra.mxu0 0.0
    %4411 = vmatprep.subr.mxu0 0.0
    %v4412 = vand.u32 %v4078, 4294901760
    %4413 = vmatpush1.msra.mxu0 %v4412
    %4414 = vmatprep.subr.mxu0 0.0
    %v4415 = vand.u32 %v4077, 4294901760
    %4416 = vmatpush1.msra.mxu0 %v4415
    %4417 = vmatprep.subr.mxu0 0.0
    %v4418 = vand.u32 %v4076, 4294901760
    %4419 = vmatpush1.msra.mxu0 %v4418
    %4420 = vmatprep.subr.mxu0 0.0
    %v4421 = vand.u32 %v4075, 4294901760
    %4422 = vmatpush1.msra.mxu0 %v4421
    %4423 = vmatprep.subr.mxu0 0.0
    %v4424 = vand.u32 %v4074, 4294901760
    %4425 = vmatpush1.msra.mxu0 %v4424
    %4426 = vmatprep.subr.mxu0 0.0
    %v4427 = vand.u32 %v4073, 4294901760
    %4428 = vmatpush1.msra.mxu0 %v4427
    %4429 = vmatprep.subr.mxu0 0.0
    %v4430 = vand.u32 %v4072, 4294901760
    %4431 = vmatpush1.msra.mxu0 %v4430
    %4432 = vmatprep.subr.mxu0 0.0
    %v4433 = vand.u32 %v4071, 4294901760
    %4434 = vmatpush1.msra.mxu0 %v4433
    %4435 = vmatprep.subr.mxu0 0.0
    %4436 = vmatpush2.msra.mxu0 0.0
    %4437 = vmatprep.subr.mxu0 0.0
    %4438 = vmatpush2.msra.mxu0 0.0
    %4439 = vmatprep.subr.mxu0 0.0
    %4440 = vmatpush2.msra.mxu0 0.0
    %4441 = vmatprep.subr.mxu0 0.0
    %4442 = vmatpush2.msra.mxu0 0.0
    %4443 = vmatprep.subr.mxu0 0.0
    %4444 = vmatpush2.msra.mxu0 0.0
    %4445 = vmatprep.subr.mxu0 0.0
    %4446 = vmatpush2.msra.mxu0 0.0
    %4447 = vmatprep.subr.mxu0 0.0
    %4448 = vmatpush2.msra.mxu0 0.0
    %4449 = vmatprep.subr.mxu0 0.0
    %4450 = vmatpush2.msra.mxu0 0.0
    %4451 = vmatprep.subr.mxu0 0.0
    %4452 = vmatpush2.msra.mxu0 0.0
    %4453 = vmatprep.subr.mxu0 0.0
    %4454 = vmatpush2.msra.mxu0 0.0
    %4455 = vmatprep.subr.mxu0 0.0
    %4456 = vmatpush2.msra.mxu0 0.0
    %4457 = vmatprep.subr.mxu0 0.0
    %4458 = vmatpush2.msra.mxu0 0.0
    %4459 = vmatprep.subr.mxu0 0.0
    %4460 = vmatpush2.msra.mxu0 0.0
    %4461 = vmatprep.subr.mxu0 0.0
    %4462 = vmatpush2.msra.mxu0 0.0
    %4463 = vmatprep.subr.mxu0 0.0
    %4464 = vmatpush2.msra.mxu0 0.0
    %4465 = vmatprep.subr.mxu0 0.0
    %4466 = vmatpush2.msra.mxu0 0.0
    %4467 = vmatprep.mubr.f32.mxu0 0.0
    %v4468 = vand.u32 %v4085, 4294901760
    %v4469 = vsub.f32 %v4085, %v4468
    %v4470 = vand.u32 %v4469, 4294901760
    %4471 = vmatmul.mubr.f32.gmra.mxu0 %v4470
    %v4472 = vpop.f32.mrf.mxu0
    %v4473 = vadd.f32 %v4385, %v4472
    %v4474 = vpop.f32.mrf.mxu0
    %4475 = vmatprep.mubr.f32.mxu0 0.0
    %v4476 = vand.u32 %v4088, 4294901760
    %v4477 = vsub.f32 %v4088, %v4476
    %v4478 = vand.u32 %v4477, 4294901760
    %4479 = vmatmul.mubr.f32.gmra.mxu0 %v4478
    %v4480 = vpop.f32.mrf.mxu0
    %v4481 = vadd.f32 %v4392, %v4480
    %v4482 = vpop.f32.mrf.mxu0
    %4483 = vdwg.mxu0
    %4484 = vmatprep.subr.mxu0 0.0
    %4485 = vmatpush1.msra.mxu0 0.0
    %4486 = vmatprep.subr.mxu0 0.0
    %4487 = vmatpush1.msra.mxu0 0.0
    %4488 = vmatprep.subr.mxu0 0.0
    %4489 = vmatpush1.msra.mxu0 0.0
    %4490 = vmatprep.subr.mxu0 0.0
    %4491 = vmatpush1.msra.mxu0 0.0
    %4492 = vmatprep.subr.mxu0 0.0
    %4493 = vmatpush1.msra.mxu0 0.0
    %4494 = vmatprep.subr.mxu0 0.0
    %4495 = vmatpush1.msra.mxu0 0.0
    %4496 = vmatprep.subr.mxu0 0.0
    %4497 = vmatpush1.msra.mxu0 0.0
    %4498 = vmatprep.subr.mxu0 0.0
    %4499 = vmatpush1.msra.mxu0 0.0
    %4500 = vmatprep.subr.mxu0 0.0
    %v4501 = vand.u32 %v4078, 4294901760
    %v4502 = vsub.f32 %v4078, %v4501
    %v4503 = vand.u32 %v4502, 4294901760
    %4504 = vmatpush1.msra.mxu0 %v4503
    %4505 = vmatprep.subr.mxu0 0.0
    %v4506 = vand.u32 %v4077, 4294901760
    %v4507 = vsub.f32 %v4077, %v4506
    %v4508 = vand.u32 %v4507, 4294901760
    %4509 = vmatpush1.msra.mxu0 %v4508
    %4510 = vmatprep.subr.mxu0 0.0
    %v4511 = vand.u32 %v4076, 4294901760
    %v4512 = vsub.f32 %v4076, %v4511
    %v4513 = vand.u32 %v4512, 4294901760
    %4514 = vmatpush1.msra.mxu0 %v4513
    %4515 = vmatprep.subr.mxu0 0.0
    %v4516 = vand.u32 %v4075, 4294901760
    %v4517 = vsub.f32 %v4075, %v4516
    %v4518 = vand.u32 %v4517, 4294901760
    %4519 = vmatpush1.msra.mxu0 %v4518
    %4520 = vmatprep.subr.mxu0 0.0
    %v4521 = vand.u32 %v4074, 4294901760
    %v4522 = vsub.f32 %v4074, %v4521
    %v4523 = vand.u32 %v4522, 4294901760
    %4524 = vmatpush1.msra.mxu0 %v4523
    %4525 = vmatprep.subr.mxu0 0.0
    %v4526 = vand.u32 %v4073, 4294901760
    %v4527 = vsub.f32 %v4073, %v4526
    %v4528 = vand.u32 %v4527, 4294901760
    %4529 = vmatpush1.msra.mxu0 %v4528
    %4530 = vmatprep.subr.mxu0 0.0
    %v4531 = vand.u32 %v4072, 4294901760
    %v4532 = vsub.f32 %v4072, %v4531
    %v4533 = vand.u32 %v4532, 4294901760
    %4534 = vmatpush1.msra.mxu0 %v4533
    %4535 = vmatprep.subr.mxu0 0.0
    %v4536 = vand.u32 %v4071, 4294901760
    %v4537 = vsub.f32 %v4071, %v4536
    %v4538 = vand.u32 %v4537, 4294901760
    %4539 = vmatpush1.msra.mxu0 %v4538
    %4540 = vmatprep.subr.mxu0 0.0
    %4541 = vmatpush2.msra.mxu0 0.0
    %4542 = vmatprep.subr.mxu0 0.0
    %4543 = vmatpush2.msra.mxu0 0.0
    %4544 = vmatprep.subr.mxu0 0.0
    %4545 = vmatpush2.msra.mxu0 0.0
    %4546 = vmatprep.subr.mxu0 0.0
    %4547 = vmatpush2.msra.mxu0 0.0
    %4548 = vmatprep.subr.mxu0 0.0
    %4549 = vmatpush2.msra.mxu0 0.0
    %4550 = vmatprep.subr.mxu0 0.0
    %4551 = vmatpush2.msra.mxu0 0.0
    %4552 = vmatprep.subr.mxu0 0.0
    %4553 = vmatpush2.msra.mxu0 0.0
    %4554 = vmatprep.subr.mxu0 0.0
    %4555 = vmatpush2.msra.mxu0 0.0
    %4556 = vmatprep.subr.mxu0 0.0
    %4557 = vmatpush2.msra.mxu0 0.0
    %4558 = vmatprep.subr.mxu0 0.0
    %4559 = vmatpush2.msra.mxu0 0.0
    %4560 = vmatprep.subr.mxu0 0.0
    %4561 = vmatpush2.msra.mxu0 0.0
    %4562 = vmatprep.subr.mxu0 0.0
    %4563 = vmatpush2.msra.mxu0 0.0
    %4564 = vmatprep.subr.mxu0 0.0
    %4565 = vmatpush2.msra.mxu0 0.0
    %4566 = vmatprep.subr.mxu0 0.0
    %4567 = vmatpush2.msra.mxu0 0.0
    %4568 = vmatprep.subr.mxu0 0.0
    %4569 = vmatpush2.msra.mxu0 0.0
    %4570 = vmatprep.subr.mxu0 0.0
    %4571 = vmatpush2.msra.mxu0 0.0
    %4572 = vmatprep.mubr.f32.mxu0 0.0
    %v4573 = vand.u32 %v4085, 4294901760
    %4574 = vmatmul.mubr.f32.gmra.mxu0 %v4573
    %v4575 = vpop.f32.mrf.mxu0
    %v4576 = vadd.f32 %v4473, %v4575
    %v4577 = vpop.f32.mrf.mxu0
    %4578 = vmatprep.mubr.f32.mxu0 0.0
    %v4579 = vand.u32 %v4088, 4294901760
    %4580 = vmatmul.mubr.f32.gmra.mxu0 %v4579
    %v4581 = vpop.f32.mrf.mxu0
    %v4582 = vadd.f32 %v4481, %v4581
    %v4583 = vpop.f32.mrf.mxu0
    %4584 = vdwg.mxu0
    %4585 = vmatprep.subr.mxu0 0.0
    %4586 = vmatpush1.msra.mxu0 0.0
    %4587 = vmatprep.subr.mxu0 0.0
    %4588 = vmatpush1.msra.mxu0 0.0
    %4589 = vmatprep.subr.mxu0 0.0
    %4590 = vmatpush1.msra.mxu0 0.0
    %4591 = vmatprep.subr.mxu0 0.0
    %4592 = vmatpush1.msra.mxu0 0.0
    %4593 = vmatprep.subr.mxu0 0.0
    %4594 = vmatpush1.msra.mxu0 0.0
    %4595 = vmatprep.subr.mxu0 0.0
    %4596 = vmatpush1.msra.mxu0 0.0
    %4597 = vmatprep.subr.mxu0 0.0
    %4598 = vmatpush1.msra.mxu0 0.0
    %4599 = vmatprep.subr.mxu0 0.0
    %4600 = vmatpush1.msra.mxu0 0.0
    %4601 = vmatprep.subr.mxu0 0.0
    %v4602 = vand.u32 %v4078, 4294901760
    %4603 = vmatpush1.msra.mxu0 %v4602
    %4604 = vmatprep.subr.mxu0 0.0
    %v4605 = vand.u32 %v4077, 4294901760
    %4606 = vmatpush1.msra.mxu0 %v4605
    %4607 = vmatprep.subr.mxu0 0.0
    %v4608 = vand.u32 %v4076, 4294901760
    %4609 = vmatpush1.msra.mxu0 %v4608
    %4610 = vmatprep.subr.mxu0 0.0
    %v4611 = vand.u32 %v4075, 4294901760
    %4612 = vmatpush1.msra.mxu0 %v4611
    %4613 = vmatprep.subr.mxu0 0.0
    %v4614 = vand.u32 %v4074, 4294901760
    %4615 = vmatpush1.msra.mxu0 %v4614
    %4616 = vmatprep.subr.mxu0 0.0
    %v4617 = vand.u32 %v4073, 4294901760
    %4618 = vmatpush1.msra.mxu0 %v4617
    %4619 = vmatprep.subr.mxu0 0.0
    %v4620 = vand.u32 %v4072, 4294901760
    %4621 = vmatpush1.msra.mxu0 %v4620
    %4622 = vmatprep.subr.mxu0 0.0
    %v4623 = vand.u32 %v4071, 4294901760
    %4624 = vmatpush1.msra.mxu0 %v4623
    %4625 = vmatprep.subr.mxu0 0.0
    %4626 = vmatpush2.msra.mxu0 0.0
    %4627 = vmatprep.subr.mxu0 0.0
    %4628 = vmatpush2.msra.mxu0 0.0
    %4629 = vmatprep.subr.mxu0 0.0
    %4630 = vmatpush2.msra.mxu0 0.0
    %4631 = vmatprep.subr.mxu0 0.0
    %4632 = vmatpush2.msra.mxu0 0.0
    %4633 = vmatprep.subr.mxu0 0.0
    %4634 = vmatpush2.msra.mxu0 0.0
    %4635 = vmatprep.subr.mxu0 0.0
    %4636 = vmatpush2.msra.mxu0 0.0
    %4637 = vmatprep.subr.mxu0 0.0
    %4638 = vmatpush2.msra.mxu0 0.0
    %4639 = vmatprep.subr.mxu0 0.0
    %4640 = vmatpush2.msra.mxu0 0.0
    %4641 = vmatprep.subr.mxu0 0.0
    %4642 = vmatpush2.msra.mxu0 0.0
    %4643 = vmatprep.subr.mxu0 0.0
    %4644 = vmatpush2.msra.mxu0 0.0
    %4645 = vmatprep.subr.mxu0 0.0
    %4646 = vmatpush2.msra.mxu0 0.0
    %4647 = vmatprep.subr.mxu0 0.0
    %4648 = vmatpush2.msra.mxu0 0.0
    %4649 = vmatprep.subr.mxu0 0.0
    %4650 = vmatpush2.msra.mxu0 0.0
    %4651 = vmatprep.subr.mxu0 0.0
    %4652 = vmatpush2.msra.mxu0 0.0
    %4653 = vmatprep.subr.mxu0 0.0
    %4654 = vmatpush2.msra.mxu0 0.0
    %4655 = vmatprep.subr.mxu0 0.0
    %4656 = vmatpush2.msra.mxu0 0.0
    %4657 = vmatprep.mubr.f32.mxu0 0.0
    %v4658 = vand.u32 %v4085, 4294901760
    %4659 = vmatmul.mubr.f32.gmra.mxu0 %v4658
    %v4660 = vpop.f32.mrf.mxu0
    %v4661 = vadd.f32 %v4576, %v4660
    %v4662 = vpop.f32.mrf.mxu0
    %4663 = vmatprep.mubr.f32.mxu0 0.0
    %v4664 = vand.u32 %v4088, 4294901760
    %4665 = vmatmul.mubr.f32.gmra.mxu0 %v4664
    %v4666 = vpop.f32.mrf.mxu0
    %v4667 = vadd.f32 %v4582, %v4666
    %v4668 = vpop.f32.mrf.mxu0
    %4669 = vdwg.mxu0
    %v4670 = vmax.f32 %v4661, 0.0
    %v4671 = vmax.f32 %v4667, 0.0
    %v4672 = vand.u32 2147483647, %v4661
    %v4673 = vand.u32 2147483647, %v4667
    %v4674 = vsub.f32 0.0, %v4672
    %v4675 = vsub.f32 0.0, %v4673
    %v4676 = vmul.f32 %v4674, 1.442695
    %v4677 = vpow.pop %v4676
    %v4678 = vmul.f32 %v4675, 1.442695
    %v4679 = vpow.pop %v4678
    %v4680 = vadd.f32 %v4677, 1.0
    %v4681 = vlog2.pop %v4680
    %v4682 = vmul.f32 %v4681, 0.6931472
    %v4683 = vmul.f32 -0.5, %v4677
    %v4684 = vadd.f32 %v4683, 1.0
    %v4685 = vmul.f32 %v4684, %v4677
    %v4686 = vand.u32 2147483647, %v4677
    %vm4687 = vcmp.lt.f32.partialorder %v4686, 0.0004427343
    %v4688 = vsel %vm4687, %v4685, %v4682
    %v4689 = vadd.f32 %v4679, 1.0
    %v4690 = vlog2.pop %v4689
    %v4691 = vmul.f32 %v4690, 0.6931472
    %v4692 = vmul.f32 -0.5, %v4679
    %v4693 = vadd.f32 %v4692, 1.0
    %v4694 = vmul.f32 %v4693, %v4679
    %v4695 = vand.u32 2147483647, %v4679
    %vm4696 = vcmp.lt.f32.partialorder %v4695, 0.0004427343
    %v4697 = vsel %vm4696, %v4694, %v4691
    %v4698 = vadd.f32 %v4670, %v4688
    %v4699 = vadd.f32 %v4671, %v4697
    %v4700 = vld [vmem:[%s3464 + $0xa8] sm:$0xff]
    %v4701 = vld [vmem:[%s3464 + $0xb0] sm:$0xff]
    %v4703 = vsel %vm1196, %v4700, 0
    %v4706 = vsel %vm1196, %v4701, 0
    %4708 = vmatprep.subr.mxu0 0.0
    %4709 = vmatpush1.xpose.msra.mxu0 0.0
    %4710 = vmatprep.subr.mxu0 0.0
    %4711 = vmatpush1.xpose.msra.mxu0 0.0
    %4712 = vmatprep.subr.mxu0 0.0
    %4713 = vmatpush1.xpose.msra.mxu0 0.0
    %4714 = vmatprep.subr.mxu0 0.0
    %4715 = vmatpush1.xpose.msra.mxu0 0.0
    %4716 = vmatprep.subr.mxu0 0.0
    %4717 = vmatpush1.xpose.msra.mxu0 0.0
    %4718 = vmatprep.subr.mxu0 0.0
    %4719 = vmatpush1.xpose.msra.mxu0 0.0
    %4720 = vmatprep.subr.mxu0 0.0
    %4721 = vmatpush1.xpose.msra.mxu0 0.0
    %4722 = vmatprep.subr.mxu0 0.0
    %4723 = vmatpush1.xpose.msra.mxu0 0.0
    %4724 = vmatprep.subr.mxu0 0.0
    %4725 = vmatpush1.xpose.msra.mxu0 0.0
    %4726 = vmatprep.subr.mxu0 0.0
    %4727 = vmatpush1.xpose.msra.mxu0 0.0
    %4728 = vmatprep.subr.mxu0 0.0
    %4729 = vmatpush1.xpose.msra.mxu0 0.0
    %4730 = vmatprep.subr.mxu0 0.0
    %4731 = vmatpush1.xpose.msra.mxu0 0.0
    %4732 = vmatprep.subr.mxu0 0.0
    %4733 = vmatpush1.xpose.msra.mxu0 0.0
    %4734 = vmatprep.subr.mxu0 0.0
    %4735 = vmatpush1.xpose.msra.mxu0 0.0
    %4736 = vmatprep.subr.mxu0 0.0
    %v4737 = vand.u32 %v4088, 4294901760
    %4738 = vmatpush1.xpose.msra.mxu0 %v4737
    %4739 = vmatprep.subr.mxu0 0.0
    %v4740 = vand.u32 %v4085, 4294901760
    %4741 = vmatpush1.xpose.msra.mxu0 %v4740
    %4742 = vmatprep.subr.mxu0 0.0
    %4743 = vmatpush2.xpose.msra.mxu0 0.0
    %4744 = vmatprep.subr.mxu0 0.0
    %4745 = vmatpush2.xpose.msra.mxu0 0.0
    %4746 = vmatprep.subr.mxu0 0.0
    %4747 = vmatpush2.xpose.msra.mxu0 0.0
    %4748 = vmatprep.subr.mxu0 0.0
    %4749 = vmatpush2.xpose.msra.mxu0 0.0
    %4750 = vmatprep.subr.mxu0 0.0
    %4751 = vmatpush2.xpose.msra.mxu0 0.0
    %4752 = vmatprep.subr.mxu0 0.0
    %4753 = vmatpush2.xpose.msra.mxu0 0.0
    %4754 = vmatprep.subr.mxu0 0.0
    %4755 = vmatpush2.xpose.msra.mxu0 0.0
    %4756 = vmatprep.subr.mxu0 0.0
    %4757 = vmatpush2.xpose.msra.mxu0 0.0
    %4758 = vmatprep.subr.mxu0 0.0
    %4759 = vmatpush2.xpose.msra.mxu0 0.0
    %4760 = vmatprep.subr.mxu0 0.0
    %4761 = vmatpush2.xpose.msra.mxu0 0.0
    %4762 = vmatprep.subr.mxu0 0.0
    %4763 = vmatpush2.xpose.msra.mxu0 0.0
    %4764 = vmatprep.subr.mxu0 0.0
    %4765 = vmatpush2.xpose.msra.mxu0 0.0
    %4766 = vmatprep.subr.mxu0 0.0
    %4767 = vmatpush2.xpose.msra.mxu0 0.0
    %4768 = vmatprep.subr.mxu0 0.0
    %4769 = vmatpush2.xpose.msra.mxu0 0.0
    %4770 = vmatprep.subr.mxu0 0.0
    %4771 = vmatpush2.xpose.msra.mxu0 0.0
    %4772 = vmatprep.subr.mxu0 0.0
    %4773 = vmatpush2.xpose.msra.mxu0 0.0
    %4774 = vmatprep.mubr.f32.mxu0 0.0
    %v4775 = vand.u32 %v4703, 4294901760
    %v4776 = vsub.f32 %v4703, %v4775
    %v4777 = vand.u32 %v4776, 4294901760
    %v4778 = vsub.f32 %v4776, %v4777
    %v4779 = vand.u32 %v4778, 4294901760
    %4780 = vmatmul.mubr.f32.gmra.mxu0 %v4779
    %v4781 = vpop.f32.mrf.mxu0
    %v4782 = vadd.f32 0.0, %v4781
    %v4783 = vpop.f32.mrf.mxu0
    %4784 = vmatprep.mubr.f32.mxu0 0.0
    %v4785 = vand.u32 %v4706, 4294901760
    %v4786 = vsub.f32 %v4706, %v4785
    %v4787 = vand.u32 %v4786, 4294901760
    %v4788 = vsub.f32 %v4786, %v4787
    %v4789 = vand.u32 %v4788, 4294901760
    %4790 = vmatmul.mubr.f32.gmra.mxu0 %v4789
    %v4791 = vpop.f32.mrf.mxu0
    %v4792 = vadd.f32 0.0, %v4791
    %v4793 = vpop.f32.mrf.mxu0
    %4794 = vdwg.mxu0
    %4795 = vmatprep.subr.mxu0 0.0
    %4796 = vmatpush1.xpose.msra.mxu0 0.0
    %4797 = vmatprep.subr.mxu0 0.0
    %4798 = vmatpush1.xpose.msra.mxu0 0.0
    %4799 = vmatprep.subr.mxu0 0.0
    %4800 = vmatpush1.xpose.msra.mxu0 0.0
    %4801 = vmatprep.subr.mxu0 0.0
    %4802 = vmatpush1.xpose.msra.mxu0 0.0
    %4803 = vmatprep.subr.mxu0 0.0
    %4804 = vmatpush1.xpose.msra.mxu0 0.0
    %4805 = vmatprep.subr.mxu0 0.0
    %4806 = vmatpush1.xpose.msra.mxu0 0.0
    %4807 = vmatprep.subr.mxu0 0.0
    %4808 = vmatpush1.xpose.msra.mxu0 0.0
    %4809 = vmatprep.subr.mxu0 0.0
    %4810 = vmatpush1.xpose.msra.mxu0 0.0
    %4811 = vmatprep.subr.mxu0 0.0
    %4812 = vmatpush1.xpose.msra.mxu0 0.0
    %4813 = vmatprep.subr.mxu0 0.0
    %4814 = vmatpush1.xpose.msra.mxu0 0.0
    %4815 = vmatprep.subr.mxu0 0.0
    %4816 = vmatpush1.xpose.msra.mxu0 0.0
    %4817 = vmatprep.subr.mxu0 0.0
    %4818 = vmatpush1.xpose.msra.mxu0 0.0
    %4819 = vmatprep.subr.mxu0 0.0
    %4820 = vmatpush1.xpose.msra.mxu0 0.0
    %4821 = vmatprep.subr.mxu0 0.0
    %4822 = vmatpush1.xpose.msra.mxu0 0.0
    %4823 = vmatprep.subr.mxu0 0.0
    %v4824 = vand.u32 %v4088, 4294901760
    %v4825 = vsub.f32 %v4088, %v4824
    %v4826 = vand.u32 %v4825, 4294901760
    %v4827 = vsub.f32 %v4825, %v4826
    %v4828 = vand.u32 %v4827, 4294901760
    %4829 = vmatpush1.xpose.msra.mxu0 %v4828
    %4830 = vmatprep.subr.mxu0 0.0
    %v4831 = vand.u32 %v4085, 4294901760
    %v4832 = vsub.f32 %v4085, %v4831
    %v4833 = vand.u32 %v4832, 4294901760
    %v4834 = vsub.f32 %v4832, %v4833
    %v4835 = vand.u32 %v4834, 4294901760
    %4836 = vmatpush1.xpose.msra.mxu0 %v4835
    %4837 = vmatprep.subr.mxu0 0.0
    %4838 = vmatpush2.xpose.msra.mxu0 0.0
    %4839 = vmatprep.subr.mxu0 0.0
    %4840 = vmatpush2.xpose.msra.mxu0 0.0
    %4841 = vmatprep.subr.mxu0 0.0
    %4842 = vmatpush2.xpose.msra.mxu0 0.0
    %4843 = vmatprep.subr.mxu0 0.0
    %4844 = vmatpush2.xpose.msra.mxu0 0.0
    %4845 = vmatprep.subr.mxu0 0.0
    %4846 = vmatpush2.xpose.msra.mxu0 0.0
    %4847 = vmatprep.subr.mxu0 0.0
    %4848 = vmatpush2.xpose.msra.mxu0 0.0
    %4849 = vmatprep.subr.mxu0 0.0
    %4850 = vmatpush2.xpose.msra.mxu0 0.0
    %4851 = vmatprep.subr.mxu0 0.0
    %4852 = vmatpush2.xpose.msra.mxu0 0.0
    %4853 = vmatprep.subr.mxu0 0.0
    %4854 = vmatpush2.xpose.msra.mxu0 0.0
    %4855 = vmatprep.subr.mxu0 0.0
    %4856 = vmatpush2.xpose.msra.mxu0 0.0
    %4857 = vmatprep.subr.mxu0 0.0
    %4858 = vmatpush2.xpose.msra.mxu0 0.0
    %4859 = vmatprep.subr.mxu0 0.0
    %4860 = vmatpush2.xpose.msra.mxu0 0.0
    %4861 = vmatprep.subr.mxu0 0.0
    %4862 = vmatpush2.xpose.msra.mxu0 0.0
    %4863 = vmatprep.subr.mxu0 0.0
    %4864 = vmatpush2.xpose.msra.mxu0 0.0
    %4865 = vmatprep.subr.mxu0 0.0
    %4866 = vmatpush2.xpose.msra.mxu0 0.0
    %4867 = vmatprep.subr.mxu0 0.0
    %4868 = vmatpush2.xpose.msra.mxu0 0.0
    %4869 = vmatprep.mubr.f32.mxu0 0.0
    %v4870 = vand.u32 %v4703, 4294901760
    %4871 = vmatmul.mubr.f32.gmra.mxu0 %v4870
    %v4872 = vpop.f32.mrf.mxu0
    %v4873 = vadd.f32 %v4782, %v4872
    %v4874 = vpop.f32.mrf.mxu0
    %4875 = vmatprep.mubr.f32.mxu0 0.0
    %v4876 = vand.u32 %v4706, 4294901760
    %4877 = vmatmul.mubr.f32.gmra.mxu0 %v4876
    %v4878 = vpop.f32.mrf.mxu0
    %v4879 = vadd.f32 %v4792, %v4878
    %v4880 = vpop.f32.mrf.mxu0
    %4881 = vdwg.mxu0
    %4882 = vmatprep.subr.mxu0 0.0
    %4883 = vmatpush1.xpose.msra.mxu0 0.0
    %4884 = vmatprep.subr.mxu0 0.0
    %4885 = vmatpush1.xpose.msra.mxu0 0.0
    %4886 = vmatprep.subr.mxu0 0.0
    %4887 = vmatpush1.xpose.msra.mxu0 0.0
    %4888 = vmatprep.subr.mxu0 0.0
    %4889 = vmatpush1.xpose.msra.mxu0 0.0
    %4890 = vmatprep.subr.mxu0 0.0
    %4891 = vmatpush1.xpose.msra.mxu0 0.0
    %4892 = vmatprep.subr.mxu0 0.0
    %4893 = vmatpush1.xpose.msra.mxu0 0.0
    %4894 = vmatprep.subr.mxu0 0.0
    %4895 = vmatpush1.xpose.msra.mxu0 0.0
    %4896 = vmatprep.subr.mxu0 0.0
    %4897 = vmatpush1.xpose.msra.mxu0 0.0
    %4898 = vmatprep.subr.mxu0 0.0
    %4899 = vmatpush1.xpose.msra.mxu0 0.0
    %4900 = vmatprep.subr.mxu0 0.0
    %4901 = vmatpush1.xpose.msra.mxu0 0.0
    %4902 = vmatprep.subr.mxu0 0.0
    %4903 = vmatpush1.xpose.msra.mxu0 0.0
    %4904 = vmatprep.subr.mxu0 0.0
    %4905 = vmatpush1.xpose.msra.mxu0 0.0
    %4906 = vmatprep.subr.mxu0 0.0
    %4907 = vmatpush1.xpose.msra.mxu0 0.0
    %4908 = vmatprep.subr.mxu0 0.0
    %4909 = vmatpush1.xpose.msra.mxu0 0.0
    %4910 = vmatprep.subr.mxu0 0.0
    %v4911 = vand.u32 %v4088, 4294901760
    %v4912 = vsub.f32 %v4088, %v4911
    %4913 = vmatpush1.xpose.msra.mxu0 %v4912
    %4914 = vmatprep.subr.mxu0 0.0
    %v4915 = vand.u32 %v4085, 4294901760
    %v4916 = vsub.f32 %v4085, %v4915
    %4917 = vmatpush1.xpose.msra.mxu0 %v4916
    %4918 = vmatprep.subr.mxu0 0.0
    %4919 = vmatpush2.xpose.msra.mxu0 0.0
    %4920 = vmatprep.subr.mxu0 0.0
    %4921 = vmatpush2.xpose.msra.mxu0 0.0
    %4922 = vmatprep.subr.mxu0 0.0
    %4923 = vmatpush2.xpose.msra.mxu0 0.0
    %4924 = vmatprep.subr.mxu0 0.0
    %4925 = vmatpush2.xpose.msra.mxu0 0.0
    %4926 = vmatprep.subr.mxu0 0.0
    %4927 = vmatpush2.xpose.msra.mxu0 0.0
    %4928 = vmatprep.subr.mxu0 0.0
    %4929 = vmatpush2.xpose.msra.mxu0 0.0
    %4930 = vmatprep.subr.mxu0 0.0
    %4931 = vmatpush2.xpose.msra.mxu0 0.0
    %4932 = vmatprep.subr.mxu0 0.0
    %4933 = vmatpush2.xpose.msra.mxu0 0.0
    %4934 = vmatprep.subr.mxu0 0.0
    %4935 = vmatpush2.xpose.msra.mxu0 0.0
    %4936 = vmatprep.subr.mxu0 0.0
    %4937 = vmatpush2.xpose.msra.mxu0 0.0
    %4938 = vmatprep.subr.mxu0 0.0
    %4939 = vmatpush2.xpose.msra.mxu0 0.0
    %4940 = vmatprep.subr.mxu0 0.0
    %4941 = vmatpush2.xpose.msra.mxu0 0.0
    %4942 = vmatprep.subr.mxu0 0.0
    %4943 = vmatpush2.xpose.msra.mxu0 0.0
    %4944 = vmatprep.subr.mxu0 0.0
    %4945 = vmatpush2.xpose.msra.mxu0 0.0
    %4946 = vmatprep.subr.mxu0 0.0
    %4947 = vmatpush2.xpose.msra.mxu0 0.0
    %4948 = vmatprep.subr.mxu0 0.0
    %4949 = vmatpush2.xpose.msra.mxu0 0.0
    %4950 = vmatprep.mubr.f32.mxu0 0.0
    %v4951 = vand.u32 %v4703, 4294901760
    %v4952 = vsub.f32 %v4703, %v4951
    %4953 = vmatmul.mubr.f32.gmra.mxu0 %v4952
    %v4954 = vpop.f32.mrf.mxu0
    %v4955 = vadd.f32 %v4873, %v4954
    %v4956 = vpop.f32.mrf.mxu0
    %4957 = vmatprep.mubr.f32.mxu0 0.0
    %v4958 = vand.u32 %v4706, 4294901760
    %v4959 = vsub.f32 %v4706, %v4958
    %4960 = vmatmul.mubr.f32.gmra.mxu0 %v4959
    %v4961 = vpop.f32.mrf.mxu0
    %v4962 = vadd.f32 %v4879, %v4961
    %v4963 = vpop.f32.mrf.mxu0
    %4964 = vdwg.mxu0
    %4965 = vmatprep.subr.mxu0 0.0
    %4966 = vmatpush1.xpose.msra.mxu0 0.0
    %4967 = vmatprep.subr.mxu0 0.0
    %4968 = vmatpush1.xpose.msra.mxu0 0.0
    %4969 = vmatprep.subr.mxu0 0.0
    %4970 = vmatpush1.xpose.msra.mxu0 0.0
    %4971 = vmatprep.subr.mxu0 0.0
    %4972 = vmatpush1.xpose.msra.mxu0 0.0
    %4973 = vmatprep.subr.mxu0 0.0
    %4974 = vmatpush1.xpose.msra.mxu0 0.0
    %4975 = vmatprep.subr.mxu0 0.0
    %4976 = vmatpush1.xpose.msra.mxu0 0.0
    %4977 = vmatprep.subr.mxu0 0.0
    %4978 = vmatpush1.xpose.msra.mxu0 0.0
    %4979 = vmatprep.subr.mxu0 0.0
    %4980 = vmatpush1.xpose.msra.mxu0 0.0
    %4981 = vmatprep.subr.mxu0 0.0
    %4982 = vmatpush1.xpose.msra.mxu0 0.0
    %4983 = vmatprep.subr.mxu0 0.0
    %4984 = vmatpush1.xpose.msra.mxu0 0.0
    %4985 = vmatprep.subr.mxu0 0.0
    %4986 = vmatpush1.xpose.msra.mxu0 0.0
    %4987 = vmatprep.subr.mxu0 0.0
    %4988 = vmatpush1.xpose.msra.mxu0 0.0
    %4989 = vmatprep.subr.mxu0 0.0
    %4990 = vmatpush1.xpose.msra.mxu0 0.0
    %4991 = vmatprep.subr.mxu0 0.0
    %4992 = vmatpush1.xpose.msra.mxu0 0.0
    %4993 = vmatprep.subr.mxu0 0.0
    %v4994 = vand.u32 %v4088, 4294901760
    %4995 = vmatpush1.xpose.msra.mxu0 %v4994
    %4996 = vmatprep.subr.mxu0 0.0
    %v4997 = vand.u32 %v4085, 4294901760
    %4998 = vmatpush1.xpose.msra.mxu0 %v4997
    %4999 = vmatprep.subr.mxu0 0.0
    %5000 = vmatpush2.xpose.msra.mxu0 0.0
    %5001 = vmatprep.subr.mxu0 0.0
    %5002 = vmatpush2.xpose.msra.mxu0 0.0
    %5003 = vmatprep.subr.mxu0 0.0
    %5004 = vmatpush2.xpose.msra.mxu0 0.0
    %5005 = vmatprep.subr.mxu0 0.0
    %5006 = vmatpush2.xpose.msra.mxu0 0.0
    %5007 = vmatprep.subr.mxu0 0.0
    %5008 = vmatpush2.xpose.msra.mxu0 0.0
    %5009 = vmatprep.subr.mxu0 0.0
    %5010 = vmatpush2.xpose.msra.mxu0 0.0
    %5011 = vmatprep.subr.mxu0 0.0
    %5012 = vmatpush2.xpose.msra.mxu0 0.0
    %5013 = vmatprep.subr.mxu0 0.0
    %5014 = vmatpush2.xpose.msra.mxu0 0.0
    %5015 = vmatprep.subr.mxu0 0.0
    %5016 = vmatpush2.xpose.msra.mxu0 0.0
    %5017 = vmatprep.subr.mxu0 0.0
    %5018 = vmatpush2.xpose.msra.mxu0 0.0
    %5019 = vmatprep.subr.mxu0 0.0
    %5020 = vmatpush2.xpose.msra.mxu0 0.0
    %5021 = vmatprep.subr.mxu0 0.0
    %5022 = vmatpush2.xpose.msra.mxu0 0.0
    %5023 = vmatprep.subr.mxu0 0.0
    %5024 = vmatpush2.xpose.msra.mxu0 0.0
    %5025 = vmatprep.subr.mxu0 0.0
    %5026 = vmatpush2.xpose.msra.mxu0 0.0
    %5027 = vmatprep.subr.mxu0 0.0
    %5028 = vmatpush2.xpose.msra.mxu0 0.0
    %5029 = vmatprep.subr.mxu0 0.0
    %5030 = vmatpush2.xpose.msra.mxu0 0.0
    %5031 = vmatprep.mubr.f32.mxu0 0.0
    %v5032 = vand.u32 %v4703, 4294901760
    %v5033 = vsub.f32 %v4703, %v5032
    %v5034 = vand.u32 %v5033, 4294901760
    %5035 = vmatmul.mubr.f32.gmra.mxu0 %v5034
    %v5036 = vpop.f32.mrf.mxu0
    %v5037 = vadd.f32 %v4955, %v5036
    %v5038 = vpop.f32.mrf.mxu0
    %5039 = vmatprep.mubr.f32.mxu0 0.0
    %v5040 = vand.u32 %v4706, 4294901760
    %v5041 = vsub.f32 %v4706, %v5040
    %v5042 = vand.u32 %v5041, 4294901760
    %5043 = vmatmul.mubr.f32.gmra.mxu0 %v5042
    %v5044 = vpop.f32.mrf.mxu0
    %v5045 = vadd.f32 %v4962, %v5044
    %v5046 = vpop.f32.mrf.mxu0
    %5047 = vdwg.mxu0
    %5048 = vmatprep.subr.mxu0 0.0
    %5049 = vmatpush1.xpose.msra.mxu0 0.0
    %5050 = vmatprep.subr.mxu0 0.0
    %5051 = vmatpush1.xpose.msra.mxu0 0.0
    %5052 = vmatprep.subr.mxu0 0.0
    %5053 = vmatpush1.xpose.msra.mxu0 0.0
    %5054 = vmatprep.subr.mxu0 0.0
    %5055 = vmatpush1.xpose.msra.mxu0 0.0
    %5056 = vmatprep.subr.mxu0 0.0
    %5057 = vmatpush1.xpose.msra.mxu0 0.0
    %5058 = vmatprep.subr.mxu0 0.0
    %5059 = vmatpush1.xpose.msra.mxu0 0.0
    %5060 = vmatprep.subr.mxu0 0.0
    %5061 = vmatpush1.xpose.msra.mxu0 0.0
    %5062 = vmatprep.subr.mxu0 0.0
    %5063 = vmatpush1.xpose.msra.mxu0 0.0
    %5064 = vmatprep.subr.mxu0 0.0
    %5065 = vmatpush1.xpose.msra.mxu0 0.0
    %5066 = vmatprep.subr.mxu0 0.0
    %5067 = vmatpush1.xpose.msra.mxu0 0.0
    %5068 = vmatprep.subr.mxu0 0.0
    %5069 = vmatpush1.xpose.msra.mxu0 0.0
    %5070 = vmatprep.subr.mxu0 0.0
    %5071 = vmatpush1.xpose.msra.mxu0 0.0
    %5072 = vmatprep.subr.mxu0 0.0
    %5073 = vmatpush1.xpose.msra.mxu0 0.0
    %5074 = vmatprep.subr.mxu0 0.0
    %5075 = vmatpush1.xpose.msra.mxu0 0.0
    %5076 = vmatprep.subr.mxu0 0.0
    %v5077 = vand.u32 %v4088, 4294901760
    %v5078 = vsub.f32 %v4088, %v5077
    %v5079 = vand.u32 %v5078, 4294901760
    %5080 = vmatpush1.xpose.msra.mxu0 %v5079
    %5081 = vmatprep.subr.mxu0 0.0
    %v5082 = vand.u32 %v4085, 4294901760
    %v5083 = vsub.f32 %v4085, %v5082
    %v5084 = vand.u32 %v5083, 4294901760
    %5085 = vmatpush1.xpose.msra.mxu0 %v5084
    %5086 = vmatprep.subr.mxu0 0.0
    %5087 = vmatpush2.xpose.msra.mxu0 0.0
    %5088 = vmatprep.subr.mxu0 0.0
    %5089 = vmatpush2.xpose.msra.mxu0 0.0
    %5090 = vmatprep.subr.mxu0 0.0
    %5091 = vmatpush2.xpose.msra.mxu0 0.0
    %5092 = vmatprep.subr.mxu0 0.0
    %5093 = vmatpush2.xpose.msra.mxu0 0.0
    %5094 = vmatprep.subr.mxu0 0.0
    %5095 = vmatpush2.xpose.msra.mxu0 0.0
    %5096 = vmatprep.subr.mxu0 0.0
    %5097 = vmatpush2.xpose.msra.mxu0 0.0
    %5098 = vmatprep.subr.mxu0 0.0
    %5099 = vmatpush2.xpose.msra.mxu0 0.0
    %5100 = vmatprep.subr.mxu0 0.0
    %5101 = vmatpush2.xpose.msra.mxu0 0.0
    %5102 = vmatprep.subr.mxu0 0.0
    %5103 = vmatpush2.xpose.msra.mxu0 0.0
    %5104 = vmatprep.subr.mxu0 0.0
    %5105 = vmatpush2.xpose.msra.mxu0 0.0
    %5106 = vmatprep.subr.mxu0 0.0
    %5107 = vmatpush2.xpose.msra.mxu0 0.0
    %5108 = vmatprep.subr.mxu0 0.0
    %5109 = vmatpush2.xpose.msra.mxu0 0.0
    %5110 = vmatprep.subr.mxu0 0.0
    %5111 = vmatpush2.xpose.msra.mxu0 0.0
    %5112 = vmatprep.subr.mxu0 0.0
    %5113 = vmatpush2.xpose.msra.mxu0 0.0
    %5114 = vmatprep.subr.mxu0 0.0
    %5115 = vmatpush2.xpose.msra.mxu0 0.0
    %5116 = vmatprep.subr.mxu0 0.0
    %5117 = vmatpush2.xpose.msra.mxu0 0.0
    %5118 = vmatprep.mubr.f32.mxu0 0.0
    %v5119 = vand.u32 %v4703, 4294901760
    %5120 = vmatmul.mubr.f32.gmra.mxu0 %v5119
    %v5121 = vpop.f32.mrf.mxu0
    %v5122 = vadd.f32 %v5037, %v5121
    %v5123 = vpop.f32.mrf.mxu0
    %5124 = vmatprep.mubr.f32.mxu0 0.0
    %v5125 = vand.u32 %v4706, 4294901760
    %5126 = vmatmul.mubr.f32.gmra.mxu0 %v5125
    %v5127 = vpop.f32.mrf.mxu0
    %v5128 = vadd.f32 %v5045, %v5127
    %v5129 = vpop.f32.mrf.mxu0
    %5130 = vdwg.mxu0
    %5131 = vmatprep.subr.mxu0 0.0
    %5132 = vmatpush1.xpose.msra.mxu0 0.0
    %5133 = vmatprep.subr.mxu0 0.0
    %5134 = vmatpush1.xpose.msra.mxu0 0.0
    %5135 = vmatprep.subr.mxu0 0.0
    %5136 = vmatpush1.xpose.msra.mxu0 0.0
    %5137 = vmatprep.subr.mxu0 0.0
    %5138 = vmatpush1.xpose.msra.mxu0 0.0
    %5139 = vmatprep.subr.mxu0 0.0
    %5140 = vmatpush1.xpose.msra.mxu0 0.0
    %5141 = vmatprep.subr.mxu0 0.0
    %5142 = vmatpush1.xpose.msra.mxu0 0.0
    %5143 = vmatprep.subr.mxu0 0.0
    %5144 = vmatpush1.xpose.msra.mxu0 0.0
    %5145 = vmatprep.subr.mxu0 0.0
    %5146 = vmatpush1.xpose.msra.mxu0 0.0
    %5147 = vmatprep.subr.mxu0 0.0
    %5148 = vmatpush1.xpose.msra.mxu0 0.0
    %5149 = vmatprep.subr.mxu0 0.0
    %5150 = vmatpush1.xpose.msra.mxu0 0.0
    %5151 = vmatprep.subr.mxu0 0.0
    %5152 = vmatpush1.xpose.msra.mxu0 0.0
    %5153 = vmatprep.subr.mxu0 0.0
    %5154 = vmatpush1.xpose.msra.mxu0 0.0
    %5155 = vmatprep.subr.mxu0 0.0
    %5156 = vmatpush1.xpose.msra.mxu0 0.0
    %5157 = vmatprep.subr.mxu0 0.0
    %5158 = vmatpush1.xpose.msra.mxu0 0.0
    %5159 = vmatprep.subr.mxu0 0.0
    %v5160 = vand.u32 %v4088, 4294901760
    %5161 = vmatpush1.xpose.msra.mxu0 %v5160
    %5162 = vmatprep.subr.mxu0 0.0
    %v5163 = vand.u32 %v4085, 4294901760
    %5164 = vmatpush1.xpose.msra.mxu0 %v5163
    %5165 = vmatprep.subr.mxu0 0.0
    %5166 = vmatpush2.xpose.msra.mxu0 0.0
    %5167 = vmatprep.subr.mxu0 0.0
    %5168 = vmatpush2.xpose.msra.mxu0 0.0
    %5169 = vmatprep.subr.mxu0 0.0
    %5170 = vmatpush2.xpose.msra.mxu0 0.0
    %5171 = vmatprep.subr.mxu0 0.0
    %5172 = vmatpush2.xpose.msra.mxu0 0.0
    %5173 = vmatprep.subr.mxu0 0.0
    %5174 = vmatpush2.xpose.msra.mxu0 0.0
    %5175 = vmatprep.subr.mxu0 0.0
    %5176 = vmatpush2.xpose.msra.mxu0 0.0
    %5177 = vmatprep.subr.mxu0 0.0
    %5178 = vmatpush2.xpose.msra.mxu0 0.0
    %5179 = vmatprep.subr.mxu0 0.0
    %5180 = vmatpush2.xpose.msra.mxu0 0.0
    %5181 = vmatprep.subr.mxu0 0.0
    %5182 = vmatpush2.xpose.msra.mxu0 0.0
    %5183 = vmatprep.subr.mxu0 0.0
    %5184 = vmatpush2.xpose.msra.mxu0 0.0
    %5185 = vmatprep.subr.mxu0 0.0
    %5186 = vmatpush2.xpose.msra.mxu0 0.0
    %5187 = vmatprep.subr.mxu0 0.0
    %5188 = vmatpush2.xpose.msra.mxu0 0.0
    %5189 = vmatprep.subr.mxu0 0.0
    %5190 = vmatpush2.xpose.msra.mxu0 0.0
    %5191 = vmatprep.subr.mxu0 0.0
    %5192 = vmatpush2.xpose.msra.mxu0 0.0
    %5193 = vmatprep.subr.mxu0 0.0
    %5194 = vmatpush2.xpose.msra.mxu0 0.0
    %5195 = vmatprep.subr.mxu0 0.0
    %5196 = vmatpush2.xpose.msra.mxu0 0.0
    %5197 = vmatprep.mubr.f32.mxu0 0.0
    %v5198 = vand.u32 %v4703, 4294901760
    %5199 = vmatmul.mubr.f32.gmra.mxu0 %v5198
    %v5200 = vpop.f32.mrf.mxu0
    %v5201 = vadd.f32 %v5122, %v5200
    %v5202 = vpop.f32.mrf.mxu0
    %5203 = vmatprep.mubr.f32.mxu0 0.0
    %v5204 = vand.u32 %v4706, 4294901760
    %5205 = vmatmul.mubr.f32.gmra.mxu0 %v5204
    %v5206 = vpop.f32.mrf.mxu0
    %v5207 = vadd.f32 %v5128, %v5206
    %v5208 = vpop.f32.mrf.mxu0
    %5209 = vdwg.mxu0
    %v5210 = vld [vmem:[%s3464 + $0xa0] sm:$0xff]
    %v5211 = vmul.f32 %v5210, 1.442695
    %v5212 = vpow.pop %v5211
    %v5213 = vsub.f32 0.0, %v5212
    %v5214 = vmul.f32 %v4698, %v4069
    %v5215 = vmul.f32 %v4699, %v4070
    %v5216 = vld [vmem:[%s3469 + $0x6] sm:$0x1]
    %v5217 = vlaneseq
    %v5218 = vshrl.u32 %v5217, 7
    %v5219 = vsub.s32 0, %v5218
    %v5220 = vrot.slane %v4698, %v5219
    %v5221 = vmul.f32 %v5220, %v5213
    %v5222 = vlaneseq
    %v5223 = vshrl.u32 %v5222, 7
    %v5224 = vsub.s32 1, %v5223
    %v5225 = vrot.slane %v4698, %v5224
    %v5226 = vmul.f32 %v5225, %v5213
    %v5227 = vlaneseq
    %v5228 = vshrl.u32 %v5227, 7
    %v5229 = vsub.s32 2, %v5228
    %v5230 = vrot.slane %v4698, %v5229
    %v5231 = vmul.f32 %v5230, %v5213
    %v5232 = vlaneseq
    %v5233 = vshrl.u32 %v5232, 7
    %v5234 = vsub.s32 3, %v5233
    %v5235 = vrot.slane %v4698, %v5234
    %v5236 = vmul.f32 %v5235, %v5213
    %v5237 = vlaneseq
    %v5238 = vshrl.u32 %v5237, 7
    %v5239 = vsub.s32 4, %v5238
    %v5240 = vrot.slane %v4698, %v5239
    %v5241 = vmul.f32 %v5240, %v5213
    %v5242 = vlaneseq
    %v5243 = vshrl.u32 %v5242, 7
    %v5244 = vsub.s32 5, %v5243
    %v5245 = vrot.slane %v4698, %v5244
    %v5246 = vmul.f32 %v5245, %v5213
    %v5247 = vlaneseq
    %v5248 = vshrl.u32 %v5247, 7
    %v5249 = vsub.s32 6, %v5248
    %v5250 = vrot.slane %v4698, %v5249
    %v5251 = vmul.f32 %v5250, %v5213
    %v5252 = vlaneseq
    %v5253 = vshrl.u32 %v5252, 7
    %v5254 = vsub.s32 7, %v5253
    %v5255 = vrot.slane %v4698, %v5254
    %v5256 = vmul.f32 %v5255, %v5213
    %v5257 = vmul.f32 %v5221, 1.442695
    %v5258 = vpow.pop %v5257
    %v5259 = vmul.f32 %v5226, 1.442695
    %v5260 = vpow.pop %v5259
    %v5261 = vmul.f32 %v5231, 1.442695
    %v5262 = vpow.pop %v5261
    %v5263 = vmul.f32 %v5236, 1.442695
    %v5264 = vpow.pop %v5263
    %v5265 = vmul.f32 %v5241, 1.442695
    %v5266 = vpow.pop %v5265
    %v5267 = vmul.f32 %v5246, 1.442695
    %v5268 = vpow.pop %v5267
    %v5269 = vmul.f32 %v5251, 1.442695
    %v5270 = vpow.pop %v5269
    %v5271 = vmul.f32 %v5256, 1.442695
    %v5272 = vpow.pop %v5271
    %5274 = vset.pattern.permute.xlu0 0
    %5275 = vperm.xlu0 %5274, %v5201
    %v5276 = vpop.permute.xlu0 %5275
    %v5278 = vlaneseq
    %v5279 = vshrl.u32 %v5278, 7
    %v5280 = vsub.s32 0, %v5279
    %v5281 = vrot.slane %v5214, %v5280
    %v5282 = vmul.f32 %v5276, %v5281
    %v5283 = vmul.f32 %v5258, 0.0
    %v5284 = vadd.f32 %v5283, %v5282
    %5286 = vset.pattern.permute.xlu0 0
    %5287 = vperm.xlu0 %5286, %v5207
    %v5288 = vpop.permute.xlu0 %5287
    %v5290 = vmul.f32 %v5288, %v5284
    %v5291 = vsel %vm1196, %v5290, 0.0
    %v5292 = vrot.slane %v5291, 4
    %v5293 = vadd.f32 %v5291, %v5292
    %v5294 = vrot.slane %v5293, 2
    %v5295 = vadd.f32 %v5293, %v5294
    %v5296 = vrot.slane %v5295, 1
    %v5297 = vadd.f32 %v5295, %v5296
    %5298 = vset.pattern.permute.xlu0 1
    %5299 = vperm.xlu0 %5298, %v5201
    %v5300 = vpop.permute.xlu0 %5299
    %v5302 = vlaneseq
    %v5303 = vshrl.u32 %v5302, 7
    %v5304 = vsub.s32 1, %v5303
    %v5305 = vrot.slane %v5214, %v5304
    %v5306 = vmul.f32 %v5300, %v5305
    %v5307 = vmul.f32 %v5260, %v5284
    %v5308 = vadd.f32 %v5307, %v5306
    %5309 = vset.pattern.permute.xlu0 1
    %5310 = vperm.xlu0 %5309, %v5207
    %v5311 = vpop.permute.xlu0 %5310
    %v5313 = vmul.f32 %v5311, %v5308
    %v5314 = vsel %vm1196, %v5313, 0.0
    %v5315 = vrot.slane %v5314, 4
    %v5316 = vadd.f32 %v5314, %v5315
    %v5317 = vrot.slane %v5316, 2
    %v5318 = vadd.f32 %v5316, %v5317
    %v5319 = vrot.slane %v5318, 1
    %v5320 = vadd.f32 %v5318, %v5319
    %5321 = vset.pattern.permute.xlu0 2
    %5322 = vperm.xlu0 %5321, %v5201
    %v5323 = vpop.permute.xlu0 %5322
    %v5325 = vlaneseq
    %v5326 = vshrl.u32 %v5325, 7
    %v5327 = vsub.s32 2, %v5326
    %v5328 = vrot.slane %v5214, %v5327
    %v5329 = vmul.f32 %v5323, %v5328
    %v5330 = vmul.f32 %v5262, %v5308
    %v5331 = vadd.f32 %v5330, %v5329
    %5332 = vset.pattern.permute.xlu0 2
    %5333 = vperm.xlu0 %5332, %v5207
    %v5334 = vpop.permute.xlu0 %5333
    %v5336 = vmul.f32 %v5334, %v5331
    %v5337 = vsel %vm1196, %v5336, 0.0
    %v5338 = vrot.slane %v5337, 4
    %v5339 = vadd.f32 %v5337, %v5338
    %v5340 = vrot.slane %v5339, 2
    %v5341 = vadd.f32 %v5339, %v5340
    %v5342 = vrot.slane %v5341, 1
    %v5343 = vadd.f32 %v5341, %v5342
    %5344 = vset.pattern.permute.xlu0 3
    %5345 = vperm.xlu0 %5344, %v5201
    %v5346 = vpop.permute.xlu0 %5345
    %v5348 = vlaneseq
    %v5349 = vshrl.u32 %v5348, 7
    %v5350 = vsub.s32 3, %v5349
    %v5351 = vrot.slane %v5214, %v5350
    %v5352 = vmul.f32 %v5346, %v5351
    %v5353 = vmul.f32 %v5264, %v5331
    %v5354 = vadd.f32 %v5353, %v5352
    %5355 = vset.pattern.permute.xlu0 3
    %5356 = vperm.xlu0 %5355, %v5207
    %v5357 = vpop.permute.xlu0 %5356
    %v5359 = vmul.f32 %v5357, %v5354
    %v5360 = vsel %vm1196, %v5359, 0.0
    %v5361 = vrot.slane %v5360, 4
    %v5362 = vadd.f32 %v5360, %v5361
    %v5363 = vrot.slane %v5362, 2
    %v5364 = vadd.f32 %v5362, %v5363
    %v5365 = vrot.slane %v5364, 1
    %v5366 = vadd.f32 %v5364, %v5365
    %5367 = vset.pattern.permute.xlu0 4
    %5368 = vperm.xlu0 %5367, %v5201
    %v5369 = vpop.permute.xlu0 %5368
    %v5371 = vlaneseq
    %v5372 = vshrl.u32 %v5371, 7
    %v5373 = vsub.s32 4, %v5372
    %v5374 = vrot.slane %v5214, %v5373
    %v5375 = vmul.f32 %v5369, %v5374
    %v5376 = vmul.f32 %v5266, %v5354
    %v5377 = vadd.f32 %v5376, %v5375
    %5378 = vset.pattern.permute.xlu0 4
    %5379 = vperm.xlu0 %5378, %v5207
    %v5380 = vpop.permute.xlu0 %5379
    %v5382 = vmul.f32 %v5380, %v5377
    %v5383 = vsel %vm1196, %v5382, 0.0
    %v5384 = vrot.slane %v5383, 4
    %v5385 = vadd.f32 %v5383, %v5384
    %v5386 = vrot.slane %v5385, 2
    %v5387 = vadd.f32 %v5385, %v5386
    %v5388 = vrot.slane %v5387, 1
    %v5389 = vadd.f32 %v5387, %v5388
    %5390 = vset.pattern.permute.xlu0 5
    %5391 = vperm.xlu0 %5390, %v5201
    %v5392 = vpop.permute.xlu0 %5391
    %v5394 = vlaneseq
    %v5395 = vshrl.u32 %v5394, 7
    %v5396 = vsub.s32 5, %v5395
    %v5397 = vrot.slane %v5214, %v5396
    %v5398 = vmul.f32 %v5392, %v5397
    %v5399 = vmul.f32 %v5268, %v5377
    %v5400 = vadd.f32 %v5399, %v5398
    %5401 = vset.pattern.permute.xlu0 5
    %5402 = vperm.xlu0 %5401, %v5207
    %v5403 = vpop.permute.xlu0 %5402
    %v5405 = vmul.f32 %v5403, %v5400
    %v5406 = vsel %vm1196, %v5405, 0.0
    %v5407 = vrot.slane %v5406, 4
    %v5408 = vadd.f32 %v5406, %v5407
    %v5409 = vrot.slane %v5408, 2
    %v5410 = vadd.f32 %v5408, %v5409
    %v5411 = vrot.slane %v5410, 1
    %v5412 = vadd.f32 %v5410, %v5411
    %5413 = vset.pattern.permute.xlu0 6
    %5414 = vperm.xlu0 %5413, %v5201
    %v5415 = vpop.permute.xlu0 %5414
    %v5417 = vlaneseq
    %v5418 = vshrl.u32 %v5417, 7
    %v5419 = vsub.s32 6, %v5418
    %v5420 = vrot.slane %v5214, %v5419
    %v5421 = vmul.f32 %v5415, %v5420
    %v5422 = vmul.f32 %v5270, %v5400
    %v5423 = vadd.f32 %v5422, %v5421
    %5424 = vset.pattern.permute.xlu0 6
    %5425 = vperm.xlu0 %5424, %v5207
    %v5426 = vpop.permute.xlu0 %5425
    %v5428 = vmul.f32 %v5426, %v5423
    %v5429 = vsel %vm1196, %v5428, 0.0
    %v5430 = vrot.slane %v5429, 4
    %v5431 = vadd.f32 %v5429, %v5430
    %v5432 = vrot.slane %v5431, 2
    %v5433 = vadd.f32 %v5431, %v5432
    %v5434 = vrot.slane %v5433, 1
    %v5435 = vadd.f32 %v5433, %v5434
    %5436 = vset.pattern.permute.xlu0 7
    %5437 = vperm.xlu0 %5436, %v5201
    %v5438 = vpop.permute.xlu0 %5437
    %v5440 = vlaneseq
    %v5441 = vshrl.u32 %v5440, 7
    %v5442 = vsub.s32 7, %v5441
    %v5443 = vrot.slane %v5214, %v5442
    %v5444 = vmul.f32 %v5438, %v5443
    %v5445 = vmul.f32 %v5272, %v5423
    %v5446 = vadd.f32 %v5445, %v5444
    %5447 = vset.pattern.permute.xlu0 7
    %5448 = vperm.xlu0 %5447, %v5207
    %v5449 = vpop.permute.xlu0 %5448
    %v5451 = vmul.f32 %v5449, %v5446
    %v5452 = vsel %vm1196, %v5451, 0.0
    %v5453 = vrot.slane %v5452, 4
    %v5454 = vadd.f32 %v5452, %v5453
    %v5455 = vrot.slane %v5454, 2
    %v5456 = vadd.f32 %v5454, %v5455
    %v5457 = vrot.slane %v5456, 1
    %v5458 = vadd.f32 %v5456, %v5457
    %v5459 = vlaneseq
    %v5460 = vshrl.u32 %v5459, 7
    %v5461 = vsub.s32 0, %v5460
    %v5462 = vrot.slane %v4699, %v5461
    %v5463 = vmul.f32 %v5462, %v5213
    %v5464 = vlaneseq
    %v5465 = vshrl.u32 %v5464, 7
    %v5466 = vsub.s32 1, %v5465
    %v5467 = vrot.slane %v4699, %v5466
    %v5468 = vmul.f32 %v5467, %v5213
    %v5469 = vlaneseq
    %v5470 = vshrl.u32 %v5469, 7
    %v5471 = vsub.s32 2, %v5470
    %v5472 = vrot.slane %v4699, %v5471
    %v5473 = vmul.f32 %v5472, %v5213
    %v5474 = vlaneseq
    %v5475 = vshrl.u32 %v5474, 7
    %v5476 = vsub.s32 3, %v5475
    %v5477 = vrot.slane %v4699, %v5476
    %v5478 = vmul.f32 %v5477, %v5213
    %v5479 = vlaneseq
    %v5480 = vshrl.u32 %v5479, 7
    %v5481 = vsub.s32 4, %v5480
    %v5482 = vrot.slane %v4699, %v5481
    %v5483 = vmul.f32 %v5482, %v5213
    %v5484 = vlaneseq
    %v5485 = vshrl.u32 %v5484, 7
    %v5486 = vsub.s32 5, %v5485
    %v5487 = vrot.slane %v4699, %v5486
    %v5488 = vmul.f32 %v5487, %v5213
    %v5489 = vlaneseq
    %v5490 = vshrl.u32 %v5489, 7
    %v5491 = vsub.s32 6, %v5490
    %v5492 = vrot.slane %v4699, %v5491
    %v5493 = vmul.f32 %v5492, %v5213
    %v5494 = vlaneseq
    %v5495 = vshrl.u32 %v5494, 7
    %v5496 = vsub.s32 7, %v5495
    %v5497 = vrot.slane %v4699, %v5496
    %v5498 = vmul.f32 %v5497, %v5213
    %v5499 = vmul.f32 %v5463, 1.442695
    %v5500 = vpow.pop %v5499
    %v5501 = vmul.f32 %v5468, 1.442695
    %v5502 = vpow.pop %v5501
    %v5503 = vmul.f32 %v5473, 1.442695
    %v5504 = vpow.pop %v5503
    %v5505 = vmul.f32 %v5478, 1.442695
    %v5506 = vpow.pop %v5505
    %v5507 = vmul.f32 %v5483, 1.442695
    %v5508 = vpow.pop %v5507
    %v5509 = vmul.f32 %v5488, 1.442695
    %v5510 = vpow.pop %v5509
    %v5511 = vmul.f32 %v5493, 1.442695
    %v5512 = vpow.pop %v5511
    %v5513 = vmul.f32 %v5498, 1.442695
    %v5514 = vpow.pop %v5513
    %5515 = vset.pattern.permute.xlu0 8
    %5516 = vperm.xlu0 %5515, %v5201
    %v5517 = vpop.permute.xlu0 %5516
    %v5519 = vlaneseq
    %v5520 = vshrl.u32 %v5519, 7
    %v5521 = vsub.s32 0, %v5520
    %v5522 = vrot.slane %v5215, %v5521
    %v5523 = vmul.f32 %v5517, %v5522
    %v5524 = vmul.f32 %v5500, 0.0
    %v5525 = vadd.f32 %v5524, %v5523
    %5526 = vset.pattern.permute.xlu0 8
    %5527 = vperm.xlu0 %5526, %v5207
    %v5528 = vpop.permute.xlu0 %5527
    %v5530 = vmul.f32 %v5528, %v5525
    %v5531 = vsel %vm1196, %v5530, 0.0
    %v5532 = vrot.slane %v5531, 4
    %v5533 = vadd.f32 %v5531, %v5532
    %v5534 = vrot.slane %v5533, 2
    %v5535 = vadd.f32 %v5533, %v5534
    %v5536 = vrot.slane %v5535, 1
    %v5537 = vadd.f32 %v5535, %v5536
    %5538 = vset.pattern.permute.xlu0 9
    %5539 = vperm.xlu0 %5538, %v5201
    %v5540 = vpop.permute.xlu0 %5539
    %v5542 = vlaneseq
    %v5543 = vshrl.u32 %v5542, 7
    %v5544 = vsub.s32 1, %v5543
    %v5545 = vrot.slane %v5215, %v5544
    %v5546 = vmul.f32 %v5540, %v5545
    %v5547 = vmul.f32 %v5502, %v5525
    %v5548 = vadd.f32 %v5547, %v5546
    %5549 = vset.pattern.permute.xlu0 9
    %5550 = vperm.xlu0 %5549, %v5207
    %v5551 = vpop.permute.xlu0 %5550
    %v5553 = vmul.f32 %v5551, %v5548
    %v5554 = vsel %vm1196, %v5553, 0.0
    %v5555 = vrot.slane %v5554, 4
    %v5556 = vadd.f32 %v5554, %v5555
    %v5557 = vrot.slane %v5556, 2
    %v5558 = vadd.f32 %v5556, %v5557
    %v5559 = vrot.slane %v5558, 1
    %v5560 = vadd.f32 %v5558, %v5559
    %5561 = vset.pattern.permute.xlu0 10
    %5562 = vperm.xlu0 %5561, %v5201
    %v5563 = vpop.permute.xlu0 %5562
    %v5565 = vlaneseq
    %v5566 = vshrl.u32 %v5565, 7
    %v5567 = vsub.s32 2, %v5566
    %v5568 = vrot.slane %v5215, %v5567
    %v5569 = vmul.f32 %v5563, %v5568
    %v5570 = vmul.f32 %v5504, %v5548
    %v5571 = vadd.f32 %v5570, %v5569
    %5572 = vset.pattern.permute.xlu0 10
    %5573 = vperm.xlu0 %5572, %v5207
    %v5574 = vpop.permute.xlu0 %5573
    %v5576 = vmul.f32 %v5574, %v5571
    %v5577 = vsel %vm1196, %v5576, 0.0
    %v5578 = vrot.slane %v5577, 4
    %v5579 = vadd.f32 %v5577, %v5578
    %v5580 = vrot.slane %v5579, 2
    %v5581 = vadd.f32 %v5579, %v5580
    %v5582 = vrot.slane %v5581, 1
    %v5583 = vadd.f32 %v5581, %v5582
    %5584 = vset.pattern.permute.xlu0 11
    %5585 = vperm.xlu0 %5584, %v5201
    %v5586 = vpop.permute.xlu0 %5585
    %v5588 = vlaneseq
    %v5589 = vshrl.u32 %v5588, 7
    %v5590 = vsub.s32 3, %v5589
    %v5591 = vrot.slane %v5215, %v5590
    %v5592 = vmul.f32 %v5586, %v5591
    %v5593 = vmul.f32 %v5506, %v5571
    %v5594 = vadd.f32 %v5593, %v5592
    %5595 = vset.pattern.permute.xlu0 11
    %5596 = vperm.xlu0 %5595, %v5207
    %v5597 = vpop.permute.xlu0 %5596
    %v5599 = vmul.f32 %v5597, %v5594
    %v5600 = vsel %vm1196, %v5599, 0.0
    %v5601 = vrot.slane %v5600, 4
    %v5602 = vadd.f32 %v5600, %v5601
    %v5603 = vrot.slane %v5602, 2
    %v5604 = vadd.f32 %v5602, %v5603
    %v5605 = vrot.slane %v5604, 1
    %v5606 = vadd.f32 %v5604, %v5605
    %5607 = vset.pattern.permute.xlu0 12
    %5608 = vperm.xlu0 %5607, %v5201
    %v5609 = vpop.permute.xlu0 %5608
    %v5611 = vlaneseq
    %v5612 = vshrl.u32 %v5611, 7
    %v5613 = vsub.s32 4, %v5612
    %v5614 = vrot.slane %v5215, %v5613
    %v5615 = vmul.f32 %v5609, %v5614
    %v5616 = vmul.f32 %v5508, %v5594
    %v5617 = vadd.f32 %v5616, %v5615
    %5618 = vset.pattern.permute.xlu0 12
    %5619 = vperm.xlu0 %5618, %v5207
    %v5620 = vpop.permute.xlu0 %5619
    %v5622 = vmul.f32 %v5620, %v5617
    %v5623 = vsel %vm1196, %v5622, 0.0
    %v5624 = vrot.slane %v5623, 4
    %v5625 = vadd.f32 %v5623, %v5624
    %v5626 = vrot.slane %v5625, 2
    %v5627 = vadd.f32 %v5625, %v5626
    %v5628 = vrot.slane %v5627, 1
    %v5629 = vadd.f32 %v5627, %v5628
    %5630 = vset.pattern.permute.xlu0 13
    %5631 = vperm.xlu0 %5630, %v5201
    %v5632 = vpop.permute.xlu0 %5631
    %v5634 = vlaneseq
    %v5635 = vshrl.u32 %v5634, 7
    %v5636 = vsub.s32 5, %v5635
    %v5637 = vrot.slane %v5215, %v5636
    %v5638 = vmul.f32 %v5632, %v5637
    %v5639 = vmul.f32 %v5510, %v5617
    %v5640 = vadd.f32 %v5639, %v5638
    %5641 = vset.pattern.permute.xlu0 13
    %5642 = vperm.xlu0 %5641, %v5207
    %v5643 = vpop.permute.xlu0 %5642
    %v5645 = vmul.f32 %v5643, %v5640
    %v5646 = vsel %vm1196, %v5645, 0.0
    %v5647 = vrot.slane %v5646, 4
    %v5648 = vadd.f32 %v5646, %v5647
    %v5649 = vrot.slane %v5648, 2
    %v5650 = vadd.f32 %v5648, %v5649
    %v5651 = vrot.slane %v5650, 1
    %v5652 = vadd.f32 %v5650, %v5651
    %5653 = vset.pattern.permute.xlu0 14
    %5654 = vperm.xlu0 %5653, %v5201
    %v5655 = vpop.permute.xlu0 %5654
    %v5657 = vlaneseq
    %v5658 = vshrl.u32 %v5657, 7
    %v5659 = vsub.s32 6, %v5658
    %v5660 = vrot.slane %v5215, %v5659
    %v5661 = vmul.f32 %v5655, %v5660
    %v5662 = vmul.f32 %v5512, %v5640
    %v5663 = vadd.f32 %v5662, %v5661
    %5664 = vset.pattern.permute.xlu0 14
    %5665 = vperm.xlu0 %5664, %v5207
    %v5666 = vpop.permute.xlu0 %5665
    %v5668 = vmul.f32 %v5666, %v5663
    %v5669 = vsel %vm1196, %v5668, 0.0
    %v5670 = vrot.slane %v5669, 4
    %v5671 = vadd.f32 %v5669, %v5670
    %v5672 = vrot.slane %v5671, 2
    %v5673 = vadd.f32 %v5671, %v5672
    %v5674 = vrot.slane %v5673, 1
    %v5675 = vadd.f32 %v5673, %v5674
    %5676 = vset.pattern.permute.xlu0 15
    %5677 = vperm.xlu0 %5676, %v5201
    %v5678 = vpop.permute.xlu0 %5677
    %v5680 = vlaneseq
    %v5681 = vshrl.u32 %v5680, 7
    %v5682 = vsub.s32 7, %v5681
    %v5683 = vrot.slane %v5215, %v5682
    %v5684 = vmul.f32 %v5678, %v5683
    %v5685 = vmul.f32 %v5514, %v5663
    %v5686 = vadd.f32 %v5685, %v5684
    %5687 = vset.pattern.permute.xlu0 15
    %5688 = vperm.xlu0 %5687, %v5207
    %v5689 = vpop.permute.xlu0 %5688
    %v5691 = vmul.f32 %v5689, %v5686
    %v5692 = vsel %vm1196, %v5691, 0.0
    %v5693 = vrot.slane %v5692, 4
    %v5694 = vadd.f32 %v5692, %v5693
    %v5695 = vrot.slane %v5694, 2
    %v5696 = vadd.f32 %v5694, %v5695
    %v5697 = vrot.slane %v5696, 1
    %v5698 = vadd.f32 %v5696, %v5697
    %v5699 = vlaneseq
    %v5700 = vshrl.u32 %v5699, 7
    %v5701 = vsub.s32 0, %v5700
    %v5702 = vrot.slane %v5216, %v5701
    %v5703 = vmul.f32 %v5702, %v4069
    %v5704 = vmul.f32 %v5702, %v4070
    %v5705 = vsel %vm1139, %v5297, %v5320
    %v5706 = vsel %vm1116, %v5705, %v5343
    %v5707 = vsel %vm2820, %v5706, %v5366
    %v5708 = vsel %vm2822, %v5707, %v5389
    %v5709 = vsel %vm2824, %v5708, %v5412
    %v5710 = vsel %vm2826, %v5709, %v5435
    %v5711 = vsel %vm2828, %v5710, %v5458
    %v5712 = vsel %vm1139, %v5537, %v5560
    %v5713 = vsel %vm1116, %v5712, %v5583
    %v5714 = vsel %vm2820, %v5713, %v5606
    %v5715 = vsel %vm2822, %v5714, %v5629
    %v5716 = vsel %vm2824, %v5715, %v5652
    %v5717 = vsel %vm2826, %v5716, %v5675
    %v5718 = vsel %vm2828, %v5717, %v5698
    %v5719 = vadd.f32 %v5703, %v5711
    %v5720 = vadd.f32 %v5704, %v5718
    %v5721 = vsub.f32 0.0, %v4000
    %v5722 = vsub.f32 0.0, %v4006
    %v5723 = vmul.f32 %v5721, 1.442695
    %v5724 = vpow.pop %v5723
    %v5725 = vmul.f32 %v5722, 1.442695
    %v5726 = vpow.pop %v5725
    %v5727 = vadd.f32 %v5724, 1.0
    %v5728 = vadd.f32 %v5726, 1.0
    %v5729 = vrcp.pop %v5727
    %v5730 = vmul.f32 1.0, %v5729
    %v5731 = vrcp.pop %v5728
    %v5732 = vmul.f32 1.0, %v5731
    %v5733 = vmul.f32 %v4000, %v5730
    %v5734 = vmul.f32 %v4006, %v5732
    %5737 = vrot.lane.b32.xlu0 %v5733, 64
    %v5738 = vpop.permute.xlu0 %5737
    %5739 = vrot.lane.b32.xlu0 %v5734, 64
    %v5740 = vpop.permute.xlu0 %5739
    %v5743 = vmul.f32 %v5719, %v5738
    %v5744 = vmul.f32 %v5720, %v5740
    %v5745 = vld [vmem:[%s3464 + $0x60] sm:$0xff]
    %v5746 = vld [vmem:[%s3464 + $0x68] sm:$0xff]
    %v5747 = vld [vmem:[%s3464 + $0x70] sm:$0xff]
    %v5748 = vld [vmem:[%s3464 + $0x78] sm:$0xff]
    %v5749 = vld [vmem:[%s3464 + $0x80] sm:$0xff]
    %v5750 = vld [vmem:[%s3464 + $0x88] sm:$0xff]
    %v5751 = vld [vmem:[%s3464 + $0x90] sm:$0xff]
    %v5752 = vld [vmem:[%s3464 + $0x98] sm:$0xff]
    %v5753 = vld [vmem:[%s3469 + $0x7] sm:$0x1]
    %v5754 = vlaneseq
    %v5755 = vshrl.u32 %v5754, 7
    %v5756 = vsub.s32 0, %v5755
    %v5757 = vrot.slane %v5753, %v5756
    %v5759 = vsel %vm1196, %v5743, 0
    %v5762 = vsel %vm1196, %v5744, 0
    %5764 = vmatprep.subr.mxu0 0.0
    %5765 = vmatpush1.msra.mxu0 0.0
    %5766 = vmatprep.subr.mxu0 0.0
    %5767 = vmatpush1.msra.mxu0 0.0
    %5768 = vmatprep.subr.mxu0 0.0
    %5769 = vmatpush1.msra.mxu0 0.0
    %5770 = vmatprep.subr.mxu0 0.0
    %5771 = vmatpush1.msra.mxu0 0.0
    %5772 = vmatprep.subr.mxu0 0.0
    %5773 = vmatpush1.msra.mxu0 0.0
    %5774 = vmatprep.subr.mxu0 0.0
    %5775 = vmatpush1.msra.mxu0 0.0
    %5776 = vmatprep.subr.mxu0 0.0
    %5777 = vmatpush1.msra.mxu0 0.0
    %5778 = vmatprep.subr.mxu0 0.0
    %5779 = vmatpush1.msra.mxu0 0.0
    %5780 = vmatprep.subr.mxu0 0.0
    %v5781 = vand.u32 %v5752, 4294901760
    %5782 = vmatpush1.msra.mxu0 %v5781
    %5783 = vmatprep.subr.mxu0 0.0
    %v5784 = vand.u32 %v5751, 4294901760
    %5785 = vmatpush1.msra.mxu0 %v5784
    %5786 = vmatprep.subr.mxu0 0.0
    %v5787 = vand.u32 %v5750, 4294901760
    %5788 = vmatpush1.msra.mxu0 %v5787
    %5789 = vmatprep.subr.mxu0 0.0
    %v5790 = vand.u32 %v5749, 4294901760
    %5791 = vmatpush1.msra.mxu0 %v5790
    %5792 = vmatprep.subr.mxu0 0.0
    %v5793 = vand.u32 %v5748, 4294901760
    %5794 = vmatpush1.msra.mxu0 %v5793
    %5795 = vmatprep.subr.mxu0 0.0
    %v5796 = vand.u32 %v5747, 4294901760
    %5797 = vmatpush1.msra.mxu0 %v5796
    %5798 = vmatprep.subr.mxu0 0.0
    %v5799 = vand.u32 %v5746, 4294901760
    %5800 = vmatpush1.msra.mxu0 %v5799
    %5801 = vmatprep.subr.mxu0 0.0
    %v5802 = vand.u32 %v5745, 4294901760
    %5803 = vmatpush1.msra.mxu0 %v5802
    %5804 = vmatprep.subr.mxu0 0.0
    %5805 = vmatpush2.msra.mxu0 0.0
    %5806 = vmatprep.subr.mxu0 0.0
    %5807 = vmatpush2.msra.mxu0 0.0
    %5808 = vmatprep.subr.mxu0 0.0
    %5809 = vmatpush2.msra.mxu0 0.0
    %5810 = vmatprep.subr.mxu0 0.0
    %5811 = vmatpush2.msra.mxu0 0.0
    %5812 = vmatprep.subr.mxu0 0.0
    %5813 = vmatpush2.msra.mxu0 0.0
    %5814 = vmatprep.subr.mxu0 0.0
    %5815 = vmatpush2.msra.mxu0 0.0
    %5816 = vmatprep.subr.mxu0 0.0
    %5817 = vmatpush2.msra.mxu0 0.0
    %5818 = vmatprep.subr.mxu0 0.0
    %5819 = vmatpush2.msra.mxu0 0.0
    %5820 = vmatprep.subr.mxu0 0.0
    %5821 = vmatpush2.msra.mxu0 0.0
    %5822 = vmatprep.subr.mxu0 0.0
    %5823 = vmatpush2.msra.mxu0 0.0
    %5824 = vmatprep.subr.mxu0 0.0
    %5825 = vmatpush2.msra.mxu0 0.0
    %5826 = vmatprep.subr.mxu0 0.0
    %5827 = vmatpush2.msra.mxu0 0.0
    %5828 = vmatprep.subr.mxu0 0.0
    %5829 = vmatpush2.msra.mxu0 0.0
    %5830 = vmatprep.subr.mxu0 0.0
    %5831 = vmatpush2.msra.mxu0 0.0
    %5832 = vmatprep.subr.mxu0 0.0
    %5833 = vmatpush2.msra.mxu0 0.0
    %5834 = vmatprep.subr.mxu0 0.0
    %5835 = vmatpush2.msra.mxu0 0.0
    %5836 = vmatprep.mubr.f32.mxu0 0.0
    %v5837 = vand.u32 %v5759, 4294901760
    %v5838 = vsub.f32 %v5759, %v5837
    %v5839 = vand.u32 %v5838, 4294901760
    %v5840 = vsub.f32 %v5838, %v5839
    %v5841 = vand.u32 %v5840, 4294901760
    %5842 = vmatmul.mubr.f32.gmra.mxu0 %v5841
    %v5843 = vpop.f32.mrf.mxu0
    %v5844 = vadd.f32 %v5757, %v5843
    %v5845 = vpop.f32.mrf.mxu0
    %5846 = vmatprep.mubr.f32.mxu0 0.0
    %v5847 = vand.u32 %v5762, 4294901760
    %v5848 = vsub.f32 %v5762, %v5847
    %v5849 = vand.u32 %v5848, 4294901760
    %v5850 = vsub.f32 %v5848, %v5849
    %v5851 = vand.u32 %v5850, 4294901760
    %5852 = vmatmul.mubr.f32.gmra.mxu0 %v5851
    %v5853 = vpop.f32.mrf.mxu0
    %v5854 = vadd.f32 %v5757, %v5853
    %v5855 = vpop.f32.mrf.mxu0
    %5856 = vdwg.mxu0
    %5857 = vmatprep.subr.mxu0 0.0
    %5858 = vmatpush1.msra.mxu0 0.0
    %5859 = vmatprep.subr.mxu0 0.0
    %5860 = vmatpush1.msra.mxu0 0.0
    %5861 = vmatprep.subr.mxu0 0.0
    %5862 = vmatpush1.msra.mxu0 0.0
    %5863 = vmatprep.subr.mxu0 0.0
    %5864 = vmatpush1.msra.mxu0 0.0
    %5865 = vmatprep.subr.mxu0 0.0
    %5866 = vmatpush1.msra.mxu0 0.0
    %5867 = vmatprep.subr.mxu0 0.0
    %5868 = vmatpush1.msra.mxu0 0.0
    %5869 = vmatprep.subr.mxu0 0.0
    %5870 = vmatpush1.msra.mxu0 0.0
    %5871 = vmatprep.subr.mxu0 0.0
    %5872 = vmatpush1.msra.mxu0 0.0
    %5873 = vmatprep.subr.mxu0 0.0
    %v5874 = vand.u32 %v5752, 4294901760
    %v5875 = vsub.f32 %v5752, %v5874
    %v5876 = vand.u32 %v5875, 4294901760
    %v5877 = vsub.f32 %v5875, %v5876
    %v5878 = vand.u32 %v5877, 4294901760
    %5879 = vmatpush1.msra.mxu0 %v5878
    %5880 = vmatprep.subr.mxu0 0.0
    %v5881 = vand.u32 %v5751, 4294901760
    %v5882 = vsub.f32 %v5751, %v5881
    %v5883 = vand.u32 %v5882, 4294901760
    %v5884 = vsub.f32 %v5882, %v5883
    %v5885 = vand.u32 %v5884, 4294901760
    %5886 = vmatpush1.msra.mxu0 %v5885
    %5887 = vmatprep.subr.mxu0 0.0
    %v5888 = vand.u32 %v5750, 4294901760
    %v5889 = vsub.f32 %v5750, %v5888
    %v5890 = vand.u32 %v5889, 4294901760
    %v5891 = vsub.f32 %v5889, %v5890
    %v5892 = vand.u32 %v5891, 4294901760
    %5893 = vmatpush1.msra.mxu0 %v5892
    %5894 = vmatprep.subr.mxu0 0.0
    %v5895 = vand.u32 %v5749, 4294901760
    %v5896 = vsub.f32 %v5749, %v5895
    %v5897 = vand.u32 %v5896, 4294901760
    %v5898 = vsub.f32 %v5896, %v5897
    %v5899 = vand.u32 %v5898, 4294901760
    %5900 = vmatpush1.msra.mxu0 %v5899
    %5901 = vmatprep.subr.mxu0 0.0
    %v5902 = vand.u32 %v5748, 4294901760
    %v5903 = vsub.f32 %v5748, %v5902
    %v5904 = vand.u32 %v5903, 4294901760
    %v5905 = vsub.f32 %v5903, %v5904
    %v5906 = vand.u32 %v5905, 4294901760
    %5907 = vmatpush1.msra.mxu0 %v5906
    %5908 = vmatprep.subr.mxu0 0.0
    %v5909 = vand.u32 %v5747, 4294901760
    %v5910 = vsub.f32 %v5747, %v5909
    %v5911 = vand.u32 %v5910, 4294901760
    %v5912 = vsub.f32 %v5910, %v5911
    %v5913 = vand.u32 %v5912, 4294901760
    %5914 = vmatpush1.msra.mxu0 %v5913
    %5915 = vmatprep.subr.mxu0 0.0
    %v5916 = vand.u32 %v5746, 4294901760
    %v5917 = vsub.f32 %v5746, %v5916
    %v5918 = vand.u32 %v5917, 4294901760
    %v5919 = vsub.f32 %v5917, %v5918
    %v5920 = vand.u32 %v5919, 4294901760
    %5921 = vmatpush1.msra.mxu0 %v5920
    %5922 = vmatprep.subr.mxu0 0.0
    %v5923 = vand.u32 %v5745, 4294901760
    %v5924 = vsub.f32 %v5745, %v5923
    %v5925 = vand.u32 %v5924, 4294901760
    %v5926 = vsub.f32 %v5924, %v5925
    %v5927 = vand.u32 %v5926, 4294901760
    %5928 = vmatpush1.msra.mxu0 %v5927
    %5929 = vmatprep.subr.mxu0 0.0
    %5930 = vmatpush2.msra.mxu0 0.0
    %5931 = vmatprep.subr.mxu0 0.0
    %5932 = vmatpush2.msra.mxu0 0.0
    %5933 = vmatprep.subr.mxu0 0.0
    %5934 = vmatpush2.msra.mxu0 0.0
    %5935 = vmatprep.subr.mxu0 0.0
    %5936 = vmatpush2.msra.mxu0 0.0
    %5937 = vmatprep.subr.mxu0 0.0
    %5938 = vmatpush2.msra.mxu0 0.0
    %5939 = vmatprep.subr.mxu0 0.0
    %5940 = vmatpush2.msra.mxu0 0.0
    %5941 = vmatprep.subr.mxu0 0.0
    %5942 = vmatpush2.msra.mxu0 0.0
    %5943 = vmatprep.subr.mxu0 0.0
    %5944 = vmatpush2.msra.mxu0 0.0
    %5945 = vmatprep.subr.mxu0 0.0
    %5946 = vmatpush2.msra.mxu0 0.0
    %5947 = vmatprep.subr.mxu0 0.0
    %5948 = vmatpush2.msra.mxu0 0.0
    %5949 = vmatprep.subr.mxu0 0.0
    %5950 = vmatpush2.msra.mxu0 0.0
    %5951 = vmatprep.subr.mxu0 0.0
    %5952 = vmatpush2.msra.mxu0 0.0
    %5953 = vmatprep.subr.mxu0 0.0
    %5954 = vmatpush2.msra.mxu0 0.0
    %5955 = vmatprep.subr.mxu0 0.0
    %5956 = vmatpush2.msra.mxu0 0.0
    %5957 = vmatprep.subr.mxu0 0.0
    %5958 = vmatpush2.msra.mxu0 0.0
    %5959 = vmatprep.subr.mxu0 0.0
    %5960 = vmatpush2.msra.mxu0 0.0
    %5961 = vmatprep.mubr.f32.mxu0 0.0
    %v5962 = vand.u32 %v5759, 4294901760
    %5963 = vmatmul.mubr.f32.gmra.mxu0 %v5962
    %v5964 = vpop.f32.mrf.mxu0
    %v5965 = vadd.f32 %v5844, %v5964
    %v5966 = vpop.f32.mrf.mxu0
    %5967 = vmatprep.mubr.f32.mxu0 0.0
    %v5968 = vand.u32 %v5762, 4294901760
    %5969 = vmatmul.mubr.f32.gmra.mxu0 %v5968
    %v5970 = vpop.f32.mrf.mxu0
    %v5971 = vadd.f32 %v5854, %v5970
    %v5972 = vpop.f32.mrf.mxu0
    %5973 = vdwg.mxu0
    %5974 = vmatprep.subr.mxu0 0.0
    %5975 = vmatpush1.msra.mxu0 0.0
    %5976 = vmatprep.subr.mxu0 0.0
    %5977 = vmatpush1.msra.mxu0 0.0
    %5978 = vmatprep.subr.mxu0 0.0
    %5979 = vmatpush1.msra.mxu0 0.0
    %5980 = vmatprep.subr.mxu0 0.0
    %5981 = vmatpush1.msra.mxu0 0.0
    %5982 = vmatprep.subr.mxu0 0.0
    %5983 = vmatpush1.msra.mxu0 0.0
    %5984 = vmatprep.subr.mxu0 0.0
    %5985 = vmatpush1.msra.mxu0 0.0
    %5986 = vmatprep.subr.mxu0 0.0
    %5987 = vmatpush1.msra.mxu0 0.0
    %5988 = vmatprep.subr.mxu0 0.0
    %5989 = vmatpush1.msra.mxu0 0.0
    %5990 = vmatprep.subr.mxu0 0.0
    %v5991 = vand.u32 %v5752, 4294901760
    %v5992 = vsub.f32 %v5752, %v5991
    %5993 = vmatpush1.msra.mxu0 %v5992
    %5994 = vmatprep.subr.mxu0 0.0
    %v5995 = vand.u32 %v5751, 4294901760
    %v5996 = vsub.f32 %v5751, %v5995
    %5997 = vmatpush1.msra.mxu0 %v5996
    %5998 = vmatprep.subr.mxu0 0.0
    %v5999 = vand.u32 %v5750, 4294901760
    %v6000 = vsub.f32 %v5750, %v5999
    %6001 = vmatpush1.msra.mxu0 %v6000
    %6002 = vmatprep.subr.mxu0 0.0
    %v6003 = vand.u32 %v5749, 4294901760
    %v6004 = vsub.f32 %v5749, %v6003
    %6005 = vmatpush1.msra.mxu0 %v6004
    %6006 = vmatprep.subr.mxu0 0.0
    %v6007 = vand.u32 %v5748, 4294901760
    %v6008 = vsub.f32 %v5748, %v6007
    %6009 = vmatpush1.msra.mxu0 %v6008
    %6010 = vmatprep.subr.mxu0 0.0
    %v6011 = vand.u32 %v5747, 4294901760
    %v6012 = vsub.f32 %v5747, %v6011
    %6013 = vmatpush1.msra.mxu0 %v6012
    %6014 = vmatprep.subr.mxu0 0.0
    %v6015 = vand.u32 %v5746, 4294901760
    %v6016 = vsub.f32 %v5746, %v6015
    %6017 = vmatpush1.msra.mxu0 %v6016
    %6018 = vmatprep.subr.mxu0 0.0
    %v6019 = vand.u32 %v5745, 4294901760
    %v6020 = vsub.f32 %v5745, %v6019
    %6021 = vmatpush1.msra.mxu0 %v6020
    %6022 = vmatprep.subr.mxu0 0.0
    %6023 = vmatpush2.msra.mxu0 0.0
    %6024 = vmatprep.subr.mxu0 0.0
    %6025 = vmatpush2.msra.mxu0 0.0
    %6026 = vmatprep.subr.mxu0 0.0
    %6027 = vmatpush2.msra.mxu0 0.0
    %6028 = vmatprep.subr.mxu0 0.0
    %6029 = vmatpush2.msra.mxu0 0.0
    %6030 = vmatprep.subr.mxu0 0.0
    %6031 = vmatpush2.msra.mxu0 0.0
    %6032 = vmatprep.subr.mxu0 0.0
    %6033 = vmatpush2.msra.mxu0 0.0
    %6034 = vmatprep.subr.mxu0 0.0
    %6035 = vmatpush2.msra.mxu0 0.0
    %6036 = vmatprep.subr.mxu0 0.0
    %6037 = vmatpush2.msra.mxu0 0.0
    %6038 = vmatprep.subr.mxu0 0.0
    %6039 = vmatpush2.msra.mxu0 0.0
    %6040 = vmatprep.subr.mxu0 0.0
    %6041 = vmatpush2.msra.mxu0 0.0
    %6042 = vmatprep.subr.mxu0 0.0
    %6043 = vmatpush2.msra.mxu0 0.0
    %6044 = vmatprep.subr.mxu0 0.0
    %6045 = vmatpush2.msra.mxu0 0.0
    %6046 = vmatprep.subr.mxu0 0.0
    %6047 = vmatpush2.msra.mxu0 0.0
    %6048 = vmatprep.subr.mxu0 0.0
    %6049 = vmatpush2.msra.mxu0 0.0
    %6050 = vmatprep.subr.mxu0 0.0
    %6051 = vmatpush2.msra.mxu0 0.0
    %6052 = vmatprep.subr.mxu0 0.0
    %6053 = vmatpush2.msra.mxu0 0.0
    %6054 = vmatprep.mubr.f32.mxu0 0.0
    %v6055 = vand.u32 %v5759, 4294901760
    %v6056 = vsub.f32 %v5759, %v6055
    %6057 = vmatmul.mubr.f32.gmra.mxu0 %v6056
    %v6058 = vpop.f32.mrf.mxu0
    %v6059 = vadd.f32 %v5965, %v6058
    %v6060 = vpop.f32.mrf.mxu0
    %6061 = vmatprep.mubr.f32.mxu0 0.0
    %v6062 = vand.u32 %v5762, 4294901760
    %v6063 = vsub.f32 %v5762, %v6062
    %6064 = vmatmul.mubr.f32.gmra.mxu0 %v6063
    %v6065 = vpop.f32.mrf.mxu0
    %v6066 = vadd.f32 %v5971, %v6065
    %v6067 = vpop.f32.mrf.mxu0
    %6068 = vdwg.mxu0
    %6069 = vmatprep.subr.mxu0 0.0
    %6070 = vmatpush1.msra.mxu0 0.0
    %6071 = vmatprep.subr.mxu0 0.0
    %6072 = vmatpush1.msra.mxu0 0.0
    %6073 = vmatprep.subr.mxu0 0.0
    %6074 = vmatpush1.msra.mxu0 0.0
    %6075 = vmatprep.subr.mxu0 0.0
    %6076 = vmatpush1.msra.mxu0 0.0
    %6077 = vmatprep.subr.mxu0 0.0
    %6078 = vmatpush1.msra.mxu0 0.0
    %6079 = vmatprep.subr.mxu0 0.0
    %6080 = vmatpush1.msra.mxu0 0.0
    %6081 = vmatprep.subr.mxu0 0.0
    %6082 = vmatpush1.msra.mxu0 0.0
    %6083 = vmatprep.subr.mxu0 0.0
    %6084 = vmatpush1.msra.mxu0 0.0
    %6085 = vmatprep.subr.mxu0 0.0
    %v6086 = vand.u32 %v5752, 4294901760
    %6087 = vmatpush1.msra.mxu0 %v6086
    %6088 = vmatprep.subr.mxu0 0.0
    %v6089 = vand.u32 %v5751, 4294901760
    %6090 = vmatpush1.msra.mxu0 %v6089
    %6091 = vmatprep.subr.mxu0 0.0
    %v6092 = vand.u32 %v5750, 4294901760
    %6093 = vmatpush1.msra.mxu0 %v6092
    %6094 = vmatprep.subr.mxu0 0.0
    %v6095 = vand.u32 %v5749, 4294901760
    %6096 = vmatpush1.msra.mxu0 %v6095
    %6097 = vmatprep.subr.mxu0 0.0
    %v6098 = vand.u32 %v5748, 4294901760
    %6099 = vmatpush1.msra.mxu0 %v6098
    %6100 = vmatprep.subr.mxu0 0.0
    %v6101 = vand.u32 %v5747, 4294901760
    %6102 = vmatpush1.msra.mxu0 %v6101
    %6103 = vmatprep.subr.mxu0 0.0
    %v6104 = vand.u32 %v5746, 4294901760
    %6105 = vmatpush1.msra.mxu0 %v6104
    %6106 = vmatprep.subr.mxu0 0.0
    %v6107 = vand.u32 %v5745, 4294901760
    %6108 = vmatpush1.msra.mxu0 %v6107
    %6109 = vmatprep.subr.mxu0 0.0
    %6110 = vmatpush2.msra.mxu0 0.0
    %6111 = vmatprep.subr.mxu0 0.0
    %6112 = vmatpush2.msra.mxu0 0.0
    %6113 = vmatprep.subr.mxu0 0.0
    %6114 = vmatpush2.msra.mxu0 0.0
    %6115 = vmatprep.subr.mxu0 0.0
    %6116 = vmatpush2.msra.mxu0 0.0
    %6117 = vmatprep.subr.mxu0 0.0
    %6118 = vmatpush2.msra.mxu0 0.0
    %6119 = vmatprep.subr.mxu0 0.0
    %6120 = vmatpush2.msra.mxu0 0.0
    %6121 = vmatprep.subr.mxu0 0.0
    %6122 = vmatpush2.msra.mxu0 0.0
    %6123 = vmatprep.subr.mxu0 0.0
    %6124 = vmatpush2.msra.mxu0 0.0
    %6125 = vmatprep.subr.mxu0 0.0
    %6126 = vmatpush2.msra.mxu0 0.0
    %6127 = vmatprep.subr.mxu0 0.0
    %6128 = vmatpush2.msra.mxu0 0.0
    %6129 = vmatprep.subr.mxu0 0.0
    %6130 = vmatpush2.msra.mxu0 0.0
    %6131 = vmatprep.subr.mxu0 0.0
    %6132 = vmatpush2.msra.mxu0 0.0
    %6133 = vmatprep.subr.mxu0 0.0
    %6134 = vmatpush2.msra.mxu0 0.0
    %6135 = vmatprep.subr.mxu0 0.0
    %6136 = vmatpush2.msra.mxu0 0.0
    %6137 = vmatprep.subr.mxu0 0.0
    %6138 = vmatpush2.msra.mxu0 0.0
    %6139 = vmatprep.subr.mxu0 0.0
    %6140 = vmatpush2.msra.mxu0 0.0
    %6141 = vmatprep.mubr.f32.mxu0 0.0
    %v6142 = vand.u32 %v5759, 4294901760
    %v6143 = vsub.f32 %v5759, %v6142
    %v6144 = vand.u32 %v6143, 4294901760
    %6145 = vmatmul.mubr.f32.gmra.mxu0 %v6144
    %v6146 = vpop.f32.mrf.mxu0
    %v6147 = vadd.f32 %v6059, %v6146
    %v6148 = vpop.f32.mrf.mxu0
    %6149 = vmatprep.mubr.f32.mxu0 0.0
    %v6150 = vand.u32 %v5762, 4294901760
    %v6151 = vsub.f32 %v5762, %v6150
    %v6152 = vand.u32 %v6151, 4294901760
    %6153 = vmatmul.mubr.f32.gmra.mxu0 %v6152
    %v6154 = vpop.f32.mrf.mxu0
    %v6155 = vadd.f32 %v6066, %v6154
    %v6156 = vpop.f32.mrf.mxu0
    %6157 = vdwg.mxu0
    %6158 = vmatprep.subr.mxu0 0.0
    %6159 = vmatpush1.msra.mxu0 0.0
    %6160 = vmatprep.subr.mxu0 0.0
    %6161 = vmatpush1.msra.mxu0 0.0
    %6162 = vmatprep.subr.mxu0 0.0
    %6163 = vmatpush1.msra.mxu0 0.0
    %6164 = vmatprep.subr.mxu0 0.0
    %6165 = vmatpush1.msra.mxu0 0.0
    %6166 = vmatprep.subr.mxu0 0.0
    %6167 = vmatpush1.msra.mxu0 0.0
    %6168 = vmatprep.subr.mxu0 0.0
    %6169 = vmatpush1.msra.mxu0 0.0
    %6170 = vmatprep.subr.mxu0 0.0
    %6171 = vmatpush1.msra.mxu0 0.0
    %6172 = vmatprep.subr.mxu0 0.0
    %6173 = vmatpush1.msra.mxu0 0.0
    %6174 = vmatprep.subr.mxu0 0.0
    %v6175 = vand.u32 %v5752, 4294901760
    %v6176 = vsub.f32 %v5752, %v6175
    %v6177 = vand.u32 %v6176, 4294901760
    %6178 = vmatpush1.msra.mxu0 %v6177
    %6179 = vmatprep.subr.mxu0 0.0
    %v6180 = vand.u32 %v5751, 4294901760
    %v6181 = vsub.f32 %v5751, %v6180
    %v6182 = vand.u32 %v6181, 4294901760
    %6183 = vmatpush1.msra.mxu0 %v6182
    %6184 = vmatprep.subr.mxu0 0.0
    %v6185 = vand.u32 %v5750, 4294901760
    %v6186 = vsub.f32 %v5750, %v6185
    %v6187 = vand.u32 %v6186, 4294901760
    %6188 = vmatpush1.msra.mxu0 %v6187
    %6189 = vmatprep.subr.mxu0 0.0
    %v6190 = vand.u32 %v5749, 4294901760
    %v6191 = vsub.f32 %v5749, %v6190
    %v6192 = vand.u32 %v6191, 4294901760
    %6193 = vmatpush1.msra.mxu0 %v6192
    %6194 = vmatprep.subr.mxu0 0.0
    %v6195 = vand.u32 %v5748, 4294901760
    %v6196 = vsub.f32 %v5748, %v6195
    %v6197 = vand.u32 %v6196, 4294901760
    %6198 = vmatpush1.msra.mxu0 %v6197
    %6199 = vmatprep.subr.mxu0 0.0
    %v6200 = vand.u32 %v5747, 4294901760
    %v6201 = vsub.f32 %v5747, %v6200
    %v6202 = vand.u32 %v6201, 4294901760
    %6203 = vmatpush1.msra.mxu0 %v6202
    %6204 = vmatprep.subr.mxu0 0.0
    %v6205 = vand.u32 %v5746, 4294901760
    %v6206 = vsub.f32 %v5746, %v6205
    %v6207 = vand.u32 %v6206, 4294901760
    %6208 = vmatpush1.msra.mxu0 %v6207
    %6209 = vmatprep.subr.mxu0 0.0
    %v6210 = vand.u32 %v5745, 4294901760
    %v6211 = vsub.f32 %v5745, %v6210
    %v6212 = vand.u32 %v6211, 4294901760
    %6213 = vmatpush1.msra.mxu0 %v6212
    %6214 = vmatprep.subr.mxu0 0.0
    %6215 = vmatpush2.msra.mxu0 0.0
    %6216 = vmatprep.subr.mxu0 0.0
    %6217 = vmatpush2.msra.mxu0 0.0
    %6218 = vmatprep.subr.mxu0 0.0
    %6219 = vmatpush2.msra.mxu0 0.0
    %6220 = vmatprep.subr.mxu0 0.0
    %6221 = vmatpush2.msra.mxu0 0.0
    %6222 = vmatprep.subr.mxu0 0.0
    %6223 = vmatpush2.msra.mxu0 0.0
    %6224 = vmatprep.subr.mxu0 0.0
    %6225 = vmatpush2.msra.mxu0 0.0
    %6226 = vmatprep.subr.mxu0 0.0
    %6227 = vmatpush2.msra.mxu0 0.0
    %6228 = vmatprep.subr.mxu0 0.0
    %6229 = vmatpush2.msra.mxu0 0.0
    %6230 = vmatprep.subr.mxu0 0.0
    %6231 = vmatpush2.msra.mxu0 0.0
    %6232 = vmatprep.subr.mxu0 0.0
    %6233 = vmatpush2.msra.mxu0 0.0
    %6234 = vmatprep.subr.mxu0 0.0
    %6235 = vmatpush2.msra.mxu0 0.0
    %6236 = vmatprep.subr.mxu0 0.0
    %6237 = vmatpush2.msra.mxu0 0.0
    %6238 = vmatprep.subr.mxu0 0.0
    %6239 = vmatpush2.msra.mxu0 0.0
    %6240 = vmatprep.subr.mxu0 0.0
    %6241 = vmatpush2.msra.mxu0 0.0
    %6242 = vmatprep.subr.mxu0 0.0
    %6243 = vmatpush2.msra.mxu0 0.0
    %6244 = vmatprep.subr.mxu0 0.0
    %6245 = vmatpush2.msra.mxu0 0.0
    %6246 = vmatprep.mubr.f32.mxu0 0.0
    %v6247 = vand.u32 %v5759, 4294901760
    %6248 = vmatmul.mubr.f32.gmra.mxu0 %v6247
    %v6249 = vpop.f32.mrf.mxu0
    %v6250 = vadd.f32 %v6147, %v6249
    %v6251 = vpop.f32.mrf.mxu0
    %6252 = vmatprep.mubr.f32.mxu0 0.0
    %v6253 = vand.u32 %v5762, 4294901760
    %6254 = vmatmul.mubr.f32.gmra.mxu0 %v6253
    %v6255 = vpop.f32.mrf.mxu0
    %v6256 = vadd.f32 %v6155, %v6255
    %v6257 = vpop.f32.mrf.mxu0
    %6258 = vdwg.mxu0
    %6259 = vmatprep.subr.mxu0 0.0
    %6260 = vmatpush1.msra.mxu0 0.0
    %6261 = vmatprep.subr.mxu0 0.0
    %6262 = vmatpush1.msra.mxu0 0.0
    %6263 = vmatprep.subr.mxu0 0.0
    %6264 = vmatpush1.msra.mxu0 0.0
    %6265 = vmatprep.subr.mxu0 0.0
    %6266 = vmatpush1.msra.mxu0 0.0
    %6267 = vmatprep.subr.mxu0 0.0
    %6268 = vmatpush1.msra.mxu0 0.0
    %6269 = vmatprep.subr.mxu0 0.0
    %6270 = vmatpush1.msra.mxu0 0.0
    %6271 = vmatprep.subr.mxu0 0.0
    %6272 = vmatpush1.msra.mxu0 0.0
    %6273 = vmatprep.subr.mxu0 0.0
    %6274 = vmatpush1.msra.mxu0 0.0
    %6275 = vmatprep.subr.mxu0 0.0
    %v6276 = vand.u32 %v5752, 4294901760
    %6277 = vmatpush1.msra.mxu0 %v6276
    %6278 = vmatprep.subr.mxu0 0.0
    %v6279 = vand.u32 %v5751, 4294901760
    %6280 = vmatpush1.msra.mxu0 %v6279
    %6281 = vmatprep.subr.mxu0 0.0
    %v6282 = vand.u32 %v5750, 4294901760
    %6283 = vmatpush1.msra.mxu0 %v6282
    %6284 = vmatprep.subr.mxu0 0.0
    %v6285 = vand.u32 %v5749, 4294901760
    %6286 = vmatpush1.msra.mxu0 %v6285
    %6287 = vmatprep.subr.mxu0 0.0
    %v6288 = vand.u32 %v5748, 4294901760
    %6289 = vmatpush1.msra.mxu0 %v6288
    %6290 = vmatprep.subr.mxu0 0.0
    %v6291 = vand.u32 %v5747, 4294901760
    %6292 = vmatpush1.msra.mxu0 %v6291
    %6293 = vmatprep.subr.mxu0 0.0
    %v6294 = vand.u32 %v5746, 4294901760
    %6295 = vmatpush1.msra.mxu0 %v6294
    %6296 = vmatprep.subr.mxu0 0.0
    %v6297 = vand.u32 %v5745, 4294901760
    %6298 = vmatpush1.msra.mxu0 %v6297
    %6299 = vmatprep.subr.mxu0 0.0
    %6300 = vmatpush2.msra.mxu0 0.0
    %6301 = vmatprep.subr.mxu0 0.0
    %6302 = vmatpush2.msra.mxu0 0.0
    %6303 = vmatprep.subr.mxu0 0.0
    %6304 = vmatpush2.msra.mxu0 0.0
    %6305 = vmatprep.subr.mxu0 0.0
    %6306 = vmatpush2.msra.mxu0 0.0
    %6307 = vmatprep.subr.mxu0 0.0
    %6308 = vmatpush2.msra.mxu0 0.0
    %6309 = vmatprep.subr.mxu0 0.0
    %6310 = vmatpush2.msra.mxu0 0.0
    %6311 = vmatprep.subr.mxu0 0.0
    %6312 = vmatpush2.msra.mxu0 0.0
    %6313 = vmatprep.subr.mxu0 0.0
    %6314 = vmatpush2.msra.mxu0 0.0
    %6315 = vmatprep.subr.mxu0 0.0
    %6316 = vmatpush2.msra.mxu0 0.0
    %6317 = vmatprep.subr.mxu0 0.0
    %6318 = vmatpush2.msra.mxu0 0.0
    %6319 = vmatprep.subr.mxu0 0.0
    %6320 = vmatpush2.msra.mxu0 0.0
    %6321 = vmatprep.subr.mxu0 0.0
    %6322 = vmatpush2.msra.mxu0 0.0
    %6323 = vmatprep.subr.mxu0 0.0
    %6324 = vmatpush2.msra.mxu0 0.0
    %6325 = vmatprep.subr.mxu0 0.0
    %6326 = vmatpush2.msra.mxu0 0.0
    %6327 = vmatprep.subr.mxu0 0.0
    %6328 = vmatpush2.msra.mxu0 0.0
    %6329 = vmatprep.subr.mxu0 0.0
    %6330 = vmatpush2.msra.mxu0 0.0
    %6331 = vmatprep.mubr.f32.mxu0 0.0
    %v6332 = vand.u32 %v5759, 4294901760
    %6333 = vmatmul.mubr.f32.gmra.mxu0 %v6332
    %v6334 = vpop.f32.mrf.mxu0
    %v6335 = vadd.f32 %v6250, %v6334
    %v6336 = vpop.f32.mrf.mxu0
    %6337 = vmatprep.mubr.f32.mxu0 0.0
    %v6338 = vand.u32 %v5762, 4294901760
    %6339 = vmatmul.mubr.f32.gmra.mxu0 %v6338
    %v6340 = vpop.f32.mrf.mxu0
    %v6341 = vadd.f32 %v6256, %v6340
    %v6342 = vpop.f32.mrf.mxu0
    %6343 = vdwg.mxu0
    %v6344 = vadd.f32 %v6335, %v3462
    %v6345 = vadd.f32 %v6341, %v3463
    %v6346 = vsel %vm572, %v6344, 0.0
    %6347 = vadd.xlane.f32.xlu0 %v6346
    %v6348 = vpop.xlane.xlu0 %6347
    %v6349 = vsel %vm572, %v6345, 0.0
    %6350 = vadd.xlane.f32.xlu0 %v6349
    %v6351 = vpop.xlane.xlu0 %6350
    %v6352 = vrcp.pop 32.0
    %v6353 = vmul.f32 %v6348, %v6352
    %v6354 = vmul.f32 %v6351, %v6352
    %v6355 = vsub.f32 %v6344, %v6353
    %v6356 = vsub.f32 %v6345, %v6354
    %v6357 = vmul.f32 %v6355, %v6355
    %v6358 = vmul.f32 %v6356, %v6356
    %v6359 = vsel %vm572, %v6357, 0.0
    %6360 = vadd.xlane.f32.xlu0 %v6359
    %v6361 = vpop.xlane.xlu0 %6360
    %v6362 = vsel %vm572, %v6358, 0.0
    %6363 = vadd.xlane.f32.xlu0 %v6362
    %v6364 = vpop.xlane.xlu0 %6363
    %v6365 = vmul.f32 %v6361, %v6352
    %v6366 = vmul.f32 %v6364, %v6352
    %v6367 = vadd.f32 %v6365, 1e-05
    %v6368 = vadd.f32 %v6366, 1e-05
    %v6369 = vrsqrt.pop %v6367
    %v6370 = vrsqrt.pop %v6368
    %v6371 = vmul.f32 %v6355, %v6369
    %v6372 = vmul.f32 %v6356, %v6370
    %v6373 = vld [vmem:[%s3 + $0x31] sm:$0x1]
    %v6374 = vlaneseq
    %v6375 = vshrl.u32 %v6374, 7
    %v6376 = vsub.s32 0, %v6375
    %v6377 = vrot.slane %v6373, %v6376
    %v6378 = vmul.f32 %v6371, %v6377
    %v6379 = vmul.f32 %v6372, %v6377
    %v6380 = vld [vmem:[%s3 + $0x32] sm:$0x1]
    %v6381 = vlaneseq
    %v6382 = vshrl.u32 %v6381, 7
    %v6383 = vsub.s32 0, %v6382
    %v6384 = vrot.slane %v6380, %v6383
    %v6385 = vadd.f32 %v6378, %v6384
    %v6386 = vadd.f32 %v6379, %v6384
    %v6387 = vld [vmem:[%s3 + $0x10] sm:$0xff]
    %v6388 = vld [vmem:[%s3 + $0x18] sm:$0xff]
    %v6389 = vld [vmem:[%s3 + $0x20] sm:$0xff]
    %v6390 = vld [vmem:[%s3 + $0x28] sm:$0xff]
    %v6391 = vld [vmem:[%s3 + $0x33] sm:$0x1]
    %v6392 = vlaneseq
    %v6393 = vshrl.u32 %v6392, 7
    %v6394 = vsub.s32 0, %v6393
    %v6395 = vrot.slane %v6391, %v6394
    %v6397 = vsel %vm572, %v6385, 0
    %v6400 = vsel %vm572, %v6386, 0
    %6402 = vmatprep.subr.mxu0 0.0
    %6403 = vmatpush1.msra.mxu0 0.0
    %6404 = vmatprep.subr.mxu0 0.0
    %6405 = vmatpush1.msra.mxu0 0.0
    %6406 = vmatprep.subr.mxu0 0.0
    %6407 = vmatpush1.msra.mxu0 0.0
    %6408 = vmatprep.subr.mxu0 0.0
    %6409 = vmatpush1.msra.mxu0 0.0
    %6410 = vmatprep.subr.mxu0 0.0
    %6411 = vmatpush1.msra.mxu0 0.0
    %6412 = vmatprep.subr.mxu0 0.0
    %6413 = vmatpush1.msra.mxu0 0.0
    %6414 = vmatprep.subr.mxu0 0.0
    %6415 = vmatpush1.msra.mxu0 0.0
    %6416 = vmatprep.subr.mxu0 0.0
    %6417 = vmatpush1.msra.mxu0 0.0
    %6418 = vmatprep.subr.mxu0 0.0
    %6419 = vmatpush1.msra.mxu0 0.0
    %6420 = vmatprep.subr.mxu0 0.0
    %6421 = vmatpush1.msra.mxu0 0.0
    %6422 = vmatprep.subr.mxu0 0.0
    %6423 = vmatpush1.msra.mxu0 0.0
    %6424 = vmatprep.subr.mxu0 0.0
    %6425 = vmatpush1.msra.mxu0 0.0
    %6426 = vmatprep.subr.mxu0 0.0
    %v6427 = vand.u32 %v6390, 4294901760
    %6428 = vmatpush1.msra.mxu0 %v6427
    %6429 = vmatprep.subr.mxu0 0.0
    %v6430 = vand.u32 %v6389, 4294901760
    %6431 = vmatpush1.msra.mxu0 %v6430
    %6432 = vmatprep.subr.mxu0 0.0
    %v6433 = vand.u32 %v6388, 4294901760
    %6434 = vmatpush1.msra.mxu0 %v6433
    %6435 = vmatprep.subr.mxu0 0.0
    %v6436 = vand.u32 %v6387, 4294901760
    %6437 = vmatpush1.msra.mxu0 %v6436
    %6438 = vmatprep.subr.mxu0 0.0
    %6439 = vmatpush2.msra.mxu0 0.0
    %6440 = vmatprep.subr.mxu0 0.0
    %6441 = vmatpush2.msra.mxu0 0.0
    %6442 = vmatprep.subr.mxu0 0.0
    %6443 = vmatpush2.msra.mxu0 0.0
    %6444 = vmatprep.subr.mxu0 0.0
    %6445 = vmatpush2.msra.mxu0 0.0
    %6446 = vmatprep.subr.mxu0 0.0
    %6447 = vmatpush2.msra.mxu0 0.0
    %6448 = vmatprep.subr.mxu0 0.0
    %6449 = vmatpush2.msra.mxu0 0.0
    %6450 = vmatprep.subr.mxu0 0.0
    %6451 = vmatpush2.msra.mxu0 0.0
    %6452 = vmatprep.subr.mxu0 0.0
    %6453 = vmatpush2.msra.mxu0 0.0
    %6454 = vmatprep.subr.mxu0 0.0
    %6455 = vmatpush2.msra.mxu0 0.0
    %6456 = vmatprep.subr.mxu0 0.0
    %6457 = vmatpush2.msra.mxu0 0.0
    %6458 = vmatprep.subr.mxu0 0.0
    %6459 = vmatpush2.msra.mxu0 0.0
    %6460 = vmatprep.subr.mxu0 0.0
    %6461 = vmatpush2.msra.mxu0 0.0
    %6462 = vmatprep.subr.mxu0 0.0
    %6463 = vmatpush2.msra.mxu0 0.0
    %6464 = vmatprep.subr.mxu0 0.0
    %6465 = vmatpush2.msra.mxu0 0.0
    %6466 = vmatprep.subr.mxu0 0.0
    %6467 = vmatpush2.msra.mxu0 0.0
    %6468 = vmatprep.subr.mxu0 0.0
    %6469 = vmatpush2.msra.mxu0 0.0
    %6470 = vmatprep.mubr.f32.mxu0 0.0
    %v6471 = vand.u32 %v6397, 4294901760
    %v6472 = vsub.f32 %v6397, %v6471
    %v6473 = vand.u32 %v6472, 4294901760
    %v6474 = vsub.f32 %v6472, %v6473
    %v6475 = vand.u32 %v6474, 4294901760
    %6476 = vmatmul.mubr.f32.gmra.mxu0 %v6475
    %v6477 = vpop.f32.mrf.mxu0
    %v6478 = vadd.f32 %v6395, %v6477
    %v6479 = vpop.f32.mrf.mxu0
    %6480 = vmatprep.mubr.f32.mxu0 0.0
    %v6481 = vand.u32 %v6400, 4294901760
    %v6482 = vsub.f32 %v6400, %v6481
    %v6483 = vand.u32 %v6482, 4294901760
    %v6484 = vsub.f32 %v6482, %v6483
    %v6485 = vand.u32 %v6484, 4294901760
    %6486 = vmatmul.mubr.f32.gmra.mxu0 %v6485
    %v6487 = vpop.f32.mrf.mxu0
    %v6488 = vadd.f32 %v6395, %v6487
    %v6489 = vpop.f32.mrf.mxu0
    %6490 = vdwg.mxu0
    %6491 = vmatprep.subr.mxu0 0.0
    %6492 = vmatpush1.msra.mxu0 0.0
    %6493 = vmatprep.subr.mxu0 0.0
    %6494 = vmatpush1.msra.mxu0 0.0
    %6495 = vmatprep.subr.mxu0 0.0
    %6496 = vmatpush1.msra.mxu0 0.0
    %6497 = vmatprep.subr.mxu0 0.0
    %6498 = vmatpush1.msra.mxu0 0.0
    %6499 = vmatprep.subr.mxu0 0.0
    %6500 = vmatpush1.msra.mxu0 0.0
    %6501 = vmatprep.subr.mxu0 0.0
    %6502 = vmatpush1.msra.mxu0 0.0
    %6503 = vmatprep.subr.mxu0 0.0
    %6504 = vmatpush1.msra.mxu0 0.0
    %6505 = vmatprep.subr.mxu0 0.0
    %6506 = vmatpush1.msra.mxu0 0.0
    %6507 = vmatprep.subr.mxu0 0.0
    %6508 = vmatpush1.msra.mxu0 0.0
    %6509 = vmatprep.subr.mxu0 0.0
    %6510 = vmatpush1.msra.mxu0 0.0
    %6511 = vmatprep.subr.mxu0 0.0
    %6512 = vmatpush1.msra.mxu0 0.0
    %6513 = vmatprep.subr.mxu0 0.0
    %6514 = vmatpush1.msra.mxu0 0.0
    %6515 = vmatprep.subr.mxu0 0.0
    %v6516 = vand.u32 %v6390, 4294901760
    %v6517 = vsub.f32 %v6390, %v6516
    %v6518 = vand.u32 %v6517, 4294901760
    %v6519 = vsub.f32 %v6517, %v6518
    %v6520 = vand.u32 %v6519, 4294901760
    %6521 = vmatpush1.msra.mxu0 %v6520
    %6522 = vmatprep.subr.mxu0 0.0
    %v6523 = vand.u32 %v6389, 4294901760
    %v6524 = vsub.f32 %v6389, %v6523
    %v6525 = vand.u32 %v6524, 4294901760
    %v6526 = vsub.f32 %v6524, %v6525
    %v6527 = vand.u32 %v6526, 4294901760
    %6528 = vmatpush1.msra.mxu0 %v6527
    %6529 = vmatprep.subr.mxu0 0.0
    %v6530 = vand.u32 %v6388, 4294901760
    %v6531 = vsub.f32 %v6388, %v6530
    %v6532 = vand.u32 %v6531, 4294901760
    %v6533 = vsub.f32 %v6531, %v6532
    %v6534 = vand.u32 %v6533, 4294901760
    %6535 = vmatpush1.msra.mxu0 %v6534
    %6536 = vmatprep.subr.mxu0 0.0
    %v6537 = vand.u32 %v6387, 4294901760
    %v6538 = vsub.f32 %v6387, %v6537
    %v6539 = vand.u32 %v6538, 4294901760
    %v6540 = vsub.f32 %v6538, %v6539
    %v6541 = vand.u32 %v6540, 4294901760
    %6542 = vmatpush1.msra.mxu0 %v6541
    %6543 = vmatprep.subr.mxu0 0.0
    %6544 = vmatpush2.msra.mxu0 0.0
    %6545 = vmatprep.subr.mxu0 0.0
    %6546 = vmatpush2.msra.mxu0 0.0
    %6547 = vmatprep.subr.mxu0 0.0
    %6548 = vmatpush2.msra.mxu0 0.0
    %6549 = vmatprep.subr.mxu0 0.0
    %6550 = vmatpush2.msra.mxu0 0.0
    %6551 = vmatprep.subr.mxu0 0.0
    %6552 = vmatpush2.msra.mxu0 0.0
    %6553 = vmatprep.subr.mxu0 0.0
    %6554 = vmatpush2.msra.mxu0 0.0
    %6555 = vmatprep.subr.mxu0 0.0
    %6556 = vmatpush2.msra.mxu0 0.0
    %6557 = vmatprep.subr.mxu0 0.0
    %6558 = vmatpush2.msra.mxu0 0.0
    %6559 = vmatprep.subr.mxu0 0.0
    %6560 = vmatpush2.msra.mxu0 0.0
    %6561 = vmatprep.subr.mxu0 0.0
    %6562 = vmatpush2.msra.mxu0 0.0
    %6563 = vmatprep.subr.mxu0 0.0
    %6564 = vmatpush2.msra.mxu0 0.0
    %6565 = vmatprep.subr.mxu0 0.0
    %6566 = vmatpush2.msra.mxu0 0.0
    %6567 = vmatprep.subr.mxu0 0.0
    %6568 = vmatpush2.msra.mxu0 0.0
    %6569 = vmatprep.subr.mxu0 0.0
    %6570 = vmatpush2.msra.mxu0 0.0
    %6571 = vmatprep.subr.mxu0 0.0
    %6572 = vmatpush2.msra.mxu0 0.0
    %6573 = vmatprep.subr.mxu0 0.0
    %6574 = vmatpush2.msra.mxu0 0.0
    %6575 = vmatprep.mubr.f32.mxu0 0.0
    %v6576 = vand.u32 %v6397, 4294901760
    %6577 = vmatmul.mubr.f32.gmra.mxu0 %v6576
    %v6578 = vpop.f32.mrf.mxu0
    %v6579 = vadd.f32 %v6478, %v6578
    %v6580 = vpop.f32.mrf.mxu0
    %6581 = vmatprep.mubr.f32.mxu0 0.0
    %v6582 = vand.u32 %v6400, 4294901760
    %6583 = vmatmul.mubr.f32.gmra.mxu0 %v6582
    %v6584 = vpop.f32.mrf.mxu0
    %v6585 = vadd.f32 %v6488, %v6584
    %v6586 = vpop.f32.mrf.mxu0
    %6587 = vdwg.mxu0
    %6588 = vmatprep.subr.mxu0 0.0
    %6589 = vmatpush1.msra.mxu0 0.0
    %6590 = vmatprep.subr.mxu0 0.0
    %6591 = vmatpush1.msra.mxu0 0.0
    %6592 = vmatprep.subr.mxu0 0.0
    %6593 = vmatpush1.msra.mxu0 0.0
    %6594 = vmatprep.subr.mxu0 0.0
    %6595 = vmatpush1.msra.mxu0 0.0
    %6596 = vmatprep.subr.mxu0 0.0
    %6597 = vmatpush1.msra.mxu0 0.0
    %6598 = vmatprep.subr.mxu0 0.0
    %6599 = vmatpush1.msra.mxu0 0.0
    %6600 = vmatprep.subr.mxu0 0.0
    %6601 = vmatpush1.msra.mxu0 0.0
    %6602 = vmatprep.subr.mxu0 0.0
    %6603 = vmatpush1.msra.mxu0 0.0
    %6604 = vmatprep.subr.mxu0 0.0
    %6605 = vmatpush1.msra.mxu0 0.0
    %6606 = vmatprep.subr.mxu0 0.0
    %6607 = vmatpush1.msra.mxu0 0.0
    %6608 = vmatprep.subr.mxu0 0.0
    %6609 = vmatpush1.msra.mxu0 0.0
    %6610 = vmatprep.subr.mxu0 0.0
    %6611 = vmatpush1.msra.mxu0 0.0
    %6612 = vmatprep.subr.mxu0 0.0
    %v6613 = vand.u32 %v6390, 4294901760
    %v6614 = vsub.f32 %v6390, %v6613
    %6615 = vmatpush1.msra.mxu0 %v6614
    %6616 = vmatprep.subr.mxu0 0.0
    %v6617 = vand.u32 %v6389, 4294901760
    %v6618 = vsub.f32 %v6389, %v6617
    %6619 = vmatpush1.msra.mxu0 %v6618
    %6620 = vmatprep.subr.mxu0 0.0
    %v6621 = vand.u32 %v6388, 4294901760
    %v6622 = vsub.f32 %v6388, %v6621
    %6623 = vmatpush1.msra.mxu0 %v6622
    %6624 = vmatprep.subr.mxu0 0.0
    %v6625 = vand.u32 %v6387, 4294901760
    %v6626 = vsub.f32 %v6387, %v6625
    %6627 = vmatpush1.msra.mxu0 %v6626
    %6628 = vmatprep.subr.mxu0 0.0
    %6629 = vmatpush2.msra.mxu0 0.0
    %6630 = vmatprep.subr.mxu0 0.0
    %6631 = vmatpush2.msra.mxu0 0.0
    %6632 = vmatprep.subr.mxu0 0.0
    %6633 = vmatpush2.msra.mxu0 0.0
    %6634 = vmatprep.subr.mxu0 0.0
    %6635 = vmatpush2.msra.mxu0 0.0
    %6636 = vmatprep.subr.mxu0 0.0
    %6637 = vmatpush2.msra.mxu0 0.0
    %6638 = vmatprep.subr.mxu0 0.0
    %6639 = vmatpush2.msra.mxu0 0.0
    %6640 = vmatprep.subr.mxu0 0.0
    %6641 = vmatpush2.msra.mxu0 0.0
    %6642 = vmatprep.subr.mxu0 0.0
    %6643 = vmatpush2.msra.mxu0 0.0
    %6644 = vmatprep.subr.mxu0 0.0
    %6645 = vmatpush2.msra.mxu0 0.0
    %6646 = vmatprep.subr.mxu0 0.0
    %6647 = vmatpush2.msra.mxu0 0.0
    %6648 = vmatprep.subr.mxu0 0.0
    %6649 = vmatpush2.msra.mxu0 0.0
    %6650 = vmatprep.subr.mxu0 0.0
    %6651 = vmatpush2.msra.mxu0 0.0
    %6652 = vmatprep.subr.mxu0 0.0
    %6653 = vmatpush2.msra.mxu0 0.0
    %6654 = vmatprep.subr.mxu0 0.0
    %6655 = vmatpush2.msra.mxu0 0.0
    %6656 = vmatprep.subr.mxu0 0.0
    %6657 = vmatpush2.msra.mxu0 0.0
    %6658 = vmatprep.subr.mxu0 0.0
    %6659 = vmatpush2.msra.mxu0 0.0
    %6660 = vmatprep.mubr.f32.mxu0 0.0
    %v6661 = vand.u32 %v6397, 4294901760
    %v6662 = vsub.f32 %v6397, %v6661
    %6663 = vmatmul.mubr.f32.gmra.mxu0 %v6662
    %v6664 = vpop.f32.mrf.mxu0
    %v6665 = vadd.f32 %v6579, %v6664
    %v6666 = vpop.f32.mrf.mxu0
    %6667 = vmatprep.mubr.f32.mxu0 0.0
    %v6668 = vand.u32 %v6400, 4294901760
    %v6669 = vsub.f32 %v6400, %v6668
    %6670 = vmatmul.mubr.f32.gmra.mxu0 %v6669
    %v6671 = vpop.f32.mrf.mxu0
    %v6672 = vadd.f32 %v6585, %v6671
    %v6673 = vpop.f32.mrf.mxu0
    %6674 = vdwg.mxu0
    %6675 = vmatprep.subr.mxu0 0.0
    %6676 = vmatpush1.msra.mxu0 0.0
    %6677 = vmatprep.subr.mxu0 0.0
    %6678 = vmatpush1.msra.mxu0 0.0
    %6679 = vmatprep.subr.mxu0 0.0
    %6680 = vmatpush1.msra.mxu0 0.0
    %6681 = vmatprep.subr.mxu0 0.0
    %6682 = vmatpush1.msra.mxu0 0.0
    %6683 = vmatprep.subr.mxu0 0.0
    %6684 = vmatpush1.msra.mxu0 0.0
    %6685 = vmatprep.subr.mxu0 0.0
    %6686 = vmatpush1.msra.mxu0 0.0
    %6687 = vmatprep.subr.mxu0 0.0
    %6688 = vmatpush1.msra.mxu0 0.0
    %6689 = vmatprep.subr.mxu0 0.0
    %6690 = vmatpush1.msra.mxu0 0.0
    %6691 = vmatprep.subr.mxu0 0.0
    %6692 = vmatpush1.msra.mxu0 0.0
    %6693 = vmatprep.subr.mxu0 0.0
    %6694 = vmatpush1.msra.mxu0 0.0
    %6695 = vmatprep.subr.mxu0 0.0
    %6696 = vmatpush1.msra.mxu0 0.0
    %6697 = vmatprep.subr.mxu0 0.0
    %6698 = vmatpush1.msra.mxu0 0.0
    %6699 = vmatprep.subr.mxu0 0.0
    %v6700 = vand.u32 %v6390, 4294901760
    %6701 = vmatpush1.msra.mxu0 %v6700
    %6702 = vmatprep.subr.mxu0 0.0
    %v6703 = vand.u32 %v6389, 4294901760
    %6704 = vmatpush1.msra.mxu0 %v6703
    %6705 = vmatprep.subr.mxu0 0.0
    %v6706 = vand.u32 %v6388, 4294901760
    %6707 = vmatpush1.msra.mxu0 %v6706
    %6708 = vmatprep.subr.mxu0 0.0
    %v6709 = vand.u32 %v6387, 4294901760
    %6710 = vmatpush1.msra.mxu0 %v6709
    %6711 = vmatprep.subr.mxu0 0.0
    %6712 = vmatpush2.msra.mxu0 0.0
    %6713 = vmatprep.subr.mxu0 0.0
    %6714 = vmatpush2.msra.mxu0 0.0
    %6715 = vmatprep.subr.mxu0 0.0
    %6716 = vmatpush2.msra.mxu0 0.0
    %6717 = vmatprep.subr.mxu0 0.0
    %6718 = vmatpush2.msra.mxu0 0.0
    %6719 = vmatprep.subr.mxu0 0.0
    %6720 = vmatpush2.msra.mxu0 0.0
    %6721 = vmatprep.subr.mxu0 0.0
    %6722 = vmatpush2.msra.mxu0 0.0
    %6723 = vmatprep.subr.mxu0 0.0
    %6724 = vmatpush2.msra.mxu0 0.0
    %6725 = vmatprep.subr.mxu0 0.0
    %6726 = vmatpush2.msra.mxu0 0.0
    %6727 = vmatprep.subr.mxu0 0.0
    %6728 = vmatpush2.msra.mxu0 0.0
    %6729 = vmatprep.subr.mxu0 0.0
    %6730 = vmatpush2.msra.mxu0 0.0
    %6731 = vmatprep.subr.mxu0 0.0
    %6732 = vmatpush2.msra.mxu0 0.0
    %6733 = vmatprep.subr.mxu0 0.0
    %6734 = vmatpush2.msra.mxu0 0.0
    %6735 = vmatprep.subr.mxu0 0.0
    %6736 = vmatpush2.msra.mxu0 0.0
    %6737 = vmatprep.subr.mxu0 0.0
    %6738 = vmatpush2.msra.mxu0 0.0
    %6739 = vmatprep.subr.mxu0 0.0
    %6740 = vmatpush2.msra.mxu0 0.0
    %6741 = vmatprep.subr.mxu0 0.0
    %6742 = vmatpush2.msra.mxu0 0.0
    %6743 = vmatprep.mubr.f32.mxu0 0.0
    %v6744 = vand.u32 %v6397, 4294901760
    %v6745 = vsub.f32 %v6397, %v6744
    %v6746 = vand.u32 %v6745, 4294901760
    %6747 = vmatmul.mubr.f32.gmra.mxu0 %v6746
    %v6748 = vpop.f32.mrf.mxu0
    %v6749 = vadd.f32 %v6665, %v6748
    %v6750 = vpop.f32.mrf.mxu0
    %6751 = vmatprep.mubr.f32.mxu0 0.0
    %v6752 = vand.u32 %v6400, 4294901760
    %v6753 = vsub.f32 %v6400, %v6752
    %v6754 = vand.u32 %v6753, 4294901760
    %6755 = vmatmul.mubr.f32.gmra.mxu0 %v6754
    %v6756 = vpop.f32.mrf.mxu0
    %v6757 = vadd.f32 %v6672, %v6756
    %v6758 = vpop.f32.mrf.mxu0
    %6759 = vdwg.mxu0
    %6760 = vmatprep.subr.mxu0 0.0
    %6761 = vmatpush1.msra.mxu0 0.0
    %6762 = vmatprep.subr.mxu0 0.0
    %6763 = vmatpush1.msra.mxu0 0.0
    %6764 = vmatprep.subr.mxu0 0.0
    %6765 = vmatpush1.msra.mxu0 0.0
    %6766 = vmatprep.subr.mxu0 0.0
    %6767 = vmatpush1.msra.mxu0 0.0
    %6768 = vmatprep.subr.mxu0 0.0
    %6769 = vmatpush1.msra.mxu0 0.0
    %6770 = vmatprep.subr.mxu0 0.0
    %6771 = vmatpush1.msra.mxu0 0.0
    %6772 = vmatprep.subr.mxu0 0.0
    %6773 = vmatpush1.msra.mxu0 0.0
    %6774 = vmatprep.subr.mxu0 0.0
    %6775 = vmatpush1.msra.mxu0 0.0
    %6776 = vmatprep.subr.mxu0 0.0
    %6777 = vmatpush1.msra.mxu0 0.0
    %6778 = vmatprep.subr.mxu0 0.0
    %6779 = vmatpush1.msra.mxu0 0.0
    %6780 = vmatprep.subr.mxu0 0.0
    %6781 = vmatpush1.msra.mxu0 0.0
    %6782 = vmatprep.subr.mxu0 0.0
    %6783 = vmatpush1.msra.mxu0 0.0
    %6784 = vmatprep.subr.mxu0 0.0
    %v6785 = vand.u32 %v6390, 4294901760
    %v6786 = vsub.f32 %v6390, %v6785
    %v6787 = vand.u32 %v6786, 4294901760
    %6788 = vmatpush1.msra.mxu0 %v6787
    %6789 = vmatprep.subr.mxu0 0.0
    %v6790 = vand.u32 %v6389, 4294901760
    %v6791 = vsub.f32 %v6389, %v6790
    %v6792 = vand.u32 %v6791, 4294901760
    %6793 = vmatpush1.msra.mxu0 %v6792
    %6794 = vmatprep.subr.mxu0 0.0
    %v6795 = vand.u32 %v6388, 4294901760
    %v6796 = vsub.f32 %v6388, %v6795
    %v6797 = vand.u32 %v6796, 4294901760
    %6798 = vmatpush1.msra.mxu0 %v6797
    %6799 = vmatprep.subr.mxu0 0.0
    %v6800 = vand.u32 %v6387, 4294901760
    %v6801 = vsub.f32 %v6387, %v6800
    %v6802 = vand.u32 %v6801, 4294901760
    %6803 = vmatpush1.msra.mxu0 %v6802
    %6804 = vmatprep.subr.mxu0 0.0
    %6805 = vmatpush2.msra.mxu0 0.0
    %6806 = vmatprep.subr.mxu0 0.0
    %6807 = vmatpush2.msra.mxu0 0.0
    %6808 = vmatprep.subr.mxu0 0.0
    %6809 = vmatpush2.msra.mxu0 0.0
    %6810 = vmatprep.subr.mxu0 0.0
    %6811 = vmatpush2.msra.mxu0 0.0
    %6812 = vmatprep.subr.mxu0 0.0
    %6813 = vmatpush2.msra.mxu0 0.0
    %6814 = vmatprep.subr.mxu0 0.0
    %6815 = vmatpush2.msra.mxu0 0.0
    %6816 = vmatprep.subr.mxu0 0.0
    %6817 = vmatpush2.msra.mxu0 0.0
    %6818 = vmatprep.subr.mxu0 0.0
    %6819 = vmatpush2.msra.mxu0 0.0
    %6820 = vmatprep.subr.mxu0 0.0
    %6821 = vmatpush2.msra.mxu0 0.0
    %6822 = vmatprep.subr.mxu0 0.0
    %6823 = vmatpush2.msra.mxu0 0.0
    %6824 = vmatprep.subr.mxu0 0.0
    %6825 = vmatpush2.msra.mxu0 0.0
    %6826 = vmatprep.subr.mxu0 0.0
    %6827 = vmatpush2.msra.mxu0 0.0
    %6828 = vmatprep.subr.mxu0 0.0
    %6829 = vmatpush2.msra.mxu0 0.0
    %6830 = vmatprep.subr.mxu0 0.0
    %6831 = vmatpush2.msra.mxu0 0.0
    %6832 = vmatprep.subr.mxu0 0.0
    %6833 = vmatpush2.msra.mxu0 0.0
    %6834 = vmatprep.subr.mxu0 0.0
    %6835 = vmatpush2.msra.mxu0 0.0
    %6836 = vmatprep.mubr.f32.mxu0 0.0
    %v6837 = vand.u32 %v6397, 4294901760
    %6838 = vmatmul.mubr.f32.gmra.mxu0 %v6837
    %v6839 = vpop.f32.mrf.mxu0
    %v6840 = vadd.f32 %v6749, %v6839
    %v6841 = vpop.f32.mrf.mxu0
    %6842 = vmatprep.mubr.f32.mxu0 0.0
    %v6843 = vand.u32 %v6400, 4294901760
    %6844 = vmatmul.mubr.f32.gmra.mxu0 %v6843
    %v6845 = vpop.f32.mrf.mxu0
    %v6846 = vadd.f32 %v6757, %v6845
    %v6847 = vpop.f32.mrf.mxu0
    %6848 = vdwg.mxu0
    %6849 = vmatprep.subr.mxu0 0.0
    %6850 = vmatpush1.msra.mxu0 0.0
    %6851 = vmatprep.subr.mxu0 0.0
    %6852 = vmatpush1.msra.mxu0 0.0
    %6853 = vmatprep.subr.mxu0 0.0
    %6854 = vmatpush1.msra.mxu0 0.0
    %6855 = vmatprep.subr.mxu0 0.0
    %6856 = vmatpush1.msra.mxu0 0.0
    %6857 = vmatprep.subr.mxu0 0.0
    %6858 = vmatpush1.msra.mxu0 0.0
    %6859 = vmatprep.subr.mxu0 0.0
    %6860 = vmatpush1.msra.mxu0 0.0
    %6861 = vmatprep.subr.mxu0 0.0
    %6862 = vmatpush1.msra.mxu0 0.0
    %6863 = vmatprep.subr.mxu0 0.0
    %6864 = vmatpush1.msra.mxu0 0.0
    %6865 = vmatprep.subr.mxu0 0.0
    %6866 = vmatpush1.msra.mxu0 0.0
    %6867 = vmatprep.subr.mxu0 0.0
    %6868 = vmatpush1.msra.mxu0 0.0
    %6869 = vmatprep.subr.mxu0 0.0
    %6870 = vmatpush1.msra.mxu0 0.0
    %6871 = vmatprep.subr.mxu0 0.0
    %6872 = vmatpush1.msra.mxu0 0.0
    %6873 = vmatprep.subr.mxu0 0.0
    %v6874 = vand.u32 %v6390, 4294901760
    %6875 = vmatpush1.msra.mxu0 %v6874
    %6876 = vmatprep.subr.mxu0 0.0
    %v6877 = vand.u32 %v6389, 4294901760
    %6878 = vmatpush1.msra.mxu0 %v6877
    %6879 = vmatprep.subr.mxu0 0.0
    %v6880 = vand.u32 %v6388, 4294901760
    %6881 = vmatpush1.msra.mxu0 %v6880
    %6882 = vmatprep.subr.mxu0 0.0
    %v6883 = vand.u32 %v6387, 4294901760
    %6884 = vmatpush1.msra.mxu0 %v6883
    %6885 = vmatprep.subr.mxu0 0.0
    %6886 = vmatpush2.msra.mxu0 0.0
    %6887 = vmatprep.subr.mxu0 0.0
    %6888 = vmatpush2.msra.mxu0 0.0
    %6889 = vmatprep.subr.mxu0 0.0
    %6890 = vmatpush2.msra.mxu0 0.0
    %6891 = vmatprep.subr.mxu0 0.0
    %6892 = vmatpush2.msra.mxu0 0.0
    %6893 = vmatprep.subr.mxu0 0.0
    %6894 = vmatpush2.msra.mxu0 0.0
    %6895 = vmatprep.subr.mxu0 0.0
    %6896 = vmatpush2.msra.mxu0 0.0
    %6897 = vmatprep.subr.mxu0 0.0
    %6898 = vmatpush2.msra.mxu0 0.0
    %6899 = vmatprep.subr.mxu0 0.0
    %6900 = vmatpush2.msra.mxu0 0.0
    %6901 = vmatprep.subr.mxu0 0.0
    %6902 = vmatpush2.msra.mxu0 0.0
    %6903 = vmatprep.subr.mxu0 0.0
    %6904 = vmatpush2.msra.mxu0 0.0
    %6905 = vmatprep.subr.mxu0 0.0
    %6906 = vmatpush2.msra.mxu0 0.0
    %6907 = vmatprep.subr.mxu0 0.0
    %6908 = vmatpush2.msra.mxu0 0.0
    %6909 = vmatprep.subr.mxu0 0.0
    %6910 = vmatpush2.msra.mxu0 0.0
    %6911 = vmatprep.subr.mxu0 0.0
    %6912 = vmatpush2.msra.mxu0 0.0
    %6913 = vmatprep.subr.mxu0 0.0
    %6914 = vmatpush2.msra.mxu0 0.0
    %6915 = vmatprep.subr.mxu0 0.0
    %6916 = vmatpush2.msra.mxu0 0.0
    %6917 = vmatprep.mubr.f32.mxu0 0.0
    %v6918 = vand.u32 %v6397, 4294901760
    %6919 = vmatmul.mubr.f32.gmra.mxu0 %v6918
    %v6920 = vpop.f32.mrf.mxu0
    %v6921 = vadd.f32 %v6840, %v6920
    %v6922 = vpop.f32.mrf.mxu0
    %6923 = vmatprep.mubr.f32.mxu0 0.0
    %v6924 = vand.u32 %v6400, 4294901760
    %6925 = vmatmul.mubr.f32.gmra.mxu0 %v6924
    %v6926 = vpop.f32.mrf.mxu0
    %v6927 = vadd.f32 %v6846, %v6926
    %v6928 = vpop.f32.mrf.mxu0
    %6929 = vdwg.mxu0
    %6930 = vst.msk [vmem:[#allocation2] sm:$0xff] %vm27, %v6921
    %6931 = vst.msk [vmem:[#allocation2 + $0x8] sm:$0xff] %vm27, %v6927
    // Predicated region
    $region18: #{model_forward.1} parent=1 // pred_check
      _
    $region19: #{model_forward.1} parent=1 // pred_check_branch
      %6933 = sbr.rel (0) target = $region21
    $region20: #{model_forward.1} parent=1 // pred_region
      %s6935 = ssub.s32 256, 256
      %6936 = vsyncadd [#allocation3], %s6935
      %s6937 = sshll.u32 [#allocation2], 4
      %s6938 = int_to_ptr.vmem [resolvable:$true] %s6937
      %6943 = dma.vmem_to_hbm [thread:$0]  %s6938, 256, %s4, [#allocation3], 128, 128, 8
    $region21: #{model_forward.1} parent=1 // pred_fallthru
      _
    // Predicated region
    $region22: #{model_forward.1} parent=1 // pred_check
      _
    $region23: #{model_forward.1} parent=1 // pred_check_branch
      %6945 = sbr.rel (0) target = $region25
    $region24: #{model_forward.1} parent=1 // pred_region
      %6946 = dma.done [#allocation3], 256
    $region25: #{model_forward.1} parent=1 // pred_fallthru
      _
    %6947 = vsyncpa [#allocation3], 1

</llo_original>
